<compile_context>
chip_gen: v5e
topology: v5e:2x2
jax: 0.10.0
libtpu: 0.0.40
codegen_flags: <defaults>
</compile_context>

<pallas_src>
import functools

import jax
import jax.numpy as jnp
from jax.experimental import pallas as pl
from jax.experimental.pallas import tpu as pltpu

LRELU_SLOPE = 0.01   # nn.LeakyReLU default negative_slope
BN_EPS = 1e-5        # nn.BatchNorm2d default eps


# ----------------------------------------------------------------------------
# Fused kernel: whole UpResiBlock forward for one sample, [C, lanes] layout.
# ----------------------------------------------------------------------------
def _upresi_kernel(x_ref, s1_ref, b1_ref, w1_ref, b2_ref, pext_ref,
                   w2_ref, b3_ref, pgrid_ref, w3s_ref, e_ref, o_ref,
                   *, Wp, Lpad, B, f3, rr):
    x = x_ref[...]                                            # [Cin, D] f32

    # conv_block1: BN1 + LeakyReLU -> 1x1 conv (BN2 scale folded into the
    # weights) + BN2 shift + LeakyReLU, all on the dense 128-aligned layout.
    a = x * s1_ref[...] + b1_ref[...]
    a = jnp.where(a >= 0.0, a, LRELU_SLOPE * a).astype(jnp.bfloat16)
    z = jnp.dot(w1_ref[...], a, preferred_element_type=jnp.float32) + b2_ref[...]
    act2 = jnp.where(z >= 0.0, z, LRELU_SLOPE * z).astype(jnp.bfloat16)  # [f1, D]

    # Place the dense activation onto the zero-padded conv grid (plus lane
    # margins for the tap shifts) via an exact one-hot matmul: no HBM pad,
    # no halo mask, 128-aligned lane extent.
    act2e = jnp.dot(act2, pext_ref[...],
                    preferred_element_type=jnp.float32)                 # [f1, Mext]

    # conv_block2 3x3 conv: ONE K=9*f1 matmul over the sublane-stacked,
    # lane-shifted tap slices (no HBM im2col, no per-tap accumulation).
    taps = jnp.concatenate(
        [act2e[:, B + (kh - 1) * Wp + (kw - 1):
                  B + (kh - 1) * Wp + (kw - 1) + Lpad]
         for kh in range(3) for kw in range(3)],
        axis=0).astype(jnp.bfloat16)                                     # [9*f1, Lpad]
    z3 = jnp.dot(w2_ref[...], taps, preferred_element_type=jnp.float32) + b3_ref[...]
    act3 = jnp.where(z3 >= 0.0, z3, LRELU_SLOPE * z3)                    # [r1, Lpad]

    # Shortcut input placed onto the same grid coordinates (exact one-hot).
    xg = jnp.dot(x.astype(jnp.bfloat16), pgrid_ref[...],
                 preferred_element_type=jnp.float32)                     # [Cin, Lpad]

    # conv_block3 1x1 conv (block-diagonal per subpixel) fused with the
    # shortcut 1x1 conv into a SINGLE matmul on a concatenated operand.
    ops = jnp.concatenate([act3, xg], axis=0).astype(jnp.bfloat16)       # [r1+Cin, Lpad]
    res = jnp.dot(w3s_ref[...], ops, preferred_element_type=jnp.float32)  # [r2, Lpad]

    # Interior crop + PixelShuffle as ONE big one-hot bf16 matmul; the result
    # is the flat NCHW output block -> a single unmasked lane-dense store.
    resq = jnp.concatenate([res[q * f3:(q + 1) * f3, :] for q in range(rr)],
                           axis=1).astype(jnp.bfloat16)                  # [f3, rr*Lpad]
    o_ref[...] = jnp.dot(resq, e_ref[...],
                         preferred_element_type=jnp.float32)             # [f3, OHW]


# ----------------------------------------------------------------------------
# Parameter folding helpers (host side, negligible cost)
# ----------------------------------------------------------------------------
def _bn_scale_shift(gamma, beta, mean, var):
    scale = gamma / jnp.sqrt(var + BN_EPS)
    shift = beta - mean * scale
    return scale, shift


def _round_up(v, m):
    return ((v + m - 1) // m) * m


# ----------------------------------------------------------------------------
# Parameters (deterministic, synthetic; OIHW conv weights like PyTorch)
# ----------------------------------------------------------------------------
def init_params(key, in_features, filters, stride):
    f1, f2, f3 = filters
    r1 = stride * stride * f2
    r2 = stride * stride * f3
    keys = jax.random.split(key, 7)

    def bn_params(k, c):
        k1, k2, k3, k4 = jax.random.split(k, 4)
        gamma = 1.0 + 0.1 * jax.random.normal(k1, (c,), jnp.float32)
        beta = 0.1 * jax.random.normal(k2, (c,), jnp.float32)
        mean = 0.1 * jax.random.normal(k3, (c,), jnp.float32)
        var = jnp.abs(jax.random.normal(k4, (c,), jnp.float32)) + 0.5
        return gamma, beta, mean, var

    return {
        "bn1": bn_params(keys[0], in_features),
        "w1": 0.1 * jax.random.normal(keys[1], (f1, in_features, 1, 1), jnp.float32),
        "bn2": bn_params(keys[2], f1),
        "w2": 0.1 * jax.random.normal(keys[3], (r1, f1, 3, 3), jnp.float32),
        "bn3": bn_params(keys[4], f2),
        "w3": 0.1 * jax.random.normal(keys[5], (f3, f2, 1, 1), jnp.float32),
        "ws": 0.1 * jax.random.normal(keys[6], (r2, in_features, 1, 1), jnp.float32),
    }


# ----------------------------------------------------------------------------
# UpResiBlock forward (single fused Pallas kernel)
# ----------------------------------------------------------------------------
def up_resi_block_forward(x_nchw, params, stride=2):
    N, Cin, H, W = x_nchw.shape
    r = stride
    rr = r * r
    f1 = params["w1"].shape[0]
    r1 = params["w2"].shape[0]
    f2 = r1 // rr
    f3 = params["w3"].shape[0]
    r2 = params["ws"].shape[0]
    Hp, Wp = H + 2, W + 2
    L = Hp * Wp                       # zero-padded conv grid, flattened
    D = H * W                         # dense spatial size (input lane axis)
    OHW = rr * H * W                  # flat NCHW output spatial size
    Lpad = _round_up(L, 128)          # 128-aligned conv-grid lane extent
    B = Wp + 1                        # margin so every 3x3 tap is a plain slice
    Mext = _round_up(B + (Wp + 1) + Lpad, 128)

    # Raw NCHW sample, flattened -> no HBM padding round-trips at all.
    x_flat = x_nchw.astype(jnp.float32).reshape(N, Cin, D)

    s1, b1 = _bn_scale_shift(*params["bn1"])
    s2, b2 = _bn_scale_shift(*params["bn2"])
    s3, b3 = _bn_scale_shift(*params["bn3"])

    # q-major channel permutation (q = subpixel index i*r+j) so that each
    # subpixel's channels form a contiguous block of rows.
    perm2 = jnp.array([c * rr + q for q in range(rr) for c in range(f2)])
    perms = jnp.array([c * rr + q for q in range(rr) for c in range(f3)])
    s3p = jnp.tile(s3, rr)
    b3p = jnp.tile(b3, rr)

    # Fold BN scales into the conv weights (bf16 for the MXU); shifts stay f32.
    w1p = (s2[:, None] * params["w1"][:, :, 0, 0]).astype(jnp.bfloat16)   # [f1, Cin]
    w2sp = params["w2"][perm2] * s3p[:, None, None, None]                 # [r1, f1, 3, 3]
    w2f = jnp.transpose(w2sp, (0, 2, 3, 1)).reshape(r1, 9 * f1).astype(jnp.bfloat16)
    w3blk = jnp.kron(jnp.eye(rr, dtype=jnp.float32), params["w3"][:, :, 0, 0])
    wsp = params["ws"][:, :, 0, 0][perms]
    w3s = jnp.concatenate([w3blk, wsp], axis=1).astype(jnp.bfloat16)      # [r2, r1+Cin]

    s1c = s1.reshape(Cin, 1)
    b1c = b1.reshape(Cin, 1)
    b2c = b2.reshape(f1, 1)
    b3c = b3p.reshape(r1, 1)

    # One-hot placement / crop+shuffle matrices (exact in bf16).
    hh, ww = jnp.meshgrid(jnp.arange(H), jnp.arange(W), indexing="ij")
    d_idx = (hh * W + ww).reshape(-1)                     # dense flat position
    g_idx = ((hh + 1) * Wp + (ww + 1)).reshape(-1)        # interior grid position
    pext = (jnp.zeros((D, Mext), jnp.float32)
            .at[d_idx, B + g_idx].set(1.0).astype(jnp.bfloat16))
    pgrid = (jnp.zeros((D, Lpad), jnp.float32)
             .at[d_idx, g_idx].set(1.0).astype(jnp.bfloat16))
    ecat = jnp.zeros((rr * Lpad, OHW), jnp.float32)
    for i in range(r):
        for j in range(r):
            q = i * r + j
            o_idx = ((r * hh + i) * (r * W) + (r * ww + j)).reshape(-1)
            ecat = ecat.at[q * Lpad + g_idx, o_idx].set(1.0)
    ecat = ecat.astype(jnp.bfloat16)

    kernel = functools.partial(_upresi_kernel, Wp=Wp, Lpad=Lpad, B=B, f3=f3, rr=rr)
    bcast2 = lambda n: (0, 0)

    out = pl.pallas_call(
        kernel,
        out_shape=jax.ShapeDtypeStruct((N, f3, OHW), jnp.float32),
        grid=(N,),
        in_specs=[
            pl.BlockSpec((None, Cin, D), lambda n: (n, 0, 0)),   # raw dense input
            pl.BlockSpec((Cin, 1), bcast2),                      # BN1 scale
            pl.BlockSpec((Cin, 1), bcast2),                      # BN1 shift
            pl.BlockSpec((f1, Cin), bcast2),                     # w1 (BN2 scale folded)
            pl.BlockSpec((f1, 1), bcast2),                       # BN2 shift
            pl.BlockSpec((D, Mext), bcast2),                     # placement (grid+margins)
            pl.BlockSpec((r1, 9 * f1), bcast2),                  # w2 taps flattened (BN3 folded)
            pl.BlockSpec((r1, 1), bcast2),                       # BN3 shift (q-major tiled)
            pl.BlockSpec((D, Lpad), bcast2),                     # placement (grid, shortcut)
            pl.BlockSpec((r2, r1 + Cin), bcast2),                # [w3 block-diag | shortcut]
            pl.BlockSpec((rr * Lpad, OHW), bcast2),              # crop + PixelShuffle one-hot
        ],
        out_specs=pl.BlockSpec((None, f3, OHW), lambda n: (n, 0, 0)),
        compiler_params=pltpu.CompilerParams(
            dimension_semantics=("parallel",),
            vmem_limit_bytes=32 * 1024 * 1024),
    )(x_flat, s1c, b1c, w1p, b2c, pext, w2f, b3c, pgrid, w3s, ecat)

    # Dropout(p=0.1): eval mode -> identity.  Final reshape is free (row-major).
    return out.reshape(N, f3, r * H, r * W)


# ----------------------------------------------------------------------------
# Pure-JAX reference (PyTorch NCHW semantics) for a correctness check
# ----------------------------------------------------------------------------
def reference_forward(x, params, stride=2):
    def bn(x, p):
        g, b, m, v = p
        inv = 1.0 / jnp.sqrt(v + BN_EPS)
        return ((x - m[None, :, None, None]) * inv[None, :, None, None]
                * g[None, :, None, None] + b[None, :, None, None])

    def lrelu(x):
        return jnp.where(x >= 0, x, LRELU_SLOPE * x)

    def conv(x, w, pad):
        return jax.lax.conv_general_dilated(
            x, w, window_strides=(1, 1), padding=[(pad, pad), (pad, pad)],
            dimension_numbers=("NCHW", "OIHW", "NCHW"))

    def pixel_shuffle(x, r):
        N, C, H, W = x.shape
        x = x.reshape(N, C // (r * r), r, r, H, W)
        x = x.transpose(0, 1, 4, 2, 5, 3)
        return x.reshape(N, C // (r * r), H * r, W * r)

    residual = x
    y = conv(lrelu(bn(x, params["bn1"])), params["w1"], 0)
    y = pixel_shuffle(conv(lrelu(bn(y, params["bn2"])), params["w2"], 1), stride)
    y = conv(lrelu(bn(y, params["bn3"])), params["w3"], 0)
    sc = pixel_shuffle(conv(residual, params["ws"], 0), stride)
    return y + sc


if __name__ == "__main__":
    key = jax.random.PRNGKey(0)
    kx, kp = jax.random.split(key)

    N, Cin, H, W = 2, 8, 16, 16
    filters = (8, 8, 8)
    stride = 2

    x = jax.random.normal(kx, (N, Cin, H, W), jnp.float32)
    params = init_params(kp, Cin, filters, stride)

    out = jax.block_until_ready(up_resi_block_forward(x, params, stride))
    assert out.shape == (N, filters[2], H * stride, W * stride), out.shape

    ref = reference_forward(x, params, stride)
    err = float(jnp.max(jnp.abs(out - ref)))
    if not err < 5e-2:
        raise AssertionError(f"mismatch vs reference: max abs err {err}")

    print("KERNEL_OK")
</pallas_src>

<mosaic_0001>
module attributes {stable_mosaic.version = 11 : i64} {
  func.func @_upresi_kernel(%arg0: i32, %arg1: memref<1x8x256xf32, #tpu.memory_space<vmem>>, %arg2: memref<8x1xf32, #tpu.memory_space<vmem>>, %arg3: memref<8x1xf32, #tpu.memory_space<vmem>>, %arg4: memref<8x8xbf16, #tpu.memory_space<vmem>>, %arg5: memref<8x1xf32, #tpu.memory_space<vmem>>, %arg6: memref<256x512xbf16, #tpu.memory_space<vmem>>, %arg7: memref<32x72xbf16, #tpu.memory_space<vmem>>, %arg8: memref<32x1xf32, #tpu.memory_space<vmem>>, %arg9: memref<256x384xbf16, #tpu.memory_space<vmem>>, %arg10: memref<32x40xbf16, #tpu.memory_space<vmem>>, %arg11: memref<1536x1024xbf16, #tpu.memory_space<vmem>>, %arg12: memref<1x8x1024xf32, #tpu.memory_space<vmem>>) attributes {dimension_semantics = [#tpu.dimension_semantics<parallel>], iteration_bounds = array<i64: 2>, scalar_prefetch = 0 : i64, scratch_operands = 0 : i64, tpu.core_type = #tpu.core_type<tc>, window_params = [{transform_indices = @transform_0, window_bounds = array<i64: 1, 8, 256>}, {pipeline_mode = #tpu.pipeline_mode<synchronous>, transform_indices = @transform_1, window_bounds = array<i64: 8, 1>}, {pipeline_mode = #tpu.pipeline_mode<synchronous>, transform_indices = @transform_2, window_bounds = array<i64: 8, 1>}, {pipeline_mode = #tpu.pipeline_mode<synchronous>, transform_indices = @transform_3, window_bounds = array<i64: 8, 8>}, {pipeline_mode = #tpu.pipeline_mode<synchronous>, transform_indices = @transform_4, window_bounds = array<i64: 8, 1>}, {pipeline_mode = #tpu.pipeline_mode<synchronous>, transform_indices = @transform_5, window_bounds = array<i64: 256, 512>}, {pipeline_mode = #tpu.pipeline_mode<synchronous>, transform_indices = @transform_6, window_bounds = array<i64: 32, 72>}, {pipeline_mode = #tpu.pipeline_mode<synchronous>, transform_indices = @transform_7, window_bounds = array<i64: 32, 1>}, {pipeline_mode = #tpu.pipeline_mode<synchronous>, transform_indices = @transform_8, window_bounds = array<i64: 256, 384>}, {pipeline_mode = #tpu.pipeline_mode<synchronous>, transform_indices = @transform_9, window_bounds = array<i64: 32, 40>}, {pipeline_mode = #tpu.pipeline_mode<synchronous>, transform_indices = @transform_10, window_bounds = array<i64: 1536, 1024>}, {transform_indices = @transform_11, window_bounds = array<i64: 1, 8, 1024>}]} {
    %c0 = arith.constant 0 : index
    %c0_0 = arith.constant 0 : index
    %c0_1 = arith.constant 0 : index
    %0 = vector.load %arg1[%c0, %c0_0, %c0_1] : memref<1x8x256xf32, #tpu.memory_space<vmem>>, vector<1x8x256xf32>
    %1 = vector.shape_cast %0 : vector<1x8x256xf32> to vector<8x256xf32>
    %c0_2 = arith.constant 0 : index
    %c0_3 = arith.constant 0 : index
    %2 = vector.load %arg2[%c0_2, %c0_3] : memref<8x1xf32, #tpu.memory_space<vmem>>, vector<8x1xf32>
    %3 = vector.broadcast %2 : vector<8x1xf32> to vector<8x256xf32>
    %4 = arith.mulf %1, %3 : vector<8x256xf32>
    %c0_4 = arith.constant 0 : index
    %c0_5 = arith.constant 0 : index
    %5 = vector.load %arg3[%c0_4, %c0_5] : memref<8x1xf32, #tpu.memory_space<vmem>>, vector<8x1xf32>
    %6 = vector.broadcast %5 : vector<8x1xf32> to vector<8x256xf32>
    %7 = arith.addf %4, %6 : vector<8x256xf32>
    %cst = arith.constant 0.000000e+00 : f32
    %8 = vector.broadcast %cst : f32 to vector<8x256xf32>
    %9 = arith.cmpf oge, %7, %8 : vector<8x256xf32>
    %cst_6 = arith.constant 0.00999999977 : f32
    %10 = vector.broadcast %cst_6 : f32 to vector<8x256xf32>
    %11 = arith.mulf %10, %7 : vector<8x256xf32>
    %12 = arith.select %9, %7, %11 : vector<8x256xi1>, vector<8x256xf32>
    %13 = arith.truncf %12 : vector<8x256xf32> to vector<8x256xbf16>
    %c0_7 = arith.constant 0 : index
    %c0_8 = arith.constant 0 : index
    %14 = vector.load %arg4[%c0_7, %c0_8] : memref<8x8xbf16, #tpu.memory_space<vmem>>, vector<8x8xbf16>
    %cst_9 = arith.constant dense<0.000000e+00> : vector<8x256xf32>
    %15 = tpu.matmul %14, %13, %cst_9 {dimension_numbers = #tpu.dot_dimension_numbers<[1], [0], [0], [1], [0, 0, 1, 1], [], []>} : vector<8x8xbf16>, vector<8x256xbf16>, vector<8x256xf32> -> vector<8x256xf32>
    %c0_10 = arith.constant 0 : index
    %c0_11 = arith.constant 0 : index
    %16 = vector.load %arg5[%c0_10, %c0_11] : memref<8x1xf32, #tpu.memory_space<vmem>>, vector<8x1xf32>
    %17 = vector.broadcast %16 : vector<8x1xf32> to vector<8x256xf32>
    %18 = arith.addf %15, %17 : vector<8x256xf32>
    %cst_12 = arith.constant 0.000000e+00 : f32
    %19 = vector.broadcast %cst_12 : f32 to vector<8x256xf32>
    %20 = arith.cmpf oge, %18, %19 : vector<8x256xf32>
    %cst_13 = arith.constant 0.00999999977 : f32
    %21 = vector.broadcast %cst_13 : f32 to vector<8x256xf32>
    %22 = arith.mulf %21, %18 : vector<8x256xf32>
    %23 = arith.select %20, %18, %22 : vector<8x256xi1>, vector<8x256xf32>
    %24 = arith.truncf %23 : vector<8x256xf32> to vector<8x256xbf16>
    %c0_14 = arith.constant 0 : index
    %c0_15 = arith.constant 0 : index
    %25 = vector.load %arg6[%c0_14, %c0_15] : memref<256x512xbf16, #tpu.memory_space<vmem>>, vector<256x512xbf16>
    %cst_16 = arith.constant dense<0.000000e+00> : vector<8x512xf32>
    %26 = tpu.matmul %24, %25, %cst_16 {dimension_numbers = #tpu.dot_dimension_numbers<[1], [0], [0], [1], [0, 0, 1, 1], [], []>} : vector<8x256xbf16>, vector<256x512xbf16>, vector<8x512xf32> -> vector<8x512xf32>
    %27 = vector.extract_strided_slice %26 {offsets = [0, 0], sizes = [8, 384], strides = [1, 1]} : vector<8x512xf32> to vector<8x384xf32>
    %28 = vector.extract_strided_slice %26 {offsets = [0, 1], sizes = [8, 384], strides = [1, 1]} : vector<8x512xf32> to vector<8x384xf32>
    %29 = vector.extract_strided_slice %26 {offsets = [0, 2], sizes = [8, 384], strides = [1, 1]} : vector<8x512xf32> to vector<8x384xf32>
    %30 = vector.extract_strided_slice %26 {offsets = [0, 18], sizes = [8, 384], strides = [1, 1]} : vector<8x512xf32> to vector<8x384xf32>
    %31 = vector.extract_strided_slice %26 {offsets = [0, 19], sizes = [8, 384], strides = [1, 1]} : vector<8x512xf32> to vector<8x384xf32>
    %32 = vector.extract_strided_slice %26 {offsets = [0, 20], sizes = [8, 384], strides = [1, 1]} : vector<8x512xf32> to vector<8x384xf32>
    %33 = vector.extract_strided_slice %26 {offsets = [0, 36], sizes = [8, 384], strides = [1, 1]} : vector<8x512xf32> to vector<8x384xf32>
    %34 = vector.extract_strided_slice %26 {offsets = [0, 37], sizes = [8, 384], strides = [1, 1]} : vector<8x512xf32> to vector<8x384xf32>
    %35 = vector.extract_strided_slice %26 {offsets = [0, 38], sizes = [8, 384], strides = [1, 1]} : vector<8x512xf32> to vector<8x384xf32>
    %36 = tpu.concatenate %27, %28, %29, %30, %31, %32, %33, %34, %35 in 0 : vector<8x384xf32>, vector<8x384xf32>, vector<8x384xf32>, vector<8x384xf32>, vector<8x384xf32>, vector<8x384xf32>, vector<8x384xf32>, vector<8x384xf32>, vector<8x384xf32> -> vector<72x384xf32>
    %37 = arith.truncf %36 : vector<72x384xf32> to vector<72x384xbf16>
    %c0_17 = arith.constant 0 : index
    %c0_18 = arith.constant 0 : index
    %38 = vector.load %arg7[%c0_17, %c0_18] : memref<32x72xbf16, #tpu.memory_space<vmem>>, vector<32x72xbf16>
    %cst_19 = arith.constant dense<0.000000e+00> : vector<32x384xf32>
    %39 = tpu.matmul %38, %37, %cst_19 {dimension_numbers = #tpu.dot_dimension_numbers<[1], [0], [0], [1], [0, 0, 1, 1], [], []>} : vector<32x72xbf16>, vector<72x384xbf16>, vector<32x384xf32> -> vector<32x384xf32>
    %c0_20 = arith.constant 0 : index
    %c0_21 = arith.constant 0 : index
    %40 = vector.load %arg8[%c0_20, %c0_21] : memref<32x1xf32, #tpu.memory_space<vmem>>, vector<32x1xf32>
    %41 = vector.broadcast %40 : vector<32x1xf32> to vector<32x384xf32>
    %42 = arith.addf %39, %41 : vector<32x384xf32>
    %cst_22 = arith.constant 0.000000e+00 : f32
    %43 = vector.broadcast %cst_22 : f32 to vector<32x384xf32>
    %44 = arith.cmpf oge, %42, %43 : vector<32x384xf32>
    %cst_23 = arith.constant 0.00999999977 : f32
    %45 = vector.broadcast %cst_23 : f32 to vector<32x384xf32>
    %46 = arith.mulf %45, %42 : vector<32x384xf32>
    %47 = arith.select %44, %42, %46 : vector<32x384xi1>, vector<32x384xf32>
    %48 = arith.truncf %1 : vector<8x256xf32> to vector<8x256xbf16>
    %c0_24 = arith.constant 0 : index
    %c0_25 = arith.constant 0 : index
    %49 = vector.load %arg9[%c0_24, %c0_25] : memref<256x384xbf16, #tpu.memory_space<vmem>>, vector<256x384xbf16>
    %cst_26 = arith.constant dense<0.000000e+00> : vector<8x384xf32>
    %50 = tpu.matmul %48, %49, %cst_26 {dimension_numbers = #tpu.dot_dimension_numbers<[1], [0], [0], [1], [0, 0, 1, 1], [], []>} : vector<8x256xbf16>, vector<256x384xbf16>, vector<8x384xf32> -> vector<8x384xf32>
    %51 = tpu.concatenate %47, %50 in 0 : vector<32x384xf32>, vector<8x384xf32> -> vector<40x384xf32>
    %52 = arith.truncf %51 : vector<40x384xf32> to vector<40x384xbf16>
    %c0_27 = arith.constant 0 : index
    %c0_28 = arith.constant 0 : index
    %53 = vector.load %arg10[%c0_27, %c0_28] : memref<32x40xbf16, #tpu.memory_space<vmem>>, vector<32x40xbf16>
    %cst_29 = arith.constant dense<0.000000e+00> : vector<32x384xf32>
    %54 = tpu.matmul %53, %52, %cst_29 {dimension_numbers = #tpu.dot_dimension_numbers<[1], [0], [0], [1], [0, 0, 1, 1], [], []>} : vector<32x40xbf16>, vector<40x384xbf16>, vector<32x384xf32> -> vector<32x384xf32>
    %55 = vector.extract_strided_slice %54 {offsets = [0, 0], sizes = [8, 384], strides = [1, 1]} : vector<32x384xf32> to vector<8x384xf32>
    %56 = vector.extract_strided_slice %54 {offsets = [8, 0], sizes = [8, 384], strides = [1, 1]} : vector<32x384xf32> to vector<8x384xf32>
    %57 = vector.extract_strided_slice %54 {offsets = [16, 0], sizes = [8, 384], strides = [1, 1]} : vector<32x384xf32> to vector<8x384xf32>
    %58 = vector.extract_strided_slice %54 {offsets = [24, 0], sizes = [8, 384], strides = [1, 1]} : vector<32x384xf32> to vector<8x384xf32>
    %59 = tpu.concatenate %55, %56, %57, %58 in 1 : vector<8x384xf32>, vector<8x384xf32>, vector<8x384xf32>, vector<8x384xf32> -> vector<8x1536xf32>
    %60 = arith.truncf %59 : vector<8x1536xf32> to vector<8x1536xbf16>
    %c0_30 = arith.constant 0 : index
    %c0_31 = arith.constant 0 : index
    %61 = vector.load %arg11[%c0_30, %c0_31] : memref<1536x1024xbf16, #tpu.memory_space<vmem>>, vector<1536x1024xbf16>
    %cst_32 = arith.constant dense<0.000000e+00> : vector<8x1024xf32>
    %62 = tpu.matmul %60, %61, %cst_32 {dimension_numbers = #tpu.dot_dimension_numbers<[1], [0], [0], [1], [0, 0, 1, 1], [], []>} : vector<8x1536xbf16>, vector<1536x1024xbf16>, vector<8x1024xf32> -> vector<8x1024xf32>
    %c0_33 = arith.constant 0 : index
    %c0_34 = arith.constant 0 : index
    %c0_35 = arith.constant 0 : index
    %63 = vector.load %arg12[%c0_33, %c0_34, %c0_35] : memref<1x8x1024xf32, #tpu.memory_space<vmem>>, vector<1x8x1024xf32>
    %64 = vector.shape_cast %63 : vector<1x8x1024xf32> to vector<8x1024xf32>
    %65 = vector.shape_cast %62 : vector<8x1024xf32> to vector<1x8x1024xf32>
    tpu.vector_store %arg12[%c0_33, %c0_34, %c0_35], %65 {strides = array<i32>} : memref<1x8x1024xf32, #tpu.memory_space<vmem>>, vector<1x8x1024xf32>,
    return
  }
  func.func @transform_0(%arg0: i32) -> (i32, i32, i32) {
    %c0_i32 = arith.constant 0 : i32
    %c0_i32_0 = arith.constant 0 : i32
    %c0_i32_1 = arith.constant 0 : i32
    return %arg0, %c0_i32, %c0_i32_0 : i32, i32, i32
  }
  func.func @transform_1(%arg0: i32) -> (i32, i32) {
    %c0_i32 = arith.constant 0 : i32
    %c0_i32_0 = arith.constant 0 : i32
    %c0_i32_1 = arith.constant 0 : i32
    return %c0_i32, %c0_i32_0 : i32, i32
  }
  func.func @transform_2(%arg0: i32) -> (i32, i32) {
    %c0_i32 = arith.constant 0 : i32
    %c0_i32_0 = arith.constant 0 : i32
    %c0_i32_1 = arith.constant 0 : i32
    return %c0_i32, %c0_i32_0 : i32, i32
  }
  func.func @transform_3(%arg0: i32) -> (i32, i32) {
    %c0_i32 = arith.constant 0 : i32
    %c0_i32_0 = arith.constant 0 : i32
    %c0_i32_1 = arith.constant 0 : i32
    return %c0_i32, %c0_i32_0 : i32, i32
  }
  func.func @transform_4(%arg0: i32) -> (i32, i32) {
    %c0_i32 = arith.constant 0 : i32
    %c0_i32_0 = arith.constant 0 : i32
    %c0_i32_1 = arith.constant 0 : i32
    return %c0_i32, %c0_i32_0 : i32, i32
  }
  func.func @transform_5(%arg0: i32) -> (i32, i32) {
    %c0_i32 = arith.constant 0 : i32
    %c0_i32_0 = arith.constant 0 : i32
    %c0_i32_1 = arith.constant 0 : i32
    return %c0_i32, %c0_i32_0 : i32, i32
  }
  func.func @transform_6(%arg0: i32) -> (i32, i32) {
    %c0_i32 = arith.constant 0 : i32
    %c0_i32_0 = arith.constant 0 : i32
    %c0_i32_1 = arith.constant 0 : i32
    return %c0_i32, %c0_i32_0 : i32, i32
  }
  func.func @transform_7(%arg0: i32) -> (i32, i32) {
    %c0_i32 = arith.constant 0 : i32
    %c0_i32_0 = arith.constant 0 : i32
    %c0_i32_1 = arith.constant 0 : i32
    return %c0_i32, %c0_i32_0 : i32, i32
  }
  func.func @transform_8(%arg0: i32) -> (i32, i32) {
    %c0_i32 = arith.constant 0 : i32
    %c0_i32_0 = arith.constant 0 : i32
    %c0_i32_1 = arith.constant 0 : i32
    return %c0_i32, %c0_i32_0 : i32, i32
  }
  func.func @transform_9(%arg0: i32) -> (i32, i32) {
    %c0_i32 = arith.constant 0 : i32
    %c0_i32_0 = arith.constant 0 : i32
    %c0_i32_1 = arith.constant 0 : i32
    return %c0_i32, %c0_i32_0 : i32, i32
  }
  func.func @transform_10(%arg0: i32) -> (i32, i32) {
    %c0_i32 = arith.constant 0 : i32
    %c0_i32_0 = arith.constant 0 : i32
    %c0_i32_1 = arith.constant 0 : i32
    return %c0_i32, %c0_i32_0 : i32, i32
  }
  func.func @transform_11(%arg0: i32) -> (i32, i32, i32) {
    %c0_i32 = arith.constant 0 : i32
    %c0_i32_0 = arith.constant 0 : i32
    %c0_i32_1 = arith.constant 0 : i32
    return %arg0, %c0_i32, %c0_i32_0 : i32, i32, i32
  }
}

</mosaic_0001>

<llo_original>
// kernel: tpu_custom_call.1
$region0: #{tpu_custom_call.1}
  #allocation0 [shape = 'u32[]', space=smem, size = 0x4, offset = 0x4, fixed_abs, tag = 'smem constant byte address 0x4 - core index']
  #allocation1 [shape = 'u32[72,128]{1,0:T(1,128)}', space=vmem, size = 0x9000, scoped, tag = 'internal scratch']
  %s0 = inlined_call_operand.hbm [shape: f32[2,8,256], index: 0, kind: input, shape index: {}]
  %s1 = inlined_call_operand.vmem [shape: f32[8,1], index: 1, kind: input, shape index: {}]
  %s2 = inlined_call_operand.vmem [shape: f32[8,1], index: 2, kind: input, shape index: {}]
  %s3 = inlined_call_operand.hbm [shape: bf16[8,8], index: 3, kind: input, shape index: {}]
  %s4 = inlined_call_operand.vmem [shape: f32[8,1], index: 4, kind: input, shape index: {}]
  %s5 = inlined_call_operand.hbm [shape: bf16[256,512], index: 5, kind: input, shape index: {}]
  %s6 = inlined_call_operand.hbm [shape: bf16[32,72], index: 6, kind: input, shape index: {}]
  %s7 = inlined_call_operand.vmem [shape: f32[32,1], index: 7, kind: input, shape index: {}]
  %s8 = inlined_call_operand.hbm [shape: bf16[256,384], index: 8, kind: input, shape index: {}]
  %s9 = inlined_call_operand.hbm [shape: bf16[32,40], index: 9, kind: input, shape index: {}]
  %s10 = inlined_call_operand.hbm [shape: bf16[1536,1024], index: 10, kind: input, shape index: {}]
  %s11 = inlined_call_operand.hbm [shape: f32[2,8,1024], index: 11, kind: output, shape index: {}]
  %s12 = sld [smem:[#allocation0]]
  $region105: #{tpu_custom_call.1} parent=0
    _
  %s14 = ssub.s32 1, %s12
  %s15 = scalar_select 0, %s14, %s12
  $region1: #{tpu_custom_call.1} parent=0
    #allocation2 [shape = 'u8[16384]{0}', space=vmem, size = 0x4000, scoped, tag = 'input window, operand 0']
    #allocation3 [shape = 's32[2]{0}', space=sflag, size = 0x8, scoped, tag = 'scoped memory for tpu_custom_call.1']
    #allocation4 [shape = 's32[2]{0}', space=sflag, size = 0x8, scoped, tag = 'scoped memory for tpu_custom_call.1']
    #allocation5 [shape = 'u8[2048]{0}', space=vmem, size = 0x800, scoped, tag = 'input window, operand 3, single buffered']
    #allocation6 [shape = 's32[1]{0}', space=sflag, size = 0x4, scoped, tag = 'scoped memory for tpu_custom_call.1']
    #allocation7 [shape = 'u8[262144]{0}', space=vmem, size = 0x40000, scoped, tag = 'input window, operand 5, single buffered']
    #allocation8 [shape = 'u8[8192]{0}', space=vmem, size = 0x2000, scoped, tag = 'input window, operand 6, single buffered']
    #allocation9 [shape = 's32[1]{0}', space=sflag, size = 0x4, scoped, tag = 'scoped memory for tpu_custom_call.1']
    #allocation10 [shape = 'u8[196608]{0}', space=vmem, size = 0x30000, scoped, tag = 'input window, operand 8, single buffered']
    #allocation11 [shape = 'u8[8192]{0}', space=vmem, size = 0x2000, scoped, tag = 'input window, operand 9, single buffered']
    #allocation12 [shape = 's32[1]{0}', space=sflag, size = 0x4, scoped, tag = 'scoped memory for tpu_custom_call.1']
    #allocation13 [shape = 'u8[3145728]{0}', space=vmem, size = 0x300000, scoped, tag = 'input window, operand 10, single buffered']
    #allocation14 [shape = 'u8[65536]{0}', space=vmem, size = 0x10000, scoped, tag = 'output window, operand 0']
    %16 = vsyncpa [#allocation3], 0
    %s17 = scalar_lea.sflag [#allocation3], 1
    %18 = vsyncpa %s17, 0
    %19 = vsyncpa [#allocation6], 0
    %20 = vsyncpa [#allocation9], 0
    %21 = vsyncpa [#allocation12], 0
    %22 = vsyncpa [#allocation4], 0
    %s23 = scalar_lea.sflag [#allocation4], 1
    %24 = vsyncpa %s23, 0
    loop: start=0, step=1, limit=4
    $region2: #{tpu_custom_call.1} parent=1 // loop_pre_header
      _
    $region3: #{tpu_custom_call.1} parent=1 // loop_header
      %s26 = sphi 0, %s30
      %p27 = scmp.ge.s32.totalorder %s26, 4
      %s36 = sphi 0, %s38
      %s39 = sphi 0, %s36
      %s40 = sphi 0, %s39
      %s56 = sphi 0, %s40
      %s60 = sphi 0, %s60
      %s62 = sphi 0, %s60
      %s63 = sphi 0, %s62
      %s77 = sphi 0, %s63
      %s81 = sphi 0, %s81
      %s83 = sphi 0, %s81
      %s84 = sphi 0, %s83
      %s98 = sphi 0, %s84
      %s102 = sphi 0, %s102
      %s104 = sphi 0, %s102
      %s105 = sphi 0, %s104
      %s119 = sphi 0, %s105
      %s123 = sphi 0, %s123
      %s125 = sphi 0, %s123
      %s126 = sphi 0, %s125
      %s140 = sphi 0, %s126
      %s144 = sphi 0, %s144
      %s146 = sphi 0, %s144
      %s147 = sphi 0, %s146
      %s161 = sphi 0, %s147
      %s165 = sphi 0, %s165
      %s167 = sphi 0, %s165
      %s168 = sphi 0, %s167
      %s182 = sphi 0, %s168
      %s186 = sphi 0, %s186
      %s188 = sphi 0, %s186
      %s189 = sphi 0, %s188
      %s203 = sphi 0, %s189
      %s207 = sphi 0, %s207
      %s209 = sphi 0, %s207
      %s210 = sphi 0, %s209
      %s224 = sphi 0, %s210
      %s228 = sphi 0, %s228
      %s230 = sphi 0, %s228
      %s231 = sphi 0, %s230
      %s245 = sphi 0, %s231
      %s249 = sphi 0, %s249
      %s251 = sphi 0, %s249
      %s252 = sphi 0, %s251
      %s266 = sphi 0, %s252
      %s272 = sphi 0, %s274
      %s275 = sphi 0, %s272
      %s276 = sphi 0, %s275
      %s292 = sphi 0, %s276
    $region4: #{tpu_custom_call.1} parent=1 // loop_header_branch
      %29 = sbr.rel (%p27) target = $region8
    $region5: #{tpu_custom_call.1} parent=1 // loop_body
      %s31 = ssub.s32 %s26, 1
      %s32 = ssub.s32 %s26, 2
      %s33 = sadd.s32 %s26, 1
      %s34 = ssub.s32 %s26, %s33
      %p35 = scmp.eq.s32.totalorder %s34, 0
      %s37 = sadd.s32 %s36, 1
      %s38 = scalar_select %p35, %s36, %s37
      %p41 = pneg %p35
      %p42 = scmp.eq.s32.totalorder %s26, 1
      %p43 = por %p41, %p42
      %p44 = scmp.ne.s32.totalorder %s36, %s39
      %p45 = scmp.eq.s32.totalorder %s26, 0
      %p46 = por %p44, %p45
      %p47 = scmp.ne.s32.totalorder %s36, %s39
      %p48 = scmp.eq.s32.totalorder %s31, 1
      %p49 = por %p47, %p48
      %p50 = scmp.ne.s32.totalorder %s39, %s40
      %p51 = scmp.eq.s32.totalorder %s31, 0
      %p52 = por %p50, %p51
      %p53 = scmp.ne.s32.totalorder %s39, %s40
      %p54 = scmp.eq.s32.totalorder %s32, 1
      %p55 = por %p53, %p54
      %p57 = scmp.ne.s32.totalorder %s40, %s56
      %p58 = scmp.eq.s32.totalorder %s32, 0
      %p59 = por %p57, %p58
      %s61 = sadd.s32 %s60, 1
      %p64 = scmp.eq.s32.totalorder %s26, 1
      %p65 = scmp.ne.s32.totalorder %s60, %s62
      %p66 = scmp.eq.s32.totalorder %s26, 0
      %p67 = por %p65, %p66
      %p68 = scmp.ne.s32.totalorder %s60, %s62
      %p69 = scmp.eq.s32.totalorder %s31, 1
      %p70 = por %p68, %p69
      %p71 = scmp.ne.s32.totalorder %s62, %s63
      %p72 = scmp.eq.s32.totalorder %s31, 0
      %p73 = por %p71, %p72
      %p74 = scmp.ne.s32.totalorder %s62, %s63
      %p75 = scmp.eq.s32.totalorder %s32, 1
      %p76 = por %p74, %p75
      %p78 = scmp.ne.s32.totalorder %s63, %s77
      %p79 = scmp.eq.s32.totalorder %s32, 0
      %p80 = por %p78, %p79
      %s82 = sadd.s32 %s81, 1
      %p85 = scmp.eq.s32.totalorder %s26, 1
      %p86 = scmp.ne.s32.totalorder %s81, %s83
      %p87 = scmp.eq.s32.totalorder %s26, 0
      %p88 = por %p86, %p87
      %p89 = scmp.ne.s32.totalorder %s81, %s83
      %p90 = scmp.eq.s32.totalorder %s31, 1
      %p91 = por %p89, %p90
      %p92 = scmp.ne.s32.totalorder %s83, %s84
      %p93 = scmp.eq.s32.totalorder %s31, 0
      %p94 = por %p92, %p93
      %p95 = scmp.ne.s32.totalorder %s83, %s84
      %p96 = scmp.eq.s32.totalorder %s32, 1
      %p97 = por %p95, %p96
      %p99 = scmp.ne.s32.totalorder %s84, %s98
      %p100 = scmp.eq.s32.totalorder %s32, 0
      %p101 = por %p99, %p100
      %s103 = sadd.s32 %s102, 1
      %p106 = scmp.eq.s32.totalorder %s26, 1
      %p107 = scmp.ne.s32.totalorder %s102, %s104
      %p108 = scmp.eq.s32.totalorder %s26, 0
      %p109 = por %p107, %p108
      %p110 = scmp.ne.s32.totalorder %s102, %s104
      %p111 = scmp.eq.s32.totalorder %s31, 1
      %p112 = por %p110, %p111
      %p113 = scmp.ne.s32.totalorder %s104, %s105
      %p114 = scmp.eq.s32.totalorder %s31, 0
      %p115 = por %p113, %p114
      %p116 = scmp.ne.s32.totalorder %s104, %s105
      %p117 = scmp.eq.s32.totalorder %s32, 1
      %p118 = por %p116, %p117
      %p120 = scmp.ne.s32.totalorder %s105, %s119
      %p121 = scmp.eq.s32.totalorder %s32, 0
      %p122 = por %p120, %p121
      %s124 = sadd.s32 %s123, 1
      %p127 = scmp.eq.s32.totalorder %s26, 1
      %p128 = scmp.ne.s32.totalorder %s123, %s125
      %p129 = scmp.eq.s32.totalorder %s26, 0
      %p130 = por %p128, %p129
      %p131 = scmp.ne.s32.totalorder %s123, %s125
      %p132 = scmp.eq.s32.totalorder %s31, 1
      %p133 = por %p131, %p132
      %p134 = scmp.ne.s32.totalorder %s125, %s126
      %p135 = scmp.eq.s32.totalorder %s31, 0
      %p136 = por %p134, %p135
      %p137 = scmp.ne.s32.totalorder %s125, %s126
      %p138 = scmp.eq.s32.totalorder %s32, 1
      %p139 = por %p137, %p138
      %p141 = scmp.ne.s32.totalorder %s126, %s140
      %p142 = scmp.eq.s32.totalorder %s32, 0
      %p143 = por %p141, %p142
      %s145 = sadd.s32 %s144, 1
      %p148 = scmp.eq.s32.totalorder %s26, 1
      %p149 = scmp.ne.s32.totalorder %s144, %s146
      %p150 = scmp.eq.s32.totalorder %s26, 0
      %p151 = por %p149, %p150
      %p152 = scmp.ne.s32.totalorder %s144, %s146
      %p153 = scmp.eq.s32.totalorder %s31, 1
      %p154 = por %p152, %p153
      %p155 = scmp.ne.s32.totalorder %s146, %s147
      %p156 = scmp.eq.s32.totalorder %s31, 0
      %p157 = por %p155, %p156
      %p158 = scmp.ne.s32.totalorder %s146, %s147
      %p159 = scmp.eq.s32.totalorder %s32, 1
      %p160 = por %p158, %p159
      %p162 = scmp.ne.s32.totalorder %s147, %s161
      %p163 = scmp.eq.s32.totalorder %s32, 0
      %p164 = por %p162, %p163
      %s166 = sadd.s32 %s165, 1
      %p169 = scmp.eq.s32.totalorder %s26, 1
      %p170 = scmp.ne.s32.totalorder %s165, %s167
      %p171 = scmp.eq.s32.totalorder %s26, 0
      %p172 = por %p170, %p171
      %p173 = scmp.ne.s32.totalorder %s165, %s167
      %p174 = scmp.eq.s32.totalorder %s31, 1
      %p175 = por %p173, %p174
      %p176 = scmp.ne.s32.totalorder %s167, %s168
      %p177 = scmp.eq.s32.totalorder %s31, 0
      %p178 = por %p176, %p177
      %p179 = scmp.ne.s32.totalorder %s167, %s168
      %p180 = scmp.eq.s32.totalorder %s32, 1
      %p181 = por %p179, %p180
      %p183 = scmp.ne.s32.totalorder %s168, %s182
      %p184 = scmp.eq.s32.totalorder %s32, 0
      %p185 = por %p183, %p184
      %s187 = sadd.s32 %s186, 1
      %p190 = scmp.eq.s32.totalorder %s26, 1
      %p191 = scmp.ne.s32.totalorder %s186, %s188
      %p192 = scmp.eq.s32.totalorder %s26, 0
      %p193 = por %p191, %p192
      %p194 = scmp.ne.s32.totalorder %s186, %s188
      %p195 = scmp.eq.s32.totalorder %s31, 1
      %p196 = por %p194, %p195
      %p197 = scmp.ne.s32.totalorder %s188, %s189
      %p198 = scmp.eq.s32.totalorder %s31, 0
      %p199 = por %p197, %p198
      %p200 = scmp.ne.s32.totalorder %s188, %s189
      %p201 = scmp.eq.s32.totalorder %s32, 1
      %p202 = por %p200, %p201
      %p204 = scmp.ne.s32.totalorder %s189, %s203
      %p205 = scmp.eq.s32.totalorder %s32, 0
      %p206 = por %p204, %p205
      %s208 = sadd.s32 %s207, 1
      %p211 = scmp.eq.s32.totalorder %s26, 1
      %p212 = scmp.ne.s32.totalorder %s207, %s209
      %p213 = scmp.eq.s32.totalorder %s26, 0
      %p214 = por %p212, %p213
      %p215 = scmp.ne.s32.totalorder %s207, %s209
      %p216 = scmp.eq.s32.totalorder %s31, 1
      %p217 = por %p215, %p216
      %p218 = scmp.ne.s32.totalorder %s209, %s210
      %p219 = scmp.eq.s32.totalorder %s31, 0
      %p220 = por %p218, %p219
      %p221 = scmp.ne.s32.totalorder %s209, %s210
      %p222 = scmp.eq.s32.totalorder %s32, 1
      %p223 = por %p221, %p222
      %p225 = scmp.ne.s32.totalorder %s210, %s224
      %p226 = scmp.eq.s32.totalorder %s32, 0
      %p227 = por %p225, %p226
      %s229 = sadd.s32 %s228, 1
      %p232 = scmp.eq.s32.totalorder %s26, 1
      %p233 = scmp.ne.s32.totalorder %s228, %s230
      %p234 = scmp.eq.s32.totalorder %s26, 0
      %p235 = por %p233, %p234
      %p236 = scmp.ne.s32.totalorder %s228, %s230
      %p237 = scmp.eq.s32.totalorder %s31, 1
      %p238 = por %p236, %p237
      %p239 = scmp.ne.s32.totalorder %s230, %s231
      %p240 = scmp.eq.s32.totalorder %s31, 0
      %p241 = por %p239, %p240
      %p242 = scmp.ne.s32.totalorder %s230, %s231
      %p243 = scmp.eq.s32.totalorder %s32, 1
      %p244 = por %p242, %p243
      %p246 = scmp.ne.s32.totalorder %s231, %s245
      %p247 = scmp.eq.s32.totalorder %s32, 0
      %p248 = por %p246, %p247
      %s250 = sadd.s32 %s249, 1
      %p253 = scmp.eq.s32.totalorder %s26, 1
      %p254 = scmp.ne.s32.totalorder %s249, %s251
      %p255 = scmp.eq.s32.totalorder %s26, 0
      %p256 = por %p254, %p255
      %p257 = scmp.ne.s32.totalorder %s249, %s251
      %p258 = scmp.eq.s32.totalorder %s31, 1
      %p259 = por %p257, %p258
      %p260 = scmp.ne.s32.totalorder %s251, %s252
      %p261 = scmp.eq.s32.totalorder %s31, 0
      %p262 = por %p260, %p261
      %p263 = scmp.ne.s32.totalorder %s251, %s252
      %p264 = scmp.eq.s32.totalorder %s32, 1
      %p265 = por %p263, %p264
      %p267 = scmp.ne.s32.totalorder %s252, %s266
      %p268 = scmp.eq.s32.totalorder %s32, 0
      %p269 = por %p267, %p268
      %s270 = ssub.s32 %s26, %s33
      %p271 = scmp.eq.s32.totalorder %s270, 0
      %s273 = sadd.s32 %s272, 1
      %s274 = scalar_select %p271, %s272, %s273
      %p277 = pneg %p271
      %p278 = scmp.eq.s32.totalorder %s26, 1
      %p279 = por %p277, %p278
      %p280 = scmp.ne.s32.totalorder %s272, %s275
      %p281 = scmp.eq.s32.totalorder %s26, 0
      %p282 = por %p280, %p281
      %p283 = scmp.ne.s32.totalorder %s272, %s275
      %p284 = scmp.eq.s32.totalorder %s31, 1
      %p285 = por %p283, %p284
      %p286 = scmp.ne.s32.totalorder %s275, %s276
      %p287 = scmp.eq.s32.totalorder %s31, 0
      %p288 = por %p286, %p287
      %p289 = scmp.ne.s32.totalorder %s275, %s276
      %p290 = scmp.eq.s32.totalorder %s32, 1
      %p291 = por %p289, %p290
      %p293 = scmp.ne.s32.totalorder %s276, %s292
      %p294 = scmp.eq.s32.totalorder %s32, 0
      %p295 = por %p293, %p294
      %p296 = scmp.le.s32.totalorder 1, %s26
      %p297 = scmp.lt.s32.totalorder %s26, 3
      %p298 = pnand %p296, %p297
      %p299 = pneg %p298
      // Predicated region
      $region9: #{tpu_custom_call.1} parent=5 // pred_check
        _
      $region10: #{tpu_custom_call.1} parent=5 // pred_check_branch
        %301 = sbr.rel (%p298) target = $region12
      $region11: #{tpu_custom_call.1} parent=5 // pred_region
        %s302 = ssub.s32 %s26, 1
        // Predicated region
        $region13: #{tpu_custom_call.1} parent=11 // pred_check
          %p303 = pneg %p73
        $region14: #{tpu_custom_call.1} parent=11 // pred_check_branch
          %305 = sbr.rel (%p303) target = $region16
        $region15: #{tpu_custom_call.1} parent=11 // pred_region
          _
        $region16: #{tpu_custom_call.1} parent=11 // pred_fallthru
          _
        // Predicated region
        $region17: #{tpu_custom_call.1} parent=11 // pred_check
          %p306 = pneg %p94
        $region18: #{tpu_custom_call.1} parent=11 // pred_check_branch
          %308 = sbr.rel (%p306) target = $region20
        $region19: #{tpu_custom_call.1} parent=11 // pred_region
          _
        $region20: #{tpu_custom_call.1} parent=11 // pred_fallthru
          _
        // Predicated region
        $region21: #{tpu_custom_call.1} parent=11 // pred_check
          %p309 = pneg %p115
        $region22: #{tpu_custom_call.1} parent=11 // pred_check_branch
          %311 = sbr.rel (%p309) target = $region24
        $region23: #{tpu_custom_call.1} parent=11 // pred_region
          %313 = vsyncadd [#allocation6], 0
          %s315 = sshll.u32 %s3, 4
          %s316 = int_to_ptr.hbm [resolvable:$true] %s315
          %s317 = sshll.u32 [#allocation5], 4
          %s318 = int_to_ptr.vmem [resolvable:$true] %s317
          %320 = dma.hbm_to_vmem [thread:$0]  %s316, 64, %s318, [#allocation6]
        $region24: #{tpu_custom_call.1} parent=11 // pred_fallthru
          _
        // Predicated region
        $region25: #{tpu_custom_call.1} parent=11 // pred_check
          %p321 = pneg %p136
        $region26: #{tpu_custom_call.1} parent=11 // pred_check_branch
          %323 = sbr.rel (%p321) target = $region28
        $region27: #{tpu_custom_call.1} parent=11 // pred_region
          _
        $region28: #{tpu_custom_call.1} parent=11 // pred_fallthru
          _
        // Predicated region
        $region29: #{tpu_custom_call.1} parent=11 // pred_check
          %p324 = pneg %p157
        $region30: #{tpu_custom_call.1} parent=11 // pred_check_branch
          %326 = sbr.rel (%p324) target = $region32
        $region31: #{tpu_custom_call.1} parent=11 // pred_region
          %328 = vsyncadd [#allocation6], 0
          %s329 = sshll.u32 %s5, 4
          %s330 = int_to_ptr.hbm [resolvable:$true] %s329
          %s331 = sshll.u32 [#allocation7], 4
          %s332 = int_to_ptr.vmem [resolvable:$true] %s331
          %337 = dma.hbm_to_vmem [thread:$0]  %s330, 8192, %s332, [#allocation6], 256, 256, 16
        $region32: #{tpu_custom_call.1} parent=11 // pred_fallthru
          _
        // Predicated region
        $region33: #{tpu_custom_call.1} parent=11 // pred_check
          %p338 = pneg %p178
        $region34: #{tpu_custom_call.1} parent=11 // pred_check_branch
          %340 = sbr.rel (%p338) target = $region36
        $region35: #{tpu_custom_call.1} parent=11 // pred_region
          %342 = vsyncadd [#allocation9], 0
          %s343 = sshll.u32 %s6, 4
          %s344 = int_to_ptr.hbm [resolvable:$true] %s343
          %s345 = sshll.u32 [#allocation8], 4
          %s346 = int_to_ptr.vmem [resolvable:$true] %s345
          %351 = dma.hbm_to_vmem [thread:$0]  %s344, 256, %s346, [#allocation9], 64, 64, 4
        $region36: #{tpu_custom_call.1} parent=11 // pred_fallthru
          _
        // Predicated region
        $region37: #{tpu_custom_call.1} parent=11 // pred_check
          %p352 = pneg %p199
        $region38: #{tpu_custom_call.1} parent=11 // pred_check_branch
          %354 = sbr.rel (%p352) target = $region40
        $region39: #{tpu_custom_call.1} parent=11 // pred_region
          _
        $region40: #{tpu_custom_call.1} parent=11 // pred_fallthru
          _
        // Predicated region
        $region41: #{tpu_custom_call.1} parent=11 // pred_check
          %p355 = pneg %p220
        $region42: #{tpu_custom_call.1} parent=11 // pred_check_branch
          %357 = sbr.rel (%p355) target = $region44
        $region43: #{tpu_custom_call.1} parent=11 // pred_region
          %359 = vsyncadd [#allocation9], 0
          %s360 = sshll.u32 %s8, 4
          %s361 = int_to_ptr.hbm [resolvable:$true] %s360
          %s362 = sshll.u32 [#allocation10], 4
          %s363 = int_to_ptr.vmem [resolvable:$true] %s362
          %368 = dma.hbm_to_vmem [thread:$0]  %s361, 6144, %s363, [#allocation9], 192, 192, 12
        $region44: #{tpu_custom_call.1} parent=11 // pred_fallthru
          _
        // Predicated region
        $region45: #{tpu_custom_call.1} parent=11 // pred_check
          %p369 = pneg %p241
        $region46: #{tpu_custom_call.1} parent=11 // pred_check_branch
          %371 = sbr.rel (%p369) target = $region48
        $region47: #{tpu_custom_call.1} parent=11 // pred_region
          %373 = vsyncadd [#allocation12], 0
          %s374 = sshll.u32 %s9, 4
          %s375 = int_to_ptr.hbm [resolvable:$true] %s374
          %s376 = sshll.u32 [#allocation11], 4
          %s377 = int_to_ptr.vmem [resolvable:$true] %s376
          %382 = dma.hbm_to_vmem [thread:$0]  %s375, 256, %s377, [#allocation12], 64, 64, 4
        $region48: #{tpu_custom_call.1} parent=11 // pred_fallthru
          _
        // Predicated region
        $region49: #{tpu_custom_call.1} parent=11 // pred_check
          %p383 = pneg %p262
        $region50: #{tpu_custom_call.1} parent=11 // pred_check_branch
          %385 = sbr.rel (%p383) target = $region52
        $region51: #{tpu_custom_call.1} parent=11 // pred_region
          %387 = vsyncadd [#allocation12], 0
          %s388 = sshll.u32 %s10, 4
          %s389 = int_to_ptr.hbm [resolvable:$true] %s388
          %s390 = sshll.u32 [#allocation13], 4
          %s391 = int_to_ptr.vmem [resolvable:$true] %s390
          %396 = dma.hbm_to_vmem [thread:$0]  %s389, 98304, %s391, [#allocation12], 512, 512, 32
        $region52: #{tpu_custom_call.1} parent=11 // pred_fallthru
          _
      $region12: #{tpu_custom_call.1} parent=5 // pred_fallthru
        _
      %p397 = scmp.lt.s32.totalorder %s26, 2
      // Predicated region
      $region53: #{tpu_custom_call.1} parent=5 // pred_check
        %p398 = pneg %p397
      $region54: #{tpu_custom_call.1} parent=5 // pred_check_branch
        %400 = sbr.rel (%p398) target = $region56
      $region55: #{tpu_custom_call.1} parent=5 // pred_region
        // Predicated region
        $region57: #{tpu_custom_call.1} parent=55 // pred_check
          %p401 = pneg %p46
        $region58: #{tpu_custom_call.1} parent=55 // pred_check_branch
          %403 = sbr.rel (%p401) target = $region60
        $region59: #{tpu_custom_call.1} parent=55 // pred_region
          %s404 = sand.u32 %s36, 1
          %s405 = scalar_lea.sflag [#allocation3], %s404
          %s406 = sand.u32 %s36, 1
          %s407 = smul.addr %s406, 16
          %s408 = scalar_lea.vmem [#allocation2], %s407
          %410 = vsyncadd %s405, 0
          %s411 = smul.addr %s26, 2
          %s412 = smul.addr %s411, 8
          %s413 = scalar_lea.hbm %s0, %s412
          %s415 = sshll.u32 %s413, 4
          %s416 = int_to_ptr.hbm [resolvable:$true] %s415
          %s417 = sshll.u32 %s408, 4
          %s418 = int_to_ptr.vmem [resolvable:$true] %s417
          %420 = dma.hbm_to_vmem [thread:$0]  %s416, 256, %s418, %s405
        $region60: #{tpu_custom_call.1} parent=55 // pred_fallthru
          _
      $region56: #{tpu_custom_call.1} parent=5 // pred_fallthru
        _
      %p421 = scmp.le.s32.totalorder 1, %s26
      %p422 = scmp.lt.s32.totalorder %s26, 3
      %p423 = pnand %p421, %p422
      %p424 = pneg %p423
      // Predicated region
      $region61: #{tpu_custom_call.1} parent=5 // pred_check
        _
      $region62: #{tpu_custom_call.1} parent=5 // pred_check_branch
        %426 = sbr.rel (%p423) target = $region64
      $region63: #{tpu_custom_call.1} parent=5 // pred_region
        %s427 = ssub.s32 %s26, 1
        %s428 = sand.u32 %s39, 1
        %s429 = scalar_lea.sflag [#allocation3], %s428
        %s430 = sand.u32 %s39, 1
        %s431 = smul.addr %s430, 16
        %s432 = scalar_lea.vmem [#allocation2], %s431
        // Predicated region
        $region65: #{tpu_custom_call.1} parent=63 // pred_check
          %p433 = pneg %p52
        $region66: #{tpu_custom_call.1} parent=63 // pred_check_branch
          %435 = sbr.rel (%p433) target = $region68
        $region67: #{tpu_custom_call.1} parent=63 // pred_region
          %437 = dma.done %s429, 256
        $region68: #{tpu_custom_call.1} parent=63 // pred_fallthru
          _
        // Predicated region
        $region69: #{tpu_custom_call.1} parent=63 // pred_check
          %p438 = pneg %p115
        $region70: #{tpu_custom_call.1} parent=63 // pred_check_branch
          %440 = sbr.rel (%p438) target = $region72
        $region71: #{tpu_custom_call.1} parent=63 // pred_region
          %442 = dma.done [#allocation6], 64
        $region72: #{tpu_custom_call.1} parent=63 // pred_fallthru
          _
        // Predicated region
        $region73: #{tpu_custom_call.1} parent=63 // pred_check
          %p443 = pneg %p157
        $region74: #{tpu_custom_call.1} parent=63 // pred_check_branch
          %445 = sbr.rel (%p443) target = $region76
        $region75: #{tpu_custom_call.1} parent=63 // pred_region
          %447 = dma.done [#allocation6], 8192
        $region76: #{tpu_custom_call.1} parent=63 // pred_fallthru
          _
        // Predicated region
        $region77: #{tpu_custom_call.1} parent=63 // pred_check
          %p448 = pneg %p178
        $region78: #{tpu_custom_call.1} parent=63 // pred_check_branch
          %450 = sbr.rel (%p448) target = $region80
        $region79: #{tpu_custom_call.1} parent=63 // pred_region
          %452 = dma.done [#allocation9], 256
        $region80: #{tpu_custom_call.1} parent=63 // pred_fallthru
          _
        // Predicated region
        $region81: #{tpu_custom_call.1} parent=63 // pred_check
          %p453 = pneg %p220
        $region82: #{tpu_custom_call.1} parent=63 // pred_check_branch
          %455 = sbr.rel (%p453) target = $region84
        $region83: #{tpu_custom_call.1} parent=63 // pred_region
          %457 = dma.done [#allocation9], 6144
        $region84: #{tpu_custom_call.1} parent=63 // pred_fallthru
          _
        // Predicated region
        $region85: #{tpu_custom_call.1} parent=63 // pred_check
          %p458 = pneg %p241
        $region86: #{tpu_custom_call.1} parent=63 // pred_check_branch
          %460 = sbr.rel (%p458) target = $region88
        $region87: #{tpu_custom_call.1} parent=63 // pred_region
          %462 = dma.done [#allocation12], 256
        $region88: #{tpu_custom_call.1} parent=63 // pred_fallthru
          _
        // Predicated region
        $region89: #{tpu_custom_call.1} parent=63 // pred_check
          %p463 = pneg %p262
        $region90: #{tpu_custom_call.1} parent=63 // pred_check_branch
          %465 = sbr.rel (%p463) target = $region92
        $region91: #{tpu_custom_call.1} parent=63 // pred_region
          %467 = dma.done [#allocation12], 98304
        $region92: #{tpu_custom_call.1} parent=63 // pred_fallthru
          _
        %s468 = sand.u32 %s39, 1
        %s469 = scalar_lea.sflag [#allocation3], %s468
        %s470 = sand.u32 %s39, 1
        %s471 = smul.addr %s470, 16
        %s472 = scalar_lea.vmem [#allocation2], %s471
        %p473 = pneg %p52
        %p474 = pneg %p49
        %p475 = pneg %p73
        %p476 = pneg %p70
        %p477 = pneg %p94
        %p478 = pneg %p91
        %p479 = pneg %p115
        %p480 = pneg %p112
        %p481 = pneg %p136
        %p482 = pneg %p133
        %p483 = pneg %p157
        %p484 = pneg %p154
        %p485 = pneg %p178
        %p486 = pneg %p175
        %p487 = pneg %p199
        %p488 = pneg %p196
        %p489 = pneg %p220
        %p490 = pneg %p217
        %p491 = pneg %p241
        %p492 = pneg %p238
        %p493 = pneg %p262
        %p494 = pneg %p259
        %p495 = pneg %p288
        %p496 = pneg %p285
        %s497 = sand.u32 %s275, 1
        %s498 = scalar_lea.sflag [#allocation4], %s497
        %s499 = sand.u32 %s275, 1
        %s500 = smul.addr %s499, 64
        %s501 = scalar_lea.vmem [#allocation14], %s500
        %v503 = vld [vmem:[%s432] sm:$0xff]
        %v504 = vld [vmem:[%s432 + $0x8] sm:$0xff]
        %v505 = vld [vmem:[%s1] sm:$0xff]
        %507 = vset.pattern.permute.xlu0 0
        %508 = vperm.xlu0 %507, %v505
        %v509 = vpop.permute.xlu0 %508
        %v511 = vmul.f32 %v503, %v509
        %v512 = vmul.f32 %v504, %v509
        %v513 = vld [vmem:[%s2] sm:$0xff]
        %515 = vset.pattern.permute.xlu0 0
        %516 = vperm.xlu0 %515, %v513
        %v517 = vpop.permute.xlu0 %516
        %v519 = vadd.f32 %v511, %v517
        %v520 = vadd.f32 %v512, %v517
        %vm521 = vcmp.ge.f32.partialorder %v519, 0.0
        %vm522 = vcmp.ge.f32.partialorder %v520, 0.0
        %v523 = vmul.f32 %v519, 0.01
        %v524 = vmul.f32 %v520, 0.01
        %v525 = vsel %vm521, %v519, %v523
        %v526 = vsel %vm522, %v520, %v524
        %v527 = vpack.c.bf16 %v525, %v525
        %v528 = vpack.c.bf16 %v526, %v526
        %v529 = vld [vmem:[#allocation5] sm:$0xf]
        %v530 = vld [vmem:[%s4] sm:$0xff]
        %532 = vset.pattern.permute.xlu0 0
        %533 = vperm.xlu0 %532, %v530
        %v534 = vpop.permute.xlu0 %533
        %vm536 = vcmask 64512
        %v538 = vsel %vm536, %v529, 0
        %vm540 = vcmask 1043456
        %v542 = vsel %vm540, %v527, 0
        %v545 = vsel %vm540, %v528, 0
        %547 = vmatpush.bf16.msra.mxu0 0
        %548 = vmatpush.bf16.msra.mxu0 0
        %549 = vmatpush.bf16.msra.mxu0 0
        %550 = vmatpush.bf16.msra.mxu0 0
        %551 = vmatpush.bf16.msra.mxu0 0
        %552 = vmatpush.bf16.msra.mxu0 0
        %553 = vmatpush.bf16.msra.mxu0 0
        %554 = vmatpush.bf16.msra.mxu0 %v542
        %555 = vmatmul.bf16.gmra.mxu0 %v538
        %v556 = vpop.f32.mrf.mxu0
        %v557 = vadd.f32 %v534, %v556
        %v558 = vpop.f32.mrf.mxu0
        %559 = vdwg.mxu0
        %560 = vmatpush.bf16.msra.mxu0 0
        %561 = vmatpush.bf16.msra.mxu0 0
        %562 = vmatpush.bf16.msra.mxu0 0
        %563 = vmatpush.bf16.msra.mxu0 0
        %564 = vmatpush.bf16.msra.mxu0 0
        %565 = vmatpush.bf16.msra.mxu0 0
        %566 = vmatpush.bf16.msra.mxu0 0
        %567 = vmatpush.bf16.msra.mxu0 %v545
        %568 = vmatmul.bf16.gmra.mxu0 %v538
        %v569 = vpop.f32.mrf.mxu0
        %v570 = vadd.f32 %v534, %v569
        %v571 = vpop.f32.mrf.mxu0
        %572 = vdwg.mxu0
        %vm573 = vcmp.ge.f32.partialorder %v557, 0.0
        %vm574 = vcmp.ge.f32.partialorder %v570, 0.0
        %v575 = vmul.f32 %v557, 0.01
        %v576 = vmul.f32 %v570, 0.01
        %v577 = vsel %vm573, %v557, %v575
        %v578 = vsel %vm574, %v570, %v576
        %v579 = vpack.c.bf16 %v577, %v577
        %v580 = vpack.c.bf16 %v578, %v578
        %v581 = vld [vmem:[#allocation7] sm:$0xff]
        %v582 = vld [vmem:[#allocation7 + $0x8] sm:$0xff]
        %v583 = vld [vmem:[#allocation7 + $0x10] sm:$0xff]
        %v584 = vld [vmem:[#allocation7 + $0x18] sm:$0xff]
        %v585 = vld [vmem:[#allocation7 + $0x20] sm:$0xff]
        %v586 = vld [vmem:[#allocation7 + $0x28] sm:$0xff]
        %v587 = vld [vmem:[#allocation7 + $0x30] sm:$0xff]
        %v588 = vld [vmem:[#allocation7 + $0x38] sm:$0xff]
        %v589 = vld [vmem:[#allocation7 + $0x40] sm:$0xff]
        %v590 = vld [vmem:[#allocation7 + $0x48] sm:$0xff]
        %v591 = vld [vmem:[#allocation7 + $0x50] sm:$0xff]
        %v592 = vld [vmem:[#allocation7 + $0x58] sm:$0xff]
        %v593 = vld [vmem:[#allocation7 + $0x60] sm:$0xff]
        %v594 = vld [vmem:[#allocation7 + $0x68] sm:$0xff]
        %v595 = vld [vmem:[#allocation7 + $0x70] sm:$0xff]
        %v596 = vld [vmem:[#allocation7 + $0x78] sm:$0xff]
        %v597 = vld [vmem:[#allocation7 + $0x80] sm:$0xff]
        %v598 = vld [vmem:[#allocation7 + $0x88] sm:$0xff]
        %v599 = vld [vmem:[#allocation7 + $0x90] sm:$0xff]
        %v600 = vld [vmem:[#allocation7 + $0x98] sm:$0xff]
        %v601 = vld [vmem:[#allocation7 + $0xa0] sm:$0xff]
        %v602 = vld [vmem:[#allocation7 + $0xa8] sm:$0xff]
        %v603 = vld [vmem:[#allocation7 + $0xb0] sm:$0xff]
        %v604 = vld [vmem:[#allocation7 + $0xb8] sm:$0xff]
        %v605 = vld [vmem:[#allocation7 + $0xc0] sm:$0xff]
        %v606 = vld [vmem:[#allocation7 + $0xc8] sm:$0xff]
        %v607 = vld [vmem:[#allocation7 + $0xd0] sm:$0xff]
        %v608 = vld [vmem:[#allocation7 + $0xd8] sm:$0xff]
        %v609 = vld [vmem:[#allocation7 + $0xe0] sm:$0xff]
        %v610 = vld [vmem:[#allocation7 + $0xe8] sm:$0xff]
        %v611 = vld [vmem:[#allocation7 + $0xf0] sm:$0xff]
        %v612 = vld [vmem:[#allocation7 + $0xf8] sm:$0xff]
        %v613 = vld [vmem:[#allocation7 + $0x100] sm:$0xff]
        %v614 = vld [vmem:[#allocation7 + $0x108] sm:$0xff]
        %v615 = vld [vmem:[#allocation7 + $0x110] sm:$0xff]
        %v616 = vld [vmem:[#allocation7 + $0x118] sm:$0xff]
        %v617 = vld [vmem:[#allocation7 + $0x120] sm:$0xff]
        %v618 = vld [vmem:[#allocation7 + $0x128] sm:$0xff]
        %v619 = vld [vmem:[#allocation7 + $0x130] sm:$0xff]
        %v620 = vld [vmem:[#allocation7 + $0x138] sm:$0xff]
        %v621 = vld [vmem:[#allocation7 + $0x140] sm:$0xff]
        %v622 = vld [vmem:[#allocation7 + $0x148] sm:$0xff]
        %v623 = vld [vmem:[#allocation7 + $0x150] sm:$0xff]
        %v624 = vld [vmem:[#allocation7 + $0x158] sm:$0xff]
        %v625 = vld [vmem:[#allocation7 + $0x160] sm:$0xff]
        %v626 = vld [vmem:[#allocation7 + $0x168] sm:$0xff]
        %v627 = vld [vmem:[#allocation7 + $0x170] sm:$0xff]
        %v628 = vld [vmem:[#allocation7 + $0x178] sm:$0xff]
        %v629 = vld [vmem:[#allocation7 + $0x180] sm:$0xff]
        %v630 = vld [vmem:[#allocation7 + $0x188] sm:$0xff]
        %v631 = vld [vmem:[#allocation7 + $0x190] sm:$0xff]
        %v632 = vld [vmem:[#allocation7 + $0x198] sm:$0xff]
        %v633 = vld [vmem:[#allocation7 + $0x1a0] sm:$0xff]
        %v634 = vld [vmem:[#allocation7 + $0x1a8] sm:$0xff]
        %v635 = vld [vmem:[#allocation7 + $0x1b0] sm:$0xff]
        %v636 = vld [vmem:[#allocation7 + $0x1b8] sm:$0xff]
        %v637 = vld [vmem:[#allocation7 + $0x1c0] sm:$0xff]
        %v638 = vld [vmem:[#allocation7 + $0x1c8] sm:$0xff]
        %v639 = vld [vmem:[#allocation7 + $0x1d0] sm:$0xff]
        %v640 = vld [vmem:[#allocation7 + $0x1d8] sm:$0xff]
        %v641 = vld [vmem:[#allocation7 + $0x1e0] sm:$0xff]
        %v642 = vld [vmem:[#allocation7 + $0x1e8] sm:$0xff]
        %v643 = vld [vmem:[#allocation7 + $0x1f0] sm:$0xff]
        %v644 = vld [vmem:[#allocation7 + $0x1f8] sm:$0xff]
        %v709 = vunpack.c.l.b16 %v581
        %v710 = vunpack.c.h.b16 %v581
        %v711 = vunpack.c.l.b16 %v582
        %v712 = vunpack.c.h.b16 %v582
        %v713 = vunpack.c.l.b16 %v583
        %v714 = vunpack.c.h.b16 %v583
        %v715 = vunpack.c.l.b16 %v584
        %v716 = vunpack.c.h.b16 %v584
        %v717 = vunpack.c.l.b16 %v585
        %v718 = vunpack.c.h.b16 %v585
        %v719 = vunpack.c.l.b16 %v586
        %v720 = vunpack.c.h.b16 %v586
        %v721 = vunpack.c.l.b16 %v587
        %v722 = vunpack.c.h.b16 %v587
        %v723 = vunpack.c.l.b16 %v588
        %v724 = vunpack.c.h.b16 %v588
        %v725 = vunpack.c.l.b16 %v589
        %v726 = vunpack.c.h.b16 %v589
        %v727 = vunpack.c.l.b16 %v590
        %v728 = vunpack.c.h.b16 %v590
        %v729 = vunpack.c.l.b16 %v591
        %v730 = vunpack.c.h.b16 %v591
        %v731 = vunpack.c.l.b16 %v592
        %v732 = vunpack.c.h.b16 %v592
        %v733 = vunpack.c.l.b16 %v593
        %v734 = vunpack.c.h.b16 %v593
        %v735 = vunpack.c.l.b16 %v594
        %v736 = vunpack.c.h.b16 %v594
        %v737 = vunpack.c.l.b16 %v595
        %v738 = vunpack.c.h.b16 %v595
        %v739 = vunpack.c.l.b16 %v596
        %v740 = vunpack.c.h.b16 %v596
        %v741 = vunpack.c.l.b16 %v597
        %v742 = vunpack.c.h.b16 %v597
        %v743 = vunpack.c.l.b16 %v598
        %v744 = vunpack.c.h.b16 %v598
        %v745 = vunpack.c.l.b16 %v599
        %v746 = vunpack.c.h.b16 %v599
        %v747 = vunpack.c.l.b16 %v600
        %v748 = vunpack.c.h.b16 %v600
        %v749 = vunpack.c.l.b16 %v601
        %v750 = vunpack.c.h.b16 %v601
        %v751 = vunpack.c.l.b16 %v602
        %v752 = vunpack.c.h.b16 %v602
        %v753 = vunpack.c.l.b16 %v603
        %v754 = vunpack.c.h.b16 %v603
        %v755 = vunpack.c.l.b16 %v604
        %v756 = vunpack.c.h.b16 %v604
        %v757 = vunpack.c.l.b16 %v605
        %v758 = vunpack.c.h.b16 %v605
        %v759 = vunpack.c.l.b16 %v606
        %v760 = vunpack.c.h.b16 %v606
        %v761 = vunpack.c.l.b16 %v607
        %v762 = vunpack.c.h.b16 %v607
        %v763 = vunpack.c.l.b16 %v608
        %v764 = vunpack.c.h.b16 %v608
        %v765 = vunpack.c.l.b16 %v609
        %v766 = vunpack.c.h.b16 %v609
        %v767 = vunpack.c.l.b16 %v610
        %v768 = vunpack.c.h.b16 %v610
        %v769 = vunpack.c.l.b16 %v611
        %v770 = vunpack.c.h.b16 %v611
        %v771 = vunpack.c.l.b16 %v612
        %v772 = vunpack.c.h.b16 %v612
        %v773 = vunpack.c.l.b16 %v613
        %v774 = vunpack.c.h.b16 %v613
        %v775 = vunpack.c.l.b16 %v614
        %v776 = vunpack.c.h.b16 %v614
        %v777 = vunpack.c.l.b16 %v615
        %v778 = vunpack.c.h.b16 %v615
        %v779 = vunpack.c.l.b16 %v616
        %v780 = vunpack.c.h.b16 %v616
        %v781 = vunpack.c.l.b16 %v617
        %v782 = vunpack.c.h.b16 %v617
        %v783 = vunpack.c.l.b16 %v618
        %v784 = vunpack.c.h.b16 %v618
        %v785 = vunpack.c.l.b16 %v619
        %v786 = vunpack.c.h.b16 %v619
        %v787 = vunpack.c.l.b16 %v620
        %v788 = vunpack.c.h.b16 %v620
        %v789 = vunpack.c.l.b16 %v621
        %v790 = vunpack.c.h.b16 %v621
        %v791 = vunpack.c.l.b16 %v622
        %v792 = vunpack.c.h.b16 %v622
        %v793 = vunpack.c.l.b16 %v623
        %v794 = vunpack.c.h.b16 %v623
        %v795 = vunpack.c.l.b16 %v624
        %v796 = vunpack.c.h.b16 %v624
        %v797 = vunpack.c.l.b16 %v625
        %v798 = vunpack.c.h.b16 %v625
        %v799 = vunpack.c.l.b16 %v626
        %v800 = vunpack.c.h.b16 %v626
        %v801 = vunpack.c.l.b16 %v627
        %v802 = vunpack.c.h.b16 %v627
        %v803 = vunpack.c.l.b16 %v628
        %v804 = vunpack.c.h.b16 %v628
        %v805 = vunpack.c.l.b16 %v629
        %v806 = vunpack.c.h.b16 %v629
        %v807 = vunpack.c.l.b16 %v630
        %v808 = vunpack.c.h.b16 %v630
        %v809 = vunpack.c.l.b16 %v631
        %v810 = vunpack.c.h.b16 %v631
        %v811 = vunpack.c.l.b16 %v632
        %v812 = vunpack.c.h.b16 %v632
        %v813 = vunpack.c.l.b16 %v633
        %v814 = vunpack.c.h.b16 %v633
        %v815 = vunpack.c.l.b16 %v634
        %v816 = vunpack.c.h.b16 %v634
        %v817 = vunpack.c.l.b16 %v635
        %v818 = vunpack.c.h.b16 %v635
        %v819 = vunpack.c.l.b16 %v636
        %v820 = vunpack.c.h.b16 %v636
        %v821 = vunpack.c.l.b16 %v637
        %v822 = vunpack.c.h.b16 %v637
        %v823 = vunpack.c.l.b16 %v638
        %v824 = vunpack.c.h.b16 %v638
        %v825 = vunpack.c.l.b16 %v639
        %v826 = vunpack.c.h.b16 %v639
        %v827 = vunpack.c.l.b16 %v640
        %v828 = vunpack.c.h.b16 %v640
        %v829 = vunpack.c.l.b16 %v641
        %v830 = vunpack.c.h.b16 %v641
        %v831 = vunpack.c.l.b16 %v642
        %v832 = vunpack.c.h.b16 %v642
        %v833 = vunpack.c.l.b16 %v643
        %v834 = vunpack.c.h.b16 %v643
        %v835 = vunpack.c.l.b16 %v644
        %v836 = vunpack.c.h.b16 %v644
        %v837 = vpack.c.b16 %v713, %v709
        %v838 = vpack.c.b16 %v714, %v710
        %v839 = vpack.c.b16 %v715, %v711
        %v840 = vpack.c.b16 %v716, %v712
        %v841 = vpack.c.b16 %v721, %v717
        %v842 = vpack.c.b16 %v722, %v718
        %v843 = vpack.c.b16 %v723, %v719
        %v844 = vpack.c.b16 %v724, %v720
        %v845 = vpack.c.b16 %v729, %v725
        %v846 = vpack.c.b16 %v730, %v726
        %v847 = vpack.c.b16 %v731, %v727
        %v848 = vpack.c.b16 %v732, %v728
        %v849 = vpack.c.b16 %v737, %v733
        %v850 = vpack.c.b16 %v738, %v734
        %v851 = vpack.c.b16 %v739, %v735
        %v852 = vpack.c.b16 %v740, %v736
        %v853 = vpack.c.b16 %v745, %v741
        %v854 = vpack.c.b16 %v746, %v742
        %v855 = vpack.c.b16 %v747, %v743
        %v856 = vpack.c.b16 %v748, %v744
        %v857 = vpack.c.b16 %v753, %v749
        %v858 = vpack.c.b16 %v754, %v750
        %v859 = vpack.c.b16 %v755, %v751
        %v860 = vpack.c.b16 %v756, %v752
        %v861 = vpack.c.b16 %v761, %v757
        %v862 = vpack.c.b16 %v762, %v758
        %v863 = vpack.c.b16 %v763, %v759
        %v864 = vpack.c.b16 %v764, %v760
        %v865 = vpack.c.b16 %v769, %v765
        %v866 = vpack.c.b16 %v770, %v766
        %v867 = vpack.c.b16 %v771, %v767
        %v868 = vpack.c.b16 %v772, %v768
        %v869 = vpack.c.b16 %v777, %v773
        %v870 = vpack.c.b16 %v778, %v774
        %v871 = vpack.c.b16 %v779, %v775
        %v872 = vpack.c.b16 %v780, %v776
        %v873 = vpack.c.b16 %v785, %v781
        %v874 = vpack.c.b16 %v786, %v782
        %v875 = vpack.c.b16 %v787, %v783
        %v876 = vpack.c.b16 %v788, %v784
        %v877 = vpack.c.b16 %v793, %v789
        %v878 = vpack.c.b16 %v794, %v790
        %v879 = vpack.c.b16 %v795, %v791
        %v880 = vpack.c.b16 %v796, %v792
        %v881 = vpack.c.b16 %v801, %v797
        %v882 = vpack.c.b16 %v802, %v798
        %v883 = vpack.c.b16 %v803, %v799
        %v884 = vpack.c.b16 %v804, %v800
        %v885 = vpack.c.b16 %v809, %v805
        %v886 = vpack.c.b16 %v810, %v806
        %v887 = vpack.c.b16 %v811, %v807
        %v888 = vpack.c.b16 %v812, %v808
        %v889 = vpack.c.b16 %v817, %v813
        %v890 = vpack.c.b16 %v818, %v814
        %v891 = vpack.c.b16 %v819, %v815
        %v892 = vpack.c.b16 %v820, %v816
        %v893 = vpack.c.b16 %v825, %v821
        %v894 = vpack.c.b16 %v826, %v822
        %v895 = vpack.c.b16 %v827, %v823
        %v896 = vpack.c.b16 %v828, %v824
        %v897 = vpack.c.b16 %v833, %v829
        %v898 = vpack.c.b16 %v834, %v830
        %v899 = vpack.c.b16 %v835, %v831
        %v900 = vpack.c.b16 %v836, %v832
        %965 = vmatpush.bf16.msra.mxu0 %v865
        %966 = vmatpush.bf16.msra.mxu0 %v861
        %967 = vmatpush.bf16.msra.mxu0 %v857
        %968 = vmatpush.bf16.msra.mxu0 %v853
        %969 = vmatpush.bf16.msra.mxu0 %v849
        %970 = vmatpush.bf16.msra.mxu0 %v845
        %971 = vmatpush.bf16.msra.mxu0 %v841
        %972 = vmatpush.bf16.msra.mxu0 %v837
        %973 = vmatmul.bf16.gmra.mxu0 %v579
        %v974 = vpop.f32.mrf.mxu0
        %v975 = vadd.f32 0.0, %v974
        %v976 = vpop.f32.mrf.mxu0
        %977 = vdwg.mxu0
        %978 = vmatpush.bf16.msra.mxu0 %v897
        %979 = vmatpush.bf16.msra.mxu0 %v893
        %980 = vmatpush.bf16.msra.mxu0 %v889
        %981 = vmatpush.bf16.msra.mxu0 %v885
        %982 = vmatpush.bf16.msra.mxu0 %v881
        %983 = vmatpush.bf16.msra.mxu0 %v877
        %984 = vmatpush.bf16.msra.mxu0 %v873
        %985 = vmatpush.bf16.msra.mxu0 %v869
        %986 = vmatmul.bf16.gmra.mxu0 %v580
        %v987 = vpop.f32.mrf.mxu0
        %v988 = vadd.f32 %v975, %v987
        %v989 = vpop.f32.mrf.mxu0
        %990 = vdwg.mxu0
        %991 = vmatpush.bf16.msra.mxu0 %v866
        %992 = vmatpush.bf16.msra.mxu0 %v862
        %993 = vmatpush.bf16.msra.mxu0 %v858
        %994 = vmatpush.bf16.msra.mxu0 %v854
        %995 = vmatpush.bf16.msra.mxu0 %v850
        %996 = vmatpush.bf16.msra.mxu0 %v846
        %997 = vmatpush.bf16.msra.mxu0 %v842
        %998 = vmatpush.bf16.msra.mxu0 %v838
        %999 = vmatmul.bf16.gmra.mxu0 %v579
        %v1000 = vpop.f32.mrf.mxu0
        %v1001 = vadd.f32 0.0, %v1000
        %v1002 = vpop.f32.mrf.mxu0
        %1003 = vdwg.mxu0
        %1004 = vmatpush.bf16.msra.mxu0 %v898
        %1005 = vmatpush.bf16.msra.mxu0 %v894
        %1006 = vmatpush.bf16.msra.mxu0 %v890
        %1007 = vmatpush.bf16.msra.mxu0 %v886
        %1008 = vmatpush.bf16.msra.mxu0 %v882
        %1009 = vmatpush.bf16.msra.mxu0 %v878
        %1010 = vmatpush.bf16.msra.mxu0 %v874
        %1011 = vmatpush.bf16.msra.mxu0 %v870
        %1012 = vmatmul.bf16.gmra.mxu0 %v580
        %v1013 = vpop.f32.mrf.mxu0
        %v1014 = vadd.f32 %v1001, %v1013
        %v1015 = vpop.f32.mrf.mxu0
        %1016 = vdwg.mxu0
        %1017 = vmatpush.bf16.msra.mxu0 %v867
        %1018 = vmatpush.bf16.msra.mxu0 %v863
        %1019 = vmatpush.bf16.msra.mxu0 %v859
        %1020 = vmatpush.bf16.msra.mxu0 %v855
        %1021 = vmatpush.bf16.msra.mxu0 %v851
        %1022 = vmatpush.bf16.msra.mxu0 %v847
        %1023 = vmatpush.bf16.msra.mxu0 %v843
        %1024 = vmatpush.bf16.msra.mxu0 %v839
        %1025 = vmatmul.bf16.gmra.mxu0 %v579
        %v1026 = vpop.f32.mrf.mxu0
        %v1027 = vadd.f32 0.0, %v1026
        %v1028 = vpop.f32.mrf.mxu0
        %1029 = vdwg.mxu0
        %1030 = vmatpush.bf16.msra.mxu0 %v899
        %1031 = vmatpush.bf16.msra.mxu0 %v895
        %1032 = vmatpush.bf16.msra.mxu0 %v891
        %1033 = vmatpush.bf16.msra.mxu0 %v887
        %1034 = vmatpush.bf16.msra.mxu0 %v883
        %1035 = vmatpush.bf16.msra.mxu0 %v879
        %1036 = vmatpush.bf16.msra.mxu0 %v875
        %1037 = vmatpush.bf16.msra.mxu0 %v871
        %1038 = vmatmul.bf16.gmra.mxu0 %v580
        %v1039 = vpop.f32.mrf.mxu0
        %v1040 = vadd.f32 %v1027, %v1039
        %v1041 = vpop.f32.mrf.mxu0
        %1042 = vdwg.mxu0
        %1043 = vmatpush.bf16.msra.mxu0 %v868
        %1044 = vmatpush.bf16.msra.mxu0 %v864
        %1045 = vmatpush.bf16.msra.mxu0 %v860
        %1046 = vmatpush.bf16.msra.mxu0 %v856
        %1047 = vmatpush.bf16.msra.mxu0 %v852
        %1048 = vmatpush.bf16.msra.mxu0 %v848
        %1049 = vmatpush.bf16.msra.mxu0 %v844
        %1050 = vmatpush.bf16.msra.mxu0 %v840
        %1051 = vmatmul.bf16.gmra.mxu0 %v579
        %v1052 = vpop.f32.mrf.mxu0
        %v1053 = vadd.f32 0.0, %v1052
        %v1054 = vpop.f32.mrf.mxu0
        %1055 = vdwg.mxu0
        %1056 = vmatpush.bf16.msra.mxu0 %v900
        %1057 = vmatpush.bf16.msra.mxu0 %v896
        %1058 = vmatpush.bf16.msra.mxu0 %v892
        %1059 = vmatpush.bf16.msra.mxu0 %v888
        %1060 = vmatpush.bf16.msra.mxu0 %v884
        %1061 = vmatpush.bf16.msra.mxu0 %v880
        %1062 = vmatpush.bf16.msra.mxu0 %v876
        %1063 = vmatpush.bf16.msra.mxu0 %v872
        %1064 = vmatmul.bf16.gmra.mxu0 %v580
        %v1065 = vpop.f32.mrf.mxu0
        %v1066 = vadd.f32 %v1053, %v1065
        %v1067 = vpop.f32.mrf.mxu0
        %1068 = vdwg.mxu0
        %1073 = vrot.lane.b32.xlu0 %v988, 127
        %v1074 = vpop.permute.xlu0 %1073
        %1075 = vrot.lane.b32.xlu0 %v1014, 127
        %v1076 = vpop.permute.xlu0 %1075
        %1077 = vrot.lane.b32.xlu0 %v1040, 127
        %v1078 = vpop.permute.xlu0 %1077
        %1079 = vrot.lane.b32.xlu0 %v1066, 127
        %v1080 = vpop.permute.xlu0 %1079
        %vm1081 = vcmask 1039360
        %v1082 = vsel %vm1081, %v1074, %v1076
        %v1083 = vsel %vm1081, %v1076, %v1078
        %v1084 = vsel %vm1081, %v1078, %v1080
        %1088 = vrot.lane.b32.xlu0 %v988, 126
        %v1089 = vpop.permute.xlu0 %1088
        %1090 = vrot.lane.b32.xlu0 %v1014, 126
        %v1091 = vpop.permute.xlu0 %1090
        %1092 = vrot.lane.b32.xlu0 %v1040, 126
        %v1093 = vpop.permute.xlu0 %1092
        %1094 = vrot.lane.b32.xlu0 %v1066, 126
        %v1095 = vpop.permute.xlu0 %1094
        %vm1096 = vcmask 1031168
        %v1097 = vsel %vm1096, %v1089, %v1091
        %v1098 = vsel %vm1096, %v1091, %v1093
        %v1099 = vsel %vm1096, %v1093, %v1095
        %1103 = vrot.lane.b32.xlu0 %v988, 110
        %v1104 = vpop.permute.xlu0 %1103
        %1105 = vrot.lane.b32.xlu0 %v1014, 110
        %v1106 = vpop.permute.xlu0 %1105
        %1107 = vrot.lane.b32.xlu0 %v1040, 110
        %v1108 = vpop.permute.xlu0 %1107
        %1109 = vrot.lane.b32.xlu0 %v1066, 110
        %v1110 = vpop.permute.xlu0 %1109
        %vm1111 = vcmask 900096
        %v1112 = vsel %vm1111, %v1104, %v1106
        %v1113 = vsel %vm1111, %v1106, %v1108
        %v1114 = vsel %vm1111, %v1108, %v1110
        %1118 = vrot.lane.b32.xlu0 %v988, 109
        %v1119 = vpop.permute.xlu0 %1118
        %1120 = vrot.lane.b32.xlu0 %v1014, 109
        %v1121 = vpop.permute.xlu0 %1120
        %1122 = vrot.lane.b32.xlu0 %v1040, 109
        %v1123 = vpop.permute.xlu0 %1122
        %1124 = vrot.lane.b32.xlu0 %v1066, 109
        %v1125 = vpop.permute.xlu0 %1124
        %vm1126 = vcmask 891904
        %v1127 = vsel %vm1126, %v1119, %v1121
        %v1128 = vsel %vm1126, %v1121, %v1123
        %v1129 = vsel %vm1126, %v1123, %v1125
        %1133 = vrot.lane.b32.xlu0 %v988, 108
        %v1134 = vpop.permute.xlu0 %1133
        %1135 = vrot.lane.b32.xlu0 %v1014, 108
        %v1136 = vpop.permute.xlu0 %1135
        %1137 = vrot.lane.b32.xlu0 %v1040, 108
        %v1138 = vpop.permute.xlu0 %1137
        %1139 = vrot.lane.b32.xlu0 %v1066, 108
        %v1140 = vpop.permute.xlu0 %1139
        %vm1141 = vcmask 883712
        %v1142 = vsel %vm1141, %v1134, %v1136
        %v1143 = vsel %vm1141, %v1136, %v1138
        %v1144 = vsel %vm1141, %v1138, %v1140
        %1148 = vrot.lane.b32.xlu0 %v988, 92
        %v1149 = vpop.permute.xlu0 %1148
        %1150 = vrot.lane.b32.xlu0 %v1014, 92
        %v1151 = vpop.permute.xlu0 %1150
        %1152 = vrot.lane.b32.xlu0 %v1040, 92
        %v1153 = vpop.permute.xlu0 %1152
        %1154 = vrot.lane.b32.xlu0 %v1066, 92
        %v1155 = vpop.permute.xlu0 %1154
        %vm1156 = vcmask 752640
        %v1157 = vsel %vm1156, %v1149, %v1151
        %v1158 = vsel %vm1156, %v1151, %v1153
        %v1159 = vsel %vm1156, %v1153, %v1155
        %1163 = vrot.lane.b32.xlu0 %v988, 91
        %v1164 = vpop.permute.xlu0 %1163
        %1165 = vrot.lane.b32.xlu0 %v1014, 91
        %v1166 = vpop.permute.xlu0 %1165
        %1167 = vrot.lane.b32.xlu0 %v1040, 91
        %v1168 = vpop.permute.xlu0 %1167
        %1169 = vrot.lane.b32.xlu0 %v1066, 91
        %v1170 = vpop.permute.xlu0 %1169
        %vm1171 = vcmask 744448
        %v1172 = vsel %vm1171, %v1164, %v1166
        %v1173 = vsel %vm1171, %v1166, %v1168
        %v1174 = vsel %vm1171, %v1168, %v1170
        %1178 = vrot.lane.b32.xlu0 %v988, 90
        %v1179 = vpop.permute.xlu0 %1178
        %1180 = vrot.lane.b32.xlu0 %v1014, 90
        %v1181 = vpop.permute.xlu0 %1180
        %1182 = vrot.lane.b32.xlu0 %v1040, 90
        %v1183 = vpop.permute.xlu0 %1182
        %1184 = vrot.lane.b32.xlu0 %v1066, 90
        %v1185 = vpop.permute.xlu0 %1184
        %vm1186 = vcmask 736256
        %v1187 = vsel %vm1186, %v1179, %v1181
        %v1188 = vsel %vm1186, %v1181, %v1183
        %v1189 = vsel %vm1186, %v1183, %v1185
        %v1193 = vpack.c.bf16 %v1082, %v988
        %v1194 = vpack.c.bf16 %v1083, %v1014
        %v1195 = vpack.c.bf16 %v1084, %v1040
        %v1196 = vpack.c.bf16 %v1112, %v1097
        %v1197 = vpack.c.bf16 %v1113, %v1098
        %v1198 = vpack.c.bf16 %v1114, %v1099
        %v1199 = vpack.c.bf16 %v1142, %v1127
        %v1200 = vpack.c.bf16 %v1143, %v1128
        %v1201 = vpack.c.bf16 %v1144, %v1129
        %v1202 = vpack.c.bf16 %v1172, %v1157
        %v1203 = vpack.c.bf16 %v1173, %v1158
        %v1204 = vpack.c.bf16 %v1174, %v1159
        %v1205 = vpack.c.bf16 %v1187, %v1187
        %v1206 = vpack.c.bf16 %v1188, %v1188
        %v1207 = vpack.c.bf16 %v1189, %v1189
        %v1208 = vld [vmem:[#allocation8] sm:$0xf]
        %v1209 = vld [vmem:[#allocation8 + $0x4] sm:$0xf]
        %v1210 = vld [vmem:[#allocation8 + $0x8] sm:$0xf]
        %v1211 = vld [vmem:[#allocation8 + $0xc] sm:$0xf]
        %v1212 = vld [vmem:[%s7] sm:$0xff]
        %v1213 = vld [vmem:[%s7 + $0x8] sm:$0xff]
        %v1214 = vld [vmem:[%s7 + $0x10] sm:$0xff]
        %v1215 = vld [vmem:[%s7 + $0x18] sm:$0xff]
        %1217 = vset.pattern.permute.xlu0 0
        %1218 = vperm.xlu0 %1217, %v1212
        %v1219 = vpop.permute.xlu0 %1218
        %1222 = vset.pattern.permute.xlu0 0
        %1223 = vperm.xlu0 %1222, %v1213
        %v1224 = vpop.permute.xlu0 %1223
        %1227 = vset.pattern.permute.xlu0 0
        %1228 = vperm.xlu0 %1227, %v1214
        %v1229 = vpop.permute.xlu0 %1228
        %1232 = vset.pattern.permute.xlu0 0
        %1233 = vperm.xlu0 %1232, %v1215
        %v1234 = vpop.permute.xlu0 %1233
        %v1240 = vunpack.c.l.b16 %v1208
        %v1241 = vunpack.c.l.b16 %v1209
        %v1242 = vunpack.c.l.b16 %v1210
        %v1243 = vunpack.c.l.b16 %v1211
        %v1244 = vpack.c.b16 %v1241, %v1240
        %v1245 = vpack.c.b16 %v1243, %v1242
        %vm1246 = vcmask 588800
        %v1248 = vsel %vm1246, %v1244, 0
        %v1251 = vsel %vm1246, %v1245, 0
        %v1254 = vsel %vm540, %v1205, 0
        %v1257 = vsel %vm540, %v1206, 0
        %v1260 = vsel %vm540, %v1207, 0
        %1262 = vmatpush.bf16.msra.mxu0 0
        %1263 = vmatpush.bf16.msra.mxu0 0
        %1264 = vmatpush.bf16.msra.mxu0 0
        %1265 = vmatpush.bf16.msra.mxu0 %v1254
        %1266 = vmatpush.bf16.msra.mxu0 %v1202
        %1267 = vmatpush.bf16.msra.mxu0 %v1199
        %1268 = vmatpush.bf16.msra.mxu0 %v1196
        %1269 = vmatpush.bf16.msra.mxu0 %v1193
        %1270 = vmatmul.bf16.gmra.mxu0 %v1248
        %v1271 = vpop.f32.mrf.mxu0
        %v1272 = vadd.f32 %v1219, %v1271
        %v1273 = vpop.f32.mrf.mxu0
        %v1274 = vadd.f32 %v1224, %v1273
        %1275 = vmatmul.bf16.gmra.mxu0 %v1251
        %v1276 = vpop.f32.mrf.mxu0
        %v1277 = vadd.f32 %v1229, %v1276
        %v1278 = vpop.f32.mrf.mxu0
        %v1279 = vadd.f32 %v1234, %v1278
        %1280 = vdwg.mxu0
        %1281 = vmatpush.bf16.msra.mxu0 0
        %1282 = vmatpush.bf16.msra.mxu0 0
        %1283 = vmatpush.bf16.msra.mxu0 0
        %1284 = vmatpush.bf16.msra.mxu0 %v1257
        %1285 = vmatpush.bf16.msra.mxu0 %v1203
        %1286 = vmatpush.bf16.msra.mxu0 %v1200
        %1287 = vmatpush.bf16.msra.mxu0 %v1197
        %1288 = vmatpush.bf16.msra.mxu0 %v1194
        %1289 = vmatmul.bf16.gmra.mxu0 %v1248
        %v1290 = vpop.f32.mrf.mxu0
        %v1291 = vadd.f32 %v1219, %v1290
        %v1292 = vpop.f32.mrf.mxu0
        %v1293 = vadd.f32 %v1224, %v1292
        %1294 = vmatmul.bf16.gmra.mxu0 %v1251
        %v1295 = vpop.f32.mrf.mxu0
        %v1296 = vadd.f32 %v1229, %v1295
        %v1297 = vpop.f32.mrf.mxu0
        %v1298 = vadd.f32 %v1234, %v1297
        %1299 = vdwg.mxu0
        %1300 = vmatpush.bf16.msra.mxu0 0
        %1301 = vmatpush.bf16.msra.mxu0 0
        %1302 = vmatpush.bf16.msra.mxu0 0
        %1303 = vmatpush.bf16.msra.mxu0 %v1260
        %1304 = vmatpush.bf16.msra.mxu0 %v1204
        %1305 = vmatpush.bf16.msra.mxu0 %v1201
        %1306 = vmatpush.bf16.msra.mxu0 %v1198
        %1307 = vmatpush.bf16.msra.mxu0 %v1195
        %1308 = vmatmul.bf16.gmra.mxu0 %v1248
        %v1309 = vpop.f32.mrf.mxu0
        %v1310 = vadd.f32 %v1219, %v1309
        %v1311 = vpop.f32.mrf.mxu0
        %v1312 = vadd.f32 %v1224, %v1311
        %1313 = vmatmul.bf16.gmra.mxu0 %v1251
        %v1314 = vpop.f32.mrf.mxu0
        %v1315 = vadd.f32 %v1229, %v1314
        %v1316 = vpop.f32.mrf.mxu0
        %v1317 = vadd.f32 %v1234, %v1316
        %1318 = vdwg.mxu0
        %vm1319 = vcmp.ge.f32.partialorder %v1272, 0.0
        %vm1320 = vcmp.ge.f32.partialorder %v1291, 0.0
        %vm1321 = vcmp.ge.f32.partialorder %v1310, 0.0
        %vm1322 = vcmp.ge.f32.partialorder %v1274, 0.0
        %vm1323 = vcmp.ge.f32.partialorder %v1293, 0.0
        %vm1324 = vcmp.ge.f32.partialorder %v1312, 0.0
        %vm1325 = vcmp.ge.f32.partialorder %v1277, 0.0
        %vm1326 = vcmp.ge.f32.partialorder %v1296, 0.0
        %vm1327 = vcmp.ge.f32.partialorder %v1315, 0.0
        %vm1328 = vcmp.ge.f32.partialorder %v1279, 0.0
        %vm1329 = vcmp.ge.f32.partialorder %v1298, 0.0
        %vm1330 = vcmp.ge.f32.partialorder %v1317, 0.0
        %v1331 = vmul.f32 %v1272, 0.01
        %v1332 = vmul.f32 %v1291, 0.01
        %v1333 = vmul.f32 %v1310, 0.01
        %v1334 = vmul.f32 %v1274, 0.01
        %v1335 = vmul.f32 %v1293, 0.01
        %v1336 = vmul.f32 %v1312, 0.01
        %v1337 = vmul.f32 %v1277, 0.01
        %v1338 = vmul.f32 %v1296, 0.01
        %v1339 = vmul.f32 %v1315, 0.01
        %v1340 = vmul.f32 %v1279, 0.01
        %v1341 = vmul.f32 %v1298, 0.01
        %v1342 = vmul.f32 %v1317, 0.01
        %v1343 = vsel %vm1319, %v1272, %v1331
        %v1344 = vsel %vm1320, %v1291, %v1332
        %v1345 = vsel %vm1321, %v1310, %v1333
        %v1346 = vsel %vm1322, %v1274, %v1334
        %v1347 = vsel %vm1323, %v1293, %v1335
        %v1348 = vsel %vm1324, %v1312, %v1336
        %v1349 = vsel %vm1325, %v1277, %v1337
        %v1350 = vsel %vm1326, %v1296, %v1338
        %v1351 = vsel %vm1327, %v1315, %v1339
        %v1352 = vsel %vm1328, %v1279, %v1340
        %v1353 = vsel %vm1329, %v1298, %v1341
        %v1354 = vsel %vm1330, %v1317, %v1342
        %v1355 = vpack.c.bf16 %v503, %v503
        %v1356 = vpack.c.bf16 %v504, %v504
        %v1357 = vld [vmem:[#allocation10] sm:$0xff]
        %v1358 = vld [vmem:[#allocation10 + $0x8] sm:$0xf]
        %v1359 = vld [vmem:[#allocation10 + $0xc] sm:$0xff]
        %v1360 = vld [vmem:[#allocation10 + $0x14] sm:$0xf]
        %v1361 = vld [vmem:[#allocation10 + $0x18] sm:$0xff]
        %v1362 = vld [vmem:[#allocation10 + $0x20] sm:$0xf]
        %v1363 = vld [vmem:[#allocation10 + $0x24] sm:$0xff]
        %v1364 = vld [vmem:[#allocation10 + $0x2c] sm:$0xf]
        %v1365 = vld [vmem:[#allocation10 + $0x30] sm:$0xff]
        %v1366 = vld [vmem:[#allocation10 + $0x38] sm:$0xf]
        %v1367 = vld [vmem:[#allocation10 + $0x3c] sm:$0xff]
        %v1368 = vld [vmem:[#allocation10 + $0x44] sm:$0xf]
        %v1369 = vld [vmem:[#allocation10 + $0x48] sm:$0xff]
        %v1370 = vld [vmem:[#allocation10 + $0x50] sm:$0xf]
        %v1371 = vld [vmem:[#allocation10 + $0x54] sm:$0xff]
        %v1372 = vld [vmem:[#allocation10 + $0x5c] sm:$0xf]
        %v1373 = vld [vmem:[#allocation10 + $0x60] sm:$0xff]
        %v1374 = vld [vmem:[#allocation10 + $0x68] sm:$0xf]
        %v1375 = vld [vmem:[#allocation10 + $0x6c] sm:$0xff]
        %v1376 = vld [vmem:[#allocation10 + $0x74] sm:$0xf]
        %v1377 = vld [vmem:[#allocation10 + $0x78] sm:$0xff]
        %v1378 = vld [vmem:[#allocation10 + $0x80] sm:$0xf]
        %v1379 = vld [vmem:[#allocation10 + $0x84] sm:$0xff]
        %v1380 = vld [vmem:[#allocation10 + $0x8c] sm:$0xf]
        %v1381 = vld [vmem:[#allocation10 + $0x90] sm:$0xff]
        %v1382 = vld [vmem:[#allocation10 + $0x98] sm:$0xf]
        %v1383 = vld [vmem:[#allocation10 + $0x9c] sm:$0xff]
        %v1384 = vld [vmem:[#allocation10 + $0xa4] sm:$0xf]
        %v1385 = vld [vmem:[#allocation10 + $0xa8] sm:$0xff]
        %v1386 = vld [vmem:[#allocation10 + $0xb0] sm:$0xf]
        %v1387 = vld [vmem:[#allocation10 + $0xb4] sm:$0xff]
        %v1388 = vld [vmem:[#allocation10 + $0xbc] sm:$0xf]
        %v1389 = vld [vmem:[#allocation10 + $0xc0] sm:$0xff]
        %v1390 = vld [vmem:[#allocation10 + $0xc8] sm:$0xf]
        %v1391 = vld [vmem:[#allocation10 + $0xcc] sm:$0xff]
        %v1392 = vld [vmem:[#allocation10 + $0xd4] sm:$0xf]
        %v1393 = vld [vmem:[#allocation10 + $0xd8] sm:$0xff]
        %v1394 = vld [vmem:[#allocation10 + $0xe0] sm:$0xf]
        %v1395 = vld [vmem:[#allocation10 + $0xe4] sm:$0xff]
        %v1396 = vld [vmem:[#allocation10 + $0xec] sm:$0xf]
        %v1397 = vld [vmem:[#allocation10 + $0xf0] sm:$0xff]
        %v1398 = vld [vmem:[#allocation10 + $0xf8] sm:$0xf]
        %v1399 = vld [vmem:[#allocation10 + $0xfc] sm:$0xff]
        %v1400 = vld [vmem:[#allocation10 + $0x104] sm:$0xf]
        %v1401 = vld [vmem:[#allocation10 + $0x108] sm:$0xff]
        %v1402 = vld [vmem:[#allocation10 + $0x110] sm:$0xf]
        %v1403 = vld [vmem:[#allocation10 + $0x114] sm:$0xff]
        %v1404 = vld [vmem:[#allocation10 + $0x11c] sm:$0xf]
        %v1405 = vld [vmem:[#allocation10 + $0x120] sm:$0xff]
        %v1406 = vld [vmem:[#allocation10 + $0x128] sm:$0xf]
        %v1407 = vld [vmem:[#allocation10 + $0x12c] sm:$0xff]
        %v1408 = vld [vmem:[#allocation10 + $0x134] sm:$0xf]
        %v1409 = vld [vmem:[#allocation10 + $0x138] sm:$0xff]
        %v1410 = vld [vmem:[#allocation10 + $0x140] sm:$0xf]
        %v1411 = vld [vmem:[#allocation10 + $0x144] sm:$0xff]
        %v1412 = vld [vmem:[#allocation10 + $0x14c] sm:$0xf]
        %v1413 = vld [vmem:[#allocation10 + $0x150] sm:$0xff]
        %v1414 = vld [vmem:[#allocation10 + $0x158] sm:$0xf]
        %v1415 = vld [vmem:[#allocation10 + $0x15c] sm:$0xff]
        %v1416 = vld [vmem:[#allocation10 + $0x164] sm:$0xf]
        %v1417 = vld [vmem:[#allocation10 + $0x168] sm:$0xff]
        %v1418 = vld [vmem:[#allocation10 + $0x170] sm:$0xf]
        %v1419 = vld [vmem:[#allocation10 + $0x174] sm:$0xff]
        %v1420 = vld [vmem:[#allocation10 + $0x17c] sm:$0xf]
        %v1485 = vunpack.c.l.b16 %v1357
        %v1486 = vunpack.c.h.b16 %v1357
        %v1487 = vunpack.c.l.b16 %v1358
        %v1488 = vunpack.c.l.b16 %v1359
        %v1489 = vunpack.c.h.b16 %v1359
        %v1490 = vunpack.c.l.b16 %v1360
        %v1491 = vunpack.c.l.b16 %v1361
        %v1492 = vunpack.c.h.b16 %v1361
        %v1493 = vunpack.c.l.b16 %v1362
        %v1494 = vunpack.c.l.b16 %v1363
        %v1495 = vunpack.c.h.b16 %v1363
        %v1496 = vunpack.c.l.b16 %v1364
        %v1497 = vunpack.c.l.b16 %v1365
        %v1498 = vunpack.c.h.b16 %v1365
        %v1499 = vunpack.c.l.b16 %v1366
        %v1500 = vunpack.c.l.b16 %v1367
        %v1501 = vunpack.c.h.b16 %v1367
        %v1502 = vunpack.c.l.b16 %v1368
        %v1503 = vunpack.c.l.b16 %v1369
        %v1504 = vunpack.c.h.b16 %v1369
        %v1505 = vunpack.c.l.b16 %v1370
        %v1506 = vunpack.c.l.b16 %v1371
        %v1507 = vunpack.c.h.b16 %v1371
        %v1508 = vunpack.c.l.b16 %v1372
        %v1509 = vunpack.c.l.b16 %v1373
        %v1510 = vunpack.c.h.b16 %v1373
        %v1511 = vunpack.c.l.b16 %v1374
        %v1512 = vunpack.c.l.b16 %v1375
        %v1513 = vunpack.c.h.b16 %v1375
        %v1514 = vunpack.c.l.b16 %v1376
        %v1515 = vunpack.c.l.b16 %v1377
        %v1516 = vunpack.c.h.b16 %v1377
        %v1517 = vunpack.c.l.b16 %v1378
        %v1518 = vunpack.c.l.b16 %v1379
        %v1519 = vunpack.c.h.b16 %v1379
        %v1520 = vunpack.c.l.b16 %v1380
        %v1521 = vunpack.c.l.b16 %v1381
        %v1522 = vunpack.c.h.b16 %v1381
        %v1523 = vunpack.c.l.b16 %v1382
        %v1524 = vunpack.c.l.b16 %v1383
        %v1525 = vunpack.c.h.b16 %v1383
        %v1526 = vunpack.c.l.b16 %v1384
        %v1527 = vunpack.c.l.b16 %v1385
        %v1528 = vunpack.c.h.b16 %v1385
        %v1529 = vunpack.c.l.b16 %v1386
        %v1530 = vunpack.c.l.b16 %v1387
        %v1531 = vunpack.c.h.b16 %v1387
        %v1532 = vunpack.c.l.b16 %v1388
        %v1533 = vunpack.c.l.b16 %v1389
        %v1534 = vunpack.c.h.b16 %v1389
        %v1535 = vunpack.c.l.b16 %v1390
        %v1536 = vunpack.c.l.b16 %v1391
        %v1537 = vunpack.c.h.b16 %v1391
        %v1538 = vunpack.c.l.b16 %v1392
        %v1539 = vunpack.c.l.b16 %v1393
        %v1540 = vunpack.c.h.b16 %v1393
        %v1541 = vunpack.c.l.b16 %v1394
        %v1542 = vunpack.c.l.b16 %v1395
        %v1543 = vunpack.c.h.b16 %v1395
        %v1544 = vunpack.c.l.b16 %v1396
        %v1545 = vunpack.c.l.b16 %v1397
        %v1546 = vunpack.c.h.b16 %v1397
        %v1547 = vunpack.c.l.b16 %v1398
        %v1548 = vunpack.c.l.b16 %v1399
        %v1549 = vunpack.c.h.b16 %v1399
        %v1550 = vunpack.c.l.b16 %v1400
        %v1551 = vunpack.c.l.b16 %v1401
        %v1552 = vunpack.c.h.b16 %v1401
        %v1553 = vunpack.c.l.b16 %v1402
        %v1554 = vunpack.c.l.b16 %v1403
        %v1555 = vunpack.c.h.b16 %v1403
        %v1556 = vunpack.c.l.b16 %v1404
        %v1557 = vunpack.c.l.b16 %v1405
        %v1558 = vunpack.c.h.b16 %v1405
        %v1559 = vunpack.c.l.b16 %v1406
        %v1560 = vunpack.c.l.b16 %v1407
        %v1561 = vunpack.c.h.b16 %v1407
        %v1562 = vunpack.c.l.b16 %v1408
        %v1563 = vunpack.c.l.b16 %v1409
        %v1564 = vunpack.c.h.b16 %v1409
        %v1565 = vunpack.c.l.b16 %v1410
        %v1566 = vunpack.c.l.b16 %v1411
        %v1567 = vunpack.c.h.b16 %v1411
        %v1568 = vunpack.c.l.b16 %v1412
        %v1569 = vunpack.c.l.b16 %v1413
        %v1570 = vunpack.c.h.b16 %v1413
        %v1571 = vunpack.c.l.b16 %v1414
        %v1572 = vunpack.c.l.b16 %v1415
        %v1573 = vunpack.c.h.b16 %v1415
        %v1574 = vunpack.c.l.b16 %v1416
        %v1575 = vunpack.c.l.b16 %v1417
        %v1576 = vunpack.c.h.b16 %v1417
        %v1577 = vunpack.c.l.b16 %v1418
        %v1578 = vunpack.c.l.b16 %v1419
        %v1579 = vunpack.c.h.b16 %v1419
        %v1580 = vunpack.c.l.b16 %v1420
        %v1581 = vpack.c.b16 %v1488, %v1485
        %v1582 = vpack.c.b16 %v1489, %v1486
        %v1583 = vpack.c.b16 %v1490, %v1487
        %v1584 = vpack.c.b16 %v1494, %v1491
        %v1585 = vpack.c.b16 %v1495, %v1492
        %v1586 = vpack.c.b16 %v1496, %v1493
        %v1587 = vpack.c.b16 %v1500, %v1497
        %v1588 = vpack.c.b16 %v1501, %v1498
        %v1589 = vpack.c.b16 %v1502, %v1499
        %v1590 = vpack.c.b16 %v1506, %v1503
        %v1591 = vpack.c.b16 %v1507, %v1504
        %v1592 = vpack.c.b16 %v1508, %v1505
        %v1593 = vpack.c.b16 %v1512, %v1509
        %v1594 = vpack.c.b16 %v1513, %v1510
        %v1595 = vpack.c.b16 %v1514, %v1511
        %v1596 = vpack.c.b16 %v1518, %v1515
        %v1597 = vpack.c.b16 %v1519, %v1516
        %v1598 = vpack.c.b16 %v1520, %v1517
        %v1599 = vpack.c.b16 %v1524, %v1521
        %v1600 = vpack.c.b16 %v1525, %v1522
        %v1601 = vpack.c.b16 %v1526, %v1523
        %v1602 = vpack.c.b16 %v1530, %v1527
        %v1603 = vpack.c.b16 %v1531, %v1528
        %v1604 = vpack.c.b16 %v1532, %v1529
        %v1605 = vpack.c.b16 %v1536, %v1533
        %v1606 = vpack.c.b16 %v1537, %v1534
        %v1607 = vpack.c.b16 %v1538, %v1535
        %v1608 = vpack.c.b16 %v1542, %v1539
        %v1609 = vpack.c.b16 %v1543, %v1540
        %v1610 = vpack.c.b16 %v1544, %v1541
        %v1611 = vpack.c.b16 %v1548, %v1545
        %v1612 = vpack.c.b16 %v1549, %v1546
        %v1613 = vpack.c.b16 %v1550, %v1547
        %v1614 = vpack.c.b16 %v1554, %v1551
        %v1615 = vpack.c.b16 %v1555, %v1552
        %v1616 = vpack.c.b16 %v1556, %v1553
        %v1617 = vpack.c.b16 %v1560, %v1557
        %v1618 = vpack.c.b16 %v1561, %v1558
        %v1619 = vpack.c.b16 %v1562, %v1559
        %v1620 = vpack.c.b16 %v1566, %v1563
        %v1621 = vpack.c.b16 %v1567, %v1564
        %v1622 = vpack.c.b16 %v1568, %v1565
        %v1623 = vpack.c.b16 %v1572, %v1569
        %v1624 = vpack.c.b16 %v1573, %v1570
        %v1625 = vpack.c.b16 %v1574, %v1571
        %v1626 = vpack.c.b16 %v1578, %v1575
        %v1627 = vpack.c.b16 %v1579, %v1576
        %v1628 = vpack.c.b16 %v1580, %v1577
        %1677 = vmatpush.bf16.msra.mxu0 %v1602
        %1678 = vmatpush.bf16.msra.mxu0 %v1599
        %1679 = vmatpush.bf16.msra.mxu0 %v1596
        %1680 = vmatpush.bf16.msra.mxu0 %v1593
        %1681 = vmatpush.bf16.msra.mxu0 %v1590
        %1682 = vmatpush.bf16.msra.mxu0 %v1587
        %1683 = vmatpush.bf16.msra.mxu0 %v1584
        %1684 = vmatpush.bf16.msra.mxu0 %v1581
        %1685 = vmatmul.bf16.gmra.mxu0 %v1355
        %v1686 = vpop.f32.mrf.mxu0
        %v1687 = vadd.f32 0.0, %v1686
        %v1688 = vpop.f32.mrf.mxu0
        %1689 = vdwg.mxu0
        %1690 = vmatpush.bf16.msra.mxu0 %v1626
        %1691 = vmatpush.bf16.msra.mxu0 %v1623
        %1692 = vmatpush.bf16.msra.mxu0 %v1620
        %1693 = vmatpush.bf16.msra.mxu0 %v1617
        %1694 = vmatpush.bf16.msra.mxu0 %v1614
        %1695 = vmatpush.bf16.msra.mxu0 %v1611
        %1696 = vmatpush.bf16.msra.mxu0 %v1608
        %1697 = vmatpush.bf16.msra.mxu0 %v1605
        %1698 = vmatmul.bf16.gmra.mxu0 %v1356
        %v1699 = vpop.f32.mrf.mxu0
        %v1700 = vadd.f32 %v1687, %v1699
        %v1701 = vpop.f32.mrf.mxu0
        %1702 = vdwg.mxu0
        %1703 = vmatpush.bf16.msra.mxu0 %v1603
        %1704 = vmatpush.bf16.msra.mxu0 %v1600
        %1705 = vmatpush.bf16.msra.mxu0 %v1597
        %1706 = vmatpush.bf16.msra.mxu0 %v1594
        %1707 = vmatpush.bf16.msra.mxu0 %v1591
        %1708 = vmatpush.bf16.msra.mxu0 %v1588
        %1709 = vmatpush.bf16.msra.mxu0 %v1585
        %1710 = vmatpush.bf16.msra.mxu0 %v1582
        %1711 = vmatmul.bf16.gmra.mxu0 %v1355
        %v1712 = vpop.f32.mrf.mxu0
        %v1713 = vadd.f32 0.0, %v1712
        %v1714 = vpop.f32.mrf.mxu0
        %1715 = vdwg.mxu0
        %1716 = vmatpush.bf16.msra.mxu0 %v1627
        %1717 = vmatpush.bf16.msra.mxu0 %v1624
        %1718 = vmatpush.bf16.msra.mxu0 %v1621
        %1719 = vmatpush.bf16.msra.mxu0 %v1618
        %1720 = vmatpush.bf16.msra.mxu0 %v1615
        %1721 = vmatpush.bf16.msra.mxu0 %v1612
        %1722 = vmatpush.bf16.msra.mxu0 %v1609
        %1723 = vmatpush.bf16.msra.mxu0 %v1606
        %1724 = vmatmul.bf16.gmra.mxu0 %v1356
        %v1725 = vpop.f32.mrf.mxu0
        %v1726 = vadd.f32 %v1713, %v1725
        %v1727 = vpop.f32.mrf.mxu0
        %1728 = vdwg.mxu0
        %1729 = vmatpush.bf16.msra.mxu0 %v1604
        %1730 = vmatpush.bf16.msra.mxu0 %v1601
        %1731 = vmatpush.bf16.msra.mxu0 %v1598
        %1732 = vmatpush.bf16.msra.mxu0 %v1595
        %1733 = vmatpush.bf16.msra.mxu0 %v1592
        %1734 = vmatpush.bf16.msra.mxu0 %v1589
        %1735 = vmatpush.bf16.msra.mxu0 %v1586
        %1736 = vmatpush.bf16.msra.mxu0 %v1583
        %1737 = vmatmul.bf16.gmra.mxu0 %v1355
        %v1738 = vpop.f32.mrf.mxu0
        %v1739 = vadd.f32 0.0, %v1738
        %v1740 = vpop.f32.mrf.mxu0
        %1741 = vdwg.mxu0
        %1742 = vmatpush.bf16.msra.mxu0 %v1628
        %1743 = vmatpush.bf16.msra.mxu0 %v1625
        %1744 = vmatpush.bf16.msra.mxu0 %v1622
        %1745 = vmatpush.bf16.msra.mxu0 %v1619
        %1746 = vmatpush.bf16.msra.mxu0 %v1616
        %1747 = vmatpush.bf16.msra.mxu0 %v1613
        %1748 = vmatpush.bf16.msra.mxu0 %v1610
        %1749 = vmatpush.bf16.msra.mxu0 %v1607
        %1750 = vmatmul.bf16.gmra.mxu0 %v1356
        %v1751 = vpop.f32.mrf.mxu0
        %v1752 = vadd.f32 %v1739, %v1751
        %v1753 = vpop.f32.mrf.mxu0
        %1754 = vdwg.mxu0
        %v1755 = vpack.c.bf16 %v1346, %v1343
        %v1756 = vpack.c.bf16 %v1347, %v1344
        %v1757 = vpack.c.bf16 %v1348, %v1345
        %v1758 = vpack.c.bf16 %v1352, %v1349
        %v1759 = vpack.c.bf16 %v1353, %v1350
        %v1760 = vpack.c.bf16 %v1354, %v1351
        %v1761 = vpack.c.bf16 %v1700, %v1700
        %v1762 = vpack.c.bf16 %v1726, %v1726
        %v1763 = vpack.c.bf16 %v1752, %v1752
        %v1764 = vld [vmem:[#allocation11] sm:$0xf]
        %v1765 = vld [vmem:[#allocation11 + $0x4] sm:$0xf]
        %v1766 = vld [vmem:[#allocation11 + $0x8] sm:$0xf]
        %v1767 = vld [vmem:[#allocation11 + $0xc] sm:$0xf]
        %v1772 = vunpack.c.l.b16 %v1764
        %v1773 = vunpack.c.l.b16 %v1765
        %v1774 = vunpack.c.l.b16 %v1766
        %v1775 = vunpack.c.l.b16 %v1767
        %v1776 = vpack.c.b16 %v1773, %v1772
        %v1777 = vpack.c.b16 %v1775, %v1774
        %vm1778 = vcmask 326656
        %v1780 = vsel %vm1778, %v1776, 0
        %v1783 = vsel %vm1778, %v1777, 0
        %v1786 = vsel %vm540, %v1761, 0
        %v1789 = vsel %vm540, %v1762, 0
        %v1792 = vsel %vm540, %v1763, 0
        %1794 = vmatpush.bf16.msra.mxu0 0
        %1795 = vmatpush.bf16.msra.mxu0 0
        %1796 = vmatpush.bf16.msra.mxu0 0
        %1797 = vmatpush.bf16.msra.mxu0 0
        %1798 = vmatpush.bf16.msra.mxu0 0
        %1799 = vmatpush.bf16.msra.mxu0 %v1786
        %1800 = vmatpush.bf16.msra.mxu0 %v1758
        %1801 = vmatpush.bf16.msra.mxu0 %v1755
        %1802 = vmatmul.bf16.gmra.mxu0 %v1780
        %v1803 = vpop.f32.mrf.mxu0
        %v1804 = vadd.f32 0.0, %v1803
        %v1805 = vpop.f32.mrf.mxu0
        %v1806 = vadd.f32 0.0, %v1805
        %1807 = vmatmul.bf16.gmra.mxu0 %v1783
        %v1808 = vpop.f32.mrf.mxu0
        %v1809 = vadd.f32 0.0, %v1808
        %v1810 = vpop.f32.mrf.mxu0
        %v1811 = vadd.f32 0.0, %v1810
        %1812 = vdwg.mxu0
        %1813 = vmatpush.bf16.msra.mxu0 0
        %1814 = vmatpush.bf16.msra.mxu0 0
        %1815 = vmatpush.bf16.msra.mxu0 0
        %1816 = vmatpush.bf16.msra.mxu0 0
        %1817 = vmatpush.bf16.msra.mxu0 0
        %1818 = vmatpush.bf16.msra.mxu0 %v1789
        %1819 = vmatpush.bf16.msra.mxu0 %v1759
        %1820 = vmatpush.bf16.msra.mxu0 %v1756
        %1821 = vmatmul.bf16.gmra.mxu0 %v1780
        %v1822 = vpop.f32.mrf.mxu0
        %v1823 = vadd.f32 0.0, %v1822
        %v1824 = vpop.f32.mrf.mxu0
        %v1825 = vadd.f32 0.0, %v1824
        %1826 = vmatmul.bf16.gmra.mxu0 %v1783
        %v1827 = vpop.f32.mrf.mxu0
        %v1828 = vadd.f32 0.0, %v1827
        %v1829 = vpop.f32.mrf.mxu0
        %v1830 = vadd.f32 0.0, %v1829
        %1831 = vdwg.mxu0
        %1832 = vmatpush.bf16.msra.mxu0 0
        %1833 = vmatpush.bf16.msra.mxu0 0
        %1834 = vmatpush.bf16.msra.mxu0 0
        %1835 = vmatpush.bf16.msra.mxu0 0
        %1836 = vmatpush.bf16.msra.mxu0 0
        %1837 = vmatpush.bf16.msra.mxu0 %v1792
        %1838 = vmatpush.bf16.msra.mxu0 %v1760
        %1839 = vmatpush.bf16.msra.mxu0 %v1757
        %1840 = vmatmul.bf16.gmra.mxu0 %v1780
        %v1841 = vpop.f32.mrf.mxu0
        %v1842 = vadd.f32 0.0, %v1841
        %v1843 = vpop.f32.mrf.mxu0
        %v1844 = vadd.f32 0.0, %v1843
        %1845 = vmatmul.bf16.gmra.mxu0 %v1783
        %v1846 = vpop.f32.mrf.mxu0
        %v1847 = vadd.f32 0.0, %v1846
        %v1848 = vpop.f32.mrf.mxu0
        %v1849 = vadd.f32 0.0, %v1848
        %1850 = vdwg.mxu0
        %v1851 = vpack.c.bf16 %v1804, %v1804
        %v1852 = vpack.c.bf16 %v1823, %v1823
        %v1853 = vpack.c.bf16 %v1842, %v1842
        %v1854 = vpack.c.bf16 %v1806, %v1806
        %v1855 = vpack.c.bf16 %v1825, %v1825
        %v1856 = vpack.c.bf16 %v1844, %v1844
        %v1857 = vpack.c.bf16 %v1809, %v1809
        %v1858 = vpack.c.bf16 %v1828, %v1828
        %v1859 = vpack.c.bf16 %v1847, %v1847
        %v1860 = vpack.c.bf16 %v1811, %v1811
        %v1861 = vpack.c.bf16 %v1830, %v1830
        %v1862 = vpack.c.bf16 %v1849, %v1849
        %v1863 = vld [vmem:[#allocation13] sm:$0xff]
        %v1864 = vld [vmem:[#allocation13 + $0x8] sm:$0xff]
        %v1865 = vld [vmem:[#allocation13 + $0x10] sm:$0xff]
        %v1866 = vld [vmem:[#allocation13 + $0x18] sm:$0xff]
        %v1867 = vld [vmem:[#allocation13 + $0x20] sm:$0xff]
        %v1868 = vld [vmem:[#allocation13 + $0x28] sm:$0xff]
        %v1869 = vld [vmem:[#allocation13 + $0x30] sm:$0xff]
        %v1870 = vld [vmem:[#allocation13 + $0x38] sm:$0xff]
        %v1871 = vld [vmem:[#allocation13 + $0x40] sm:$0xff]
        %v1872 = vld [vmem:[#allocation13 + $0x48] sm:$0xff]
        %v1873 = vld [vmem:[#allocation13 + $0x50] sm:$0xff]
        %v1874 = vld [vmem:[#allocation13 + $0x58] sm:$0xff]
        %v1875 = vld [vmem:[#allocation13 + $0x60] sm:$0xff]
        %v1876 = vld [vmem:[#allocation13 + $0x68] sm:$0xff]
        %v1877 = vld [vmem:[#allocation13 + $0x70] sm:$0xff]
        %v1878 = vld [vmem:[#allocation13 + $0x78] sm:$0xff]
        %v1879 = vld [vmem:[#allocation13 + $0x80] sm:$0xff]
        %v1880 = vld [vmem:[#allocation13 + $0x88] sm:$0xff]
        %v1881 = vld [vmem:[#allocation13 + $0x90] sm:$0xff]
        %v1882 = vld [vmem:[#allocation13 + $0x98] sm:$0xff]
        %v1883 = vld [vmem:[#allocation13 + $0xa0] sm:$0xff]
        %v1884 = vld [vmem:[#allocation13 + $0xa8] sm:$0xff]
        %v1885 = vld [vmem:[#allocation13 + $0xb0] sm:$0xff]
        %v1886 = vld [vmem:[#allocation13 + $0xb8] sm:$0xff]
        %v1887 = vld [vmem:[#allocation13 + $0xc0] sm:$0xff]
        %v1888 = vld [vmem:[#allocation13 + $0xc8] sm:$0xff]
        %v1889 = vld [vmem:[#allocation13 + $0xd0] sm:$0xff]
        %v1890 = vld [vmem:[#allocation13 + $0xd8] sm:$0xff]
        %v1891 = vld [vmem:[#allocation13 + $0xe0] sm:$0xff]
        %v1892 = vld [vmem:[#allocation13 + $0xe8] sm:$0xff]
        %v1893 = vld [vmem:[#allocation13 + $0xf0] sm:$0xff]
        %v1894 = vld [vmem:[#allocation13 + $0xf8] sm:$0xff]
        %v1895 = vld [vmem:[#allocation13 + $0x100] sm:$0xff]
        %v1896 = vld [vmem:[#allocation13 + $0x108] sm:$0xff]
        %v1897 = vld [vmem:[#allocation13 + $0x110] sm:$0xff]
        %v1898 = vld [vmem:[#allocation13 + $0x118] sm:$0xff]
        %v1899 = vld [vmem:[#allocation13 + $0x120] sm:$0xff]
        %v1900 = vld [vmem:[#allocation13 + $0x128] sm:$0xff]
        %v1901 = vld [vmem:[#allocation13 + $0x130] sm:$0xff]
        %v1902 = vld [vmem:[#allocation13 + $0x138] sm:$0xff]
        %v1903 = vld [vmem:[#allocation13 + $0x140] sm:$0xff]
        %v1904 = vld [vmem:[#allocation13 + $0x148] sm:$0xff]
        %v1905 = vld [vmem:[#allocation13 + $0x150] sm:$0xff]
        %v1906 = vld [vmem:[#allocation13 + $0x158] sm:$0xff]
        %v1907 = vld [vmem:[#allocation13 + $0x160] sm:$0xff]
        %v1908 = vld [vmem:[#allocation13 + $0x168] sm:$0xff]
        %v1909 = vld [vmem:[#allocation13 + $0x170] sm:$0xff]
        %v1910 = vld [vmem:[#allocation13 + $0x178] sm:$0xff]
        %v1911 = vld [vmem:[#allocation13 + $0x180] sm:$0xff]
        %v1912 = vld [vmem:[#allocation13 + $0x188] sm:$0xff]
        %v1913 = vld [vmem:[#allocation13 + $0x190] sm:$0xff]
        %v1914 = vld [vmem:[#allocation13 + $0x198] sm:$0xff]
        %v1915 = vld [vmem:[#allocation13 + $0x1a0] sm:$0xff]
        %v1916 = vld [vmem:[#allocation13 + $0x1a8] sm:$0xff]
        %v1917 = vld [vmem:[#allocation13 + $0x1b0] sm:$0xff]
        %v1918 = vld [vmem:[#allocation13 + $0x1b8] sm:$0xff]
        %v1919 = vld [vmem:[#allocation13 + $0x1c0] sm:$0xff]
        %v1920 = vld [vmem:[#allocation13 + $0x1c8] sm:$0xff]
        %v1921 = vld [vmem:[#allocation13 + $0x1d0] sm:$0xff]
        %v1922 = vld [vmem:[#allocation13 + $0x1d8] sm:$0xff]
        %v1923 = vld [vmem:[#allocation13 + $0x1e0] sm:$0xff]
        %v1924 = vld [vmem:[#allocation13 + $0x1e8] sm:$0xff]
        %v1925 = vld [vmem:[#allocation13 + $0x1f0] sm:$0xff]
        %v1926 = vld [vmem:[#allocation13 + $0x1f8] sm:$0xff]
        %v1927 = vld [vmem:[#allocation13 + $0x200] sm:$0xff]
        %v1928 = vld [vmem:[#allocation13 + $0x208] sm:$0xff]
        %v1929 = vld [vmem:[#allocation13 + $0x210] sm:$0xff]
        %v1930 = vld [vmem:[#allocation13 + $0x218] sm:$0xff]
        %v1931 = vld [vmem:[#allocation13 + $0x220] sm:$0xff]
        %v1932 = vld [vmem:[#allocation13 + $0x228] sm:$0xff]
        %v1933 = vld [vmem:[#allocation13 + $0x230] sm:$0xff]
        %v1934 = vld [vmem:[#allocation13 + $0x238] sm:$0xff]
        %v1935 = vld [vmem:[#allocation13 + $0x240] sm:$0xff]
        %v1936 = vld [vmem:[#allocation13 + $0x248] sm:$0xff]
        %v1937 = vld [vmem:[#allocation13 + $0x250] sm:$0xff]
        %v1938 = vld [vmem:[#allocation13 + $0x258] sm:$0xff]
        %v1939 = vld [vmem:[#allocation13 + $0x260] sm:$0xff]
        %v1940 = vld [vmem:[#allocation13 + $0x268] sm:$0xff]
        %v1941 = vld [vmem:[#allocation13 + $0x270] sm:$0xff]
        %v1942 = vld [vmem:[#allocation13 + $0x278] sm:$0xff]
        %v1943 = vld [vmem:[#allocation13 + $0x280] sm:$0xff]
        %v1944 = vld [vmem:[#allocation13 + $0x288] sm:$0xff]
        %v1945 = vld [vmem:[#allocation13 + $0x290] sm:$0xff]
        %v1946 = vld [vmem:[#allocation13 + $0x298] sm:$0xff]
        %v1947 = vld [vmem:[#allocation13 + $0x2a0] sm:$0xff]
        %v1948 = vld [vmem:[#allocation13 + $0x2a8] sm:$0xff]
        %v1949 = vld [vmem:[#allocation13 + $0x2b0] sm:$0xff]
        %v1950 = vld [vmem:[#allocation13 + $0x2b8] sm:$0xff]
        %v1951 = vld [vmem:[#allocation13 + $0x2c0] sm:$0xff]
        %v1952 = vld [vmem:[#allocation13 + $0x2c8] sm:$0xff]
        %v1953 = vld [vmem:[#allocation13 + $0x2d0] sm:$0xff]
        %v1954 = vld [vmem:[#allocation13 + $0x2d8] sm:$0xff]
        %v1955 = vld [vmem:[#allocation13 + $0x2e0] sm:$0xff]
        %v1956 = vld [vmem:[#allocation13 + $0x2e8] sm:$0xff]
        %v1957 = vld [vmem:[#allocation13 + $0x2f0] sm:$0xff]
        %v1958 = vld [vmem:[#allocation13 + $0x2f8] sm:$0xff]
        %v1959 = vld [vmem:[#allocation13 + $0x300] sm:$0xff]
        %v1960 = vld [vmem:[#allocation13 + $0x308] sm:$0xff]
        %v1961 = vld [vmem:[#allocation13 + $0x310] sm:$0xff]
        %v1962 = vld [vmem:[#allocation13 + $0x318] sm:$0xff]
        %v1963 = vld [vmem:[#allocation13 + $0x320] sm:$0xff]
        %v1964 = vld [vmem:[#allocation13 + $0x328] sm:$0xff]
        %v1965 = vld [vmem:[#allocation13 + $0x330] sm:$0xff]
        %v1966 = vld [vmem:[#allocation13 + $0x338] sm:$0xff]
        %v1967 = vld [vmem:[#allocation13 + $0x340] sm:$0xff]
        %v1968 = vld [vmem:[#allocation13 + $0x348] sm:$0xff]
        %v1969 = vld [vmem:[#allocation13 + $0x350] sm:$0xff]
        %v1970 = vld [vmem:[#allocation13 + $0x358] sm:$0xff]
        %v1971 = vld [vmem:[#allocation13 + $0x360] sm:$0xff]
        %v1972 = vld [vmem:[#allocation13 + $0x368] sm:$0xff]
        %v1973 = vld [vmem:[#allocation13 + $0x370] sm:$0xff]
        %v1974 = vld [vmem:[#allocation13 + $0x378] sm:$0xff]
        %v1975 = vld [vmem:[#allocation13 + $0x380] sm:$0xff]
        %v1976 = vld [vmem:[#allocation13 + $0x388] sm:$0xff]
        %v1977 = vld [vmem:[#allocation13 + $0x390] sm:$0xff]
        %v1978 = vld [vmem:[#allocation13 + $0x398] sm:$0xff]
        %v1979 = vld [vmem:[#allocation13 + $0x3a0] sm:$0xff]
        %v1980 = vld [vmem:[#allocation13 + $0x3a8] sm:$0xff]
        %v1981 = vld [vmem:[#allocation13 + $0x3b0] sm:$0xff]
        %v1982 = vld [vmem:[#allocation13 + $0x3b8] sm:$0xff]
        %v1983 = vld [vmem:[#allocation13 + $0x3c0] sm:$0xff]
        %v1984 = vld [vmem:[#allocation13 + $0x3c8] sm:$0xff]
        %v1985 = vld [vmem:[#allocation13 + $0x3d0] sm:$0xff]
        %v1986 = vld [vmem:[#allocation13 + $0x3d8] sm:$0xff]
        %v1987 = vld [vmem:[#allocation13 + $0x3e0] sm:$0xff]
        %v1988 = vld [vmem:[#allocation13 + $0x3e8] sm:$0xff]
        %v1989 = vld [vmem:[#allocation13 + $0x3f0] sm:$0xff]
        %v1990 = vld [vmem:[#allocation13 + $0x3f8] sm:$0xff]
        %v1991 = vld [vmem:[#allocation13 + $0x400] sm:$0xff]
        %v1992 = vld [vmem:[#allocation13 + $0x408] sm:$0xff]
        %v1993 = vld [vmem:[#allocation13 + $0x410] sm:$0xff]
        %v1994 = vld [vmem:[#allocation13 + $0x418] sm:$0xff]
        %v1995 = vld [vmem:[#allocation13 + $0x420] sm:$0xff]
        %v1996 = vld [vmem:[#allocation13 + $0x428] sm:$0xff]
        %v1997 = vld [vmem:[#allocation13 + $0x430] sm:$0xff]
        %v1998 = vld [vmem:[#allocation13 + $0x438] sm:$0xff]
        %v1999 = vld [vmem:[#allocation13 + $0x440] sm:$0xff]
        %v2000 = vld [vmem:[#allocation13 + $0x448] sm:$0xff]
        %v2001 = vld [vmem:[#allocation13 + $0x450] sm:$0xff]
        %v2002 = vld [vmem:[#allocation13 + $0x458] sm:$0xff]
        %v2003 = vld [vmem:[#allocation13 + $0x460] sm:$0xff]
        %v2004 = vld [vmem:[#allocation13 + $0x468] sm:$0xff]
        %v2005 = vld [vmem:[#allocation13 + $0x470] sm:$0xff]
        %v2006 = vld [vmem:[#allocation13 + $0x478] sm:$0xff]
        %v2007 = vld [vmem:[#allocation13 + $0x480] sm:$0xff]
        %v2008 = vld [vmem:[#allocation13 + $0x488] sm:$0xff]
        %v2009 = vld [vmem:[#allocation13 + $0x490] sm:$0xff]
        %v2010 = vld [vmem:[#allocation13 + $0x498] sm:$0xff]
        %v2011 = vld [vmem:[#allocation13 + $0x4a0] sm:$0xff]
        %v2012 = vld [vmem:[#allocation13 + $0x4a8] sm:$0xff]
        %v2013 = vld [vmem:[#allocation13 + $0x4b0] sm:$0xff]
        %v2014 = vld [vmem:[#allocation13 + $0x4b8] sm:$0xff]
        %v2015 = vld [vmem:[#allocation13 + $0x4c0] sm:$0xff]
        %v2016 = vld [vmem:[#allocation13 + $0x4c8] sm:$0xff]
        %v2017 = vld [vmem:[#allocation13 + $0x4d0] sm:$0xff]
        %v2018 = vld [vmem:[#allocation13 + $0x4d8] sm:$0xff]
        %v2019 = vld [vmem:[#allocation13 + $0x4e0] sm:$0xff]
        %v2020 = vld [vmem:[#allocation13 + $0x4e8] sm:$0xff]
        %v2021 = vld [vmem:[#allocation13 + $0x4f0] sm:$0xff]
        %v2022 = vld [vmem:[#allocation13 + $0x4f8] sm:$0xff]
        %v2023 = vld [vmem:[#allocation13 + $0x500] sm:$0xff]
        %v2024 = vld [vmem:[#allocation13 + $0x508] sm:$0xff]
        %v2025 = vld [vmem:[#allocation13 + $0x510] sm:$0xff]
        %v2026 = vld [vmem:[#allocation13 + $0x518] sm:$0xff]
        %v2027 = vld [vmem:[#allocation13 + $0x520] sm:$0xff]
        %v2028 = vld [vmem:[#allocation13 + $0x528] sm:$0xff]
        %v2029 = vld [vmem:[#allocation13 + $0x530] sm:$0xff]
        %v2030 = vld [vmem:[#allocation13 + $0x538] sm:$0xff]
        %v2031 = vld [vmem:[#allocation13 + $0x540] sm:$0xff]
        %v2032 = vld [vmem:[#allocation13 + $0x548] sm:$0xff]
        %v2033 = vld [vmem:[#allocation13 + $0x550] sm:$0xff]
        %v2034 = vld [vmem:[#allocation13 + $0x558] sm:$0xff]
        %v2035 = vld [vmem:[#allocation13 + $0x560] sm:$0xff]
        %v2036 = vld [vmem:[#allocation13 + $0x568] sm:$0xff]
        %v2037 = vld [vmem:[#allocation13 + $0x570] sm:$0xff]
        %v2038 = vld [vmem:[#allocation13 + $0x578] sm:$0xff]
        %v2039 = vld [vmem:[#allocation13 + $0x580] sm:$0xff]
        %v2040 = vld [vmem:[#allocation13 + $0x588] sm:$0xff]
        %v2041 = vld [vmem:[#allocation13 + $0x590] sm:$0xff]
        %v2042 = vld [vmem:[#allocation13 + $0x598] sm:$0xff]
        %v2043 = vld [vmem:[#allocation13 + $0x5a0] sm:$0xff]
        %v2044 = vld [vmem:[#allocation13 + $0x5a8] sm:$0xff]
        %v2045 = vld [vmem:[#allocation13 + $0x5b0] sm:$0xff]
        %v2046 = vld [vmem:[#allocation13 + $0x5b8] sm:$0xff]
        %v2047 = vld [vmem:[#allocation13 + $0x5c0] sm:$0xff]
        %v2048 = vld [vmem:[#allocation13 + $0x5c8] sm:$0xff]
        %v2049 = vld [vmem:[#allocation13 + $0x5d0] sm:$0xff]
        %v2050 = vld [vmem:[#allocation13 + $0x5d8] sm:$0xff]
        %v2051 = vld [vmem:[#allocation13 + $0x5e0] sm:$0xff]
        %v2052 = vld [vmem:[#allocation13 + $0x5e8] sm:$0xff]
        %v2053 = vld [vmem:[#allocation13 + $0x5f0] sm:$0xff]
        %v2054 = vld [vmem:[#allocation13 + $0x5f8] sm:$0xff]
        %v2055 = vld [vmem:[#allocation13 + $0x600] sm:$0xff]
        %v2056 = vld [vmem:[#allocation13 + $0x608] sm:$0xff]
        %v2057 = vld [vmem:[#allocation13 + $0x610] sm:$0xff]
        %v2058 = vld [vmem:[#allocation13 + $0x618] sm:$0xff]
        %v2059 = vld [vmem:[#allocation13 + $0x620] sm:$0xff]
        %v2060 = vld [vmem:[#allocation13 + $0x628] sm:$0xff]
        %v2061 = vld [vmem:[#allocation13 + $0x630] sm:$0xff]
        %v2062 = vld [vmem:[#allocation13 + $0x638] sm:$0xff]
        %v2063 = vld [vmem:[#allocation13 + $0x640] sm:$0xff]
        %v2064 = vld [vmem:[#allocation13 + $0x648] sm:$0xff]
        %v2065 = vld [vmem:[#allocation13 + $0x650] sm:$0xff]
        %v2066 = vld [vmem:[#allocation13 + $0x658] sm:$0xff]
        %v2067 = vld [vmem:[#allocation13 + $0x660] sm:$0xff]
        %v2068 = vld [vmem:[#allocation13 + $0x668] sm:$0xff]
        %v2069 = vld [vmem:[#allocation13 + $0x670] sm:$0xff]
        %v2070 = vld [vmem:[#allocation13 + $0x678] sm:$0xff]
        %v2071 = vld [vmem:[#allocation13 + $0x680] sm:$0xff]
        %v2072 = vld [vmem:[#allocation13 + $0x688] sm:$0xff]
        %v2073 = vld [vmem:[#allocation13 + $0x690] sm:$0xff]
        %v2074 = vld [vmem:[#allocation13 + $0x698] sm:$0xff]
        %v2075 = vld [vmem:[#allocation13 + $0x6a0] sm:$0xff]
        %v2076 = vld [vmem:[#allocation13 + $0x6a8] sm:$0xff]
        %v2077 = vld [vmem:[#allocation13 + $0x6b0] sm:$0xff]
        %v2078 = vld [vmem:[#allocation13 + $0x6b8] sm:$0xff]
        %v2079 = vld [vmem:[#allocation13 + $0x6c0] sm:$0xff]
        %v2080 = vld [vmem:[#allocation13 + $0x6c8] sm:$0xff]
        %v2081 = vld [vmem:[#allocation13 + $0x6d0] sm:$0xff]
        %v2082 = vld [vmem:[#allocation13 + $0x6d8] sm:$0xff]
        %v2083 = vld [vmem:[#allocation13 + $0x6e0] sm:$0xff]
        %v2084 = vld [vmem:[#allocation13 + $0x6e8] sm:$0xff]
        %v2085 = vld [vmem:[#allocation13 + $0x6f0] sm:$0xff]
        %v2086 = vld [vmem:[#allocation13 + $0x6f8] sm:$0xff]
        %v2087 = vld [vmem:[#allocation13 + $0x700] sm:$0xff]
        %v2088 = vld [vmem:[#allocation13 + $0x708] sm:$0xff]
        %v2089 = vld [vmem:[#allocation13 + $0x710] sm:$0xff]
        %v2090 = vld [vmem:[#allocation13 + $0x718] sm:$0xff]
        %v2091 = vld [vmem:[#allocation13 + $0x720] sm:$0xff]
        %v2092 = vld [vmem:[#allocation13 + $0x728] sm:$0xff]
        %v2093 = vld [vmem:[#allocation13 + $0x730] sm:$0xff]
        %v2094 = vld [vmem:[#allocation13 + $0x738] sm:$0xff]
        %v2095 = vld [vmem:[#allocation13 + $0x740] sm:$0xff]
        %v2096 = vld [vmem:[#allocation13 + $0x748] sm:$0xff]
        %v2097 = vld [vmem:[#allocation13 + $0x750] sm:$0xff]
        %v2098 = vld [vmem:[#allocation13 + $0x758] sm:$0xff]
        %v2099 = vld [vmem:[#allocation13 + $0x760] sm:$0xff]
        %v2100 = vld [vmem:[#allocation13 + $0x768] sm:$0xff]
        %v2101 = vld [vmem:[#allocation13 + $0x770] sm:$0xff]
        %v2102 = vld [vmem:[#allocation13 + $0x778] sm:$0xff]
        %v2103 = vld [vmem:[#allocation13 + $0x780] sm:$0xff]
        %v2104 = vld [vmem:[#allocation13 + $0x788] sm:$0xff]
        %v2105 = vld [vmem:[#allocation13 + $0x790] sm:$0xff]
        %v2106 = vld [vmem:[#allocation13 + $0x798] sm:$0xff]
        %v2107 = vld [vmem:[#allocation13 + $0x7a0] sm:$0xff]
        %v2108 = vld [vmem:[#allocation13 + $0x7a8] sm:$0xff]
        %v2109 = vld [vmem:[#allocation13 + $0x7b0] sm:$0xff]
        %v2110 = vld [vmem:[#allocation13 + $0x7b8] sm:$0xff]
        %v2111 = vld [vmem:[#allocation13 + $0x7c0] sm:$0xff]
        %v2112 = vld [vmem:[#allocation13 + $0x7c8] sm:$0xff]
        %v2113 = vld [vmem:[#allocation13 + $0x7d0] sm:$0xff]
        %v2114 = vld [vmem:[#allocation13 + $0x7d8] sm:$0xff]
        %v2115 = vld [vmem:[#allocation13 + $0x7e0] sm:$0xff]
        %v2116 = vld [vmem:[#allocation13 + $0x7e8] sm:$0xff]
        %v2117 = vld [vmem:[#allocation13 + $0x7f0] sm:$0xff]
        %v2118 = vld [vmem:[#allocation13 + $0x7f8] sm:$0xff]
        %v2119 = vld [vmem:[#allocation13 + $0x800] sm:$0xff]
        %v2120 = vld [vmem:[#allocation13 + $0x808] sm:$0xff]
        %v2121 = vld [vmem:[#allocation13 + $0x810] sm:$0xff]
        %v2122 = vld [vmem:[#allocation13 + $0x818] sm:$0xff]
        %v2123 = vld [vmem:[#allocation13 + $0x820] sm:$0xff]
        %v2124 = vld [vmem:[#allocation13 + $0x828] sm:$0xff]
        %v2125 = vld [vmem:[#allocation13 + $0x830] sm:$0xff]
        %v2126 = vld [vmem:[#allocation13 + $0x838] sm:$0xff]
        %v2127 = vld [vmem:[#allocation13 + $0x840] sm:$0xff]
        %v2128 = vld [vmem:[#allocation13 + $0x848] sm:$0xff]
        %v2129 = vld [vmem:[#allocation13 + $0x850] sm:$0xff]
        %v2130 = vld [vmem:[#allocation13 + $0x858] sm:$0xff]
        %v2131 = vld [vmem:[#allocation13 + $0x860] sm:$0xff]
        %v2132 = vld [vmem:[#allocation13 + $0x868] sm:$0xff]
        %v2133 = vld [vmem:[#allocation13 + $0x870] sm:$0xff]
        %v2134 = vld [vmem:[#allocation13 + $0x878] sm:$0xff]
        %v2135 = vld [vmem:[#allocation13 + $0x880] sm:$0xff]
        %v2136 = vld [vmem:[#allocation13 + $0x888] sm:$0xff]
        %v2137 = vld [vmem:[#allocation13 + $0x890] sm:$0xff]
        %v2138 = vld [vmem:[#allocation13 + $0x898] sm:$0xff]
        %v2139 = vld [vmem:[#allocation13 + $0x8a0] sm:$0xff]
        %v2140 = vld [vmem:[#allocation13 + $0x8a8] sm:$0xff]
        %v2141 = vld [vmem:[#allocation13 + $0x8b0] sm:$0xff]
        %v2142 = vld [vmem:[#allocation13 + $0x8b8] sm:$0xff]
        %v2143 = vld [vmem:[#allocation13 + $0x8c0] sm:$0xff]
        %v2144 = vld [vmem:[#allocation13 + $0x8c8] sm:$0xff]
        %v2145 = vld [vmem:[#allocation13 + $0x8d0] sm:$0xff]
        %v2146 = vld [vmem:[#allocation13 + $0x8d8] sm:$0xff]
        %v2147 = vld [vmem:[#allocation13 + $0x8e0] sm:$0xff]
        %v2148 = vld [vmem:[#allocation13 + $0x8e8] sm:$0xff]
        %v2149 = vld [vmem:[#allocation13 + $0x8f0] sm:$0xff]
        %v2150 = vld [vmem:[#allocation13 + $0x8f8] sm:$0xff]
        %v2151 = vld [vmem:[#allocation13 + $0x900] sm:$0xff]
        %v2152 = vld [vmem:[#allocation13 + $0x908] sm:$0xff]
        %v2153 = vld [vmem:[#allocation13 + $0x910] sm:$0xff]
        %v2154 = vld [vmem:[#allocation13 + $0x918] sm:$0xff]
        %v2155 = vld [vmem:[#allocation13 + $0x920] sm:$0xff]
        %v2156 = vld [vmem:[#allocation13 + $0x928] sm:$0xff]
        %v2157 = vld [vmem:[#allocation13 + $0x930] sm:$0xff]
        %v2158 = vld [vmem:[#allocation13 + $0x938] sm:$0xff]
        %v2159 = vld [vmem:[#allocation13 + $0x940] sm:$0xff]
        %v2160 = vld [vmem:[#allocation13 + $0x948] sm:$0xff]
        %v2161 = vld [vmem:[#allocation13 + $0x950] sm:$0xff]
        %v2162 = vld [vmem:[#allocation13 + $0x958] sm:$0xff]
        %v2163 = vld [vmem:[#allocation13 + $0x960] sm:$0xff]
        %v2164 = vld [vmem:[#allocation13 + $0x968] sm:$0xff]
        %v2165 = vld [vmem:[#allocation13 + $0x970] sm:$0xff]
        %v2166 = vld [vmem:[#allocation13 + $0x978] sm:$0xff]
        %v2167 = vld [vmem:[#allocation13 + $0x980] sm:$0xff]
        %v2168 = vld [vmem:[#allocation13 + $0x988] sm:$0xff]
        %v2169 = vld [vmem:[#allocation13 + $0x990] sm:$0xff]
        %v2170 = vld [vmem:[#allocation13 + $0x998] sm:$0xff]
        %v2171 = vld [vmem:[#allocation13 + $0x9a0] sm:$0xff]
        %v2172 = vld [vmem:[#allocation13 + $0x9a8] sm:$0xff]
        %v2173 = vld [vmem:[#allocation13 + $0x9b0] sm:$0xff]
        %v2174 = vld [vmem:[#allocation13 + $0x9b8] sm:$0xff]
        %v2175 = vld [vmem:[#allocation13 + $0x9c0] sm:$0xff]
        %v2176 = vld [vmem:[#allocation13 + $0x9c8] sm:$0xff]
        %v2177 = vld [vmem:[#allocation13 + $0x9d0] sm:$0xff]
        %v2178 = vld [vmem:[#allocation13 + $0x9d8] sm:$0xff]
        %v2179 = vld [vmem:[#allocation13 + $0x9e0] sm:$0xff]
        %v2180 = vld [vmem:[#allocation13 + $0x9e8] sm:$0xff]
        %v2181 = vld [vmem:[#allocation13 + $0x9f0] sm:$0xff]
        %v2182 = vld [vmem:[#allocation13 + $0x9f8] sm:$0xff]
        %v2183 = vld [vmem:[#allocation13 + $0xa00] sm:$0xff]
        %v2184 = vld [vmem:[#allocation13 + $0xa08] sm:$0xff]
        %v2185 = vld [vmem:[#allocation13 + $0xa10] sm:$0xff]
        %v2186 = vld [vmem:[#allocation13 + $0xa18] sm:$0xff]
        %v2187 = vld [vmem:[#allocation13 + $0xa20] sm:$0xff]
        %v2188 = vld [vmem:[#allocation13 + $0xa28] sm:$0xff]
        %v2189 = vld [vmem:[#allocation13 + $0xa30] sm:$0xff]
        %v2190 = vld [vmem:[#allocation13 + $0xa38] sm:$0xff]
        %v2191 = vld [vmem:[#allocation13 + $0xa40] sm:$0xff]
        %v2192 = vld [vmem:[#allocation13 + $0xa48] sm:$0xff]
        %v2193 = vld [vmem:[#allocation13 + $0xa50] sm:$0xff]
        %v2194 = vld [vmem:[#allocation13 + $0xa58] sm:$0xff]
        %v2195 = vld [vmem:[#allocation13 + $0xa60] sm:$0xff]
        %v2196 = vld [vmem:[#allocation13 + $0xa68] sm:$0xff]
        %v2197 = vld [vmem:[#allocation13 + $0xa70] sm:$0xff]
        %v2198 = vld [vmem:[#allocation13 + $0xa78] sm:$0xff]
        %v2199 = vld [vmem:[#allocation13 + $0xa80] sm:$0xff]
        %v2200 = vld [vmem:[#allocation13 + $0xa88] sm:$0xff]
        %v2201 = vld [vmem:[#allocation13 + $0xa90] sm:$0xff]
        %v2202 = vld [vmem:[#allocation13 + $0xa98] sm:$0xff]
        %v2203 = vld [vmem:[#allocation13 + $0xaa0] sm:$0xff]
        %v2204 = vld [vmem:[#allocation13 + $0xaa8] sm:$0xff]
        %v2205 = vld [vmem:[#allocation13 + $0xab0] sm:$0xff]
        %v2206 = vld [vmem:[#allocation13 + $0xab8] sm:$0xff]
        %v2207 = vld [vmem:[#allocation13 + $0xac0] sm:$0xff]
        %v2208 = vld [vmem:[#allocation13 + $0xac8] sm:$0xff]
        %v2209 = vld [vmem:[#allocation13 + $0xad0] sm:$0xff]
        %v2210 = vld [vmem:[#allocation13 + $0xad8] sm:$0xff]
        %v2211 = vld [vmem:[#allocation13 + $0xae0] sm:$0xff]
        %v2212 = vld [vmem:[#allocation13 + $0xae8] sm:$0xff]
        %v2213 = vld [vmem:[#allocation13 + $0xaf0] sm:$0xff]
        %v2214 = vld [vmem:[#allocation13 + $0xaf8] sm:$0xff]
        %v2215 = vld [vmem:[#allocation13 + $0xb00] sm:$0xff]
        %v2216 = vld [vmem:[#allocation13 + $0xb08] sm:$0xff]
        %v2217 = vld [vmem:[#allocation13 + $0xb10] sm:$0xff]
        %v2218 = vld [vmem:[#allocation13 + $0xb18] sm:$0xff]
        %v2219 = vld [vmem:[#allocation13 + $0xb20] sm:$0xff]
        %v2220 = vld [vmem:[#allocation13 + $0xb28] sm:$0xff]
        %v2221 = vld [vmem:[#allocation13 + $0xb30] sm:$0xff]
        %v2222 = vld [vmem:[#allocation13 + $0xb38] sm:$0xff]
        %v2223 = vld [vmem:[#allocation13 + $0xb40] sm:$0xff]
        %v2224 = vld [vmem:[#allocation13 + $0xb48] sm:$0xff]
        %v2225 = vld [vmem:[#allocation13 + $0xb50] sm:$0xff]
        %v2226 = vld [vmem:[#allocation13 + $0xb58] sm:$0xff]
        %v2227 = vld [vmem:[#allocation13 + $0xb60] sm:$0xff]
        %v2228 = vld [vmem:[#allocation13 + $0xb68] sm:$0xff]
        %v2229 = vld [vmem:[#allocation13 + $0xb70] sm:$0xff]
        %v2230 = vld [vmem:[#allocation13 + $0xb78] sm:$0xff]
        %v2231 = vld [vmem:[#allocation13 + $0xb80] sm:$0xff]
        %v2232 = vld [vmem:[#allocation13 + $0xb88] sm:$0xff]
        %v2233 = vld [vmem:[#allocation13 + $0xb90] sm:$0xff]
        %v2234 = vld [vmem:[#allocation13 + $0xb98] sm:$0xff]
        %v2235 = vld [vmem:[#allocation13 + $0xba0] sm:$0xff]
        %v2236 = vld [vmem:[#allocation13 + $0xba8] sm:$0xff]
        %v2237 = vld [vmem:[#allocation13 + $0xbb0] sm:$0xff]
        %v2238 = vld [vmem:[#allocation13 + $0xbb8] sm:$0xff]
        %v2239 = vld [vmem:[#allocation13 + $0xbc0] sm:$0xff]
        %v2240 = vld [vmem:[#allocation13 + $0xbc8] sm:$0xff]
        %v2241 = vld [vmem:[#allocation13 + $0xbd0] sm:$0xff]
        %v2242 = vld [vmem:[#allocation13 + $0xbd8] sm:$0xff]
        %v2243 = vld [vmem:[#allocation13 + $0xbe0] sm:$0xff]
        %v2244 = vld [vmem:[#allocation13 + $0xbe8] sm:$0xff]
        %v2245 = vld [vmem:[#allocation13 + $0xbf0] sm:$0xff]
        %v2246 = vld [vmem:[#allocation13 + $0xbf8] sm:$0xff]
        %v2247 = vld [vmem:[#allocation13 + $0xc00] sm:$0xff]
        %v2248 = vld [vmem:[#allocation13 + $0xc08] sm:$0xff]
        %v2249 = vld [vmem:[#allocation13 + $0xc10] sm:$0xff]
        %v2250 = vld [vmem:[#allocation13 + $0xc18] sm:$0xff]
        %v2251 = vld [vmem:[#allocation13 + $0xc20] sm:$0xff]
        %v2252 = vld [vmem:[#allocation13 + $0xc28] sm:$0xff]
        %v2253 = vld [vmem:[#allocation13 + $0xc30] sm:$0xff]
        %v2254 = vld [vmem:[#allocation13 + $0xc38] sm:$0xff]
        %v2255 = vld [vmem:[#allocation13 + $0xc40] sm:$0xff]
        %v2256 = vld [vmem:[#allocation13 + $0xc48] sm:$0xff]
        %v2257 = vld [vmem:[#allocation13 + $0xc50] sm:$0xff]
        %v2258 = vld [vmem:[#allocation13 + $0xc58] sm:$0xff]
        %v2259 = vld [vmem:[#allocation13 + $0xc60] sm:$0xff]
        %v2260 = vld [vmem:[#allocation13 + $0xc68] sm:$0xff]
        %v2261 = vld [vmem:[#allocation13 + $0xc70] sm:$0xff]
        %v2262 = vld [vmem:[#allocation13 + $0xc78] sm:$0xff]
        %v2263 = vld [vmem:[#allocation13 + $0xc80] sm:$0xff]
        %v2264 = vld [vmem:[#allocation13 + $0xc88] sm:$0xff]
        %v2265 = vld [vmem:[#allocation13 + $0xc90] sm:$0xff]
        %v2266 = vld [vmem:[#allocation13 + $0xc98] sm:$0xff]
        %v2267 = vld [vmem:[#allocation13 + $0xca0] sm:$0xff]
        %v2268 = vld [vmem:[#allocation13 + $0xca8] sm:$0xff]
        %v2269 = vld [vmem:[#allocation13 + $0xcb0] sm:$0xff]
        %v2270 = vld [vmem:[#allocation13 + $0xcb8] sm:$0xff]
        %v2271 = vld [vmem:[#allocation13 + $0xcc0] sm:$0xff]
        %v2272 = vld [vmem:[#allocation13 + $0xcc8] sm:$0xff]
        %v2273 = vld [vmem:[#allocation13 + $0xcd0] sm:$0xff]
        %v2274 = vld [vmem:[#allocation13 + $0xcd8] sm:$0xff]
        %v2275 = vld [vmem:[#allocation13 + $0xce0] sm:$0xff]
        %v2276 = vld [vmem:[#allocation13 + $0xce8] sm:$0xff]
        %v2277 = vld [vmem:[#allocation13 + $0xcf0] sm:$0xff]
        %v2278 = vld [vmem:[#allocation13 + $0xcf8] sm:$0xff]
        %v2279 = vld [vmem:[#allocation13 + $0xd00] sm:$0xff]
        %v2280 = vld [vmem:[#allocation13 + $0xd08] sm:$0xff]
        %v2281 = vld [vmem:[#allocation13 + $0xd10] sm:$0xff]
        %v2282 = vld [vmem:[#allocation13 + $0xd18] sm:$0xff]
        %v2283 = vld [vmem:[#allocation13 + $0xd20] sm:$0xff]
        %v2284 = vld [vmem:[#allocation13 + $0xd28] sm:$0xff]
        %v2285 = vld [vmem:[#allocation13 + $0xd30] sm:$0xff]
        %v2286 = vld [vmem:[#allocation13 + $0xd38] sm:$0xff]
        %v2287 = vld [vmem:[#allocation13 + $0xd40] sm:$0xff]
        %v2288 = vld [vmem:[#allocation13 + $0xd48] sm:$0xff]
        %v2289 = vld [vmem:[#allocation13 + $0xd50] sm:$0xff]
        %v2290 = vld [vmem:[#allocation13 + $0xd58] sm:$0xff]
        %v2291 = vld [vmem:[#allocation13 + $0xd60] sm:$0xff]
        %v2292 = vld [vmem:[#allocation13 + $0xd68] sm:$0xff]
        %v2293 = vld [vmem:[#allocation13 + $0xd70] sm:$0xff]
        %v2294 = vld [vmem:[#allocation13 + $0xd78] sm:$0xff]
        %v2295 = vld [vmem:[#allocation13 + $0xd80] sm:$0xff]
        %v2296 = vld [vmem:[#allocation13 + $0xd88] sm:$0xff]
        %v2297 = vld [vmem:[#allocation13 + $0xd90] sm:$0xff]
        %v2298 = vld [vmem:[#allocation13 + $0xd98] sm:$0xff]
        %v2299 = vld [vmem:[#allocation13 + $0xda0] sm:$0xff]
        %v2300 = vld [vmem:[#allocation13 + $0xda8] sm:$0xff]
        %v2301 = vld [vmem:[#allocation13 + $0xdb0] sm:$0xff]
        %v2302 = vld [vmem:[#allocation13 + $0xdb8] sm:$0xff]
        %v2303 = vld [vmem:[#allocation13 + $0xdc0] sm:$0xff]
        %v2304 = vld [vmem:[#allocation13 + $0xdc8] sm:$0xff]
        %v2305 = vld [vmem:[#allocation13 + $0xdd0] sm:$0xff]
        %v2306 = vld [vmem:[#allocation13 + $0xdd8] sm:$0xff]
        %v2307 = vld [vmem:[#allocation13 + $0xde0] sm:$0xff]
        %v2308 = vld [vmem:[#allocation13 + $0xde8] sm:$0xff]
        %v2309 = vld [vmem:[#allocation13 + $0xdf0] sm:$0xff]
        %v2310 = vld [vmem:[#allocation13 + $0xdf8] sm:$0xff]
        %v2311 = vld [vmem:[#allocation13 + $0xe00] sm:$0xff]
        %v2312 = vld [vmem:[#allocation13 + $0xe08] sm:$0xff]
        %v2313 = vld [vmem:[#allocation13 + $0xe10] sm:$0xff]
        %v2314 = vld [vmem:[#allocation13 + $0xe18] sm:$0xff]
        %v2315 = vld [vmem:[#allocation13 + $0xe20] sm:$0xff]
        %v2316 = vld [vmem:[#allocation13 + $0xe28] sm:$0xff]
        %v2317 = vld [vmem:[#allocation13 + $0xe30] sm:$0xff]
        %v2318 = vld [vmem:[#allocation13 + $0xe38] sm:$0xff]
        %v2319 = vld [vmem:[#allocation13 + $0xe40] sm:$0xff]
        %v2320 = vld [vmem:[#allocation13 + $0xe48] sm:$0xff]
        %v2321 = vld [vmem:[#allocation13 + $0xe50] sm:$0xff]
        %v2322 = vld [vmem:[#allocation13 + $0xe58] sm:$0xff]
        %v2323 = vld [vmem:[#allocation13 + $0xe60] sm:$0xff]
        %v2324 = vld [vmem:[#allocation13 + $0xe68] sm:$0xff]
        %v2325 = vld [vmem:[#allocation13 + $0xe70] sm:$0xff]
        %v2326 = vld [vmem:[#allocation13 + $0xe78] sm:$0xff]
        %v2327 = vld [vmem:[#allocation13 + $0xe80] sm:$0xff]
        %v2328 = vld [vmem:[#allocation13 + $0xe88] sm:$0xff]
        %v2329 = vld [vmem:[#allocation13 + $0xe90] sm:$0xff]
        %v2330 = vld [vmem:[#allocation13 + $0xe98] sm:$0xff]
        %v2331 = vld [vmem:[#allocation13 + $0xea0] sm:$0xff]
        %v2332 = vld [vmem:[#allocation13 + $0xea8] sm:$0xff]
        %v2333 = vld [vmem:[#allocation13 + $0xeb0] sm:$0xff]
        %v2334 = vld [vmem:[#allocation13 + $0xeb8] sm:$0xff]
        %v2335 = vld [vmem:[#allocation13 + $0xec0] sm:$0xff]
        %v2336 = vld [vmem:[#allocation13 + $0xec8] sm:$0xff]
        %v2337 = vld [vmem:[#allocation13 + $0xed0] sm:$0xff]
        %v2338 = vld [vmem:[#allocation13 + $0xed8] sm:$0xff]
        %v2339 = vld [vmem:[#allocation13 + $0xee0] sm:$0xff]
        %v2340 = vld [vmem:[#allocation13 + $0xee8] sm:$0xff]
        %v2341 = vld [vmem:[#allocation13 + $0xef0] sm:$0xff]
        %v2342 = vld [vmem:[#allocation13 + $0xef8] sm:$0xff]
        %v2343 = vld [vmem:[#allocation13 + $0xf00] sm:$0xff]
        %v2344 = vld [vmem:[#allocation13 + $0xf08] sm:$0xff]
        %v2345 = vld [vmem:[#allocation13 + $0xf10] sm:$0xff]
        %v2346 = vld [vmem:[#allocation13 + $0xf18] sm:$0xff]
        %v2347 = vld [vmem:[#allocation13 + $0xf20] sm:$0xff]
        %v2348 = vld [vmem:[#allocation13 + $0xf28] sm:$0xff]
        %v2349 = vld [vmem:[#allocation13 + $0xf30] sm:$0xff]
        %v2350 = vld [vmem:[#allocation13 + $0xf38] sm:$0xff]
        %v2351 = vld [vmem:[#allocation13 + $0xf40] sm:$0xff]
        %v2352 = vld [vmem:[#allocation13 + $0xf48] sm:$0xff]
        %v2353 = vld [vmem:[#allocation13 + $0xf50] sm:$0xff]
        %v2354 = vld [vmem:[#allocation13 + $0xf58] sm:$0xff]
        %v2355 = vld [vmem:[#allocation13 + $0xf60] sm:$0xff]
        %v2356 = vld [vmem:[#allocation13 + $0xf68] sm:$0xff]
        %v2357 = vld [vmem:[#allocation13 + $0xf70] sm:$0xff]
        %v2358 = vld [vmem:[#allocation13 + $0xf78] sm:$0xff]
        %v2359 = vld [vmem:[#allocation13 + $0xf80] sm:$0xff]
        %v2360 = vld [vmem:[#allocation13 + $0xf88] sm:$0xff]
        %v2361 = vld [vmem:[#allocation13 + $0xf90] sm:$0xff]
        %v2362 = vld [vmem:[#allocation13 + $0xf98] sm:$0xff]
        %v2363 = vld [vmem:[#allocation13 + $0xfa0] sm:$0xff]
        %v2364 = vld [vmem:[#allocation13 + $0xfa8] sm:$0xff]
        %v2365 = vld [vmem:[#allocation13 + $0xfb0] sm:$0xff]
        %v2366 = vld [vmem:[#allocation13 + $0xfb8] sm:$0xff]
        %v2367 = vld [vmem:[#allocation13 + $0xfc0] sm:$0xff]
        %v2368 = vld [vmem:[#allocation13 + $0xfc8] sm:$0xff]
        %v2369 = vld [vmem:[#allocation13 + $0xfd0] sm:$0xff]
        %v2370 = vld [vmem:[#allocation13 + $0xfd8] sm:$0xff]
        %v2371 = vld [vmem:[#allocation13 + $0xfe0] sm:$0xff]
        %v2372 = vld [vmem:[#allocation13 + $0xfe8] sm:$0xff]
        %v2373 = vld [vmem:[#allocation13 + $0xff0] sm:$0xff]
        %v2374 = vld [vmem:[#allocation13 + $0xff8] sm:$0xff]
        %v2375 = vld [vmem:[#allocation13 + $0x1000] sm:$0xff]
        %v2376 = vld [vmem:[#allocation13 + $0x1008] sm:$0xff]
        %v2377 = vld [vmem:[#allocation13 + $0x1010] sm:$0xff]
        %v2378 = vld [vmem:[#allocation13 + $0x1018] sm:$0xff]
        %v2379 = vld [vmem:[#allocation13 + $0x1020] sm:$0xff]
        %v2380 = vld [vmem:[#allocation13 + $0x1028] sm:$0xff]
        %v2381 = vld [vmem:[#allocation13 + $0x1030] sm:$0xff]
        %v2382 = vld [vmem:[#allocation13 + $0x1038] sm:$0xff]
        %v2383 = vld [vmem:[#allocation13 + $0x1040] sm:$0xff]
        %v2384 = vld [vmem:[#allocation13 + $0x1048] sm:$0xff]
        %v2385 = vld [vmem:[#allocation13 + $0x1050] sm:$0xff]
        %v2386 = vld [vmem:[#allocation13 + $0x1058] sm:$0xff]
        %v2387 = vld [vmem:[#allocation13 + $0x1060] sm:$0xff]
        %v2388 = vld [vmem:[#allocation13 + $0x1068] sm:$0xff]
        %v2389 = vld [vmem:[#allocation13 + $0x1070] sm:$0xff]
        %v2390 = vld [vmem:[#allocation13 + $0x1078] sm:$0xff]
        %v2391 = vld [vmem:[#allocation13 + $0x1080] sm:$0xff]
        %v2392 = vld [vmem:[#allocation13 + $0x1088] sm:$0xff]
        %v2393 = vld [vmem:[#allocation13 + $0x1090] sm:$0xff]
        %v2394 = vld [vmem:[#allocation13 + $0x1098] sm:$0xff]
        %v2395 = vld [vmem:[#allocation13 + $0x10a0] sm:$0xff]
        %v2396 = vld [vmem:[#allocation13 + $0x10a8] sm:$0xff]
        %v2397 = vld [vmem:[#allocation13 + $0x10b0] sm:$0xff]
        %v2398 = vld [vmem:[#allocation13 + $0x10b8] sm:$0xff]
        %v2399 = vld [vmem:[#allocation13 + $0x10c0] sm:$0xff]
        %v2400 = vld [vmem:[#allocation13 + $0x10c8] sm:$0xff]
        %v2401 = vld [vmem:[#allocation13 + $0x10d0] sm:$0xff]
        %v2402 = vld [vmem:[#allocation13 + $0x10d8] sm:$0xff]
        %v2403 = vld [vmem:[#allocation13 + $0x10e0] sm:$0xff]
        %v2404 = vld [vmem:[#allocation13 + $0x10e8] sm:$0xff]
        %v2405 = vld [vmem:[#allocation13 + $0x10f0] sm:$0xff]
        %v2406 = vld [vmem:[#allocation13 + $0x10f8] sm:$0xff]
        %v2407 = vld [vmem:[#allocation13 + $0x1100] sm:$0xff]
        %v2408 = vld [vmem:[#allocation13 + $0x1108] sm:$0xff]
        %v2409 = vld [vmem:[#allocation13 + $0x1110] sm:$0xff]
        %v2410 = vld [vmem:[#allocation13 + $0x1118] sm:$0xff]
        %v2411 = vld [vmem:[#allocation13 + $0x1120] sm:$0xff]
        %v2412 = vld [vmem:[#allocation13 + $0x1128] sm:$0xff]
        %v2413 = vld [vmem:[#allocation13 + $0x1130] sm:$0xff]
        %v2414 = vld [vmem:[#allocation13 + $0x1138] sm:$0xff]
        %v2415 = vld [vmem:[#allocation13 + $0x1140] sm:$0xff]
        %v2416 = vld [vmem:[#allocation13 + $0x1148] sm:$0xff]
        %v2417 = vld [vmem:[#allocation13 + $0x1150] sm:$0xff]
        %v2418 = vld [vmem:[#allocation13 + $0x1158] sm:$0xff]
        %v2419 = vld [vmem:[#allocation13 + $0x1160] sm:$0xff]
        %v2420 = vld [vmem:[#allocation13 + $0x1168] sm:$0xff]
        %v2421 = vld [vmem:[#allocation13 + $0x1170] sm:$0xff]
        %v2422 = vld [vmem:[#allocation13 + $0x1178] sm:$0xff]
        %v2423 = vld [vmem:[#allocation13 + $0x1180] sm:$0xff]
        %v2424 = vld [vmem:[#allocation13 + $0x1188] sm:$0xff]
        %v2425 = vld [vmem:[#allocation13 + $0x1190] sm:$0xff]
        %v2426 = vld [vmem:[#allocation13 + $0x1198] sm:$0xff]
        %v2427 = vld [vmem:[#allocation13 + $0x11a0] sm:$0xff]
        %v2428 = vld [vmem:[#allocation13 + $0x11a8] sm:$0xff]
        %v2429 = vld [vmem:[#allocation13 + $0x11b0] sm:$0xff]
        %v2430 = vld [vmem:[#allocation13 + $0x11b8] sm:$0xff]
        %v2431 = vld [vmem:[#allocation13 + $0x11c0] sm:$0xff]
        %v2432 = vld [vmem:[#allocation13 + $0x11c8] sm:$0xff]
        %v2433 = vld [vmem:[#allocation13 + $0x11d0] sm:$0xff]
        %v2434 = vld [vmem:[#allocation13 + $0x11d8] sm:$0xff]
        %v2435 = vld [vmem:[#allocation13 + $0x11e0] sm:$0xff]
        %v2436 = vld [vmem:[#allocation13 + $0x11e8] sm:$0xff]
        %v2437 = vld [vmem:[#allocation13 + $0x11f0] sm:$0xff]
        %v2438 = vld [vmem:[#allocation13 + $0x11f8] sm:$0xff]
        %v2439 = vld [vmem:[#allocation13 + $0x1200] sm:$0xff]
        %v2440 = vld [vmem:[#allocation13 + $0x1208] sm:$0xff]
        %v2441 = vld [vmem:[#allocation13 + $0x1210] sm:$0xff]
        %v2442 = vld [vmem:[#allocation13 + $0x1218] sm:$0xff]
        %v2443 = vld [vmem:[#allocation13 + $0x1220] sm:$0xff]
        %v2444 = vld [vmem:[#allocation13 + $0x1228] sm:$0xff]
        %v2445 = vld [vmem:[#allocation13 + $0x1230] sm:$0xff]
        %v2446 = vld [vmem:[#allocation13 + $0x1238] sm:$0xff]
        %v2447 = vld [vmem:[#allocation13 + $0x1240] sm:$0xff]
        %v2448 = vld [vmem:[#allocation13 + $0x1248] sm:$0xff]
        %v2449 = vld [vmem:[#allocation13 + $0x1250] sm:$0xff]
        %v2450 = vld [vmem:[#allocation13 + $0x1258] sm:$0xff]
        %v2451 = vld [vmem:[#allocation13 + $0x1260] sm:$0xff]
        %v2452 = vld [vmem:[#allocation13 + $0x1268] sm:$0xff]
        %v2453 = vld [vmem:[#allocation13 + $0x1270] sm:$0xff]
        %v2454 = vld [vmem:[#allocation13 + $0x1278] sm:$0xff]
        %v2455 = vld [vmem:[#allocation13 + $0x1280] sm:$0xff]
        %v2456 = vld [vmem:[#allocation13 + $0x1288] sm:$0xff]
        %v2457 = vld [vmem:[#allocation13 + $0x1290] sm:$0xff]
        %v2458 = vld [vmem:[#allocation13 + $0x1298] sm:$0xff]
        %v2459 = vld [vmem:[#allocation13 + $0x12a0] sm:$0xff]
        %v2460 = vld [vmem:[#allocation13 + $0x12a8] sm:$0xff]
        %v2461 = vld [vmem:[#allocation13 + $0x12b0] sm:$0xff]
        %v2462 = vld [vmem:[#allocation13 + $0x12b8] sm:$0xff]
        %v2463 = vld [vmem:[#allocation13 + $0x12c0] sm:$0xff]
        %v2464 = vld [vmem:[#allocation13 + $0x12c8] sm:$0xff]
        %v2465 = vld [vmem:[#allocation13 + $0x12d0] sm:$0xff]
        %v2466 = vld [vmem:[#allocation13 + $0x12d8] sm:$0xff]
        %v2467 = vld [vmem:[#allocation13 + $0x12e0] sm:$0xff]
        %v2468 = vld [vmem:[#allocation13 + $0x12e8] sm:$0xff]
        %v2469 = vld [vmem:[#allocation13 + $0x12f0] sm:$0xff]
        %v2470 = vld [vmem:[#allocation13 + $0x12f8] sm:$0xff]
        %v2471 = vld [vmem:[#allocation13 + $0x1300] sm:$0xff]
        %v2472 = vld [vmem:[#allocation13 + $0x1308] sm:$0xff]
        %v2473 = vld [vmem:[#allocation13 + $0x1310] sm:$0xff]
        %v2474 = vld [vmem:[#allocation13 + $0x1318] sm:$0xff]
        %v2475 = vld [vmem:[#allocation13 + $0x1320] sm:$0xff]
        %v2476 = vld [vmem:[#allocation13 + $0x1328] sm:$0xff]
        %v2477 = vld [vmem:[#allocation13 + $0x1330] sm:$0xff]
        %v2478 = vld [vmem:[#allocation13 + $0x1338] sm:$0xff]
        %v2479 = vld [vmem:[#allocation13 + $0x1340] sm:$0xff]
        %v2480 = vld [vmem:[#allocation13 + $0x1348] sm:$0xff]
        %v2481 = vld [vmem:[#allocation13 + $0x1350] sm:$0xff]
        %v2482 = vld [vmem:[#allocation13 + $0x1358] sm:$0xff]
        %v2483 = vld [vmem:[#allocation13 + $0x1360] sm:$0xff]
        %v2484 = vld [vmem:[#allocation13 + $0x1368] sm:$0xff]
        %v2485 = vld [vmem:[#allocation13 + $0x1370] sm:$0xff]
        %v2486 = vld [vmem:[#allocation13 + $0x1378] sm:$0xff]
        %v2487 = vld [vmem:[#allocation13 + $0x1380] sm:$0xff]
        %v2488 = vld [vmem:[#allocation13 + $0x1388] sm:$0xff]
        %v2489 = vld [vmem:[#allocation13 + $0x1390] sm:$0xff]
        %v2490 = vld [vmem:[#allocation13 + $0x1398] sm:$0xff]
        %v2491 = vld [vmem:[#allocation13 + $0x13a0] sm:$0xff]
        %v2492 = vld [vmem:[#allocation13 + $0x13a8] sm:$0xff]
        %v2493 = vld [vmem:[#allocation13 + $0x13b0] sm:$0xff]
        %v2494 = vld [vmem:[#allocation13 + $0x13b8] sm:$0xff]
        %v2495 = vld [vmem:[#allocation13 + $0x13c0] sm:$0xff]
        %v2496 = vld [vmem:[#allocation13 + $0x13c8] sm:$0xff]
        %v2497 = vld [vmem:[#allocation13 + $0x13d0] sm:$0xff]
        %v2498 = vld [vmem:[#allocation13 + $0x13d8] sm:$0xff]
        %v2499 = vld [vmem:[#allocation13 + $0x13e0] sm:$0xff]
        %v2500 = vld [vmem:[#allocation13 + $0x13e8] sm:$0xff]
        %v2501 = vld [vmem:[#allocation13 + $0x13f0] sm:$0xff]
        %v2502 = vld [vmem:[#allocation13 + $0x13f8] sm:$0xff]
        %v2503 = vld [vmem:[#allocation13 + $0x1400] sm:$0xff]
        %v2504 = vld [vmem:[#allocation13 + $0x1408] sm:$0xff]
        %v2505 = vld [vmem:[#allocation13 + $0x1410] sm:$0xff]
        %v2506 = vld [vmem:[#allocation13 + $0x1418] sm:$0xff]
        %v2507 = vld [vmem:[#allocation13 + $0x1420] sm:$0xff]
        %v2508 = vld [vmem:[#allocation13 + $0x1428] sm:$0xff]
        %v2509 = vld [vmem:[#allocation13 + $0x1430] sm:$0xff]
        %v2510 = vld [vmem:[#allocation13 + $0x1438] sm:$0xff]
        %v2511 = vld [vmem:[#allocation13 + $0x1440] sm:$0xff]
        %v2512 = vld [vmem:[#allocation13 + $0x1448] sm:$0xff]
        %v2513 = vld [vmem:[#allocation13 + $0x1450] sm:$0xff]
        %v2514 = vld [vmem:[#allocation13 + $0x1458] sm:$0xff]
        %v2515 = vld [vmem:[#allocation13 + $0x1460] sm:$0xff]
        %v2516 = vld [vmem:[#allocation13 + $0x1468] sm:$0xff]
        %v2517 = vld [vmem:[#allocation13 + $0x1470] sm:$0xff]
        %v2518 = vld [vmem:[#allocation13 + $0x1478] sm:$0xff]
        %v2519 = vld [vmem:[#allocation13 + $0x1480] sm:$0xff]
        %v2520 = vld [vmem:[#allocation13 + $0x1488] sm:$0xff]
        %v2521 = vld [vmem:[#allocation13 + $0x1490] sm:$0xff]
        %v2522 = vld [vmem:[#allocation13 + $0x1498] sm:$0xff]
        %v2523 = vld [vmem:[#allocation13 + $0x14a0] sm:$0xff]
        %v2524 = vld [vmem:[#allocation13 + $0x14a8] sm:$0xff]
        %v2525 = vld [vmem:[#allocation13 + $0x14b0] sm:$0xff]
        %v2526 = vld [vmem:[#allocation13 + $0x14b8] sm:$0xff]
        %v2527 = vld [vmem:[#allocation13 + $0x14c0] sm:$0xff]
        %v2528 = vld [vmem:[#allocation13 + $0x14c8] sm:$0xff]
        %v2529 = vld [vmem:[#allocation13 + $0x14d0] sm:$0xff]
        %v2530 = vld [vmem:[#allocation13 + $0x14d8] sm:$0xff]
        %v2531 = vld [vmem:[#allocation13 + $0x14e0] sm:$0xff]
        %v2532 = vld [vmem:[#allocation13 + $0x14e8] sm:$0xff]
        %v2533 = vld [vmem:[#allocation13 + $0x14f0] sm:$0xff]
        %v2534 = vld [vmem:[#allocation13 + $0x14f8] sm:$0xff]
        %v2535 = vld [vmem:[#allocation13 + $0x1500] sm:$0xff]
        %v2536 = vld [vmem:[#allocation13 + $0x1508] sm:$0xff]
        %v2537 = vld [vmem:[#allocation13 + $0x1510] sm:$0xff]
        %v2538 = vld [vmem:[#allocation13 + $0x1518] sm:$0xff]
        %v2539 = vld [vmem:[#allocation13 + $0x1520] sm:$0xff]
        %v2540 = vld [vmem:[#allocation13 + $0x1528] sm:$0xff]
        %v2541 = vld [vmem:[#allocation13 + $0x1530] sm:$0xff]
        %v2542 = vld [vmem:[#allocation13 + $0x1538] sm:$0xff]
        %v2543 = vld [vmem:[#allocation13 + $0x1540] sm:$0xff]
        %v2544 = vld [vmem:[#allocation13 + $0x1548] sm:$0xff]
        %v2545 = vld [vmem:[#allocation13 + $0x1550] sm:$0xff]
        %v2546 = vld [vmem:[#allocation13 + $0x1558] sm:$0xff]
        %v2547 = vld [vmem:[#allocation13 + $0x1560] sm:$0xff]
        %v2548 = vld [vmem:[#allocation13 + $0x1568] sm:$0xff]
        %v2549 = vld [vmem:[#allocation13 + $0x1570] sm:$0xff]
        %v2550 = vld [vmem:[#allocation13 + $0x1578] sm:$0xff]
        %v2551 = vld [vmem:[#allocation13 + $0x1580] sm:$0xff]
        %v2552 = vld [vmem:[#allocation13 + $0x1588] sm:$0xff]
        %v2553 = vld [vmem:[#allocation13 + $0x1590] sm:$0xff]
        %v2554 = vld [vmem:[#allocation13 + $0x1598] sm:$0xff]
        %v2555 = vld [vmem:[#allocation13 + $0x15a0] sm:$0xff]
        %v2556 = vld [vmem:[#allocation13 + $0x15a8] sm:$0xff]
        %v2557 = vld [vmem:[#allocation13 + $0x15b0] sm:$0xff]
        %v2558 = vld [vmem:[#allocation13 + $0x15b8] sm:$0xff]
        %v2559 = vld [vmem:[#allocation13 + $0x15c0] sm:$0xff]
        %v2560 = vld [vmem:[#allocation13 + $0x15c8] sm:$0xff]
        %v2561 = vld [vmem:[#allocation13 + $0x15d0] sm:$0xff]
        %v2562 = vld [vmem:[#allocation13 + $0x15d8] sm:$0xff]
        %v2563 = vld [vmem:[#allocation13 + $0x15e0] sm:$0xff]
        %v2564 = vld [vmem:[#allocation13 + $0x15e8] sm:$0xff]
        %v2565 = vld [vmem:[#allocation13 + $0x15f0] sm:$0xff]
        %v2566 = vld [vmem:[#allocation13 + $0x15f8] sm:$0xff]
        %v2567 = vld [vmem:[#allocation13 + $0x1600] sm:$0xff]
        %v2568 = vld [vmem:[#allocation13 + $0x1608] sm:$0xff]
        %v2569 = vld [vmem:[#allocation13 + $0x1610] sm:$0xff]
        %v2570 = vld [vmem:[#allocation13 + $0x1618] sm:$0xff]
        %v2571 = vld [vmem:[#allocation13 + $0x1620] sm:$0xff]
        %v2572 = vld [vmem:[#allocation13 + $0x1628] sm:$0xff]
        %v2573 = vld [vmem:[#allocation13 + $0x1630] sm:$0xff]
        %v2574 = vld [vmem:[#allocation13 + $0x1638] sm:$0xff]
        %v2575 = vld [vmem:[#allocation13 + $0x1640] sm:$0xff]
        %v2576 = vld [vmem:[#allocation13 + $0x1648] sm:$0xff]
        %v2577 = vld [vmem:[#allocation13 + $0x1650] sm:$0xff]
        %v2578 = vld [vmem:[#allocation13 + $0x1658] sm:$0xff]
        %v2579 = vld [vmem:[#allocation13 + $0x1660] sm:$0xff]
        %v2580 = vld [vmem:[#allocation13 + $0x1668] sm:$0xff]
        %v2581 = vld [vmem:[#allocation13 + $0x1670] sm:$0xff]
        %v2582 = vld [vmem:[#allocation13 + $0x1678] sm:$0xff]
        %v2583 = vld [vmem:[#allocation13 + $0x1680] sm:$0xff]
        %v2584 = vld [vmem:[#allocation13 + $0x1688] sm:$0xff]
        %v2585 = vld [vmem:[#allocation13 + $0x1690] sm:$0xff]
        %v2586 = vld [vmem:[#allocation13 + $0x1698] sm:$0xff]
        %v2587 = vld [vmem:[#allocation13 + $0x16a0] sm:$0xff]
        %v2588 = vld [vmem:[#allocation13 + $0x16a8] sm:$0xff]
        %v2589 = vld [vmem:[#allocation13 + $0x16b0] sm:$0xff]
        %v2590 = vld [vmem:[#allocation13 + $0x16b8] sm:$0xff]
        %v2591 = vld [vmem:[#allocation13 + $0x16c0] sm:$0xff]
        %v2592 = vld [vmem:[#allocation13 + $0x16c8] sm:$0xff]
        %v2593 = vld [vmem:[#allocation13 + $0x16d0] sm:$0xff]
        %v2594 = vld [vmem:[#allocation13 + $0x16d8] sm:$0xff]
        %v2595 = vld [vmem:[#allocation13 + $0x16e0] sm:$0xff]
        %v2596 = vld [vmem:[#allocation13 + $0x16e8] sm:$0xff]
        %v2597 = vld [vmem:[#allocation13 + $0x16f0] sm:$0xff]
        %v2598 = vld [vmem:[#allocation13 + $0x16f8] sm:$0xff]
        %v2599 = vld [vmem:[#allocation13 + $0x1700] sm:$0xff]
        %v2600 = vld [vmem:[#allocation13 + $0x1708] sm:$0xff]
        %v2601 = vld [vmem:[#allocation13 + $0x1710] sm:$0xff]
        %v2602 = vld [vmem:[#allocation13 + $0x1718] sm:$0xff]
        %v2603 = vld [vmem:[#allocation13 + $0x1720] sm:$0xff]
        %v2604 = vld [vmem:[#allocation13 + $0x1728] sm:$0xff]
        %v2605 = vld [vmem:[#allocation13 + $0x1730] sm:$0xff]
        %v2606 = vld [vmem:[#allocation13 + $0x1738] sm:$0xff]
        %v2607 = vld [vmem:[#allocation13 + $0x1740] sm:$0xff]
        %v2608 = vld [vmem:[#allocation13 + $0x1748] sm:$0xff]
        %v2609 = vld [vmem:[#allocation13 + $0x1750] sm:$0xff]
        %v2610 = vld [vmem:[#allocation13 + $0x1758] sm:$0xff]
        %v2611 = vld [vmem:[#allocation13 + $0x1760] sm:$0xff]
        %v2612 = vld [vmem:[#allocation13 + $0x1768] sm:$0xff]
        %v2613 = vld [vmem:[#allocation13 + $0x1770] sm:$0xff]
        %v2614 = vld [vmem:[#allocation13 + $0x1778] sm:$0xff]
        %v2615 = vld [vmem:[#allocation13 + $0x1780] sm:$0xff]
        %v2616 = vld [vmem:[#allocation13 + $0x1788] sm:$0xff]
        %v2617 = vld [vmem:[#allocation13 + $0x1790] sm:$0xff]
        %v2618 = vld [vmem:[#allocation13 + $0x1798] sm:$0xff]
        %v2619 = vld [vmem:[#allocation13 + $0x17a0] sm:$0xff]
        %v2620 = vld [vmem:[#allocation13 + $0x17a8] sm:$0xff]
        %v2621 = vld [vmem:[#allocation13 + $0x17b0] sm:$0xff]
        %v2622 = vld [vmem:[#allocation13 + $0x17b8] sm:$0xff]
        %v2623 = vld [vmem:[#allocation13 + $0x17c0] sm:$0xff]
        %v2624 = vld [vmem:[#allocation13 + $0x17c8] sm:$0xff]
        %v2625 = vld [vmem:[#allocation13 + $0x17d0] sm:$0xff]
        %v2626 = vld [vmem:[#allocation13 + $0x17d8] sm:$0xff]
        %v2627 = vld [vmem:[#allocation13 + $0x17e0] sm:$0xff]
        %v2628 = vld [vmem:[#allocation13 + $0x17e8] sm:$0xff]
        %v2629 = vld [vmem:[#allocation13 + $0x17f0] sm:$0xff]
        %v2630 = vld [vmem:[#allocation13 + $0x17f8] sm:$0xff]
        %v3399 = vunpack.c.l.b16 %v1863
        %v3400 = vunpack.c.h.b16 %v1863
        %v3401 = vunpack.c.l.b16 %v1864
        %v3402 = vunpack.c.h.b16 %v1864
        %v3403 = vunpack.c.l.b16 %v1865
        %v3404 = vunpack.c.h.b16 %v1865
        %v3405 = vunpack.c.l.b16 %v1866
        %v3406 = vunpack.c.h.b16 %v1866
        %v3407 = vunpack.c.l.b16 %v1867
        %v3408 = vunpack.c.h.b16 %v1867
        %v3409 = vunpack.c.l.b16 %v1868
        %v3410 = vunpack.c.h.b16 %v1868
        %v3411 = vunpack.c.l.b16 %v1869
        %v3412 = vunpack.c.h.b16 %v1869
        %v3413 = vunpack.c.l.b16 %v1870
        %v3414 = vunpack.c.h.b16 %v1870
        %v3415 = vunpack.c.l.b16 %v1871
        %v3416 = vunpack.c.h.b16 %v1871
        %v3417 = vunpack.c.l.b16 %v1872
        %v3418 = vunpack.c.h.b16 %v1872
        %v3419 = vunpack.c.l.b16 %v1873
        %v3420 = vunpack.c.h.b16 %v1873
        %v3421 = vunpack.c.l.b16 %v1874
        %v3422 = vunpack.c.h.b16 %v1874
        %v3423 = vunpack.c.l.b16 %v1875
        %v3424 = vunpack.c.h.b16 %v1875
        %v3425 = vunpack.c.l.b16 %v1876
        %v3426 = vunpack.c.h.b16 %v1876
        %v3427 = vunpack.c.l.b16 %v1877
        %v3428 = vunpack.c.h.b16 %v1877
        %v3429 = vunpack.c.l.b16 %v1878
        %v3430 = vunpack.c.h.b16 %v1878
        %v3431 = vunpack.c.l.b16 %v1879
        %v3432 = vunpack.c.h.b16 %v1879
        %v3433 = vunpack.c.l.b16 %v1880
        %v3434 = vunpack.c.h.b16 %v1880
        %v3435 = vunpack.c.l.b16 %v1881
        %v3436 = vunpack.c.h.b16 %v1881
        %v3437 = vunpack.c.l.b16 %v1882
        %v3438 = vunpack.c.h.b16 %v1882
        %v3439 = vunpack.c.l.b16 %v1883
        %v3440 = vunpack.c.h.b16 %v1883
        %v3441 = vunpack.c.l.b16 %v1884
        %v3442 = vunpack.c.h.b16 %v1884
        %v3443 = vunpack.c.l.b16 %v1885
        %v3444 = vunpack.c.h.b16 %v1885
        %v3445 = vunpack.c.l.b16 %v1886
        %v3446 = vunpack.c.h.b16 %v1886
        %v3447 = vunpack.c.l.b16 %v1887
        %v3448 = vunpack.c.h.b16 %v1887
        %v3449 = vunpack.c.l.b16 %v1888
        %v3450 = vunpack.c.h.b16 %v1888
        %v3451 = vunpack.c.l.b16 %v1889
        %v3452 = vunpack.c.h.b16 %v1889
        %v3453 = vunpack.c.l.b16 %v1890
        %v3454 = vunpack.c.h.b16 %v1890
        %v3455 = vunpack.c.l.b16 %v1891
        %v3456 = vunpack.c.h.b16 %v1891
        %v3457 = vunpack.c.l.b16 %v1892
        %v3458 = vunpack.c.h.b16 %v1892
        %v3459 = vunpack.c.l.b16 %v1893
        %v3460 = vunpack.c.h.b16 %v1893
        %v3461 = vunpack.c.l.b16 %v1894
        %v3462 = vunpack.c.h.b16 %v1894
        %v3463 = vunpack.c.l.b16 %v1895
        %v3464 = vunpack.c.h.b16 %v1895
        %v3465 = vunpack.c.l.b16 %v1896
        %v3466 = vunpack.c.h.b16 %v1896
        %v3467 = vunpack.c.l.b16 %v1897
        %v3468 = vunpack.c.h.b16 %v1897
        %v3469 = vunpack.c.l.b16 %v1898
        %v3470 = vunpack.c.h.b16 %v1898
        %v3471 = vunpack.c.l.b16 %v1899
        %v3472 = vunpack.c.h.b16 %v1899
        %v3473 = vunpack.c.l.b16 %v1900
        %v3474 = vunpack.c.h.b16 %v1900
        %v3475 = vunpack.c.l.b16 %v1901
        %v3476 = vunpack.c.h.b16 %v1901
        %v3477 = vunpack.c.l.b16 %v1902
        %v3478 = vunpack.c.h.b16 %v1902
        %v3479 = vunpack.c.l.b16 %v1903
        %v3480 = vunpack.c.h.b16 %v1903
        %v3481 = vunpack.c.l.b16 %v1904
        %v3482 = vunpack.c.h.b16 %v1904
        %v3483 = vunpack.c.l.b16 %v1905
        %v3484 = vunpack.c.h.b16 %v1905
        %v3485 = vunpack.c.l.b16 %v1906
        %v3486 = vunpack.c.h.b16 %v1906
        %v3487 = vunpack.c.l.b16 %v1907
        %v3488 = vunpack.c.h.b16 %v1907
        %v3489 = vunpack.c.l.b16 %v1908
        %v3490 = vunpack.c.h.b16 %v1908
        %v3491 = vunpack.c.l.b16 %v1909
        %v3492 = vunpack.c.h.b16 %v1909
        %v3493 = vunpack.c.l.b16 %v1910
        %v3494 = vunpack.c.h.b16 %v1910
        %v3495 = vunpack.c.l.b16 %v1911
        %v3496 = vunpack.c.h.b16 %v1911
        %v3497 = vunpack.c.l.b16 %v1912
        %v3498 = vunpack.c.h.b16 %v1912
        %v3499 = vunpack.c.l.b16 %v1913
        %v3500 = vunpack.c.h.b16 %v1913
        %v3501 = vunpack.c.l.b16 %v1914
        %v3502 = vunpack.c.h.b16 %v1914
        %v3503 = vunpack.c.l.b16 %v1915
        %v3504 = vunpack.c.h.b16 %v1915
        %v3505 = vunpack.c.l.b16 %v1916
        %v3506 = vunpack.c.h.b16 %v1916
        %v3507 = vunpack.c.l.b16 %v1917
        %v3508 = vunpack.c.h.b16 %v1917
        %v3509 = vunpack.c.l.b16 %v1918
        %v3510 = vunpack.c.h.b16 %v1918
        %v3511 = vunpack.c.l.b16 %v1919
        %v3512 = vunpack.c.h.b16 %v1919
        %v3513 = vunpack.c.l.b16 %v1920
        %v3514 = vunpack.c.h.b16 %v1920
        %v3515 = vunpack.c.l.b16 %v1921
        %v3516 = vunpack.c.h.b16 %v1921
        %v3517 = vunpack.c.l.b16 %v1922
        %v3518 = vunpack.c.h.b16 %v1922
        %v3519 = vunpack.c.l.b16 %v1923
        %v3520 = vunpack.c.h.b16 %v1923
        %v3521 = vunpack.c.l.b16 %v1924
        %v3522 = vunpack.c.h.b16 %v1924
        %v3523 = vunpack.c.l.b16 %v1925
        %v3524 = vunpack.c.h.b16 %v1925
        %v3525 = vunpack.c.l.b16 %v1926
        %v3526 = vunpack.c.h.b16 %v1926
        %v3527 = vunpack.c.l.b16 %v1927
        %v3528 = vunpack.c.h.b16 %v1927
        %v3529 = vunpack.c.l.b16 %v1928
        %v3530 = vunpack.c.h.b16 %v1928
        %v3531 = vunpack.c.l.b16 %v1929
        %v3532 = vunpack.c.h.b16 %v1929
        %v3533 = vunpack.c.l.b16 %v1930
        %v3534 = vunpack.c.h.b16 %v1930
        %v3535 = vunpack.c.l.b16 %v1931
        %v3536 = vunpack.c.h.b16 %v1931
        %v3537 = vunpack.c.l.b16 %v1932
        %v3538 = vunpack.c.h.b16 %v1932
        %v3539 = vunpack.c.l.b16 %v1933
        %v3540 = vunpack.c.h.b16 %v1933
        %v3541 = vunpack.c.l.b16 %v1934
        %v3542 = vunpack.c.h.b16 %v1934
        %v3543 = vunpack.c.l.b16 %v1935
        %v3544 = vunpack.c.h.b16 %v1935
        %v3545 = vunpack.c.l.b16 %v1936
        %v3546 = vunpack.c.h.b16 %v1936
        %v3547 = vunpack.c.l.b16 %v1937
        %v3548 = vunpack.c.h.b16 %v1937
        %v3549 = vunpack.c.l.b16 %v1938
        %v3550 = vunpack.c.h.b16 %v1938
        %v3551 = vunpack.c.l.b16 %v1939
        %v3552 = vunpack.c.h.b16 %v1939
        %v3553 = vunpack.c.l.b16 %v1940
        %v3554 = vunpack.c.h.b16 %v1940
        %v3555 = vunpack.c.l.b16 %v1941
        %v3556 = vunpack.c.h.b16 %v1941
        %v3557 = vunpack.c.l.b16 %v1942
        %v3558 = vunpack.c.h.b16 %v1942
        %v3559 = vunpack.c.l.b16 %v1943
        %v3560 = vunpack.c.h.b16 %v1943
        %v3561 = vunpack.c.l.b16 %v1944
        %v3562 = vunpack.c.h.b16 %v1944
        %v3563 = vunpack.c.l.b16 %v1945
        %v3564 = vunpack.c.h.b16 %v1945
        %v3565 = vunpack.c.l.b16 %v1946
        %v3566 = vunpack.c.h.b16 %v1946
        %v3567 = vunpack.c.l.b16 %v1947
        %v3568 = vunpack.c.h.b16 %v1947
        %v3569 = vunpack.c.l.b16 %v1948
        %v3570 = vunpack.c.h.b16 %v1948
        %v3571 = vunpack.c.l.b16 %v1949
        %v3572 = vunpack.c.h.b16 %v1949
        %v3573 = vunpack.c.l.b16 %v1950
        %v3574 = vunpack.c.h.b16 %v1950
        %v3575 = vunpack.c.l.b16 %v1951
        %v3576 = vunpack.c.h.b16 %v1951
        %v3577 = vunpack.c.l.b16 %v1952
        %v3578 = vunpack.c.h.b16 %v1952
        %v3579 = vunpack.c.l.b16 %v1953
        %v3580 = vunpack.c.h.b16 %v1953
        %v3581 = vunpack.c.l.b16 %v1954
        %v3582 = vunpack.c.h.b16 %v1954
        %v3583 = vunpack.c.l.b16 %v1955
        %v3584 = vunpack.c.h.b16 %v1955
        %v3585 = vunpack.c.l.b16 %v1956
        %v3586 = vunpack.c.h.b16 %v1956
        %v3587 = vunpack.c.l.b16 %v1957
        %v3588 = vunpack.c.h.b16 %v1957
        %v3589 = vunpack.c.l.b16 %v1958
        %v3590 = vunpack.c.h.b16 %v1958
        %v3591 = vunpack.c.l.b16 %v1959
        %v3592 = vunpack.c.h.b16 %v1959
        %v3593 = vunpack.c.l.b16 %v1960
        %v3594 = vunpack.c.h.b16 %v1960
        %v3595 = vunpack.c.l.b16 %v1961
        %v3596 = vunpack.c.h.b16 %v1961
        %v3597 = vunpack.c.l.b16 %v1962
        %v3598 = vunpack.c.h.b16 %v1962
        %v3599 = vunpack.c.l.b16 %v1963
        %v3600 = vunpack.c.h.b16 %v1963
        %v3601 = vunpack.c.l.b16 %v1964
        %v3602 = vunpack.c.h.b16 %v1964
        %v3603 = vunpack.c.l.b16 %v1965
        %v3604 = vunpack.c.h.b16 %v1965
        %v3605 = vunpack.c.l.b16 %v1966
        %v3606 = vunpack.c.h.b16 %v1966
        %v3607 = vunpack.c.l.b16 %v1967
        %v3608 = vunpack.c.h.b16 %v1967
        %v3609 = vunpack.c.l.b16 %v1968
        %v3610 = vunpack.c.h.b16 %v1968
        %v3611 = vunpack.c.l.b16 %v1969
        %v3612 = vunpack.c.h.b16 %v1969
        %v3613 = vunpack.c.l.b16 %v1970
        %v3614 = vunpack.c.h.b16 %v1970
        %v3615 = vunpack.c.l.b16 %v1971
        %v3616 = vunpack.c.h.b16 %v1971
        %v3617 = vunpack.c.l.b16 %v1972
        %v3618 = vunpack.c.h.b16 %v1972
        %v3619 = vunpack.c.l.b16 %v1973
        %v3620 = vunpack.c.h.b16 %v1973
        %v3621 = vunpack.c.l.b16 %v1974
        %v3622 = vunpack.c.h.b16 %v1974
        %v3623 = vunpack.c.l.b16 %v1975
        %v3624 = vunpack.c.h.b16 %v1975
        %v3625 = vunpack.c.l.b16 %v1976
        %v3626 = vunpack.c.h.b16 %v1976
        %v3627 = vunpack.c.l.b16 %v1977
        %v3628 = vunpack.c.h.b16 %v1977
        %v3629 = vunpack.c.l.b16 %v1978
        %v3630 = vunpack.c.h.b16 %v1978
        %v3631 = vunpack.c.l.b16 %v1979
        %v3632 = vunpack.c.h.b16 %v1979
        %v3633 = vunpack.c.l.b16 %v1980
        %v3634 = vunpack.c.h.b16 %v1980
        %v3635 = vunpack.c.l.b16 %v1981
        %v3636 = vunpack.c.h.b16 %v1981
        %v3637 = vunpack.c.l.b16 %v1982
        %v3638 = vunpack.c.h.b16 %v1982
        %v3639 = vunpack.c.l.b16 %v1983
        %v3640 = vunpack.c.h.b16 %v1983
        %v3641 = vunpack.c.l.b16 %v1984
        %v3642 = vunpack.c.h.b16 %v1984
        %v3643 = vunpack.c.l.b16 %v1985
        %v3644 = vunpack.c.h.b16 %v1985
        %v3645 = vunpack.c.l.b16 %v1986
        %v3646 = vunpack.c.h.b16 %v1986
        %v3647 = vunpack.c.l.b16 %v1987
        %v3648 = vunpack.c.h.b16 %v1987
        %v3649 = vunpack.c.l.b16 %v1988
        %v3650 = vunpack.c.h.b16 %v1988
        %v3651 = vunpack.c.l.b16 %v1989
        %v3652 = vunpack.c.h.b16 %v1989
        %v3653 = vunpack.c.l.b16 %v1990
        %v3654 = vunpack.c.h.b16 %v1990
        %v3655 = vunpack.c.l.b16 %v1991
        %v3656 = vunpack.c.h.b16 %v1991
        %v3657 = vunpack.c.l.b16 %v1992
        %v3658 = vunpack.c.h.b16 %v1992
        %v3659 = vunpack.c.l.b16 %v1993
        %v3660 = vunpack.c.h.b16 %v1993
        %v3661 = vunpack.c.l.b16 %v1994
        %v3662 = vunpack.c.h.b16 %v1994
        %v3663 = vunpack.c.l.b16 %v1995
        %v3664 = vunpack.c.h.b16 %v1995
        %v3665 = vunpack.c.l.b16 %v1996
        %v3666 = vunpack.c.h.b16 %v1996
        %v3667 = vunpack.c.l.b16 %v1997
        %v3668 = vunpack.c.h.b16 %v1997
        %v3669 = vunpack.c.l.b16 %v1998
        %v3670 = vunpack.c.h.b16 %v1998
        %v3671 = vunpack.c.l.b16 %v1999
        %v3672 = vunpack.c.h.b16 %v1999
        %v3673 = vunpack.c.l.b16 %v2000
        %v3674 = vunpack.c.h.b16 %v2000
        %v3675 = vunpack.c.l.b16 %v2001
        %v3676 = vunpack.c.h.b16 %v2001
        %v3677 = vunpack.c.l.b16 %v2002
        %v3678 = vunpack.c.h.b16 %v2002
        %v3679 = vunpack.c.l.b16 %v2003
        %v3680 = vunpack.c.h.b16 %v2003
        %v3681 = vunpack.c.l.b16 %v2004
        %v3682 = vunpack.c.h.b16 %v2004
        %v3683 = vunpack.c.l.b16 %v2005
        %v3684 = vunpack.c.h.b16 %v2005
        %v3685 = vunpack.c.l.b16 %v2006
        %v3686 = vunpack.c.h.b16 %v2006
        %v3687 = vunpack.c.l.b16 %v2007
        %v3688 = vunpack.c.h.b16 %v2007
        %v3689 = vunpack.c.l.b16 %v2008
        %v3690 = vunpack.c.h.b16 %v2008
        %v3691 = vunpack.c.l.b16 %v2009
        %v3692 = vunpack.c.h.b16 %v2009
        %v3693 = vunpack.c.l.b16 %v2010
        %v3694 = vunpack.c.h.b16 %v2010
        %v3695 = vunpack.c.l.b16 %v2011
        %v3696 = vunpack.c.h.b16 %v2011
        %v3697 = vunpack.c.l.b16 %v2012
        %v3698 = vunpack.c.h.b16 %v2012
        %v3699 = vunpack.c.l.b16 %v2013
        %v3700 = vunpack.c.h.b16 %v2013
        %v3701 = vunpack.c.l.b16 %v2014
        %v3702 = vunpack.c.h.b16 %v2014
        %v3703 = vunpack.c.l.b16 %v2015
        %v3704 = vunpack.c.h.b16 %v2015
        %v3705 = vunpack.c.l.b16 %v2016
        %v3706 = vunpack.c.h.b16 %v2016
        %v3707 = vunpack.c.l.b16 %v2017
        %v3708 = vunpack.c.h.b16 %v2017
        %v3709 = vunpack.c.l.b16 %v2018
        %v3710 = vunpack.c.h.b16 %v2018
        %v3711 = vunpack.c.l.b16 %v2019
        %v3712 = vunpack.c.h.b16 %v2019
        %v3713 = vunpack.c.l.b16 %v2020
        %v3714 = vunpack.c.h.b16 %v2020
        %v3715 = vunpack.c.l.b16 %v2021
        %v3716 = vunpack.c.h.b16 %v2021
        %v3717 = vunpack.c.l.b16 %v2022
        %v3718 = vunpack.c.h.b16 %v2022
        %v3719 = vunpack.c.l.b16 %v2023
        %v3720 = vunpack.c.h.b16 %v2023
        %v3721 = vunpack.c.l.b16 %v2024
        %v3722 = vunpack.c.h.b16 %v2024
        %v3723 = vunpack.c.l.b16 %v2025
        %v3724 = vunpack.c.h.b16 %v2025
        %v3725 = vunpack.c.l.b16 %v2026
        %v3726 = vunpack.c.h.b16 %v2026
        %v3727 = vunpack.c.l.b16 %v2027
        %v3728 = vunpack.c.h.b16 %v2027
        %v3729 = vunpack.c.l.b16 %v2028
        %v3730 = vunpack.c.h.b16 %v2028
        %v3731 = vunpack.c.l.b16 %v2029
        %v3732 = vunpack.c.h.b16 %v2029
        %v3733 = vunpack.c.l.b16 %v2030
        %v3734 = vunpack.c.h.b16 %v2030
        %v3735 = vunpack.c.l.b16 %v2031
        %v3736 = vunpack.c.h.b16 %v2031
        %v3737 = vunpack.c.l.b16 %v2032
        %v3738 = vunpack.c.h.b16 %v2032
        %v3739 = vunpack.c.l.b16 %v2033
        %v3740 = vunpack.c.h.b16 %v2033
        %v3741 = vunpack.c.l.b16 %v2034
        %v3742 = vunpack.c.h.b16 %v2034
        %v3743 = vunpack.c.l.b16 %v2035
        %v3744 = vunpack.c.h.b16 %v2035
        %v3745 = vunpack.c.l.b16 %v2036
        %v3746 = vunpack.c.h.b16 %v2036
        %v3747 = vunpack.c.l.b16 %v2037
        %v3748 = vunpack.c.h.b16 %v2037
        %v3749 = vunpack.c.l.b16 %v2038
        %v3750 = vunpack.c.h.b16 %v2038
        %v3751 = vunpack.c.l.b16 %v2039
        %v3752 = vunpack.c.h.b16 %v2039
        %v3753 = vunpack.c.l.b16 %v2040
        %v3754 = vunpack.c.h.b16 %v2040
        %v3755 = vunpack.c.l.b16 %v2041
        %v3756 = vunpack.c.h.b16 %v2041
        %v3757 = vunpack.c.l.b16 %v2042
        %v3758 = vunpack.c.h.b16 %v2042
        %v3759 = vunpack.c.l.b16 %v2043
        %v3760 = vunpack.c.h.b16 %v2043
        %v3761 = vunpack.c.l.b16 %v2044
        %v3762 = vunpack.c.h.b16 %v2044
        %v3763 = vunpack.c.l.b16 %v2045
        %v3764 = vunpack.c.h.b16 %v2045
        %v3765 = vunpack.c.l.b16 %v2046
        %v3766 = vunpack.c.h.b16 %v2046
        %v3767 = vunpack.c.l.b16 %v2047
        %v3768 = vunpack.c.h.b16 %v2047
        %v3769 = vunpack.c.l.b16 %v2048
        %v3770 = vunpack.c.h.b16 %v2048
        %v3771 = vunpack.c.l.b16 %v2049
        %v3772 = vunpack.c.h.b16 %v2049
        %v3773 = vunpack.c.l.b16 %v2050
        %v3774 = vunpack.c.h.b16 %v2050
        %v3775 = vunpack.c.l.b16 %v2051
        %v3776 = vunpack.c.h.b16 %v2051
        %v3777 = vunpack.c.l.b16 %v2052
        %v3778 = vunpack.c.h.b16 %v2052
        %v3779 = vunpack.c.l.b16 %v2053
        %v3780 = vunpack.c.h.b16 %v2053
        %v3781 = vunpack.c.l.b16 %v2054
        %v3782 = vunpack.c.h.b16 %v2054
        %v3783 = vunpack.c.l.b16 %v2055
        %v3784 = vunpack.c.h.b16 %v2055
        %v3785 = vunpack.c.l.b16 %v2056
        %v3786 = vunpack.c.h.b16 %v2056
        %v3787 = vunpack.c.l.b16 %v2057
        %v3788 = vunpack.c.h.b16 %v2057
        %v3789 = vunpack.c.l.b16 %v2058
        %v3790 = vunpack.c.h.b16 %v2058
        %v3791 = vunpack.c.l.b16 %v2059
        %v3792 = vunpack.c.h.b16 %v2059
        %v3793 = vunpack.c.l.b16 %v2060
        %v3794 = vunpack.c.h.b16 %v2060
        %v3795 = vunpack.c.l.b16 %v2061
        %v3796 = vunpack.c.h.b16 %v2061
        %v3797 = vunpack.c.l.b16 %v2062
        %v3798 = vunpack.c.h.b16 %v2062
        %v3799 = vunpack.c.l.b16 %v2063
        %v3800 = vunpack.c.h.b16 %v2063
        %v3801 = vunpack.c.l.b16 %v2064
        %v3802 = vunpack.c.h.b16 %v2064
        %v3803 = vunpack.c.l.b16 %v2065
        %v3804 = vunpack.c.h.b16 %v2065
        %v3805 = vunpack.c.l.b16 %v2066
        %v3806 = vunpack.c.h.b16 %v2066
        %v3807 = vunpack.c.l.b16 %v2067
        %v3808 = vunpack.c.h.b16 %v2067
        %v3809 = vunpack.c.l.b16 %v2068
        %v3810 = vunpack.c.h.b16 %v2068
        %v3811 = vunpack.c.l.b16 %v2069
        %v3812 = vunpack.c.h.b16 %v2069
        %v3813 = vunpack.c.l.b16 %v2070
        %v3814 = vunpack.c.h.b16 %v2070
        %v3815 = vunpack.c.l.b16 %v2071
        %v3816 = vunpack.c.h.b16 %v2071
        %v3817 = vunpack.c.l.b16 %v2072
        %v3818 = vunpack.c.h.b16 %v2072
        %v3819 = vunpack.c.l.b16 %v2073
        %v3820 = vunpack.c.h.b16 %v2073
        %v3821 = vunpack.c.l.b16 %v2074
        %v3822 = vunpack.c.h.b16 %v2074
        %v3823 = vunpack.c.l.b16 %v2075
        %v3824 = vunpack.c.h.b16 %v2075
        %v3825 = vunpack.c.l.b16 %v2076
        %v3826 = vunpack.c.h.b16 %v2076
        %v3827 = vunpack.c.l.b16 %v2077
        %v3828 = vunpack.c.h.b16 %v2077
        %v3829 = vunpack.c.l.b16 %v2078
        %v3830 = vunpack.c.h.b16 %v2078
        %v3831 = vunpack.c.l.b16 %v2079
        %v3832 = vunpack.c.h.b16 %v2079
        %v3833 = vunpack.c.l.b16 %v2080
        %v3834 = vunpack.c.h.b16 %v2080
        %v3835 = vunpack.c.l.b16 %v2081
        %v3836 = vunpack.c.h.b16 %v2081
        %v3837 = vunpack.c.l.b16 %v2082
        %v3838 = vunpack.c.h.b16 %v2082
        %v3839 = vunpack.c.l.b16 %v2083
        %v3840 = vunpack.c.h.b16 %v2083
        %v3841 = vunpack.c.l.b16 %v2084
        %v3842 = vunpack.c.h.b16 %v2084
        %v3843 = vunpack.c.l.b16 %v2085
        %v3844 = vunpack.c.h.b16 %v2085
        %v3845 = vunpack.c.l.b16 %v2086
        %v3846 = vunpack.c.h.b16 %v2086
        %v3847 = vunpack.c.l.b16 %v2087
        %v3848 = vunpack.c.h.b16 %v2087
        %v3849 = vunpack.c.l.b16 %v2088
        %v3850 = vunpack.c.h.b16 %v2088
        %v3851 = vunpack.c.l.b16 %v2089
        %v3852 = vunpack.c.h.b16 %v2089
        %v3853 = vunpack.c.l.b16 %v2090
        %v3854 = vunpack.c.h.b16 %v2090
        %v3855 = vunpack.c.l.b16 %v2091
        %v3856 = vunpack.c.h.b16 %v2091
        %v3857 = vunpack.c.l.b16 %v2092
        %v3858 = vunpack.c.h.b16 %v2092
        %v3859 = vunpack.c.l.b16 %v2093
        %v3860 = vunpack.c.h.b16 %v2093
        %v3861 = vunpack.c.l.b16 %v2094
        %v3862 = vunpack.c.h.b16 %v2094
        %v3863 = vunpack.c.l.b16 %v2095
        %v3864 = vunpack.c.h.b16 %v2095
        %v3865 = vunpack.c.l.b16 %v2096
        %v3866 = vunpack.c.h.b16 %v2096
        %v3867 = vunpack.c.l.b16 %v2097
        %v3868 = vunpack.c.h.b16 %v2097
        %v3869 = vunpack.c.l.b16 %v2098
        %v3870 = vunpack.c.h.b16 %v2098
        %v3871 = vunpack.c.l.b16 %v2099
        %v3872 = vunpack.c.h.b16 %v2099
        %v3873 = vunpack.c.l.b16 %v2100
        %v3874 = vunpack.c.h.b16 %v2100
        %v3875 = vunpack.c.l.b16 %v2101
        %v3876 = vunpack.c.h.b16 %v2101
        %v3877 = vunpack.c.l.b16 %v2102
        %v3878 = vunpack.c.h.b16 %v2102
        %v3879 = vunpack.c.l.b16 %v2103
        %v3880 = vunpack.c.h.b16 %v2103
        %v3881 = vunpack.c.l.b16 %v2104
        %v3882 = vunpack.c.h.b16 %v2104
        %v3883 = vunpack.c.l.b16 %v2105
        %v3884 = vunpack.c.h.b16 %v2105
        %v3885 = vunpack.c.l.b16 %v2106
        %v3886 = vunpack.c.h.b16 %v2106
        %v3887 = vunpack.c.l.b16 %v2107
        %v3888 = vunpack.c.h.b16 %v2107
        %v3889 = vunpack.c.l.b16 %v2108
        %v3890 = vunpack.c.h.b16 %v2108
        %v3891 = vunpack.c.l.b16 %v2109
        %v3892 = vunpack.c.h.b16 %v2109
        %v3893 = vunpack.c.l.b16 %v2110
        %v3894 = vunpack.c.h.b16 %v2110
        %v3895 = vunpack.c.l.b16 %v2111
        %v3896 = vunpack.c.h.b16 %v2111
        %v3897 = vunpack.c.l.b16 %v2112
        %v3898 = vunpack.c.h.b16 %v2112
        %v3899 = vunpack.c.l.b16 %v2113
        %v3900 = vunpack.c.h.b16 %v2113
        %v3901 = vunpack.c.l.b16 %v2114
        %v3902 = vunpack.c.h.b16 %v2114
        %v3903 = vunpack.c.l.b16 %v2115
        %v3904 = vunpack.c.h.b16 %v2115
        %v3905 = vunpack.c.l.b16 %v2116
        %v3906 = vunpack.c.h.b16 %v2116
        %v3907 = vunpack.c.l.b16 %v2117
        %v3908 = vunpack.c.h.b16 %v2117
        %v3909 = vunpack.c.l.b16 %v2118
        %v3910 = vunpack.c.h.b16 %v2118
        %v3911 = vunpack.c.l.b16 %v2119
        %v3912 = vunpack.c.h.b16 %v2119
        %v3913 = vunpack.c.l.b16 %v2120
        %v3914 = vunpack.c.h.b16 %v2120
        %v3915 = vunpack.c.l.b16 %v2121
        %v3916 = vunpack.c.h.b16 %v2121
        %v3917 = vunpack.c.l.b16 %v2122
        %v3918 = vunpack.c.h.b16 %v2122
        %v3919 = vunpack.c.l.b16 %v2123
        %v3920 = vunpack.c.h.b16 %v2123
        %v3921 = vunpack.c.l.b16 %v2124
        %v3922 = vunpack.c.h.b16 %v2124
        %v3923 = vunpack.c.l.b16 %v2125
        %v3924 = vunpack.c.h.b16 %v2125
        %v3925 = vunpack.c.l.b16 %v2126
        %v3926 = vunpack.c.h.b16 %v2126
        %v3927 = vunpack.c.l.b16 %v2127
        %v3928 = vunpack.c.h.b16 %v2127
        %v3929 = vunpack.c.l.b16 %v2128
        %v3930 = vunpack.c.h.b16 %v2128
        %v3931 = vunpack.c.l.b16 %v2129
        %v3932 = vunpack.c.h.b16 %v2129
        %v3933 = vunpack.c.l.b16 %v2130
        %v3934 = vunpack.c.h.b16 %v2130
        %v3935 = vunpack.c.l.b16 %v2131
        %v3936 = vunpack.c.h.b16 %v2131
        %v3937 = vunpack.c.l.b16 %v2132
        %v3938 = vunpack.c.h.b16 %v2132
        %v3939 = vunpack.c.l.b16 %v2133
        %v3940 = vunpack.c.h.b16 %v2133
        %v3941 = vunpack.c.l.b16 %v2134
        %v3942 = vunpack.c.h.b16 %v2134
        %v3943 = vunpack.c.l.b16 %v2135
        %v3944 = vunpack.c.h.b16 %v2135
        %v3945 = vunpack.c.l.b16 %v2136
        %v3946 = vunpack.c.h.b16 %v2136
        %v3947 = vunpack.c.l.b16 %v2137
        %v3948 = vunpack.c.h.b16 %v2137
        %v3949 = vunpack.c.l.b16 %v2138
        %v3950 = vunpack.c.h.b16 %v2138
        %v3951 = vunpack.c.l.b16 %v2139
        %v3952 = vunpack.c.h.b16 %v2139
        %v3953 = vunpack.c.l.b16 %v2140
        %v3954 = vunpack.c.h.b16 %v2140
        %v3955 = vunpack.c.l.b16 %v2141
        %v3956 = vunpack.c.h.b16 %v2141
        %v3957 = vunpack.c.l.b16 %v2142
        %v3958 = vunpack.c.h.b16 %v2142
        %v3959 = vunpack.c.l.b16 %v2143
        %v3960 = vunpack.c.h.b16 %v2143
        %v3961 = vunpack.c.l.b16 %v2144
        %v3962 = vunpack.c.h.b16 %v2144
        %v3963 = vunpack.c.l.b16 %v2145
        %v3964 = vunpack.c.h.b16 %v2145
        %v3965 = vunpack.c.l.b16 %v2146
        %v3966 = vunpack.c.h.b16 %v2146
        %v3967 = vunpack.c.l.b16 %v2147
        %v3968 = vunpack.c.h.b16 %v2147
        %v3969 = vunpack.c.l.b16 %v2148
        %v3970 = vunpack.c.h.b16 %v2148
        %v3971 = vunpack.c.l.b16 %v2149
        %v3972 = vunpack.c.h.b16 %v2149
        %v3973 = vunpack.c.l.b16 %v2150
        %v3974 = vunpack.c.h.b16 %v2150
        %v3975 = vunpack.c.l.b16 %v2151
        %v3976 = vunpack.c.h.b16 %v2151
        %v3977 = vunpack.c.l.b16 %v2152
        %v3978 = vunpack.c.h.b16 %v2152
        %v3979 = vunpack.c.l.b16 %v2153
        %v3980 = vunpack.c.h.b16 %v2153
        %v3981 = vunpack.c.l.b16 %v2154
        %v3982 = vunpack.c.h.b16 %v2154
        %v3983 = vunpack.c.l.b16 %v2155
        %v3984 = vunpack.c.h.b16 %v2155
        %v3985 = vunpack.c.l.b16 %v2156
        %v3986 = vunpack.c.h.b16 %v2156
        %v3987 = vunpack.c.l.b16 %v2157
        %v3988 = vunpack.c.h.b16 %v2157
        %v3989 = vunpack.c.l.b16 %v2158
        %v3990 = vunpack.c.h.b16 %v2158
        %v3991 = vunpack.c.l.b16 %v2159
        %v3992 = vunpack.c.h.b16 %v2159
        %v3993 = vunpack.c.l.b16 %v2160
        %v3994 = vunpack.c.h.b16 %v2160
        %v3995 = vunpack.c.l.b16 %v2161
        %v3996 = vunpack.c.h.b16 %v2161
        %v3997 = vunpack.c.l.b16 %v2162
        %v3998 = vunpack.c.h.b16 %v2162
        %v3999 = vunpack.c.l.b16 %v2163
        %v4000 = vunpack.c.h.b16 %v2163
        %v4001 = vunpack.c.l.b16 %v2164
        %v4002 = vunpack.c.h.b16 %v2164
        %v4003 = vunpack.c.l.b16 %v2165
        %v4004 = vunpack.c.h.b16 %v2165
        %v4005 = vunpack.c.l.b16 %v2166
        %v4006 = vunpack.c.h.b16 %v2166
        %v4007 = vunpack.c.l.b16 %v2167
        %v4008 = vunpack.c.h.b16 %v2167
        %v4009 = vunpack.c.l.b16 %v2168
        %v4010 = vunpack.c.h.b16 %v2168
        %v4011 = vunpack.c.l.b16 %v2169
        %v4012 = vunpack.c.h.b16 %v2169
        %v4013 = vunpack.c.l.b16 %v2170
        %v4014 = vunpack.c.h.b16 %v2170
        %v4015 = vunpack.c.l.b16 %v2171
        %v4016 = vunpack.c.h.b16 %v2171
        %v4017 = vunpack.c.l.b16 %v2172
        %v4018 = vunpack.c.h.b16 %v2172
        %v4019 = vunpack.c.l.b16 %v2173
        %v4020 = vunpack.c.h.b16 %v2173
        %v4021 = vunpack.c.l.b16 %v2174
        %v4022 = vunpack.c.h.b16 %v2174
        %v4023 = vunpack.c.l.b16 %v2175
        %v4024 = vunpack.c.h.b16 %v2175
        %v4025 = vunpack.c.l.b16 %v2176
        %v4026 = vunpack.c.h.b16 %v2176
        %v4027 = vunpack.c.l.b16 %v2177
        %v4028 = vunpack.c.h.b16 %v2177
        %v4029 = vunpack.c.l.b16 %v2178
        %v4030 = vunpack.c.h.b16 %v2178
        %v4031 = vunpack.c.l.b16 %v2179
        %v4032 = vunpack.c.h.b16 %v2179
        %v4033 = vunpack.c.l.b16 %v2180
        %v4034 = vunpack.c.h.b16 %v2180
        %v4035 = vunpack.c.l.b16 %v2181
        %v4036 = vunpack.c.h.b16 %v2181
        %v4037 = vunpack.c.l.b16 %v2182
        %v4038 = vunpack.c.h.b16 %v2182
        %v4039 = vunpack.c.l.b16 %v2183
        %v4040 = vunpack.c.h.b16 %v2183
        %v4041 = vunpack.c.l.b16 %v2184
        %v4042 = vunpack.c.h.b16 %v2184
        %v4043 = vunpack.c.l.b16 %v2185
        %v4044 = vunpack.c.h.b16 %v2185
        %v4045 = vunpack.c.l.b16 %v2186
        %v4046 = vunpack.c.h.b16 %v2186
        %v4047 = vunpack.c.l.b16 %v2187
        %v4048 = vunpack.c.h.b16 %v2187
        %v4049 = vunpack.c.l.b16 %v2188
        %v4050 = vunpack.c.h.b16 %v2188
        %v4051 = vunpack.c.l.b16 %v2189
        %v4052 = vunpack.c.h.b16 %v2189
        %v4053 = vunpack.c.l.b16 %v2190
        %v4054 = vunpack.c.h.b16 %v2190
        %v4055 = vunpack.c.l.b16 %v2191
        %v4056 = vunpack.c.h.b16 %v2191
        %v4057 = vunpack.c.l.b16 %v2192
        %v4058 = vunpack.c.h.b16 %v2192
        %v4059 = vunpack.c.l.b16 %v2193
        %v4060 = vunpack.c.h.b16 %v2193
        %v4061 = vunpack.c.l.b16 %v2194
        %v4062 = vunpack.c.h.b16 %v2194
        %v4063 = vunpack.c.l.b16 %v2195
        %v4064 = vunpack.c.h.b16 %v2195
        %v4065 = vunpack.c.l.b16 %v2196
        %v4066 = vunpack.c.h.b16 %v2196
        %v4067 = vunpack.c.l.b16 %v2197
        %v4068 = vunpack.c.h.b16 %v2197
        %v4069 = vunpack.c.l.b16 %v2198
        %v4070 = vunpack.c.h.b16 %v2198
        %v4071 = vunpack.c.l.b16 %v2199
        %v4072 = vunpack.c.h.b16 %v2199
        %v4073 = vunpack.c.l.b16 %v2200
        %v4074 = vunpack.c.h.b16 %v2200
        %v4075 = vunpack.c.l.b16 %v2201
        %v4076 = vunpack.c.h.b16 %v2201
        %v4077 = vunpack.c.l.b16 %v2202
        %v4078 = vunpack.c.h.b16 %v2202
        %v4079 = vunpack.c.l.b16 %v2203
        %v4080 = vunpack.c.h.b16 %v2203
        %v4081 = vunpack.c.l.b16 %v2204
        %v4082 = vunpack.c.h.b16 %v2204
        %v4083 = vunpack.c.l.b16 %v2205
        %v4084 = vunpack.c.h.b16 %v2205
        %v4085 = vunpack.c.l.b16 %v2206
        %v4086 = vunpack.c.h.b16 %v2206
        %v4087 = vunpack.c.l.b16 %v2207
        %v4088 = vunpack.c.h.b16 %v2207
        %v4089 = vunpack.c.l.b16 %v2208
        %v4090 = vunpack.c.h.b16 %v2208
        %v4091 = vunpack.c.l.b16 %v2209
        %v4092 = vunpack.c.h.b16 %v2209
        %v4093 = vunpack.c.l.b16 %v2210
        %v4094 = vunpack.c.h.b16 %v2210
        %v4095 = vunpack.c.l.b16 %v2211
        %v4096 = vunpack.c.h.b16 %v2211
        %v4097 = vunpack.c.l.b16 %v2212
        %v4098 = vunpack.c.h.b16 %v2212
        %v4099 = vunpack.c.l.b16 %v2213
        %v4100 = vunpack.c.h.b16 %v2213
        %v4101 = vunpack.c.l.b16 %v2214
        %v4102 = vunpack.c.h.b16 %v2214
        %v4103 = vunpack.c.l.b16 %v2215
        %v4104 = vunpack.c.h.b16 %v2215
        %v4105 = vunpack.c.l.b16 %v2216
        %v4106 = vunpack.c.h.b16 %v2216
        %v4107 = vunpack.c.l.b16 %v2217
        %v4108 = vunpack.c.h.b16 %v2217
        %v4109 = vunpack.c.l.b16 %v2218
        %v4110 = vunpack.c.h.b16 %v2218
        %v4111 = vunpack.c.l.b16 %v2219
        %v4112 = vunpack.c.h.b16 %v2219
        %v4113 = vunpack.c.l.b16 %v2220
        %v4114 = vunpack.c.h.b16 %v2220
        %v4115 = vunpack.c.l.b16 %v2221
        %v4116 = vunpack.c.h.b16 %v2221
        %v4117 = vunpack.c.l.b16 %v2222
        %v4118 = vunpack.c.h.b16 %v2222
        %v4119 = vunpack.c.l.b16 %v2223
        %v4120 = vunpack.c.h.b16 %v2223
        %v4121 = vunpack.c.l.b16 %v2224
        %v4122 = vunpack.c.h.b16 %v2224
        %v4123 = vunpack.c.l.b16 %v2225
        %v4124 = vunpack.c.h.b16 %v2225
        %v4125 = vunpack.c.l.b16 %v2226
        %v4126 = vunpack.c.h.b16 %v2226
        %v4127 = vunpack.c.l.b16 %v2227
        %v4128 = vunpack.c.h.b16 %v2227
        %v4129 = vunpack.c.l.b16 %v2228
        %v4130 = vunpack.c.h.b16 %v2228
        %v4131 = vunpack.c.l.b16 %v2229
        %v4132 = vunpack.c.h.b16 %v2229
        %v4133 = vunpack.c.l.b16 %v2230
        %v4134 = vunpack.c.h.b16 %v2230
        %v4135 = vunpack.c.l.b16 %v2231
        %v4136 = vunpack.c.h.b16 %v2231
        %v4137 = vunpack.c.l.b16 %v2232
        %v4138 = vunpack.c.h.b16 %v2232
        %v4139 = vunpack.c.l.b16 %v2233
        %v4140 = vunpack.c.h.b16 %v2233
        %v4141 = vunpack.c.l.b16 %v2234
        %v4142 = vunpack.c.h.b16 %v2234
        %v4143 = vunpack.c.l.b16 %v2235
        %v4144 = vunpack.c.h.b16 %v2235
        %v4145 = vunpack.c.l.b16 %v2236
        %v4146 = vunpack.c.h.b16 %v2236
        %v4147 = vunpack.c.l.b16 %v2237
        %v4148 = vunpack.c.h.b16 %v2237
        %v4149 = vunpack.c.l.b16 %v2238
        %v4150 = vunpack.c.h.b16 %v2238
        %v4151 = vunpack.c.l.b16 %v2239
        %v4152 = vunpack.c.h.b16 %v2239
        %v4153 = vunpack.c.l.b16 %v2240
        %v4154 = vunpack.c.h.b16 %v2240
        %v4155 = vunpack.c.l.b16 %v2241
        %v4156 = vunpack.c.h.b16 %v2241
        %v4157 = vunpack.c.l.b16 %v2242
        %v4158 = vunpack.c.h.b16 %v2242
        %v4159 = vunpack.c.l.b16 %v2243
        %v4160 = vunpack.c.h.b16 %v2243
        %v4161 = vunpack.c.l.b16 %v2244
        %v4162 = vunpack.c.h.b16 %v2244
        %v4163 = vunpack.c.l.b16 %v2245
        %v4164 = vunpack.c.h.b16 %v2245
        %v4165 = vunpack.c.l.b16 %v2246
        %v4166 = vunpack.c.h.b16 %v2246
        %v4167 = vunpack.c.l.b16 %v2247
        %v4168 = vunpack.c.h.b16 %v2247
        %v4169 = vunpack.c.l.b16 %v2248
        %v4170 = vunpack.c.h.b16 %v2248
        %v4171 = vunpack.c.l.b16 %v2249
        %v4172 = vunpack.c.h.b16 %v2249
        %v4173 = vunpack.c.l.b16 %v2250
        %v4174 = vunpack.c.h.b16 %v2250
        %v4175 = vunpack.c.l.b16 %v2251
        %v4176 = vunpack.c.h.b16 %v2251
        %v4177 = vunpack.c.l.b16 %v2252
        %v4178 = vunpack.c.h.b16 %v2252
        %v4179 = vunpack.c.l.b16 %v2253
        %v4180 = vunpack.c.h.b16 %v2253
        %v4181 = vunpack.c.l.b16 %v2254
        %v4182 = vunpack.c.h.b16 %v2254
        %v4183 = vunpack.c.l.b16 %v2255
        %v4184 = vunpack.c.h.b16 %v2255
        %v4185 = vunpack.c.l.b16 %v2256
        %v4186 = vunpack.c.h.b16 %v2256
        %v4187 = vunpack.c.l.b16 %v2257
        %v4188 = vunpack.c.h.b16 %v2257
        %v4189 = vunpack.c.l.b16 %v2258
        %v4190 = vunpack.c.h.b16 %v2258
        %v4191 = vunpack.c.l.b16 %v2259
        %v4192 = vunpack.c.h.b16 %v2259
        %v4193 = vunpack.c.l.b16 %v2260
        %v4194 = vunpack.c.h.b16 %v2260
        %v4195 = vunpack.c.l.b16 %v2261
        %v4196 = vunpack.c.h.b16 %v2261
        %v4197 = vunpack.c.l.b16 %v2262
        %v4198 = vunpack.c.h.b16 %v2262
        %v4199 = vunpack.c.l.b16 %v2263
        %v4200 = vunpack.c.h.b16 %v2263
        %v4201 = vunpack.c.l.b16 %v2264
        %v4202 = vunpack.c.h.b16 %v2264
        %v4203 = vunpack.c.l.b16 %v2265
        %v4204 = vunpack.c.h.b16 %v2265
        %v4205 = vunpack.c.l.b16 %v2266
        %v4206 = vunpack.c.h.b16 %v2266
        %v4207 = vunpack.c.l.b16 %v2267
        %v4208 = vunpack.c.h.b16 %v2267
        %v4209 = vunpack.c.l.b16 %v2268
        %v4210 = vunpack.c.h.b16 %v2268
        %v4211 = vunpack.c.l.b16 %v2269
        %v4212 = vunpack.c.h.b16 %v2269
        %v4213 = vunpack.c.l.b16 %v2270
        %v4214 = vunpack.c.h.b16 %v2270
        %v4215 = vunpack.c.l.b16 %v2271
        %v4216 = vunpack.c.h.b16 %v2271
        %v4217 = vunpack.c.l.b16 %v2272
        %v4218 = vunpack.c.h.b16 %v2272
        %v4219 = vunpack.c.l.b16 %v2273
        %v4220 = vunpack.c.h.b16 %v2273
        %v4221 = vunpack.c.l.b16 %v2274
        %v4222 = vunpack.c.h.b16 %v2274
        %v4223 = vunpack.c.l.b16 %v2275
        %v4224 = vunpack.c.h.b16 %v2275
        %v4225 = vunpack.c.l.b16 %v2276
        %v4226 = vunpack.c.h.b16 %v2276
        %v4227 = vunpack.c.l.b16 %v2277
        %v4228 = vunpack.c.h.b16 %v2277
        %v4229 = vunpack.c.l.b16 %v2278
        %v4230 = vunpack.c.h.b16 %v2278
        %v4231 = vunpack.c.l.b16 %v2279
        %v4232 = vunpack.c.h.b16 %v2279
        %v4233 = vunpack.c.l.b16 %v2280
        %v4234 = vunpack.c.h.b16 %v2280
        %v4235 = vunpack.c.l.b16 %v2281
        %v4236 = vunpack.c.h.b16 %v2281
        %v4237 = vunpack.c.l.b16 %v2282
        %v4238 = vunpack.c.h.b16 %v2282
        %v4239 = vunpack.c.l.b16 %v2283
        %v4240 = vunpack.c.h.b16 %v2283
        %v4241 = vunpack.c.l.b16 %v2284
        %v4242 = vunpack.c.h.b16 %v2284
        %v4243 = vunpack.c.l.b16 %v2285
        %v4244 = vunpack.c.h.b16 %v2285
        %v4245 = vunpack.c.l.b16 %v2286
        %v4246 = vunpack.c.h.b16 %v2286
        %v4247 = vunpack.c.l.b16 %v2287
        %v4248 = vunpack.c.h.b16 %v2287
        %v4249 = vunpack.c.l.b16 %v2288
        %v4250 = vunpack.c.h.b16 %v2288
        %v4251 = vunpack.c.l.b16 %v2289
        %v4252 = vunpack.c.h.b16 %v2289
        %v4253 = vunpack.c.l.b16 %v2290
        %v4254 = vunpack.c.h.b16 %v2290
        %v4255 = vunpack.c.l.b16 %v2291
        %v4256 = vunpack.c.h.b16 %v2291
        %v4257 = vunpack.c.l.b16 %v2292
        %v4258 = vunpack.c.h.b16 %v2292
        %v4259 = vunpack.c.l.b16 %v2293
        %v4260 = vunpack.c.h.b16 %v2293
        %v4261 = vunpack.c.l.b16 %v2294
        %v4262 = vunpack.c.h.b16 %v2294
        %v4263 = vunpack.c.l.b16 %v2295
        %v4264 = vunpack.c.h.b16 %v2295
        %v4265 = vunpack.c.l.b16 %v2296
        %v4266 = vunpack.c.h.b16 %v2296
        %v4267 = vunpack.c.l.b16 %v2297
        %v4268 = vunpack.c.h.b16 %v2297
        %v4269 = vunpack.c.l.b16 %v2298
        %v4270 = vunpack.c.h.b16 %v2298
        %v4271 = vunpack.c.l.b16 %v2299
        %v4272 = vunpack.c.h.b16 %v2299
        %v4273 = vunpack.c.l.b16 %v2300
        %v4274 = vunpack.c.h.b16 %v2300
        %v4275 = vunpack.c.l.b16 %v2301
        %v4276 = vunpack.c.h.b16 %v2301
        %v4277 = vunpack.c.l.b16 %v2302
        %v4278 = vunpack.c.h.b16 %v2302
        %v4279 = vunpack.c.l.b16 %v2303
        %v4280 = vunpack.c.h.b16 %v2303
        %v4281 = vunpack.c.l.b16 %v2304
        %v4282 = vunpack.c.h.b16 %v2304
        %v4283 = vunpack.c.l.b16 %v2305
        %v4284 = vunpack.c.h.b16 %v2305
        %v4285 = vunpack.c.l.b16 %v2306
        %v4286 = vunpack.c.h.b16 %v2306
        %v4287 = vunpack.c.l.b16 %v2307
        %v4288 = vunpack.c.h.b16 %v2307
        %v4289 = vunpack.c.l.b16 %v2308
        %v4290 = vunpack.c.h.b16 %v2308
        %v4291 = vunpack.c.l.b16 %v2309
        %v4292 = vunpack.c.h.b16 %v2309
        %v4293 = vunpack.c.l.b16 %v2310
        %v4294 = vunpack.c.h.b16 %v2310
        %v4295 = vunpack.c.l.b16 %v2311
        %v4296 = vunpack.c.h.b16 %v2311
        %v4297 = vunpack.c.l.b16 %v2312
        %v4298 = vunpack.c.h.b16 %v2312
        %v4299 = vunpack.c.l.b16 %v2313
        %v4300 = vunpack.c.h.b16 %v2313
        %v4301 = vunpack.c.l.b16 %v2314
        %v4302 = vunpack.c.h.b16 %v2314
        %v4303 = vunpack.c.l.b16 %v2315
        %v4304 = vunpack.c.h.b16 %v2315
        %v4305 = vunpack.c.l.b16 %v2316
        %v4306 = vunpack.c.h.b16 %v2316
        %v4307 = vunpack.c.l.b16 %v2317
        %v4308 = vunpack.c.h.b16 %v2317
        %v4309 = vunpack.c.l.b16 %v2318
        %v4310 = vunpack.c.h.b16 %v2318
        %v4311 = vunpack.c.l.b16 %v2319
        %v4312 = vunpack.c.h.b16 %v2319
        %v4313 = vunpack.c.l.b16 %v2320
        %v4314 = vunpack.c.h.b16 %v2320
        %v4315 = vunpack.c.l.b16 %v2321
        %v4316 = vunpack.c.h.b16 %v2321
        %v4317 = vunpack.c.l.b16 %v2322
        %v4318 = vunpack.c.h.b16 %v2322
        %v4319 = vunpack.c.l.b16 %v2323
        %v4320 = vunpack.c.h.b16 %v2323
        %v4321 = vunpack.c.l.b16 %v2324
        %v4322 = vunpack.c.h.b16 %v2324
        %v4323 = vunpack.c.l.b16 %v2325
        %v4324 = vunpack.c.h.b16 %v2325
        %v4325 = vunpack.c.l.b16 %v2326
        %v4326 = vunpack.c.h.b16 %v2326
        %v4327 = vunpack.c.l.b16 %v2327
        %v4328 = vunpack.c.h.b16 %v2327
        %v4329 = vunpack.c.l.b16 %v2328
        %v4330 = vunpack.c.h.b16 %v2328
        %v4331 = vunpack.c.l.b16 %v2329
        %v4332 = vunpack.c.h.b16 %v2329
        %v4333 = vunpack.c.l.b16 %v2330
        %v4334 = vunpack.c.h.b16 %v2330
        %v4335 = vunpack.c.l.b16 %v2331
        %v4336 = vunpack.c.h.b16 %v2331
        %v4337 = vunpack.c.l.b16 %v2332
        %v4338 = vunpack.c.h.b16 %v2332
        %v4339 = vunpack.c.l.b16 %v2333
        %v4340 = vunpack.c.h.b16 %v2333
        %v4341 = vunpack.c.l.b16 %v2334
        %v4342 = vunpack.c.h.b16 %v2334
        %v4343 = vunpack.c.l.b16 %v2335
        %v4344 = vunpack.c.h.b16 %v2335
        %v4345 = vunpack.c.l.b16 %v2336
        %v4346 = vunpack.c.h.b16 %v2336
        %v4347 = vunpack.c.l.b16 %v2337
        %v4348 = vunpack.c.h.b16 %v2337
        %v4349 = vunpack.c.l.b16 %v2338
        %v4350 = vunpack.c.h.b16 %v2338
        %v4351 = vunpack.c.l.b16 %v2339
        %v4352 = vunpack.c.h.b16 %v2339
        %v4353 = vunpack.c.l.b16 %v2340
        %v4354 = vunpack.c.h.b16 %v2340
        %v4355 = vunpack.c.l.b16 %v2341
        %v4356 = vunpack.c.h.b16 %v2341
        %v4357 = vunpack.c.l.b16 %v2342
        %v4358 = vunpack.c.h.b16 %v2342
        %v4359 = vunpack.c.l.b16 %v2343
        %v4360 = vunpack.c.h.b16 %v2343
        %v4361 = vunpack.c.l.b16 %v2344
        %v4362 = vunpack.c.h.b16 %v2344
        %v4363 = vunpack.c.l.b16 %v2345
        %v4364 = vunpack.c.h.b16 %v2345
        %v4365 = vunpack.c.l.b16 %v2346
        %v4366 = vunpack.c.h.b16 %v2346
        %v4367 = vunpack.c.l.b16 %v2347
        %v4368 = vunpack.c.h.b16 %v2347
        %v4369 = vunpack.c.l.b16 %v2348
        %v4370 = vunpack.c.h.b16 %v2348
        %v4371 = vunpack.c.l.b16 %v2349
        %v4372 = vunpack.c.h.b16 %v2349
        %v4373 = vunpack.c.l.b16 %v2350
        %v4374 = vunpack.c.h.b16 %v2350
        %v4375 = vunpack.c.l.b16 %v2351
        %v4376 = vunpack.c.h.b16 %v2351
        %v4377 = vunpack.c.l.b16 %v2352
        %v4378 = vunpack.c.h.b16 %v2352
        %v4379 = vunpack.c.l.b16 %v2353
        %v4380 = vunpack.c.h.b16 %v2353
        %v4381 = vunpack.c.l.b16 %v2354
        %v4382 = vunpack.c.h.b16 %v2354
        %v4383 = vunpack.c.l.b16 %v2355
        %v4384 = vunpack.c.h.b16 %v2355
        %v4385 = vunpack.c.l.b16 %v2356
        %v4386 = vunpack.c.h.b16 %v2356
        %v4387 = vunpack.c.l.b16 %v2357
        %v4388 = vunpack.c.h.b16 %v2357
        %v4389 = vunpack.c.l.b16 %v2358
        %v4390 = vunpack.c.h.b16 %v2358
        %v4391 = vunpack.c.l.b16 %v2359
        %v4392 = vunpack.c.h.b16 %v2359
        %v4393 = vunpack.c.l.b16 %v2360
        %v4394 = vunpack.c.h.b16 %v2360
        %v4395 = vunpack.c.l.b16 %v2361
        %v4396 = vunpack.c.h.b16 %v2361
        %v4397 = vunpack.c.l.b16 %v2362
        %v4398 = vunpack.c.h.b16 %v2362
        %v4399 = vunpack.c.l.b16 %v2363
        %v4400 = vunpack.c.h.b16 %v2363
        %v4401 = vunpack.c.l.b16 %v2364
        %v4402 = vunpack.c.h.b16 %v2364
        %v4403 = vunpack.c.l.b16 %v2365
        %v4404 = vunpack.c.h.b16 %v2365
        %v4405 = vunpack.c.l.b16 %v2366
        %v4406 = vunpack.c.h.b16 %v2366
        %v4407 = vunpack.c.l.b16 %v2367
        %v4408 = vunpack.c.h.b16 %v2367
        %v4409 = vunpack.c.l.b16 %v2368
        %v4410 = vunpack.c.h.b16 %v2368
        %v4411 = vunpack.c.l.b16 %v2369
        %v4412 = vunpack.c.h.b16 %v2369
        %v4413 = vunpack.c.l.b16 %v2370
        %v4414 = vunpack.c.h.b16 %v2370
        %v4415 = vunpack.c.l.b16 %v2371
        %v4416 = vunpack.c.h.b16 %v2371
        %v4417 = vunpack.c.l.b16 %v2372
        %v4418 = vunpack.c.h.b16 %v2372
        %v4419 = vunpack.c.l.b16 %v2373
        %v4420 = vunpack.c.h.b16 %v2373
        %v4421 = vunpack.c.l.b16 %v2374
        %v4422 = vunpack.c.h.b16 %v2374
        %v4423 = vunpack.c.l.b16 %v2375
        %v4424 = vunpack.c.h.b16 %v2375
        %v4425 = vunpack.c.l.b16 %v2376
        %v4426 = vunpack.c.h.b16 %v2376
        %v4427 = vunpack.c.l.b16 %v2377
        %v4428 = vunpack.c.h.b16 %v2377
        %v4429 = vunpack.c.l.b16 %v2378
        %v4430 = vunpack.c.h.b16 %v2378
        %v4431 = vunpack.c.l.b16 %v2379
        %v4432 = vunpack.c.h.b16 %v2379
        %v4433 = vunpack.c.l.b16 %v2380
        %v4434 = vunpack.c.h.b16 %v2380
        %v4435 = vunpack.c.l.b16 %v2381
        %v4436 = vunpack.c.h.b16 %v2381
        %v4437 = vunpack.c.l.b16 %v2382
        %v4438 = vunpack.c.h.b16 %v2382
        %v4439 = vunpack.c.l.b16 %v2383
        %v4440 = vunpack.c.h.b16 %v2383
        %v4441 = vunpack.c.l.b16 %v2384
        %v4442 = vunpack.c.h.b16 %v2384
        %v4443 = vunpack.c.l.b16 %v2385
        %v4444 = vunpack.c.h.b16 %v2385
        %v4445 = vunpack.c.l.b16 %v2386
        %v4446 = vunpack.c.h.b16 %v2386
        %v4447 = vunpack.c.l.b16 %v2387
        %v4448 = vunpack.c.h.b16 %v2387
        %v4449 = vunpack.c.l.b16 %v2388
        %v4450 = vunpack.c.h.b16 %v2388
        %v4451 = vunpack.c.l.b16 %v2389
        %v4452 = vunpack.c.h.b16 %v2389
        %v4453 = vunpack.c.l.b16 %v2390
        %v4454 = vunpack.c.h.b16 %v2390
        %v4455 = vunpack.c.l.b16 %v2391
        %v4456 = vunpack.c.h.b16 %v2391
        %v4457 = vunpack.c.l.b16 %v2392
        %v4458 = vunpack.c.h.b16 %v2392
        %v4459 = vunpack.c.l.b16 %v2393
        %v4460 = vunpack.c.h.b16 %v2393
        %v4461 = vunpack.c.l.b16 %v2394
        %v4462 = vunpack.c.h.b16 %v2394
        %v4463 = vunpack.c.l.b16 %v2395
        %v4464 = vunpack.c.h.b16 %v2395
        %v4465 = vunpack.c.l.b16 %v2396
        %v4466 = vunpack.c.h.b16 %v2396
        %v4467 = vunpack.c.l.b16 %v2397
        %v4468 = vunpack.c.h.b16 %v2397
        %v4469 = vunpack.c.l.b16 %v2398
        %v4470 = vunpack.c.h.b16 %v2398
        %v4471 = vunpack.c.l.b16 %v2399
        %v4472 = vunpack.c.h.b16 %v2399
        %v4473 = vunpack.c.l.b16 %v2400
        %v4474 = vunpack.c.h.b16 %v2400
        %v4475 = vunpack.c.l.b16 %v2401
        %v4476 = vunpack.c.h.b16 %v2401
        %v4477 = vunpack.c.l.b16 %v2402
        %v4478 = vunpack.c.h.b16 %v2402
        %v4479 = vunpack.c.l.b16 %v2403
        %v4480 = vunpack.c.h.b16 %v2403
        %v4481 = vunpack.c.l.b16 %v2404
        %v4482 = vunpack.c.h.b16 %v2404
        %v4483 = vunpack.c.l.b16 %v2405
        %v4484 = vunpack.c.h.b16 %v2405
        %v4485 = vunpack.c.l.b16 %v2406
        %v4486 = vunpack.c.h.b16 %v2406
        %v4487 = vunpack.c.l.b16 %v2407
        %v4488 = vunpack.c.h.b16 %v2407
        %v4489 = vunpack.c.l.b16 %v2408
        %v4490 = vunpack.c.h.b16 %v2408
        %v4491 = vunpack.c.l.b16 %v2409
        %v4492 = vunpack.c.h.b16 %v2409
        %v4493 = vunpack.c.l.b16 %v2410
        %v4494 = vunpack.c.h.b16 %v2410
        %v4495 = vunpack.c.l.b16 %v2411
        %v4496 = vunpack.c.h.b16 %v2411
        %v4497 = vunpack.c.l.b16 %v2412
        %v4498 = vunpack.c.h.b16 %v2412
        %v4499 = vunpack.c.l.b16 %v2413
        %v4500 = vunpack.c.h.b16 %v2413
        %v4501 = vunpack.c.l.b16 %v2414
        %v4502 = vunpack.c.h.b16 %v2414
        %v4503 = vunpack.c.l.b16 %v2415
        %v4504 = vunpack.c.h.b16 %v2415
        %v4505 = vunpack.c.l.b16 %v2416
        %v4506 = vunpack.c.h.b16 %v2416
        %v4507 = vunpack.c.l.b16 %v2417
        %v4508 = vunpack.c.h.b16 %v2417
        %v4509 = vunpack.c.l.b16 %v2418
        %v4510 = vunpack.c.h.b16 %v2418
        %v4511 = vunpack.c.l.b16 %v2419
        %v4512 = vunpack.c.h.b16 %v2419
        %v4513 = vunpack.c.l.b16 %v2420
        %v4514 = vunpack.c.h.b16 %v2420
        %v4515 = vunpack.c.l.b16 %v2421
        %v4516 = vunpack.c.h.b16 %v2421
        %v4517 = vunpack.c.l.b16 %v2422
        %v4518 = vunpack.c.h.b16 %v2422
        %v4519 = vunpack.c.l.b16 %v2423
        %v4520 = vunpack.c.h.b16 %v2423
        %v4521 = vunpack.c.l.b16 %v2424
        %v4522 = vunpack.c.h.b16 %v2424
        %v4523 = vunpack.c.l.b16 %v2425
        %v4524 = vunpack.c.h.b16 %v2425
        %v4525 = vunpack.c.l.b16 %v2426
        %v4526 = vunpack.c.h.b16 %v2426
        %v4527 = vunpack.c.l.b16 %v2427
        %v4528 = vunpack.c.h.b16 %v2427
        %v4529 = vunpack.c.l.b16 %v2428
        %v4530 = vunpack.c.h.b16 %v2428
        %v4531 = vunpack.c.l.b16 %v2429
        %v4532 = vunpack.c.h.b16 %v2429
        %v4533 = vunpack.c.l.b16 %v2430
        %v4534 = vunpack.c.h.b16 %v2430
        %v4535 = vunpack.c.l.b16 %v2431
        %v4536 = vunpack.c.h.b16 %v2431
        %v4537 = vunpack.c.l.b16 %v2432
        %v4538 = vunpack.c.h.b16 %v2432
        %v4539 = vunpack.c.l.b16 %v2433
        %v4540 = vunpack.c.h.b16 %v2433
        %v4541 = vunpack.c.l.b16 %v2434
        %v4542 = vunpack.c.h.b16 %v2434
        %v4543 = vunpack.c.l.b16 %v2435
        %v4544 = vunpack.c.h.b16 %v2435
        %v4545 = vunpack.c.l.b16 %v2436
        %v4546 = vunpack.c.h.b16 %v2436
        %v4547 = vunpack.c.l.b16 %v2437
        %v4548 = vunpack.c.h.b16 %v2437
        %v4549 = vunpack.c.l.b16 %v2438
        %v4550 = vunpack.c.h.b16 %v2438
        %v4551 = vunpack.c.l.b16 %v2439
        %v4552 = vunpack.c.h.b16 %v2439
        %v4553 = vunpack.c.l.b16 %v2440
        %v4554 = vunpack.c.h.b16 %v2440
        %v4555 = vunpack.c.l.b16 %v2441
        %v4556 = vunpack.c.h.b16 %v2441
        %v4557 = vunpack.c.l.b16 %v2442
        %v4558 = vunpack.c.h.b16 %v2442
        %v4559 = vunpack.c.l.b16 %v2443
        %v4560 = vunpack.c.h.b16 %v2443
        %v4561 = vunpack.c.l.b16 %v2444
        %v4562 = vunpack.c.h.b16 %v2444
        %v4563 = vunpack.c.l.b16 %v2445
        %v4564 = vunpack.c.h.b16 %v2445
        %v4565 = vunpack.c.l.b16 %v2446
        %v4566 = vunpack.c.h.b16 %v2446
        %v4567 = vunpack.c.l.b16 %v2447
        %v4568 = vunpack.c.h.b16 %v2447
        %v4569 = vunpack.c.l.b16 %v2448
        %v4570 = vunpack.c.h.b16 %v2448
        %v4571 = vunpack.c.l.b16 %v2449
        %v4572 = vunpack.c.h.b16 %v2449
        %v4573 = vunpack.c.l.b16 %v2450
        %v4574 = vunpack.c.h.b16 %v2450
        %v4575 = vunpack.c.l.b16 %v2451
        %v4576 = vunpack.c.h.b16 %v2451
        %v4577 = vunpack.c.l.b16 %v2452
        %v4578 = vunpack.c.h.b16 %v2452
        %v4579 = vunpack.c.l.b16 %v2453
        %v4580 = vunpack.c.h.b16 %v2453
        %v4581 = vunpack.c.l.b16 %v2454
        %v4582 = vunpack.c.h.b16 %v2454
        %v4583 = vunpack.c.l.b16 %v2455
        %v4584 = vunpack.c.h.b16 %v2455
        %v4585 = vunpack.c.l.b16 %v2456
        %v4586 = vunpack.c.h.b16 %v2456
        %v4587 = vunpack.c.l.b16 %v2457
        %v4588 = vunpack.c.h.b16 %v2457
        %v4589 = vunpack.c.l.b16 %v2458
        %v4590 = vunpack.c.h.b16 %v2458
        %v4591 = vunpack.c.l.b16 %v2459
        %v4592 = vunpack.c.h.b16 %v2459
        %v4593 = vunpack.c.l.b16 %v2460
        %v4594 = vunpack.c.h.b16 %v2460
        %v4595 = vunpack.c.l.b16 %v2461
        %v4596 = vunpack.c.h.b16 %v2461
        %v4597 = vunpack.c.l.b16 %v2462
        %v4598 = vunpack.c.h.b16 %v2462
        %v4599 = vunpack.c.l.b16 %v2463
        %v4600 = vunpack.c.h.b16 %v2463
        %v4601 = vunpack.c.l.b16 %v2464
        %v4602 = vunpack.c.h.b16 %v2464
        %v4603 = vunpack.c.l.b16 %v2465
        %v4604 = vunpack.c.h.b16 %v2465
        %v4605 = vunpack.c.l.b16 %v2466
        %v4606 = vunpack.c.h.b16 %v2466
        %v4607 = vunpack.c.l.b16 %v2467
        %v4608 = vunpack.c.h.b16 %v2467
        %v4609 = vunpack.c.l.b16 %v2468
        %v4610 = vunpack.c.h.b16 %v2468
        %v4611 = vunpack.c.l.b16 %v2469
        %v4612 = vunpack.c.h.b16 %v2469
        %v4613 = vunpack.c.l.b16 %v2470
        %v4614 = vunpack.c.h.b16 %v2470
        %v4615 = vunpack.c.l.b16 %v2471
        %v4616 = vunpack.c.h.b16 %v2471
        %v4617 = vunpack.c.l.b16 %v2472
        %v4618 = vunpack.c.h.b16 %v2472
        %v4619 = vunpack.c.l.b16 %v2473
        %v4620 = vunpack.c.h.b16 %v2473
        %v4621 = vunpack.c.l.b16 %v2474
        %v4622 = vunpack.c.h.b16 %v2474
        %v4623 = vunpack.c.l.b16 %v2475
        %v4624 = vunpack.c.h.b16 %v2475
        %v4625 = vunpack.c.l.b16 %v2476
        %v4626 = vunpack.c.h.b16 %v2476
        %v4627 = vunpack.c.l.b16 %v2477
        %v4628 = vunpack.c.h.b16 %v2477
        %v4629 = vunpack.c.l.b16 %v2478
        %v4630 = vunpack.c.h.b16 %v2478
        %v4631 = vunpack.c.l.b16 %v2479
        %v4632 = vunpack.c.h.b16 %v2479
        %v4633 = vunpack.c.l.b16 %v2480
        %v4634 = vunpack.c.h.b16 %v2480
        %v4635 = vunpack.c.l.b16 %v2481
        %v4636 = vunpack.c.h.b16 %v2481
        %v4637 = vunpack.c.l.b16 %v2482
        %v4638 = vunpack.c.h.b16 %v2482
        %v4639 = vunpack.c.l.b16 %v2483
        %v4640 = vunpack.c.h.b16 %v2483
        %v4641 = vunpack.c.l.b16 %v2484
        %v4642 = vunpack.c.h.b16 %v2484
        %v4643 = vunpack.c.l.b16 %v2485
        %v4644 = vunpack.c.h.b16 %v2485
        %v4645 = vunpack.c.l.b16 %v2486
        %v4646 = vunpack.c.h.b16 %v2486
        %v4647 = vunpack.c.l.b16 %v2487
        %v4648 = vunpack.c.h.b16 %v2487
        %v4649 = vunpack.c.l.b16 %v2488
        %v4650 = vunpack.c.h.b16 %v2488
        %v4651 = vunpack.c.l.b16 %v2489
        %v4652 = vunpack.c.h.b16 %v2489
        %v4653 = vunpack.c.l.b16 %v2490
        %v4654 = vunpack.c.h.b16 %v2490
        %v4655 = vunpack.c.l.b16 %v2491
        %v4656 = vunpack.c.h.b16 %v2491
        %v4657 = vunpack.c.l.b16 %v2492
        %v4658 = vunpack.c.h.b16 %v2492
        %v4659 = vunpack.c.l.b16 %v2493
        %v4660 = vunpack.c.h.b16 %v2493
        %v4661 = vunpack.c.l.b16 %v2494
        %v4662 = vunpack.c.h.b16 %v2494
        %v4663 = vunpack.c.l.b16 %v2495
        %v4664 = vunpack.c.h.b16 %v2495
        %v4665 = vunpack.c.l.b16 %v2496
        %v4666 = vunpack.c.h.b16 %v2496
        %v4667 = vunpack.c.l.b16 %v2497
        %v4668 = vunpack.c.h.b16 %v2497
        %v4669 = vunpack.c.l.b16 %v2498
        %v4670 = vunpack.c.h.b16 %v2498
        %v4671 = vunpack.c.l.b16 %v2499
        %v4672 = vunpack.c.h.b16 %v2499
        %v4673 = vunpack.c.l.b16 %v2500
        %v4674 = vunpack.c.h.b16 %v2500
        %v4675 = vunpack.c.l.b16 %v2501
        %v4676 = vunpack.c.h.b16 %v2501
        %v4677 = vunpack.c.l.b16 %v2502
        %v4678 = vunpack.c.h.b16 %v2502
        %v4679 = vunpack.c.l.b16 %v2503
        %v4680 = vunpack.c.h.b16 %v2503
        %v4681 = vunpack.c.l.b16 %v2504
        %v4682 = vunpack.c.h.b16 %v2504
        %v4683 = vunpack.c.l.b16 %v2505
        %v4684 = vunpack.c.h.b16 %v2505
        %v4685 = vunpack.c.l.b16 %v2506
        %v4686 = vunpack.c.h.b16 %v2506
        %v4687 = vunpack.c.l.b16 %v2507
        %v4688 = vunpack.c.h.b16 %v2507
        %v4689 = vunpack.c.l.b16 %v2508
        %v4690 = vunpack.c.h.b16 %v2508
        %v4691 = vunpack.c.l.b16 %v2509
        %v4692 = vunpack.c.h.b16 %v2509
        %v4693 = vunpack.c.l.b16 %v2510
        %v4694 = vunpack.c.h.b16 %v2510
        %v4695 = vunpack.c.l.b16 %v2511
        %v4696 = vunpack.c.h.b16 %v2511
        %v4697 = vunpack.c.l.b16 %v2512
        %v4698 = vunpack.c.h.b16 %v2512
        %v4699 = vunpack.c.l.b16 %v2513
        %v4700 = vunpack.c.h.b16 %v2513
        %v4701 = vunpack.c.l.b16 %v2514
        %v4702 = vunpack.c.h.b16 %v2514
        %v4703 = vunpack.c.l.b16 %v2515
        %v4704 = vunpack.c.h.b16 %v2515
        %v4705 = vunpack.c.l.b16 %v2516
        %v4706 = vunpack.c.h.b16 %v2516
        %v4707 = vunpack.c.l.b16 %v2517
        %v4708 = vunpack.c.h.b16 %v2517
        %v4709 = vunpack.c.l.b16 %v2518
        %v4710 = vunpack.c.h.b16 %v2518
        %v4711 = vunpack.c.l.b16 %v2519
        %v4712 = vunpack.c.h.b16 %v2519
        %v4713 = vunpack.c.l.b16 %v2520
        %v4714 = vunpack.c.h.b16 %v2520
        %v4715 = vunpack.c.l.b16 %v2521
        %v4716 = vunpack.c.h.b16 %v2521
        %v4717 = vunpack.c.l.b16 %v2522
        %v4718 = vunpack.c.h.b16 %v2522
        %v4719 = vunpack.c.l.b16 %v2523
        %v4720 = vunpack.c.h.b16 %v2523
        %v4721 = vunpack.c.l.b16 %v2524
        %v4722 = vunpack.c.h.b16 %v2524
        %v4723 = vunpack.c.l.b16 %v2525
        %v4724 = vunpack.c.h.b16 %v2525
        %v4725 = vunpack.c.l.b16 %v2526
        %v4726 = vunpack.c.h.b16 %v2526
        %v4727 = vunpack.c.l.b16 %v2527
        %v4728 = vunpack.c.h.b16 %v2527
        %v4729 = vunpack.c.l.b16 %v2528
        %v4730 = vunpack.c.h.b16 %v2528
        %v4731 = vunpack.c.l.b16 %v2529
        %v4732 = vunpack.c.h.b16 %v2529
        %v4733 = vunpack.c.l.b16 %v2530
        %v4734 = vunpack.c.h.b16 %v2530
        %v4735 = vunpack.c.l.b16 %v2531
        %v4736 = vunpack.c.h.b16 %v2531
        %v4737 = vunpack.c.l.b16 %v2532
        %v4738 = vunpack.c.h.b16 %v2532
        %v4739 = vunpack.c.l.b16 %v2533
        %v4740 = vunpack.c.h.b16 %v2533
        %v4741 = vunpack.c.l.b16 %v2534
        %v4742 = vunpack.c.h.b16 %v2534
        %v4743 = vunpack.c.l.b16 %v2535
        %v4744 = vunpack.c.h.b16 %v2535
        %v4745 = vunpack.c.l.b16 %v2536
        %v4746 = vunpack.c.h.b16 %v2536
        %v4747 = vunpack.c.l.b16 %v2537
        %v4748 = vunpack.c.h.b16 %v2537
        %v4749 = vunpack.c.l.b16 %v2538
        %v4750 = vunpack.c.h.b16 %v2538
        %v4751 = vunpack.c.l.b16 %v2539
        %v4752 = vunpack.c.h.b16 %v2539
        %v4753 = vunpack.c.l.b16 %v2540
        %v4754 = vunpack.c.h.b16 %v2540
        %v4755 = vunpack.c.l.b16 %v2541
        %v4756 = vunpack.c.h.b16 %v2541
        %v4757 = vunpack.c.l.b16 %v2542
        %v4758 = vunpack.c.h.b16 %v2542
        %v4759 = vunpack.c.l.b16 %v2543
        %v4760 = vunpack.c.h.b16 %v2543
        %v4761 = vunpack.c.l.b16 %v2544
        %v4762 = vunpack.c.h.b16 %v2544
        %v4763 = vunpack.c.l.b16 %v2545
        %v4764 = vunpack.c.h.b16 %v2545
        %v4765 = vunpack.c.l.b16 %v2546
        %v4766 = vunpack.c.h.b16 %v2546
        %v4767 = vunpack.c.l.b16 %v2547
        %v4768 = vunpack.c.h.b16 %v2547
        %v4769 = vunpack.c.l.b16 %v2548
        %v4770 = vunpack.c.h.b16 %v2548
        %v4771 = vunpack.c.l.b16 %v2549
        %v4772 = vunpack.c.h.b16 %v2549
        %v4773 = vunpack.c.l.b16 %v2550
        %v4774 = vunpack.c.h.b16 %v2550
        %v4775 = vunpack.c.l.b16 %v2551
        %v4776 = vunpack.c.h.b16 %v2551
        %v4777 = vunpack.c.l.b16 %v2552
        %v4778 = vunpack.c.h.b16 %v2552
        %v4779 = vunpack.c.l.b16 %v2553
        %v4780 = vunpack.c.h.b16 %v2553
        %v4781 = vunpack.c.l.b16 %v2554
        %v4782 = vunpack.c.h.b16 %v2554
        %v4783 = vunpack.c.l.b16 %v2555
        %v4784 = vunpack.c.h.b16 %v2555
        %v4785 = vunpack.c.l.b16 %v2556
        %v4786 = vunpack.c.h.b16 %v2556
        %v4787 = vunpack.c.l.b16 %v2557
        %v4788 = vunpack.c.h.b16 %v2557
        %v4789 = vunpack.c.l.b16 %v2558
        %v4790 = vunpack.c.h.b16 %v2558
        %v4791 = vunpack.c.l.b16 %v2559
        %v4792 = vunpack.c.h.b16 %v2559
        %v4793 = vunpack.c.l.b16 %v2560
        %v4794 = vunpack.c.h.b16 %v2560
        %v4795 = vunpack.c.l.b16 %v2561
        %v4796 = vunpack.c.h.b16 %v2561
        %v4797 = vunpack.c.l.b16 %v2562
        %v4798 = vunpack.c.h.b16 %v2562
        %v4799 = vunpack.c.l.b16 %v2563
        %v4800 = vunpack.c.h.b16 %v2563
        %v4801 = vunpack.c.l.b16 %v2564
        %v4802 = vunpack.c.h.b16 %v2564
        %v4803 = vunpack.c.l.b16 %v2565
        %v4804 = vunpack.c.h.b16 %v2565
        %v4805 = vunpack.c.l.b16 %v2566
        %v4806 = vunpack.c.h.b16 %v2566
        %v4807 = vunpack.c.l.b16 %v2567
        %v4808 = vunpack.c.h.b16 %v2567
        %v4809 = vunpack.c.l.b16 %v2568
        %v4810 = vunpack.c.h.b16 %v2568
        %v4811 = vunpack.c.l.b16 %v2569
        %v4812 = vunpack.c.h.b16 %v2569
        %v4813 = vunpack.c.l.b16 %v2570
        %v4814 = vunpack.c.h.b16 %v2570
        %v4815 = vunpack.c.l.b16 %v2571
        %v4816 = vunpack.c.h.b16 %v2571
        %v4817 = vunpack.c.l.b16 %v2572
        %v4818 = vunpack.c.h.b16 %v2572
        %v4819 = vunpack.c.l.b16 %v2573
        %v4820 = vunpack.c.h.b16 %v2573
        %v4821 = vunpack.c.l.b16 %v2574
        %v4822 = vunpack.c.h.b16 %v2574
        %v4823 = vunpack.c.l.b16 %v2575
        %v4824 = vunpack.c.h.b16 %v2575
        %v4825 = vunpack.c.l.b16 %v2576
        %v4826 = vunpack.c.h.b16 %v2576
        %v4827 = vunpack.c.l.b16 %v2577
        %v4828 = vunpack.c.h.b16 %v2577
        %v4829 = vunpack.c.l.b16 %v2578
        %v4830 = vunpack.c.h.b16 %v2578
        %v4831 = vunpack.c.l.b16 %v2579
        %v4832 = vunpack.c.h.b16 %v2579
        %v4833 = vunpack.c.l.b16 %v2580
        %v4834 = vunpack.c.h.b16 %v2580
        %v4835 = vunpack.c.l.b16 %v2581
        %v4836 = vunpack.c.h.b16 %v2581
        %v4837 = vunpack.c.l.b16 %v2582
        %v4838 = vunpack.c.h.b16 %v2582
        %v4839 = vunpack.c.l.b16 %v2583
        %v4840 = vunpack.c.h.b16 %v2583
        %v4841 = vunpack.c.l.b16 %v2584
        %v4842 = vunpack.c.h.b16 %v2584
        %v4843 = vunpack.c.l.b16 %v2585
        %v4844 = vunpack.c.h.b16 %v2585
        %v4845 = vunpack.c.l.b16 %v2586
        %v4846 = vunpack.c.h.b16 %v2586
        %v4847 = vunpack.c.l.b16 %v2587
        %v4848 = vunpack.c.h.b16 %v2587
        %v4849 = vunpack.c.l.b16 %v2588
        %v4850 = vunpack.c.h.b16 %v2588
        %v4851 = vunpack.c.l.b16 %v2589
        %v4852 = vunpack.c.h.b16 %v2589
        %v4853 = vunpack.c.l.b16 %v2590
        %v4854 = vunpack.c.h.b16 %v2590
        %v4855 = vunpack.c.l.b16 %v2591
        %v4856 = vunpack.c.h.b16 %v2591
        %v4857 = vunpack.c.l.b16 %v2592
        %v4858 = vunpack.c.h.b16 %v2592
        %v4859 = vunpack.c.l.b16 %v2593
        %v4860 = vunpack.c.h.b16 %v2593
        %v4861 = vunpack.c.l.b16 %v2594
        %v4862 = vunpack.c.h.b16 %v2594
        %v4863 = vunpack.c.l.b16 %v2595
        %v4864 = vunpack.c.h.b16 %v2595
        %v4865 = vunpack.c.l.b16 %v2596
        %v4866 = vunpack.c.h.b16 %v2596
        %v4867 = vunpack.c.l.b16 %v2597
        %v4868 = vunpack.c.h.b16 %v2597
        %v4869 = vunpack.c.l.b16 %v2598
        %v4870 = vunpack.c.h.b16 %v2598
        %v4871 = vunpack.c.l.b16 %v2599
        %v4872 = vunpack.c.h.b16 %v2599
        %v4873 = vunpack.c.l.b16 %v2600
        %v4874 = vunpack.c.h.b16 %v2600
        %v4875 = vunpack.c.l.b16 %v2601
        %v4876 = vunpack.c.h.b16 %v2601
        %v4877 = vunpack.c.l.b16 %v2602
        %v4878 = vunpack.c.h.b16 %v2602
        %v4879 = vunpack.c.l.b16 %v2603
        %v4880 = vunpack.c.h.b16 %v2603
        %v4881 = vunpack.c.l.b16 %v2604
        %v4882 = vunpack.c.h.b16 %v2604
        %v4883 = vunpack.c.l.b16 %v2605
        %v4884 = vunpack.c.h.b16 %v2605
        %v4885 = vunpack.c.l.b16 %v2606
        %v4886 = vunpack.c.h.b16 %v2606
        %v4887 = vunpack.c.l.b16 %v2607
        %v4888 = vunpack.c.h.b16 %v2607
        %v4889 = vunpack.c.l.b16 %v2608
        %v4890 = vunpack.c.h.b16 %v2608
        %v4891 = vunpack.c.l.b16 %v2609
        %v4892 = vunpack.c.h.b16 %v2609
        %v4893 = vunpack.c.l.b16 %v2610
        %v4894 = vunpack.c.h.b16 %v2610
        %v4895 = vunpack.c.l.b16 %v2611
        %v4896 = vunpack.c.h.b16 %v2611
        %v4897 = vunpack.c.l.b16 %v2612
        %v4898 = vunpack.c.h.b16 %v2612
        %v4899 = vunpack.c.l.b16 %v2613
        %v4900 = vunpack.c.h.b16 %v2613
        %v4901 = vunpack.c.l.b16 %v2614
        %v4902 = vunpack.c.h.b16 %v2614
        %v4903 = vunpack.c.l.b16 %v2615
        %v4904 = vunpack.c.h.b16 %v2615
        %v4905 = vunpack.c.l.b16 %v2616
        %v4906 = vunpack.c.h.b16 %v2616
        %v4907 = vunpack.c.l.b16 %v2617
        %v4908 = vunpack.c.h.b16 %v2617
        %v4909 = vunpack.c.l.b16 %v2618
        %v4910 = vunpack.c.h.b16 %v2618
        %v4911 = vunpack.c.l.b16 %v2619
        %v4912 = vunpack.c.h.b16 %v2619
        %v4913 = vunpack.c.l.b16 %v2620
        %v4914 = vunpack.c.h.b16 %v2620
        %v4915 = vunpack.c.l.b16 %v2621
        %v4916 = vunpack.c.h.b16 %v2621
        %v4917 = vunpack.c.l.b16 %v2622
        %v4918 = vunpack.c.h.b16 %v2622
        %v4919 = vunpack.c.l.b16 %v2623
        %v4920 = vunpack.c.h.b16 %v2623
        %v4921 = vunpack.c.l.b16 %v2624
        %v4922 = vunpack.c.h.b16 %v2624
        %v4923 = vunpack.c.l.b16 %v2625
        %v4924 = vunpack.c.h.b16 %v2625
        %v4925 = vunpack.c.l.b16 %v2626
        %v4926 = vunpack.c.h.b16 %v2626
        %v4927 = vunpack.c.l.b16 %v2627
        %v4928 = vunpack.c.h.b16 %v2627
        %v4929 = vunpack.c.l.b16 %v2628
        %v4930 = vunpack.c.h.b16 %v2628
        %v4931 = vunpack.c.l.b16 %v2629
        %v4932 = vunpack.c.h.b16 %v2629
        %v4933 = vunpack.c.l.b16 %v2630
        %v4934 = vunpack.c.h.b16 %v2630
        %v4935 = vpack.c.b16 %v3407, %v3399
        %v4936 = vpack.c.b16 %v3408, %v3400
        %v4937 = vpack.c.b16 %v3409, %v3401
        %v4938 = vpack.c.b16 %v3410, %v3402
        %v4939 = vpack.c.b16 %v3411, %v3403
        %v4940 = vpack.c.b16 %v3412, %v3404
        %v4941 = vpack.c.b16 %v3413, %v3405
        %v4942 = vpack.c.b16 %v3414, %v3406
        %v4943 = vpack.c.b16 %v3423, %v3415
        %v4944 = vpack.c.b16 %v3424, %v3416
        %v4945 = vpack.c.b16 %v3425, %v3417
        %v4946 = vpack.c.b16 %v3426, %v3418
        %v4947 = vpack.c.b16 %v3427, %v3419
        %v4948 = vpack.c.b16 %v3428, %v3420
        %v4949 = vpack.c.b16 %v3429, %v3421
        %v4950 = vpack.c.b16 %v3430, %v3422
        %v4951 = vpack.c.b16 %v3439, %v3431
        %v4952 = vpack.c.b16 %v3440, %v3432
        %v4953 = vpack.c.b16 %v3441, %v3433
        %v4954 = vpack.c.b16 %v3442, %v3434
        %v4955 = vpack.c.b16 %v3443, %v3435
        %v4956 = vpack.c.b16 %v3444, %v3436
        %v4957 = vpack.c.b16 %v3445, %v3437
        %v4958 = vpack.c.b16 %v3446, %v3438
        %v4959 = vpack.c.b16 %v3455, %v3447
        %v4960 = vpack.c.b16 %v3456, %v3448
        %v4961 = vpack.c.b16 %v3457, %v3449
        %v4962 = vpack.c.b16 %v3458, %v3450
        %v4963 = vpack.c.b16 %v3459, %v3451
        %v4964 = vpack.c.b16 %v3460, %v3452
        %v4965 = vpack.c.b16 %v3461, %v3453
        %v4966 = vpack.c.b16 %v3462, %v3454
        %v4967 = vpack.c.b16 %v3471, %v3463
        %v4968 = vpack.c.b16 %v3472, %v3464
        %v4969 = vpack.c.b16 %v3473, %v3465
        %v4970 = vpack.c.b16 %v3474, %v3466
        %v4971 = vpack.c.b16 %v3475, %v3467
        %v4972 = vpack.c.b16 %v3476, %v3468
        %v4973 = vpack.c.b16 %v3477, %v3469
        %v4974 = vpack.c.b16 %v3478, %v3470
        %v4975 = vpack.c.b16 %v3487, %v3479
        %v4976 = vpack.c.b16 %v3488, %v3480
        %v4977 = vpack.c.b16 %v3489, %v3481
        %v4978 = vpack.c.b16 %v3490, %v3482
        %v4979 = vpack.c.b16 %v3491, %v3483
        %v4980 = vpack.c.b16 %v3492, %v3484
        %v4981 = vpack.c.b16 %v3493, %v3485
        %v4982 = vpack.c.b16 %v3494, %v3486
        %v4983 = vpack.c.b16 %v3503, %v3495
        %v4984 = vpack.c.b16 %v3504, %v3496
        %v4985 = vpack.c.b16 %v3505, %v3497
        %v4986 = vpack.c.b16 %v3506, %v3498
        %v4987 = vpack.c.b16 %v3507, %v3499
        %v4988 = vpack.c.b16 %v3508, %v3500
        %v4989 = vpack.c.b16 %v3509, %v3501
        %v4990 = vpack.c.b16 %v3510, %v3502
        %v4991 = vpack.c.b16 %v3519, %v3511
        %v4992 = vpack.c.b16 %v3520, %v3512
        %v4993 = vpack.c.b16 %v3521, %v3513
        %v4994 = vpack.c.b16 %v3522, %v3514
        %v4995 = vpack.c.b16 %v3523, %v3515
        %v4996 = vpack.c.b16 %v3524, %v3516
        %v4997 = vpack.c.b16 %v3525, %v3517
        %v4998 = vpack.c.b16 %v3526, %v3518
        %v4999 = vpack.c.b16 %v3535, %v3527
        %v5000 = vpack.c.b16 %v3536, %v3528
        %v5001 = vpack.c.b16 %v3537, %v3529
        %v5002 = vpack.c.b16 %v3538, %v3530
        %v5003 = vpack.c.b16 %v3539, %v3531
        %v5004 = vpack.c.b16 %v3540, %v3532
        %v5005 = vpack.c.b16 %v3541, %v3533
        %v5006 = vpack.c.b16 %v3542, %v3534
        %v5007 = vpack.c.b16 %v3551, %v3543
        %v5008 = vpack.c.b16 %v3552, %v3544
        %v5009 = vpack.c.b16 %v3553, %v3545
        %v5010 = vpack.c.b16 %v3554, %v3546
        %v5011 = vpack.c.b16 %v3555, %v3547
        %v5012 = vpack.c.b16 %v3556, %v3548
        %v5013 = vpack.c.b16 %v3557, %v3549
        %v5014 = vpack.c.b16 %v3558, %v3550
        %v5015 = vpack.c.b16 %v3567, %v3559
        %v5016 = vpack.c.b16 %v3568, %v3560
        %v5017 = vpack.c.b16 %v3569, %v3561
        %v5018 = vpack.c.b16 %v3570, %v3562
        %v5019 = vpack.c.b16 %v3571, %v3563
        %v5020 = vpack.c.b16 %v3572, %v3564
        %v5021 = vpack.c.b16 %v3573, %v3565
        %v5022 = vpack.c.b16 %v3574, %v3566
        %v5023 = vpack.c.b16 %v3583, %v3575
        %v5024 = vpack.c.b16 %v3584, %v3576
        %v5025 = vpack.c.b16 %v3585, %v3577
        %v5026 = vpack.c.b16 %v3586, %v3578
        %v5027 = vpack.c.b16 %v3587, %v3579
        %v5028 = vpack.c.b16 %v3588, %v3580
        %v5029 = vpack.c.b16 %v3589, %v3581
        %v5030 = vpack.c.b16 %v3590, %v3582
        %v5031 = vpack.c.b16 %v3599, %v3591
        %v5032 = vpack.c.b16 %v3600, %v3592
        %v5033 = vpack.c.b16 %v3601, %v3593
        %v5034 = vpack.c.b16 %v3602, %v3594
        %v5035 = vpack.c.b16 %v3603, %v3595
        %v5036 = vpack.c.b16 %v3604, %v3596
        %v5037 = vpack.c.b16 %v3605, %v3597
        %v5038 = vpack.c.b16 %v3606, %v3598
        %v5039 = vpack.c.b16 %v3615, %v3607
        %v5040 = vpack.c.b16 %v3616, %v3608
        %v5041 = vpack.c.b16 %v3617, %v3609
        %v5042 = vpack.c.b16 %v3618, %v3610
        %v5043 = vpack.c.b16 %v3619, %v3611
        %v5044 = vpack.c.b16 %v3620, %v3612
        %v5045 = vpack.c.b16 %v3621, %v3613
        %v5046 = vpack.c.b16 %v3622, %v3614
        %v5047 = vpack.c.b16 %v3631, %v3623
        %v5048 = vpack.c.b16 %v3632, %v3624
        %v5049 = vpack.c.b16 %v3633, %v3625
        %v5050 = vpack.c.b16 %v3634, %v3626
        %v5051 = vpack.c.b16 %v3635, %v3627
        %v5052 = vpack.c.b16 %v3636, %v3628
        %v5053 = vpack.c.b16 %v3637, %v3629
        %v5054 = vpack.c.b16 %v3638, %v3630
        %v5055 = vpack.c.b16 %v3647, %v3639
        %v5056 = vpack.c.b16 %v3648, %v3640
        %v5057 = vpack.c.b16 %v3649, %v3641
        %v5058 = vpack.c.b16 %v3650, %v3642
        %v5059 = vpack.c.b16 %v3651, %v3643
        %v5060 = vpack.c.b16 %v3652, %v3644
        %v5061 = vpack.c.b16 %v3653, %v3645
        %v5062 = vpack.c.b16 %v3654, %v3646
        %v5063 = vpack.c.b16 %v3663, %v3655
        %v5064 = vpack.c.b16 %v3664, %v3656
        %v5065 = vpack.c.b16 %v3665, %v3657
        %v5066 = vpack.c.b16 %v3666, %v3658
        %v5067 = vpack.c.b16 %v3667, %v3659
        %v5068 = vpack.c.b16 %v3668, %v3660
        %v5069 = vpack.c.b16 %v3669, %v3661
        %v5070 = vpack.c.b16 %v3670, %v3662
        %v5071 = vpack.c.b16 %v3679, %v3671
        %v5072 = vpack.c.b16 %v3680, %v3672
        %v5073 = vpack.c.b16 %v3681, %v3673
        %v5074 = vpack.c.b16 %v3682, %v3674
        %v5075 = vpack.c.b16 %v3683, %v3675
        %v5076 = vpack.c.b16 %v3684, %v3676
        %v5077 = vpack.c.b16 %v3685, %v3677
        %v5078 = vpack.c.b16 %v3686, %v3678
        %v5079 = vpack.c.b16 %v3695, %v3687
        %v5080 = vpack.c.b16 %v3696, %v3688
        %v5081 = vpack.c.b16 %v3697, %v3689
        %v5082 = vpack.c.b16 %v3698, %v3690
        %v5083 = vpack.c.b16 %v3699, %v3691
        %v5084 = vpack.c.b16 %v3700, %v3692
        %v5085 = vpack.c.b16 %v3701, %v3693
        %v5086 = vpack.c.b16 %v3702, %v3694
        %v5087 = vpack.c.b16 %v3711, %v3703
        %v5088 = vpack.c.b16 %v3712, %v3704
        %v5089 = vpack.c.b16 %v3713, %v3705
        %v5090 = vpack.c.b16 %v3714, %v3706
        %v5091 = vpack.c.b16 %v3715, %v3707
        %v5092 = vpack.c.b16 %v3716, %v3708
        %v5093 = vpack.c.b16 %v3717, %v3709
        %v5094 = vpack.c.b16 %v3718, %v3710
        %v5095 = vpack.c.b16 %v3727, %v3719
        %v5096 = vpack.c.b16 %v3728, %v3720
        %v5097 = vpack.c.b16 %v3729, %v3721
        %v5098 = vpack.c.b16 %v3730, %v3722
        %v5099 = vpack.c.b16 %v3731, %v3723
        %v5100 = vpack.c.b16 %v3732, %v3724
        %v5101 = vpack.c.b16 %v3733, %v3725
        %v5102 = vpack.c.b16 %v3734, %v3726
        %v5103 = vpack.c.b16 %v3743, %v3735
        %v5104 = vpack.c.b16 %v3744, %v3736
        %v5105 = vpack.c.b16 %v3745, %v3737
        %v5106 = vpack.c.b16 %v3746, %v3738
        %v5107 = vpack.c.b16 %v3747, %v3739
        %v5108 = vpack.c.b16 %v3748, %v3740
        %v5109 = vpack.c.b16 %v3749, %v3741
        %v5110 = vpack.c.b16 %v3750, %v3742
        %v5111 = vpack.c.b16 %v3759, %v3751
        %v5112 = vpack.c.b16 %v3760, %v3752
        %v5113 = vpack.c.b16 %v3761, %v3753
        %v5114 = vpack.c.b16 %v3762, %v3754
        %v5115 = vpack.c.b16 %v3763, %v3755
        %v5116 = vpack.c.b16 %v3764, %v3756
        %v5117 = vpack.c.b16 %v3765, %v3757
        %v5118 = vpack.c.b16 %v3766, %v3758
        %v5119 = vpack.c.b16 %v3775, %v3767
        %v5120 = vpack.c.b16 %v3776, %v3768
        %v5121 = vpack.c.b16 %v3777, %v3769
        %v5122 = vpack.c.b16 %v3778, %v3770
        %v5123 = vpack.c.b16 %v3779, %v3771
        %v5124 = vpack.c.b16 %v3780, %v3772
        %v5125 = vpack.c.b16 %v3781, %v3773
        %v5126 = vpack.c.b16 %v3782, %v3774
        %v5127 = vpack.c.b16 %v3791, %v3783
        %v5128 = vpack.c.b16 %v3792, %v3784
        %v5129 = vpack.c.b16 %v3793, %v3785
        %v5130 = vpack.c.b16 %v3794, %v3786
        %v5131 = vpack.c.b16 %v3795, %v3787
        %v5132 = vpack.c.b16 %v3796, %v3788
        %v5133 = vpack.c.b16 %v3797, %v3789
        %v5134 = vpack.c.b16 %v3798, %v3790
        %v5135 = vpack.c.b16 %v3807, %v3799
        %v5136 = vpack.c.b16 %v3808, %v3800
        %v5137 = vpack.c.b16 %v3809, %v3801
        %v5138 = vpack.c.b16 %v3810, %v3802
        %v5139 = vpack.c.b16 %v3811, %v3803
        %v5140 = vpack.c.b16 %v3812, %v3804
        %v5141 = vpack.c.b16 %v3813, %v3805
        %v5142 = vpack.c.b16 %v3814, %v3806
        %v5143 = vpack.c.b16 %v3823, %v3815
        %v5144 = vpack.c.b16 %v3824, %v3816
        %v5145 = vpack.c.b16 %v3825, %v3817
        %v5146 = vpack.c.b16 %v3826, %v3818
        %v5147 = vpack.c.b16 %v3827, %v3819
        %v5148 = vpack.c.b16 %v3828, %v3820
        %v5149 = vpack.c.b16 %v3829, %v3821
        %v5150 = vpack.c.b16 %v3830, %v3822
        %v5151 = vpack.c.b16 %v3839, %v3831
        %v5152 = vpack.c.b16 %v3840, %v3832
        %v5153 = vpack.c.b16 %v3841, %v3833
        %v5154 = vpack.c.b16 %v3842, %v3834
        %v5155 = vpack.c.b16 %v3843, %v3835
        %v5156 = vpack.c.b16 %v3844, %v3836
        %v5157 = vpack.c.b16 %v3845, %v3837
        %v5158 = vpack.c.b16 %v3846, %v3838
        %v5159 = vpack.c.b16 %v3855, %v3847
        %v5160 = vpack.c.b16 %v3856, %v3848
        %v5161 = vpack.c.b16 %v3857, %v3849
        %v5162 = vpack.c.b16 %v3858, %v3850
        %v5163 = vpack.c.b16 %v3859, %v3851
        %v5164 = vpack.c.b16 %v3860, %v3852
        %v5165 = vpack.c.b16 %v3861, %v3853
        %v5166 = vpack.c.b16 %v3862, %v3854
        %v5167 = vpack.c.b16 %v3871, %v3863
        %v5168 = vpack.c.b16 %v3872, %v3864
        %v5169 = vpack.c.b16 %v3873, %v3865
        %v5170 = vpack.c.b16 %v3874, %v3866
        %v5171 = vpack.c.b16 %v3875, %v3867
        %v5172 = vpack.c.b16 %v3876, %v3868
        %v5173 = vpack.c.b16 %v3877, %v3869
        %v5174 = vpack.c.b16 %v3878, %v3870
        %v5175 = vpack.c.b16 %v3887, %v3879
        %v5176 = vpack.c.b16 %v3888, %v3880
        %v5177 = vpack.c.b16 %v3889, %v3881
        %v5178 = vpack.c.b16 %v3890, %v3882
        %v5179 = vpack.c.b16 %v3891, %v3883
        %v5180 = vpack.c.b16 %v3892, %v3884
        %v5181 = vpack.c.b16 %v3893, %v3885
        %v5182 = vpack.c.b16 %v3894, %v3886
        %v5183 = vpack.c.b16 %v3903, %v3895
        %v5184 = vpack.c.b16 %v3904, %v3896
        %v5185 = vpack.c.b16 %v3905, %v3897
        %v5186 = vpack.c.b16 %v3906, %v3898
        %v5187 = vpack.c.b16 %v3907, %v3899
        %v5188 = vpack.c.b16 %v3908, %v3900
        %v5189 = vpack.c.b16 %v3909, %v3901
        %v5190 = vpack.c.b16 %v3910, %v3902
        %v5191 = vpack.c.b16 %v3919, %v3911
        %v5192 = vpack.c.b16 %v3920, %v3912
        %v5193 = vpack.c.b16 %v3921, %v3913
        %v5194 = vpack.c.b16 %v3922, %v3914
        %v5195 = vpack.c.b16 %v3923, %v3915
        %v5196 = vpack.c.b16 %v3924, %v3916
        %v5197 = vpack.c.b16 %v3925, %v3917
        %v5198 = vpack.c.b16 %v3926, %v3918
        %v5199 = vpack.c.b16 %v3935, %v3927
        %v5200 = vpack.c.b16 %v3936, %v3928
        %v5201 = vpack.c.b16 %v3937, %v3929
        %v5202 = vpack.c.b16 %v3938, %v3930
        %v5203 = vpack.c.b16 %v3939, %v3931
        %v5204 = vpack.c.b16 %v3940, %v3932
        %v5205 = vpack.c.b16 %v3941, %v3933
        %v5206 = vpack.c.b16 %v3942, %v3934
        %v5207 = vpack.c.b16 %v3951, %v3943
        %v5208 = vpack.c.b16 %v3952, %v3944
        %v5209 = vpack.c.b16 %v3953, %v3945
        %v5210 = vpack.c.b16 %v3954, %v3946
        %v5211 = vpack.c.b16 %v3955, %v3947
        %v5212 = vpack.c.b16 %v3956, %v3948
        %v5213 = vpack.c.b16 %v3957, %v3949
        %v5214 = vpack.c.b16 %v3958, %v3950
        %v5215 = vpack.c.b16 %v3967, %v3959
        %v5216 = vpack.c.b16 %v3968, %v3960
        %v5217 = vpack.c.b16 %v3969, %v3961
        %v5218 = vpack.c.b16 %v3970, %v3962
        %v5219 = vpack.c.b16 %v3971, %v3963
        %v5220 = vpack.c.b16 %v3972, %v3964
        %v5221 = vpack.c.b16 %v3973, %v3965
        %v5222 = vpack.c.b16 %v3974, %v3966
        %v5223 = vpack.c.b16 %v3983, %v3975
        %v5224 = vpack.c.b16 %v3984, %v3976
        %v5225 = vpack.c.b16 %v3985, %v3977
        %v5226 = vpack.c.b16 %v3986, %v3978
        %v5227 = vpack.c.b16 %v3987, %v3979
        %v5228 = vpack.c.b16 %v3988, %v3980
        %v5229 = vpack.c.b16 %v3989, %v3981
        %v5230 = vpack.c.b16 %v3990, %v3982
        %v5231 = vpack.c.b16 %v3999, %v3991
        %v5232 = vpack.c.b16 %v4000, %v3992
        %v5233 = vpack.c.b16 %v4001, %v3993
        %v5234 = vpack.c.b16 %v4002, %v3994
        %v5235 = vpack.c.b16 %v4003, %v3995
        %v5236 = vpack.c.b16 %v4004, %v3996
        %v5237 = vpack.c.b16 %v4005, %v3997
        %v5238 = vpack.c.b16 %v4006, %v3998
        %v5239 = vpack.c.b16 %v4015, %v4007
        %v5240 = vpack.c.b16 %v4016, %v4008
        %v5241 = vpack.c.b16 %v4017, %v4009
        %v5242 = vpack.c.b16 %v4018, %v4010
        %v5243 = vpack.c.b16 %v4019, %v4011
        %v5244 = vpack.c.b16 %v4020, %v4012
        %v5245 = vpack.c.b16 %v4021, %v4013
        %v5246 = vpack.c.b16 %v4022, %v4014
        %v5247 = vpack.c.b16 %v4031, %v4023
        %v5248 = vpack.c.b16 %v4032, %v4024
        %v5249 = vpack.c.b16 %v4033, %v4025
        %v5250 = vpack.c.b16 %v4034, %v4026
        %v5251 = vpack.c.b16 %v4035, %v4027
        %v5252 = vpack.c.b16 %v4036, %v4028
        %v5253 = vpack.c.b16 %v4037, %v4029
        %v5254 = vpack.c.b16 %v4038, %v4030
        %v5255 = vpack.c.b16 %v4047, %v4039
        %v5256 = vpack.c.b16 %v4048, %v4040
        %v5257 = vpack.c.b16 %v4049, %v4041
        %v5258 = vpack.c.b16 %v4050, %v4042
        %v5259 = vpack.c.b16 %v4051, %v4043
        %v5260 = vpack.c.b16 %v4052, %v4044
        %v5261 = vpack.c.b16 %v4053, %v4045
        %v5262 = vpack.c.b16 %v4054, %v4046
        %v5263 = vpack.c.b16 %v4063, %v4055
        %v5264 = vpack.c.b16 %v4064, %v4056
        %v5265 = vpack.c.b16 %v4065, %v4057
        %v5266 = vpack.c.b16 %v4066, %v4058
        %v5267 = vpack.c.b16 %v4067, %v4059
        %v5268 = vpack.c.b16 %v4068, %v4060
        %v5269 = vpack.c.b16 %v4069, %v4061
        %v5270 = vpack.c.b16 %v4070, %v4062
        %v5271 = vpack.c.b16 %v4079, %v4071
        %v5272 = vpack.c.b16 %v4080, %v4072
        %v5273 = vpack.c.b16 %v4081, %v4073
        %v5274 = vpack.c.b16 %v4082, %v4074
        %v5275 = vpack.c.b16 %v4083, %v4075
        %v5276 = vpack.c.b16 %v4084, %v4076
        %v5277 = vpack.c.b16 %v4085, %v4077
        %v5278 = vpack.c.b16 %v4086, %v4078
        %v5279 = vpack.c.b16 %v4095, %v4087
        %v5280 = vpack.c.b16 %v4096, %v4088
        %v5281 = vpack.c.b16 %v4097, %v4089
        %v5282 = vpack.c.b16 %v4098, %v4090
        %v5283 = vpack.c.b16 %v4099, %v4091
        %v5284 = vpack.c.b16 %v4100, %v4092
        %v5285 = vpack.c.b16 %v4101, %v4093
        %v5286 = vpack.c.b16 %v4102, %v4094
        %v5287 = vpack.c.b16 %v4111, %v4103
        %v5288 = vpack.c.b16 %v4112, %v4104
        %v5289 = vpack.c.b16 %v4113, %v4105
        %v5290 = vpack.c.b16 %v4114, %v4106
        %v5291 = vpack.c.b16 %v4115, %v4107
        %v5292 = vpack.c.b16 %v4116, %v4108
        %v5293 = vpack.c.b16 %v4117, %v4109
        %v5294 = vpack.c.b16 %v4118, %v4110
        %v5295 = vpack.c.b16 %v4127, %v4119
        %v5296 = vpack.c.b16 %v4128, %v4120
        %v5297 = vpack.c.b16 %v4129, %v4121
        %v5298 = vpack.c.b16 %v4130, %v4122
        %v5299 = vpack.c.b16 %v4131, %v4123
        %v5300 = vpack.c.b16 %v4132, %v4124
        %v5301 = vpack.c.b16 %v4133, %v4125
        %v5302 = vpack.c.b16 %v4134, %v4126
        %v5303 = vpack.c.b16 %v4143, %v4135
        %v5304 = vpack.c.b16 %v4144, %v4136
        %v5305 = vpack.c.b16 %v4145, %v4137
        %v5306 = vpack.c.b16 %v4146, %v4138
        %v5307 = vpack.c.b16 %v4147, %v4139
        %v5308 = vpack.c.b16 %v4148, %v4140
        %v5309 = vpack.c.b16 %v4149, %v4141
        %v5310 = vpack.c.b16 %v4150, %v4142
        %v5311 = vpack.c.b16 %v4159, %v4151
        %v5312 = vpack.c.b16 %v4160, %v4152
        %v5313 = vpack.c.b16 %v4161, %v4153
        %v5314 = vpack.c.b16 %v4162, %v4154
        %v5315 = vpack.c.b16 %v4163, %v4155
        %v5316 = vpack.c.b16 %v4164, %v4156
        %v5317 = vpack.c.b16 %v4165, %v4157
        %v5318 = vpack.c.b16 %v4166, %v4158
        %v5319 = vpack.c.b16 %v4175, %v4167
        %v5320 = vpack.c.b16 %v4176, %v4168
        %v5321 = vpack.c.b16 %v4177, %v4169
        %v5322 = vpack.c.b16 %v4178, %v4170
        %v5323 = vpack.c.b16 %v4179, %v4171
        %v5324 = vpack.c.b16 %v4180, %v4172
        %v5325 = vpack.c.b16 %v4181, %v4173
        %v5326 = vpack.c.b16 %v4182, %v4174
        %v5327 = vpack.c.b16 %v4191, %v4183
        %v5328 = vpack.c.b16 %v4192, %v4184
        %v5329 = vpack.c.b16 %v4193, %v4185
        %v5330 = vpack.c.b16 %v4194, %v4186
        %v5331 = vpack.c.b16 %v4195, %v4187
        %v5332 = vpack.c.b16 %v4196, %v4188
        %v5333 = vpack.c.b16 %v4197, %v4189
        %v5334 = vpack.c.b16 %v4198, %v4190
        %v5335 = vpack.c.b16 %v4207, %v4199
        %v5336 = vpack.c.b16 %v4208, %v4200
        %v5337 = vpack.c.b16 %v4209, %v4201
        %v5338 = vpack.c.b16 %v4210, %v4202
        %v5339 = vpack.c.b16 %v4211, %v4203
        %v5340 = vpack.c.b16 %v4212, %v4204
        %v5341 = vpack.c.b16 %v4213, %v4205
        %v5342 = vpack.c.b16 %v4214, %v4206
        %v5343 = vpack.c.b16 %v4223, %v4215
        %v5344 = vpack.c.b16 %v4224, %v4216
        %v5345 = vpack.c.b16 %v4225, %v4217
        %v5346 = vpack.c.b16 %v4226, %v4218
        %v5347 = vpack.c.b16 %v4227, %v4219
        %v5348 = vpack.c.b16 %v4228, %v4220
        %v5349 = vpack.c.b16 %v4229, %v4221
        %v5350 = vpack.c.b16 %v4230, %v4222
        %v5351 = vpack.c.b16 %v4239, %v4231
        %v5352 = vpack.c.b16 %v4240, %v4232
        %v5353 = vpack.c.b16 %v4241, %v4233
        %v5354 = vpack.c.b16 %v4242, %v4234
        %v5355 = vpack.c.b16 %v4243, %v4235
        %v5356 = vpack.c.b16 %v4244, %v4236
        %v5357 = vpack.c.b16 %v4245, %v4237
        %v5358 = vpack.c.b16 %v4246, %v4238
        %v5359 = vpack.c.b16 %v4255, %v4247
        %v5360 = vpack.c.b16 %v4256, %v4248
        %v5361 = vpack.c.b16 %v4257, %v4249
        %v5362 = vpack.c.b16 %v4258, %v4250
        %v5363 = vpack.c.b16 %v4259, %v4251
        %v5364 = vpack.c.b16 %v4260, %v4252
        %v5365 = vpack.c.b16 %v4261, %v4253
        %v5366 = vpack.c.b16 %v4262, %v4254
        %v5367 = vpack.c.b16 %v4271, %v4263
        %v5368 = vpack.c.b16 %v4272, %v4264
        %v5369 = vpack.c.b16 %v4273, %v4265
        %v5370 = vpack.c.b16 %v4274, %v4266
        %v5371 = vpack.c.b16 %v4275, %v4267
        %v5372 = vpack.c.b16 %v4276, %v4268
        %v5373 = vpack.c.b16 %v4277, %v4269
        %v5374 = vpack.c.b16 %v4278, %v4270
        %v5375 = vpack.c.b16 %v4287, %v4279
        %v5376 = vpack.c.b16 %v4288, %v4280
        %v5377 = vpack.c.b16 %v4289, %v4281
        %v5378 = vpack.c.b16 %v4290, %v4282
        %v5379 = vpack.c.b16 %v4291, %v4283
        %v5380 = vpack.c.b16 %v4292, %v4284
        %v5381 = vpack.c.b16 %v4293, %v4285
        %v5382 = vpack.c.b16 %v4294, %v4286
        %v5383 = vpack.c.b16 %v4303, %v4295
        %v5384 = vpack.c.b16 %v4304, %v4296
        %v5385 = vpack.c.b16 %v4305, %v4297
        %v5386 = vpack.c.b16 %v4306, %v4298
        %v5387 = vpack.c.b16 %v4307, %v4299
        %v5388 = vpack.c.b16 %v4308, %v4300
        %v5389 = vpack.c.b16 %v4309, %v4301
        %v5390 = vpack.c.b16 %v4310, %v4302
        %v5391 = vpack.c.b16 %v4319, %v4311
        %v5392 = vpack.c.b16 %v4320, %v4312
        %v5393 = vpack.c.b16 %v4321, %v4313
        %v5394 = vpack.c.b16 %v4322, %v4314
        %v5395 = vpack.c.b16 %v4323, %v4315
        %v5396 = vpack.c.b16 %v4324, %v4316
        %v5397 = vpack.c.b16 %v4325, %v4317
        %v5398 = vpack.c.b16 %v4326, %v4318
        %v5399 = vpack.c.b16 %v4335, %v4327
        %v5400 = vpack.c.b16 %v4336, %v4328
        %v5401 = vpack.c.b16 %v4337, %v4329
        %v5402 = vpack.c.b16 %v4338, %v4330
        %v5403 = vpack.c.b16 %v4339, %v4331
        %v5404 = vpack.c.b16 %v4340, %v4332
        %v5405 = vpack.c.b16 %v4341, %v4333
        %v5406 = vpack.c.b16 %v4342, %v4334
        %v5407 = vpack.c.b16 %v4351, %v4343
        %v5408 = vpack.c.b16 %v4352, %v4344
        %v5409 = vpack.c.b16 %v4353, %v4345
        %v5410 = vpack.c.b16 %v4354, %v4346
        %v5411 = vpack.c.b16 %v4355, %v4347
        %v5412 = vpack.c.b16 %v4356, %v4348
        %v5413 = vpack.c.b16 %v4357, %v4349
        %v5414 = vpack.c.b16 %v4358, %v4350
        %v5415 = vpack.c.b16 %v4367, %v4359
        %v5416 = vpack.c.b16 %v4368, %v4360
        %v5417 = vpack.c.b16 %v4369, %v4361
        %v5418 = vpack.c.b16 %v4370, %v4362
        %v5419 = vpack.c.b16 %v4371, %v4363
        %v5420 = vpack.c.b16 %v4372, %v4364
        %v5421 = vpack.c.b16 %v4373, %v4365
        %v5422 = vpack.c.b16 %v4374, %v4366
        %v5423 = vpack.c.b16 %v4383, %v4375
        %v5424 = vpack.c.b16 %v4384, %v4376
        %v5425 = vpack.c.b16 %v4385, %v4377
        %v5426 = vpack.c.b16 %v4386, %v4378
        %v5427 = vpack.c.b16 %v4387, %v4379
        %v5428 = vpack.c.b16 %v4388, %v4380
        %v5429 = vpack.c.b16 %v4389, %v4381
        %v5430 = vpack.c.b16 %v4390, %v4382
        %v5431 = vpack.c.b16 %v4399, %v4391
        %v5432 = vpack.c.b16 %v4400, %v4392
        %v5433 = vpack.c.b16 %v4401, %v4393
        %v5434 = vpack.c.b16 %v4402, %v4394
        %v5435 = vpack.c.b16 %v4403, %v4395
        %v5436 = vpack.c.b16 %v4404, %v4396
        %v5437 = vpack.c.b16 %v4405, %v4397
        %v5438 = vpack.c.b16 %v4406, %v4398
        %v5439 = vpack.c.b16 %v4415, %v4407
        %v5440 = vpack.c.b16 %v4416, %v4408
        %v5441 = vpack.c.b16 %v4417, %v4409
        %v5442 = vpack.c.b16 %v4418, %v4410
        %v5443 = vpack.c.b16 %v4419, %v4411
        %v5444 = vpack.c.b16 %v4420, %v4412
        %v5445 = vpack.c.b16 %v4421, %v4413
        %v5446 = vpack.c.b16 %v4422, %v4414
        %v5447 = vpack.c.b16 %v4431, %v4423
        %v5448 = vpack.c.b16 %v4432, %v4424
        %v5449 = vpack.c.b16 %v4433, %v4425
        %v5450 = vpack.c.b16 %v4434, %v4426
        %v5451 = vpack.c.b16 %v4435, %v4427
        %v5452 = vpack.c.b16 %v4436, %v4428
        %v5453 = vpack.c.b16 %v4437, %v4429
        %v5454 = vpack.c.b16 %v4438, %v4430
        %v5455 = vpack.c.b16 %v4447, %v4439
        %v5456 = vpack.c.b16 %v4448, %v4440
        %v5457 = vpack.c.b16 %v4449, %v4441
        %v5458 = vpack.c.b16 %v4450, %v4442
        %v5459 = vpack.c.b16 %v4451, %v4443
        %v5460 = vpack.c.b16 %v4452, %v4444
        %v5461 = vpack.c.b16 %v4453, %v4445
        %v5462 = vpack.c.b16 %v4454, %v4446
        %v5463 = vpack.c.b16 %v4463, %v4455
        %v5464 = vpack.c.b16 %v4464, %v4456
        %v5465 = vpack.c.b16 %v4465, %v4457
        %v5466 = vpack.c.b16 %v4466, %v4458
        %v5467 = vpack.c.b16 %v4467, %v4459
        %v5468 = vpack.c.b16 %v4468, %v4460
        %v5469 = vpack.c.b16 %v4469, %v4461
        %v5470 = vpack.c.b16 %v4470, %v4462
        %v5471 = vpack.c.b16 %v4479, %v4471
        %v5472 = vpack.c.b16 %v4480, %v4472
        %v5473 = vpack.c.b16 %v4481, %v4473
        %v5474 = vpack.c.b16 %v4482, %v4474
        %v5475 = vpack.c.b16 %v4483, %v4475
        %v5476 = vpack.c.b16 %v4484, %v4476
        %v5477 = vpack.c.b16 %v4485, %v4477
        %v5478 = vpack.c.b16 %v4486, %v4478
        %v5479 = vpack.c.b16 %v4495, %v4487
        %v5480 = vpack.c.b16 %v4496, %v4488
        %v5481 = vpack.c.b16 %v4497, %v4489
        %v5482 = vpack.c.b16 %v4498, %v4490
        %v5483 = vpack.c.b16 %v4499, %v4491
        %v5484 = vpack.c.b16 %v4500, %v4492
        %v5485 = vpack.c.b16 %v4501, %v4493
        %v5486 = vpack.c.b16 %v4502, %v4494
        %v5487 = vpack.c.b16 %v4511, %v4503
        %v5488 = vpack.c.b16 %v4512, %v4504
        %v5489 = vpack.c.b16 %v4513, %v4505
        %v5490 = vpack.c.b16 %v4514, %v4506
        %v5491 = vpack.c.b16 %v4515, %v4507
        %v5492 = vpack.c.b16 %v4516, %v4508
        %v5493 = vpack.c.b16 %v4517, %v4509
        %v5494 = vpack.c.b16 %v4518, %v4510
        %v5495 = vpack.c.b16 %v4527, %v4519
        %v5496 = vpack.c.b16 %v4528, %v4520
        %v5497 = vpack.c.b16 %v4529, %v4521
        %v5498 = vpack.c.b16 %v4530, %v4522
        %v5499 = vpack.c.b16 %v4531, %v4523
        %v5500 = vpack.c.b16 %v4532, %v4524
        %v5501 = vpack.c.b16 %v4533, %v4525
        %v5502 = vpack.c.b16 %v4534, %v4526
        %v5503 = vpack.c.b16 %v4543, %v4535
        %v5504 = vpack.c.b16 %v4544, %v4536
        %v5505 = vpack.c.b16 %v4545, %v4537
        %v5506 = vpack.c.b16 %v4546, %v4538
        %v5507 = vpack.c.b16 %v4547, %v4539
        %v5508 = vpack.c.b16 %v4548, %v4540
        %v5509 = vpack.c.b16 %v4549, %v4541
        %v5510 = vpack.c.b16 %v4550, %v4542
        %v5511 = vpack.c.b16 %v4559, %v4551
        %v5512 = vpack.c.b16 %v4560, %v4552
        %v5513 = vpack.c.b16 %v4561, %v4553
        %v5514 = vpack.c.b16 %v4562, %v4554
        %v5515 = vpack.c.b16 %v4563, %v4555
        %v5516 = vpack.c.b16 %v4564, %v4556
        %v5517 = vpack.c.b16 %v4565, %v4557
        %v5518 = vpack.c.b16 %v4566, %v4558
        %v5519 = vpack.c.b16 %v4575, %v4567
        %v5520 = vpack.c.b16 %v4576, %v4568
        %v5521 = vpack.c.b16 %v4577, %v4569
        %v5522 = vpack.c.b16 %v4578, %v4570
        %v5523 = vpack.c.b16 %v4579, %v4571
        %v5524 = vpack.c.b16 %v4580, %v4572
        %v5525 = vpack.c.b16 %v4581, %v4573
        %v5526 = vpack.c.b16 %v4582, %v4574
        %v5527 = vpack.c.b16 %v4591, %v4583
        %v5528 = vpack.c.b16 %v4592, %v4584
        %v5529 = vpack.c.b16 %v4593, %v4585
        %v5530 = vpack.c.b16 %v4594, %v4586
        %v5531 = vpack.c.b16 %v4595, %v4587
        %v5532 = vpack.c.b16 %v4596, %v4588
        %v5533 = vpack.c.b16 %v4597, %v4589
        %v5534 = vpack.c.b16 %v4598, %v4590
        %v5535 = vpack.c.b16 %v4607, %v4599
        %v5536 = vpack.c.b16 %v4608, %v4600
        %v5537 = vpack.c.b16 %v4609, %v4601
        %v5538 = vpack.c.b16 %v4610, %v4602
        %v5539 = vpack.c.b16 %v4611, %v4603
        %v5540 = vpack.c.b16 %v4612, %v4604
        %v5541 = vpack.c.b16 %v4613, %v4605
        %v5542 = vpack.c.b16 %v4614, %v4606
        %v5543 = vpack.c.b16 %v4623, %v4615
        %v5544 = vpack.c.b16 %v4624, %v4616
        %v5545 = vpack.c.b16 %v4625, %v4617
        %v5546 = vpack.c.b16 %v4626, %v4618
        %v5547 = vpack.c.b16 %v4627, %v4619
        %v5548 = vpack.c.b16 %v4628, %v4620
        %v5549 = vpack.c.b16 %v4629, %v4621
        %v5550 = vpack.c.b16 %v4630, %v4622
        %v5551 = vpack.c.b16 %v4639, %v4631
        %v5552 = vpack.c.b16 %v4640, %v4632
        %v5553 = vpack.c.b16 %v4641, %v4633
        %v5554 = vpack.c.b16 %v4642, %v4634
        %v5555 = vpack.c.b16 %v4643, %v4635
        %v5556 = vpack.c.b16 %v4644, %v4636
        %v5557 = vpack.c.b16 %v4645, %v4637
        %v5558 = vpack.c.b16 %v4646, %v4638
        %v5559 = vpack.c.b16 %v4655, %v4647
        %v5560 = vpack.c.b16 %v4656, %v4648
        %v5561 = vpack.c.b16 %v4657, %v4649
        %v5562 = vpack.c.b16 %v4658, %v4650
        %v5563 = vpack.c.b16 %v4659, %v4651
        %v5564 = vpack.c.b16 %v4660, %v4652
        %v5565 = vpack.c.b16 %v4661, %v4653
        %v5566 = vpack.c.b16 %v4662, %v4654
        %v5567 = vpack.c.b16 %v4671, %v4663
        %v5568 = vpack.c.b16 %v4672, %v4664
        %v5569 = vpack.c.b16 %v4673, %v4665
        %v5570 = vpack.c.b16 %v4674, %v4666
        %v5571 = vpack.c.b16 %v4675, %v4667
        %v5572 = vpack.c.b16 %v4676, %v4668
        %v5573 = vpack.c.b16 %v4677, %v4669
        %v5574 = vpack.c.b16 %v4678, %v4670
        %v5575 = vpack.c.b16 %v4687, %v4679
        %v5576 = vpack.c.b16 %v4688, %v4680
        %v5577 = vpack.c.b16 %v4689, %v4681
        %v5578 = vpack.c.b16 %v4690, %v4682
        %v5579 = vpack.c.b16 %v4691, %v4683
        %v5580 = vpack.c.b16 %v4692, %v4684
        %v5581 = vpack.c.b16 %v4693, %v4685
        %v5582 = vpack.c.b16 %v4694, %v4686
        %v5583 = vpack.c.b16 %v4703, %v4695
        %v5584 = vpack.c.b16 %v4704, %v4696
        %v5585 = vpack.c.b16 %v4705, %v4697
        %v5586 = vpack.c.b16 %v4706, %v4698
        %v5587 = vpack.c.b16 %v4707, %v4699
        %v5588 = vpack.c.b16 %v4708, %v4700
        %v5589 = vpack.c.b16 %v4709, %v4701
        %v5590 = vpack.c.b16 %v4710, %v4702
        %v5591 = vpack.c.b16 %v4719, %v4711
        %v5592 = vpack.c.b16 %v4720, %v4712
        %v5593 = vpack.c.b16 %v4721, %v4713
        %v5594 = vpack.c.b16 %v4722, %v4714
        %v5595 = vpack.c.b16 %v4723, %v4715
        %v5596 = vpack.c.b16 %v4724, %v4716
        %v5597 = vpack.c.b16 %v4725, %v4717
        %v5598 = vpack.c.b16 %v4726, %v4718
        %v5599 = vpack.c.b16 %v4735, %v4727
        %v5600 = vpack.c.b16 %v4736, %v4728
        %v5601 = vpack.c.b16 %v4737, %v4729
        %v5602 = vpack.c.b16 %v4738, %v4730
        %v5603 = vpack.c.b16 %v4739, %v4731
        %v5604 = vpack.c.b16 %v4740, %v4732
        %v5605 = vpack.c.b16 %v4741, %v4733
        %v5606 = vpack.c.b16 %v4742, %v4734
        %v5607 = vpack.c.b16 %v4751, %v4743
        %v5608 = vpack.c.b16 %v4752, %v4744
        %v5609 = vpack.c.b16 %v4753, %v4745
        %v5610 = vpack.c.b16 %v4754, %v4746
        %v5611 = vpack.c.b16 %v4755, %v4747
        %v5612 = vpack.c.b16 %v4756, %v4748
        %v5613 = vpack.c.b16 %v4757, %v4749
        %v5614 = vpack.c.b16 %v4758, %v4750
        %v5615 = vpack.c.b16 %v4767, %v4759
        %v5616 = vpack.c.b16 %v4768, %v4760
        %v5617 = vpack.c.b16 %v4769, %v4761
        %v5618 = vpack.c.b16 %v4770, %v4762
        %v5619 = vpack.c.b16 %v4771, %v4763
        %v5620 = vpack.c.b16 %v4772, %v4764
        %v5621 = vpack.c.b16 %v4773, %v4765
        %v5622 = vpack.c.b16 %v4774, %v4766
        %v5623 = vpack.c.b16 %v4783, %v4775
        %v5624 = vpack.c.b16 %v4784, %v4776
        %v5625 = vpack.c.b16 %v4785, %v4777
        %v5626 = vpack.c.b16 %v4786, %v4778
        %v5627 = vpack.c.b16 %v4787, %v4779
        %v5628 = vpack.c.b16 %v4788, %v4780
        %v5629 = vpack.c.b16 %v4789, %v4781
        %v5630 = vpack.c.b16 %v4790, %v4782
        %v5631 = vpack.c.b16 %v4799, %v4791
        %v5632 = vpack.c.b16 %v4800, %v4792
        %v5633 = vpack.c.b16 %v4801, %v4793
        %v5634 = vpack.c.b16 %v4802, %v4794
        %v5635 = vpack.c.b16 %v4803, %v4795
        %v5636 = vpack.c.b16 %v4804, %v4796
        %v5637 = vpack.c.b16 %v4805, %v4797
        %v5638 = vpack.c.b16 %v4806, %v4798
        %v5639 = vpack.c.b16 %v4815, %v4807
        %v5640 = vpack.c.b16 %v4816, %v4808
        %v5641 = vpack.c.b16 %v4817, %v4809
        %v5642 = vpack.c.b16 %v4818, %v4810
        %v5643 = vpack.c.b16 %v4819, %v4811
        %v5644 = vpack.c.b16 %v4820, %v4812
        %v5645 = vpack.c.b16 %v4821, %v4813
        %v5646 = vpack.c.b16 %v4822, %v4814
        %v5647 = vpack.c.b16 %v4831, %v4823
        %v5648 = vpack.c.b16 %v4832, %v4824
        %v5649 = vpack.c.b16 %v4833, %v4825
        %v5650 = vpack.c.b16 %v4834, %v4826
        %v5651 = vpack.c.b16 %v4835, %v4827
        %v5652 = vpack.c.b16 %v4836, %v4828
        %v5653 = vpack.c.b16 %v4837, %v4829
        %v5654 = vpack.c.b16 %v4838, %v4830
        %v5655 = vpack.c.b16 %v4847, %v4839
        %v5656 = vpack.c.b16 %v4848, %v4840
        %v5657 = vpack.c.b16 %v4849, %v4841
        %v5658 = vpack.c.b16 %v4850, %v4842
        %v5659 = vpack.c.b16 %v4851, %v4843
        %v5660 = vpack.c.b16 %v4852, %v4844
        %v5661 = vpack.c.b16 %v4853, %v4845
        %v5662 = vpack.c.b16 %v4854, %v4846
        %v5663 = vpack.c.b16 %v4863, %v4855
        %v5664 = vpack.c.b16 %v4864, %v4856
        %v5665 = vpack.c.b16 %v4865, %v4857
        %v5666 = vpack.c.b16 %v4866, %v4858
        %v5667 = vpack.c.b16 %v4867, %v4859
        %v5668 = vpack.c.b16 %v4868, %v4860
        %v5669 = vpack.c.b16 %v4869, %v4861
        %v5670 = vpack.c.b16 %v4870, %v4862
        %v5671 = vpack.c.b16 %v4879, %v4871
        %v5672 = vpack.c.b16 %v4880, %v4872
        %v5673 = vpack.c.b16 %v4881, %v4873
        %v5674 = vpack.c.b16 %v4882, %v4874
        %v5675 = vpack.c.b16 %v4883, %v4875
        %v5676 = vpack.c.b16 %v4884, %v4876
        %v5677 = vpack.c.b16 %v4885, %v4877
        %v5678 = vpack.c.b16 %v4886, %v4878
        %v5679 = vpack.c.b16 %v4895, %v4887
        %v5680 = vpack.c.b16 %v4896, %v4888
        %v5681 = vpack.c.b16 %v4897, %v4889
        %v5682 = vpack.c.b16 %v4898, %v4890
        %v5683 = vpack.c.b16 %v4899, %v4891
        %v5684 = vpack.c.b16 %v4900, %v4892
        %v5685 = vpack.c.b16 %v4901, %v4893
        %v5686 = vpack.c.b16 %v4902, %v4894
        %v5687 = vpack.c.b16 %v4911, %v4903
        %v5688 = vpack.c.b16 %v4912, %v4904
        %v5689 = vpack.c.b16 %v4913, %v4905
        %v5690 = vpack.c.b16 %v4914, %v4906
        %v5691 = vpack.c.b16 %v4915, %v4907
        %v5692 = vpack.c.b16 %v4916, %v4908
        %v5693 = vpack.c.b16 %v4917, %v4909
        %v5694 = vpack.c.b16 %v4918, %v4910
        %v5695 = vpack.c.b16 %v4927, %v4919
        %v5696 = vpack.c.b16 %v4928, %v4920
        %v5697 = vpack.c.b16 %v4929, %v4921
        %v5698 = vpack.c.b16 %v4930, %v4922
        %v5699 = vpack.c.b16 %v4931, %v4923
        %v5700 = vpack.c.b16 %v4932, %v4924
        %v5701 = vpack.c.b16 %v4933, %v4925
        %v5702 = vpack.c.b16 %v4934, %v4926
        %6471 = vmatpush.bf16.msra.mxu0 %v4991
        %6472 = vmatpush.bf16.msra.mxu0 %v4983
        %6473 = vmatpush.bf16.msra.mxu0 %v4975
        %6474 = vmatpush.bf16.msra.mxu0 %v4967
        %6475 = vmatpush.bf16.msra.mxu0 %v4959
        %6476 = vmatpush.bf16.msra.mxu0 %v4951
        %6477 = vmatpush.bf16.msra.mxu0 %v4943
        %6478 = vmatpush.bf16.msra.mxu0 %v4935
        %6479 = vmatmul.bf16.gmra.mxu0 %v1851
        %v6480 = vpop.f32.mrf.mxu0
        %v6481 = vadd.f32 0.0, %v6480
        %v6482 = vpop.f32.mrf.mxu0
        %6483 = vdwg.mxu0
        %6484 = vmatpush.bf16.msra.mxu0 %v5055
        %6485 = vmatpush.bf16.msra.mxu0 %v5047
        %6486 = vmatpush.bf16.msra.mxu0 %v5039
        %6487 = vmatpush.bf16.msra.mxu0 %v5031
        %6488 = vmatpush.bf16.msra.mxu0 %v5023
        %6489 = vmatpush.bf16.msra.mxu0 %v5015
        %6490 = vmatpush.bf16.msra.mxu0 %v5007
        %6491 = vmatpush.bf16.msra.mxu0 %v4999
        %6492 = vmatmul.bf16.gmra.mxu0 %v1852
        %v6493 = vpop.f32.mrf.mxu0
        %v6494 = vadd.f32 %v6481, %v6493
        %v6495 = vpop.f32.mrf.mxu0
        %6496 = vdwg.mxu0
        %6497 = vmatpush.bf16.msra.mxu0 %v5119
        %6498 = vmatpush.bf16.msra.mxu0 %v5111
        %6499 = vmatpush.bf16.msra.mxu0 %v5103
        %6500 = vmatpush.bf16.msra.mxu0 %v5095
        %6501 = vmatpush.bf16.msra.mxu0 %v5087
        %6502 = vmatpush.bf16.msra.mxu0 %v5079
        %6503 = vmatpush.bf16.msra.mxu0 %v5071
        %6504 = vmatpush.bf16.msra.mxu0 %v5063
        %6505 = vmatmul.bf16.gmra.mxu0 %v1853
        %v6506 = vpop.f32.mrf.mxu0
        %v6507 = vadd.f32 %v6494, %v6506
        %v6508 = vpop.f32.mrf.mxu0
        %6509 = vdwg.mxu0
        %6510 = vmatpush.bf16.msra.mxu0 %v5183
        %6511 = vmatpush.bf16.msra.mxu0 %v5175
        %6512 = vmatpush.bf16.msra.mxu0 %v5167
        %6513 = vmatpush.bf16.msra.mxu0 %v5159
        %6514 = vmatpush.bf16.msra.mxu0 %v5151
        %6515 = vmatpush.bf16.msra.mxu0 %v5143
        %6516 = vmatpush.bf16.msra.mxu0 %v5135
        %6517 = vmatpush.bf16.msra.mxu0 %v5127
        %6518 = vmatmul.bf16.gmra.mxu0 %v1854
        %v6519 = vpop.f32.mrf.mxu0
        %v6520 = vadd.f32 %v6507, %v6519
        %v6521 = vpop.f32.mrf.mxu0
        %6522 = vdwg.mxu0
        %6523 = vmatpush.bf16.msra.mxu0 %v5247
        %6524 = vmatpush.bf16.msra.mxu0 %v5239
        %6525 = vmatpush.bf16.msra.mxu0 %v5231
        %6526 = vmatpush.bf16.msra.mxu0 %v5223
        %6527 = vmatpush.bf16.msra.mxu0 %v5215
        %6528 = vmatpush.bf16.msra.mxu0 %v5207
        %6529 = vmatpush.bf16.msra.mxu0 %v5199
        %6530 = vmatpush.bf16.msra.mxu0 %v5191
        %6531 = vmatmul.bf16.gmra.mxu0 %v1855
        %v6532 = vpop.f32.mrf.mxu0
        %v6533 = vadd.f32 %v6520, %v6532
        %v6534 = vpop.f32.mrf.mxu0
        %6535 = vdwg.mxu0
        %6536 = vmatpush.bf16.msra.mxu0 %v5311
        %6537 = vmatpush.bf16.msra.mxu0 %v5303
        %6538 = vmatpush.bf16.msra.mxu0 %v5295
        %6539 = vmatpush.bf16.msra.mxu0 %v5287
        %6540 = vmatpush.bf16.msra.mxu0 %v5279
        %6541 = vmatpush.bf16.msra.mxu0 %v5271
        %6542 = vmatpush.bf16.msra.mxu0 %v5263
        %6543 = vmatpush.bf16.msra.mxu0 %v5255
        %6544 = vmatmul.bf16.gmra.mxu0 %v1856
        %v6545 = vpop.f32.mrf.mxu0
        %v6546 = vadd.f32 %v6533, %v6545
        %v6547 = vpop.f32.mrf.mxu0
        %6548 = vdwg.mxu0
        %6549 = vmatpush.bf16.msra.mxu0 %v5375
        %6550 = vmatpush.bf16.msra.mxu0 %v5367
        %6551 = vmatpush.bf16.msra.mxu0 %v5359
        %6552 = vmatpush.bf16.msra.mxu0 %v5351
        %6553 = vmatpush.bf16.msra.mxu0 %v5343
        %6554 = vmatpush.bf16.msra.mxu0 %v5335
        %6555 = vmatpush.bf16.msra.mxu0 %v5327
        %6556 = vmatpush.bf16.msra.mxu0 %v5319
        %6557 = vmatmul.bf16.gmra.mxu0 %v1857
        %v6558 = vpop.f32.mrf.mxu0
        %v6559 = vadd.f32 %v6546, %v6558
        %v6560 = vpop.f32.mrf.mxu0
        %6561 = vdwg.mxu0
        %6562 = vmatpush.bf16.msra.mxu0 %v5439
        %6563 = vmatpush.bf16.msra.mxu0 %v5431
        %6564 = vmatpush.bf16.msra.mxu0 %v5423
        %6565 = vmatpush.bf16.msra.mxu0 %v5415
        %6566 = vmatpush.bf16.msra.mxu0 %v5407
        %6567 = vmatpush.bf16.msra.mxu0 %v5399
        %6568 = vmatpush.bf16.msra.mxu0 %v5391
        %6569 = vmatpush.bf16.msra.mxu0 %v5383
        %6570 = vmatmul.bf16.gmra.mxu0 %v1858
        %v6571 = vpop.f32.mrf.mxu0
        %v6572 = vadd.f32 %v6559, %v6571
        %v6573 = vpop.f32.mrf.mxu0
        %6574 = vdwg.mxu0
        %6575 = vmatpush.bf16.msra.mxu0 %v5503
        %6576 = vmatpush.bf16.msra.mxu0 %v5495
        %6577 = vmatpush.bf16.msra.mxu0 %v5487
        %6578 = vmatpush.bf16.msra.mxu0 %v5479
        %6579 = vmatpush.bf16.msra.mxu0 %v5471
        %6580 = vmatpush.bf16.msra.mxu0 %v5463
        %6581 = vmatpush.bf16.msra.mxu0 %v5455
        %6582 = vmatpush.bf16.msra.mxu0 %v5447
        %6583 = vmatmul.bf16.gmra.mxu0 %v1859
        %v6584 = vpop.f32.mrf.mxu0
        %v6585 = vadd.f32 %v6572, %v6584
        %v6586 = vpop.f32.mrf.mxu0
        %6587 = vdwg.mxu0
        %6588 = vmatpush.bf16.msra.mxu0 %v5567
        %6589 = vmatpush.bf16.msra.mxu0 %v5559
        %6590 = vmatpush.bf16.msra.mxu0 %v5551
        %6591 = vmatpush.bf16.msra.mxu0 %v5543
        %6592 = vmatpush.bf16.msra.mxu0 %v5535
        %6593 = vmatpush.bf16.msra.mxu0 %v5527
        %6594 = vmatpush.bf16.msra.mxu0 %v5519
        %6595 = vmatpush.bf16.msra.mxu0 %v5511
        %6596 = vmatmul.bf16.gmra.mxu0 %v1860
        %v6597 = vpop.f32.mrf.mxu0
        %v6598 = vadd.f32 %v6585, %v6597
        %v6599 = vpop.f32.mrf.mxu0
        %6600 = vdwg.mxu0
        %6601 = vmatpush.bf16.msra.mxu0 %v5631
        %6602 = vmatpush.bf16.msra.mxu0 %v5623
        %6603 = vmatpush.bf16.msra.mxu0 %v5615
        %6604 = vmatpush.bf16.msra.mxu0 %v5607
        %6605 = vmatpush.bf16.msra.mxu0 %v5599
        %6606 = vmatpush.bf16.msra.mxu0 %v5591
        %6607 = vmatpush.bf16.msra.mxu0 %v5583
        %6608 = vmatpush.bf16.msra.mxu0 %v5575
        %6609 = vmatmul.bf16.gmra.mxu0 %v1861
        %v6610 = vpop.f32.mrf.mxu0
        %v6611 = vadd.f32 %v6598, %v6610
        %v6612 = vpop.f32.mrf.mxu0
        %6613 = vdwg.mxu0
        %6614 = vmatpush.bf16.msra.mxu0 %v5695
        %6615 = vmatpush.bf16.msra.mxu0 %v5687
        %6616 = vmatpush.bf16.msra.mxu0 %v5679
        %6617 = vmatpush.bf16.msra.mxu0 %v5671
        %6618 = vmatpush.bf16.msra.mxu0 %v5663
        %6619 = vmatpush.bf16.msra.mxu0 %v5655
        %6620 = vmatpush.bf16.msra.mxu0 %v5647
        %6621 = vmatpush.bf16.msra.mxu0 %v5639
        %6622 = vmatmul.bf16.gmra.mxu0 %v1862
        %v6623 = vpop.f32.mrf.mxu0
        %v6624 = vadd.f32 %v6611, %v6623
        %v6625 = vpop.f32.mrf.mxu0
        %6626 = vdwg.mxu0
        %6627 = vmatpush.bf16.msra.mxu0 %v4992
        %6628 = vmatpush.bf16.msra.mxu0 %v4984
        %6629 = vmatpush.bf16.msra.mxu0 %v4976
        %6630 = vmatpush.bf16.msra.mxu0 %v4968
        %6631 = vmatpush.bf16.msra.mxu0 %v4960
        %6632 = vmatpush.bf16.msra.mxu0 %v4952
        %6633 = vmatpush.bf16.msra.mxu0 %v4944
        %6634 = vmatpush.bf16.msra.mxu0 %v4936
        %6635 = vmatmul.bf16.gmra.mxu0 %v1851
        %v6636 = vpop.f32.mrf.mxu0
        %v6637 = vadd.f32 0.0, %v6636
        %v6638 = vpop.f32.mrf.mxu0
        %6639 = vdwg.mxu0
        %6640 = vmatpush.bf16.msra.mxu0 %v5056
        %6641 = vmatpush.bf16.msra.mxu0 %v5048
        %6642 = vmatpush.bf16.msra.mxu0 %v5040
        %6643 = vmatpush.bf16.msra.mxu0 %v5032
        %6644 = vmatpush.bf16.msra.mxu0 %v5024
        %6645 = vmatpush.bf16.msra.mxu0 %v5016
        %6646 = vmatpush.bf16.msra.mxu0 %v5008
        %6647 = vmatpush.bf16.msra.mxu0 %v5000
        %6648 = vmatmul.bf16.gmra.mxu0 %v1852
        %v6649 = vpop.f32.mrf.mxu0
        %v6650 = vadd.f32 %v6637, %v6649
        %v6651 = vpop.f32.mrf.mxu0
        %6652 = vdwg.mxu0
        %6653 = vmatpush.bf16.msra.mxu0 %v5120
        %6654 = vmatpush.bf16.msra.mxu0 %v5112
        %6655 = vmatpush.bf16.msra.mxu0 %v5104
        %6656 = vmatpush.bf16.msra.mxu0 %v5096
        %6657 = vmatpush.bf16.msra.mxu0 %v5088
        %6658 = vmatpush.bf16.msra.mxu0 %v5080
        %6659 = vmatpush.bf16.msra.mxu0 %v5072
        %6660 = vmatpush.bf16.msra.mxu0 %v5064
        %6661 = vmatmul.bf16.gmra.mxu0 %v1853
        %v6662 = vpop.f32.mrf.mxu0
        %v6663 = vadd.f32 %v6650, %v6662
        %v6664 = vpop.f32.mrf.mxu0
        %6665 = vdwg.mxu0
        %6666 = vmatpush.bf16.msra.mxu0 %v5184
        %6667 = vmatpush.bf16.msra.mxu0 %v5176
        %6668 = vmatpush.bf16.msra.mxu0 %v5168
        %6669 = vmatpush.bf16.msra.mxu0 %v5160
        %6670 = vmatpush.bf16.msra.mxu0 %v5152
        %6671 = vmatpush.bf16.msra.mxu0 %v5144
        %6672 = vmatpush.bf16.msra.mxu0 %v5136
        %6673 = vmatpush.bf16.msra.mxu0 %v5128
        %6674 = vmatmul.bf16.gmra.mxu0 %v1854
        %v6675 = vpop.f32.mrf.mxu0
        %v6676 = vadd.f32 %v6663, %v6675
        %v6677 = vpop.f32.mrf.mxu0
        %6678 = vdwg.mxu0
        %6679 = vmatpush.bf16.msra.mxu0 %v5248
        %6680 = vmatpush.bf16.msra.mxu0 %v5240
        %6681 = vmatpush.bf16.msra.mxu0 %v5232
        %6682 = vmatpush.bf16.msra.mxu0 %v5224
        %6683 = vmatpush.bf16.msra.mxu0 %v5216
        %6684 = vmatpush.bf16.msra.mxu0 %v5208
        %6685 = vmatpush.bf16.msra.mxu0 %v5200
        %6686 = vmatpush.bf16.msra.mxu0 %v5192
        %6687 = vmatmul.bf16.gmra.mxu0 %v1855
        %v6688 = vpop.f32.mrf.mxu0
        %v6689 = vadd.f32 %v6676, %v6688
        %v6690 = vpop.f32.mrf.mxu0
        %6691 = vdwg.mxu0
        %6692 = vmatpush.bf16.msra.mxu0 %v5312
        %6693 = vmatpush.bf16.msra.mxu0 %v5304
        %6694 = vmatpush.bf16.msra.mxu0 %v5296
        %6695 = vmatpush.bf16.msra.mxu0 %v5288
        %6696 = vmatpush.bf16.msra.mxu0 %v5280
        %6697 = vmatpush.bf16.msra.mxu0 %v5272
        %6698 = vmatpush.bf16.msra.mxu0 %v5264
        %6699 = vmatpush.bf16.msra.mxu0 %v5256
        %6700 = vmatmul.bf16.gmra.mxu0 %v1856
        %v6701 = vpop.f32.mrf.mxu0
        %v6702 = vadd.f32 %v6689, %v6701
        %v6703 = vpop.f32.mrf.mxu0
        %6704 = vdwg.mxu0
        %6705 = vmatpush.bf16.msra.mxu0 %v5376
        %6706 = vmatpush.bf16.msra.mxu0 %v5368
        %6707 = vmatpush.bf16.msra.mxu0 %v5360
        %6708 = vmatpush.bf16.msra.mxu0 %v5352
        %6709 = vmatpush.bf16.msra.mxu0 %v5344
        %6710 = vmatpush.bf16.msra.mxu0 %v5336
        %6711 = vmatpush.bf16.msra.mxu0 %v5328
        %6712 = vmatpush.bf16.msra.mxu0 %v5320
        %6713 = vmatmul.bf16.gmra.mxu0 %v1857
        %v6714 = vpop.f32.mrf.mxu0
        %v6715 = vadd.f32 %v6702, %v6714
        %v6716 = vpop.f32.mrf.mxu0
        %6717 = vdwg.mxu0
        %6718 = vmatpush.bf16.msra.mxu0 %v5440
        %6719 = vmatpush.bf16.msra.mxu0 %v5432
        %6720 = vmatpush.bf16.msra.mxu0 %v5424
        %6721 = vmatpush.bf16.msra.mxu0 %v5416
        %6722 = vmatpush.bf16.msra.mxu0 %v5408
        %6723 = vmatpush.bf16.msra.mxu0 %v5400
        %6724 = vmatpush.bf16.msra.mxu0 %v5392
        %6725 = vmatpush.bf16.msra.mxu0 %v5384
        %6726 = vmatmul.bf16.gmra.mxu0 %v1858
        %v6727 = vpop.f32.mrf.mxu0
        %v6728 = vadd.f32 %v6715, %v6727
        %v6729 = vpop.f32.mrf.mxu0
        %6730 = vdwg.mxu0
        %6731 = vmatpush.bf16.msra.mxu0 %v5504
        %6732 = vmatpush.bf16.msra.mxu0 %v5496
        %6733 = vmatpush.bf16.msra.mxu0 %v5488
        %6734 = vmatpush.bf16.msra.mxu0 %v5480
        %6735 = vmatpush.bf16.msra.mxu0 %v5472
        %6736 = vmatpush.bf16.msra.mxu0 %v5464
        %6737 = vmatpush.bf16.msra.mxu0 %v5456
        %6738 = vmatpush.bf16.msra.mxu0 %v5448
        %6739 = vmatmul.bf16.gmra.mxu0 %v1859
        %v6740 = vpop.f32.mrf.mxu0
        %v6741 = vadd.f32 %v6728, %v6740
        %v6742 = vpop.f32.mrf.mxu0
        %6743 = vdwg.mxu0
        %6744 = vmatpush.bf16.msra.mxu0 %v5568
        %6745 = vmatpush.bf16.msra.mxu0 %v5560
        %6746 = vmatpush.bf16.msra.mxu0 %v5552
        %6747 = vmatpush.bf16.msra.mxu0 %v5544
        %6748 = vmatpush.bf16.msra.mxu0 %v5536
        %6749 = vmatpush.bf16.msra.mxu0 %v5528
        %6750 = vmatpush.bf16.msra.mxu0 %v5520
        %6751 = vmatpush.bf16.msra.mxu0 %v5512
        %6752 = vmatmul.bf16.gmra.mxu0 %v1860
        %v6753 = vpop.f32.mrf.mxu0
        %v6754 = vadd.f32 %v6741, %v6753
        %v6755 = vpop.f32.mrf.mxu0
        %6756 = vdwg.mxu0
        %6757 = vmatpush.bf16.msra.mxu0 %v5632
        %6758 = vmatpush.bf16.msra.mxu0 %v5624
        %6759 = vmatpush.bf16.msra.mxu0 %v5616
        %6760 = vmatpush.bf16.msra.mxu0 %v5608
        %6761 = vmatpush.bf16.msra.mxu0 %v5600
        %6762 = vmatpush.bf16.msra.mxu0 %v5592
        %6763 = vmatpush.bf16.msra.mxu0 %v5584
        %6764 = vmatpush.bf16.msra.mxu0 %v5576
        %6765 = vmatmul.bf16.gmra.mxu0 %v1861
        %v6766 = vpop.f32.mrf.mxu0
        %v6767 = vadd.f32 %v6754, %v6766
        %v6768 = vpop.f32.mrf.mxu0
        %6769 = vdwg.mxu0
        %6770 = vmatpush.bf16.msra.mxu0 %v5696
        %6771 = vmatpush.bf16.msra.mxu0 %v5688
        %6772 = vmatpush.bf16.msra.mxu0 %v5680
        %6773 = vmatpush.bf16.msra.mxu0 %v5672
        %6774 = vmatpush.bf16.msra.mxu0 %v5664
        %6775 = vmatpush.bf16.msra.mxu0 %v5656
        %6776 = vmatpush.bf16.msra.mxu0 %v5648
        %6777 = vmatpush.bf16.msra.mxu0 %v5640
        %6778 = vmatmul.bf16.gmra.mxu0 %v1862
        %v6779 = vpop.f32.mrf.mxu0
        %v6780 = vadd.f32 %v6767, %v6779
        %v6781 = vpop.f32.mrf.mxu0
        %6782 = vdwg.mxu0
        %6783 = vmatpush.bf16.msra.mxu0 %v4993
        %6784 = vmatpush.bf16.msra.mxu0 %v4985
        %6785 = vmatpush.bf16.msra.mxu0 %v4977
        %6786 = vmatpush.bf16.msra.mxu0 %v4969
        %6787 = vmatpush.bf16.msra.mxu0 %v4961
        %6788 = vmatpush.bf16.msra.mxu0 %v4953
        %6789 = vmatpush.bf16.msra.mxu0 %v4945
        %6790 = vmatpush.bf16.msra.mxu0 %v4937
        %6791 = vmatmul.bf16.gmra.mxu0 %v1851
        %v6792 = vpop.f32.mrf.mxu0
        %v6793 = vadd.f32 0.0, %v6792
        %v6794 = vpop.f32.mrf.mxu0
        %6795 = vdwg.mxu0
        %6796 = vmatpush.bf16.msra.mxu0 %v5057
        %6797 = vmatpush.bf16.msra.mxu0 %v5049
        %6798 = vmatpush.bf16.msra.mxu0 %v5041
        %6799 = vmatpush.bf16.msra.mxu0 %v5033
        %6800 = vmatpush.bf16.msra.mxu0 %v5025
        %6801 = vmatpush.bf16.msra.mxu0 %v5017
        %6802 = vmatpush.bf16.msra.mxu0 %v5009
        %6803 = vmatpush.bf16.msra.mxu0 %v5001
        %6804 = vmatmul.bf16.gmra.mxu0 %v1852
        %v6805 = vpop.f32.mrf.mxu0
        %v6806 = vadd.f32 %v6793, %v6805
        %v6807 = vpop.f32.mrf.mxu0
        %6808 = vdwg.mxu0
        %6809 = vmatpush.bf16.msra.mxu0 %v5121
        %6810 = vmatpush.bf16.msra.mxu0 %v5113
        %6811 = vmatpush.bf16.msra.mxu0 %v5105
        %6812 = vmatpush.bf16.msra.mxu0 %v5097
        %6813 = vmatpush.bf16.msra.mxu0 %v5089
        %6814 = vmatpush.bf16.msra.mxu0 %v5081
        %6815 = vmatpush.bf16.msra.mxu0 %v5073
        %6816 = vmatpush.bf16.msra.mxu0 %v5065
        %6817 = vmatmul.bf16.gmra.mxu0 %v1853
        %v6818 = vpop.f32.mrf.mxu0
        %v6819 = vadd.f32 %v6806, %v6818
        %v6820 = vpop.f32.mrf.mxu0
        %6821 = vdwg.mxu0
        %6822 = vmatpush.bf16.msra.mxu0 %v5185
        %6823 = vmatpush.bf16.msra.mxu0 %v5177
        %6824 = vmatpush.bf16.msra.mxu0 %v5169
        %6825 = vmatpush.bf16.msra.mxu0 %v5161
        %6826 = vmatpush.bf16.msra.mxu0 %v5153
        %6827 = vmatpush.bf16.msra.mxu0 %v5145
        %6828 = vmatpush.bf16.msra.mxu0 %v5137
        %6829 = vmatpush.bf16.msra.mxu0 %v5129
        %6830 = vmatmul.bf16.gmra.mxu0 %v1854
        %v6831 = vpop.f32.mrf.mxu0
        %v6832 = vadd.f32 %v6819, %v6831
        %v6833 = vpop.f32.mrf.mxu0
        %6834 = vdwg.mxu0
        %6835 = vmatpush.bf16.msra.mxu0 %v5249
        %6836 = vmatpush.bf16.msra.mxu0 %v5241
        %6837 = vmatpush.bf16.msra.mxu0 %v5233
        %6838 = vmatpush.bf16.msra.mxu0 %v5225
        %6839 = vmatpush.bf16.msra.mxu0 %v5217
        %6840 = vmatpush.bf16.msra.mxu0 %v5209
        %6841 = vmatpush.bf16.msra.mxu0 %v5201
        %6842 = vmatpush.bf16.msra.mxu0 %v5193
        %6843 = vmatmul.bf16.gmra.mxu0 %v1855
        %v6844 = vpop.f32.mrf.mxu0
        %v6845 = vadd.f32 %v6832, %v6844
        %v6846 = vpop.f32.mrf.mxu0
        %6847 = vdwg.mxu0
        %6848 = vmatpush.bf16.msra.mxu0 %v5313
        %6849 = vmatpush.bf16.msra.mxu0 %v5305
        %6850 = vmatpush.bf16.msra.mxu0 %v5297
        %6851 = vmatpush.bf16.msra.mxu0 %v5289
        %6852 = vmatpush.bf16.msra.mxu0 %v5281
        %6853 = vmatpush.bf16.msra.mxu0 %v5273
        %6854 = vmatpush.bf16.msra.mxu0 %v5265
        %6855 = vmatpush.bf16.msra.mxu0 %v5257
        %6856 = vmatmul.bf16.gmra.mxu0 %v1856
        %v6857 = vpop.f32.mrf.mxu0
        %v6858 = vadd.f32 %v6845, %v6857
        %v6859 = vpop.f32.mrf.mxu0
        %6860 = vdwg.mxu0
        %6861 = vmatpush.bf16.msra.mxu0 %v5377
        %6862 = vmatpush.bf16.msra.mxu0 %v5369
        %6863 = vmatpush.bf16.msra.mxu0 %v5361
        %6864 = vmatpush.bf16.msra.mxu0 %v5353
        %6865 = vmatpush.bf16.msra.mxu0 %v5345
        %6866 = vmatpush.bf16.msra.mxu0 %v5337
        %6867 = vmatpush.bf16.msra.mxu0 %v5329
        %6868 = vmatpush.bf16.msra.mxu0 %v5321
        %6869 = vmatmul.bf16.gmra.mxu0 %v1857
        %v6870 = vpop.f32.mrf.mxu0
        %v6871 = vadd.f32 %v6858, %v6870
        %v6872 = vpop.f32.mrf.mxu0
        %6873 = vdwg.mxu0
        %6874 = vmatpush.bf16.msra.mxu0 %v5441
        %6875 = vmatpush.bf16.msra.mxu0 %v5433
        %6876 = vmatpush.bf16.msra.mxu0 %v5425
        %6877 = vmatpush.bf16.msra.mxu0 %v5417
        %6878 = vmatpush.bf16.msra.mxu0 %v5409
        %6879 = vmatpush.bf16.msra.mxu0 %v5401
        %6880 = vmatpush.bf16.msra.mxu0 %v5393
        %6881 = vmatpush.bf16.msra.mxu0 %v5385
        %6882 = vmatmul.bf16.gmra.mxu0 %v1858
        %v6883 = vpop.f32.mrf.mxu0
        %v6884 = vadd.f32 %v6871, %v6883
        %v6885 = vpop.f32.mrf.mxu0
        %6886 = vdwg.mxu0
        %6887 = vmatpush.bf16.msra.mxu0 %v5505
        %6888 = vmatpush.bf16.msra.mxu0 %v5497
        %6889 = vmatpush.bf16.msra.mxu0 %v5489
        %6890 = vmatpush.bf16.msra.mxu0 %v5481
        %6891 = vmatpush.bf16.msra.mxu0 %v5473
        %6892 = vmatpush.bf16.msra.mxu0 %v5465
        %6893 = vmatpush.bf16.msra.mxu0 %v5457
        %6894 = vmatpush.bf16.msra.mxu0 %v5449
        %6895 = vmatmul.bf16.gmra.mxu0 %v1859
        %v6896 = vpop.f32.mrf.mxu0
        %v6897 = vadd.f32 %v6884, %v6896
        %v6898 = vpop.f32.mrf.mxu0
        %6899 = vdwg.mxu0
        %6900 = vmatpush.bf16.msra.mxu0 %v5569
        %6901 = vmatpush.bf16.msra.mxu0 %v5561
        %6902 = vmatpush.bf16.msra.mxu0 %v5553
        %6903 = vmatpush.bf16.msra.mxu0 %v5545
        %6904 = vmatpush.bf16.msra.mxu0 %v5537
        %6905 = vmatpush.bf16.msra.mxu0 %v5529
        %6906 = vmatpush.bf16.msra.mxu0 %v5521
        %6907 = vmatpush.bf16.msra.mxu0 %v5513
        %6908 = vmatmul.bf16.gmra.mxu0 %v1860
        %v6909 = vpop.f32.mrf.mxu0
        %v6910 = vadd.f32 %v6897, %v6909
        %v6911 = vpop.f32.mrf.mxu0
        %6912 = vdwg.mxu0
        %6913 = vmatpush.bf16.msra.mxu0 %v5633
        %6914 = vmatpush.bf16.msra.mxu0 %v5625
        %6915 = vmatpush.bf16.msra.mxu0 %v5617
        %6916 = vmatpush.bf16.msra.mxu0 %v5609
        %6917 = vmatpush.bf16.msra.mxu0 %v5601
        %6918 = vmatpush.bf16.msra.mxu0 %v5593
        %6919 = vmatpush.bf16.msra.mxu0 %v5585
        %6920 = vmatpush.bf16.msra.mxu0 %v5577
        %6921 = vmatmul.bf16.gmra.mxu0 %v1861
        %v6922 = vpop.f32.mrf.mxu0
        %v6923 = vadd.f32 %v6910, %v6922
        %v6924 = vpop.f32.mrf.mxu0
        %6925 = vdwg.mxu0
        %6926 = vmatpush.bf16.msra.mxu0 %v5697
        %6927 = vmatpush.bf16.msra.mxu0 %v5689
        %6928 = vmatpush.bf16.msra.mxu0 %v5681
        %6929 = vmatpush.bf16.msra.mxu0 %v5673
        %6930 = vmatpush.bf16.msra.mxu0 %v5665
        %6931 = vmatpush.bf16.msra.mxu0 %v5657
        %6932 = vmatpush.bf16.msra.mxu0 %v5649
        %6933 = vmatpush.bf16.msra.mxu0 %v5641
        %6934 = vmatmul.bf16.gmra.mxu0 %v1862
        %v6935 = vpop.f32.mrf.mxu0
        %v6936 = vadd.f32 %v6923, %v6935
        %v6937 = vpop.f32.mrf.mxu0
        %6938 = vdwg.mxu0
        %6939 = vmatpush.bf16.msra.mxu0 %v4994
        %6940 = vmatpush.bf16.msra.mxu0 %v4986
        %6941 = vmatpush.bf16.msra.mxu0 %v4978
        %6942 = vmatpush.bf16.msra.mxu0 %v4970
        %6943 = vmatpush.bf16.msra.mxu0 %v4962
        %6944 = vmatpush.bf16.msra.mxu0 %v4954
        %6945 = vmatpush.bf16.msra.mxu0 %v4946
        %6946 = vmatpush.bf16.msra.mxu0 %v4938
        %6947 = vmatmul.bf16.gmra.mxu0 %v1851
        %v6948 = vpop.f32.mrf.mxu0
        %v6949 = vadd.f32 0.0, %v6948
        %v6950 = vpop.f32.mrf.mxu0
        %6951 = vdwg.mxu0
        %6952 = vmatpush.bf16.msra.mxu0 %v5058
        %6953 = vmatpush.bf16.msra.mxu0 %v5050
        %6954 = vmatpush.bf16.msra.mxu0 %v5042
        %6955 = vmatpush.bf16.msra.mxu0 %v5034
        %6956 = vmatpush.bf16.msra.mxu0 %v5026
        %6957 = vmatpush.bf16.msra.mxu0 %v5018
        %6958 = vmatpush.bf16.msra.mxu0 %v5010
        %6959 = vmatpush.bf16.msra.mxu0 %v5002
        %6960 = vmatmul.bf16.gmra.mxu0 %v1852
        %v6961 = vpop.f32.mrf.mxu0
        %v6962 = vadd.f32 %v6949, %v6961
        %v6963 = vpop.f32.mrf.mxu0
        %6964 = vdwg.mxu0
        %6965 = vmatpush.bf16.msra.mxu0 %v5122
        %6966 = vmatpush.bf16.msra.mxu0 %v5114
        %6967 = vmatpush.bf16.msra.mxu0 %v5106
        %6968 = vmatpush.bf16.msra.mxu0 %v5098
        %6969 = vmatpush.bf16.msra.mxu0 %v5090
        %6970 = vmatpush.bf16.msra.mxu0 %v5082
        %6971 = vmatpush.bf16.msra.mxu0 %v5074
        %6972 = vmatpush.bf16.msra.mxu0 %v5066
        %6973 = vmatmul.bf16.gmra.mxu0 %v1853
        %v6974 = vpop.f32.mrf.mxu0
        %v6975 = vadd.f32 %v6962, %v6974
        %v6976 = vpop.f32.mrf.mxu0
        %6977 = vdwg.mxu0
        %6978 = vmatpush.bf16.msra.mxu0 %v5186
        %6979 = vmatpush.bf16.msra.mxu0 %v5178
        %6980 = vmatpush.bf16.msra.mxu0 %v5170
        %6981 = vmatpush.bf16.msra.mxu0 %v5162
        %6982 = vmatpush.bf16.msra.mxu0 %v5154
        %6983 = vmatpush.bf16.msra.mxu0 %v5146
        %6984 = vmatpush.bf16.msra.mxu0 %v5138
        %6985 = vmatpush.bf16.msra.mxu0 %v5130
        %6986 = vmatmul.bf16.gmra.mxu0 %v1854
        %v6987 = vpop.f32.mrf.mxu0
        %v6988 = vadd.f32 %v6975, %v6987
        %v6989 = vpop.f32.mrf.mxu0
        %6990 = vdwg.mxu0
        %6991 = vmatpush.bf16.msra.mxu0 %v5250
        %6992 = vmatpush.bf16.msra.mxu0 %v5242
        %6993 = vmatpush.bf16.msra.mxu0 %v5234
        %6994 = vmatpush.bf16.msra.mxu0 %v5226
        %6995 = vmatpush.bf16.msra.mxu0 %v5218
        %6996 = vmatpush.bf16.msra.mxu0 %v5210
        %6997 = vmatpush.bf16.msra.mxu0 %v5202
        %6998 = vmatpush.bf16.msra.mxu0 %v5194
        %6999 = vmatmul.bf16.gmra.mxu0 %v1855
        %v7000 = vpop.f32.mrf.mxu0
        %v7001 = vadd.f32 %v6988, %v7000
        %v7002 = vpop.f32.mrf.mxu0
        %7003 = vdwg.mxu0
        %7004 = vmatpush.bf16.msra.mxu0 %v5314
        %7005 = vmatpush.bf16.msra.mxu0 %v5306
        %7006 = vmatpush.bf16.msra.mxu0 %v5298
        %7007 = vmatpush.bf16.msra.mxu0 %v5290
        %7008 = vmatpush.bf16.msra.mxu0 %v5282
        %7009 = vmatpush.bf16.msra.mxu0 %v5274
        %7010 = vmatpush.bf16.msra.mxu0 %v5266
        %7011 = vmatpush.bf16.msra.mxu0 %v5258
        %7012 = vmatmul.bf16.gmra.mxu0 %v1856
        %v7013 = vpop.f32.mrf.mxu0
        %v7014 = vadd.f32 %v7001, %v7013
        %v7015 = vpop.f32.mrf.mxu0
        %7016 = vdwg.mxu0
        %7017 = vmatpush.bf16.msra.mxu0 %v5378
        %7018 = vmatpush.bf16.msra.mxu0 %v5370
        %7019 = vmatpush.bf16.msra.mxu0 %v5362
        %7020 = vmatpush.bf16.msra.mxu0 %v5354
        %7021 = vmatpush.bf16.msra.mxu0 %v5346
        %7022 = vmatpush.bf16.msra.mxu0 %v5338
        %7023 = vmatpush.bf16.msra.mxu0 %v5330
        %7024 = vmatpush.bf16.msra.mxu0 %v5322
        %7025 = vmatmul.bf16.gmra.mxu0 %v1857
        %v7026 = vpop.f32.mrf.mxu0
        %v7027 = vadd.f32 %v7014, %v7026
        %v7028 = vpop.f32.mrf.mxu0
        %7029 = vdwg.mxu0
        %7030 = vmatpush.bf16.msra.mxu0 %v5442
        %7031 = vmatpush.bf16.msra.mxu0 %v5434
        %7032 = vmatpush.bf16.msra.mxu0 %v5426
        %7033 = vmatpush.bf16.msra.mxu0 %v5418
        %7034 = vmatpush.bf16.msra.mxu0 %v5410
        %7035 = vmatpush.bf16.msra.mxu0 %v5402
        %7036 = vmatpush.bf16.msra.mxu0 %v5394
        %7037 = vmatpush.bf16.msra.mxu0 %v5386
        %7038 = vmatmul.bf16.gmra.mxu0 %v1858
        %v7039 = vpop.f32.mrf.mxu0
        %v7040 = vadd.f32 %v7027, %v7039
        %v7041 = vpop.f32.mrf.mxu0
        %7042 = vdwg.mxu0
        %7043 = vmatpush.bf16.msra.mxu0 %v5506
        %7044 = vmatpush.bf16.msra.mxu0 %v5498
        %7045 = vmatpush.bf16.msra.mxu0 %v5490
        %7046 = vmatpush.bf16.msra.mxu0 %v5482
        %7047 = vmatpush.bf16.msra.mxu0 %v5474
        %7048 = vmatpush.bf16.msra.mxu0 %v5466
        %7049 = vmatpush.bf16.msra.mxu0 %v5458
        %7050 = vmatpush.bf16.msra.mxu0 %v5450
        %7051 = vmatmul.bf16.gmra.mxu0 %v1859
        %v7052 = vpop.f32.mrf.mxu0
        %v7053 = vadd.f32 %v7040, %v7052
        %v7054 = vpop.f32.mrf.mxu0
        %7055 = vdwg.mxu0
        %7056 = vmatpush.bf16.msra.mxu0 %v5570
        %7057 = vmatpush.bf16.msra.mxu0 %v5562
        %7058 = vmatpush.bf16.msra.mxu0 %v5554
        %7059 = vmatpush.bf16.msra.mxu0 %v5546
        %7060 = vmatpush.bf16.msra.mxu0 %v5538
        %7061 = vmatpush.bf16.msra.mxu0 %v5530
        %7062 = vmatpush.bf16.msra.mxu0 %v5522
        %7063 = vmatpush.bf16.msra.mxu0 %v5514
        %7064 = vmatmul.bf16.gmra.mxu0 %v1860
        %v7065 = vpop.f32.mrf.mxu0
        %v7066 = vadd.f32 %v7053, %v7065
        %v7067 = vpop.f32.mrf.mxu0
        %7068 = vdwg.mxu0
        %7069 = vmatpush.bf16.msra.mxu0 %v5634
        %7070 = vmatpush.bf16.msra.mxu0 %v5626
        %7071 = vmatpush.bf16.msra.mxu0 %v5618
        %7072 = vmatpush.bf16.msra.mxu0 %v5610
        %7073 = vmatpush.bf16.msra.mxu0 %v5602
        %7074 = vmatpush.bf16.msra.mxu0 %v5594
        %7075 = vmatpush.bf16.msra.mxu0 %v5586
        %7076 = vmatpush.bf16.msra.mxu0 %v5578
        %7077 = vmatmul.bf16.gmra.mxu0 %v1861
        %v7078 = vpop.f32.mrf.mxu0
        %v7079 = vadd.f32 %v7066, %v7078
        %v7080 = vpop.f32.mrf.mxu0
        %7081 = vdwg.mxu0
        %7082 = vmatpush.bf16.msra.mxu0 %v5698
        %7083 = vmatpush.bf16.msra.mxu0 %v5690
        %7084 = vmatpush.bf16.msra.mxu0 %v5682
        %7085 = vmatpush.bf16.msra.mxu0 %v5674
        %7086 = vmatpush.bf16.msra.mxu0 %v5666
        %7087 = vmatpush.bf16.msra.mxu0 %v5658
        %7088 = vmatpush.bf16.msra.mxu0 %v5650
        %7089 = vmatpush.bf16.msra.mxu0 %v5642
        %7090 = vmatmul.bf16.gmra.mxu0 %v1862
        %v7091 = vpop.f32.mrf.mxu0
        %v7092 = vadd.f32 %v7079, %v7091
        %v7093 = vpop.f32.mrf.mxu0
        %7094 = vdwg.mxu0
        %7095 = vmatpush.bf16.msra.mxu0 %v4995
        %7096 = vmatpush.bf16.msra.mxu0 %v4987
        %7097 = vmatpush.bf16.msra.mxu0 %v4979
        %7098 = vmatpush.bf16.msra.mxu0 %v4971
        %7099 = vmatpush.bf16.msra.mxu0 %v4963
        %7100 = vmatpush.bf16.msra.mxu0 %v4955
        %7101 = vmatpush.bf16.msra.mxu0 %v4947
        %7102 = vmatpush.bf16.msra.mxu0 %v4939
        %7103 = vmatmul.bf16.gmra.mxu0 %v1851
        %v7104 = vpop.f32.mrf.mxu0
        %v7105 = vadd.f32 0.0, %v7104
        %v7106 = vpop.f32.mrf.mxu0
        %7107 = vdwg.mxu0
        %7108 = vmatpush.bf16.msra.mxu0 %v5059
        %7109 = vmatpush.bf16.msra.mxu0 %v5051
        %7110 = vmatpush.bf16.msra.mxu0 %v5043
        %7111 = vmatpush.bf16.msra.mxu0 %v5035
        %7112 = vmatpush.bf16.msra.mxu0 %v5027
        %7113 = vmatpush.bf16.msra.mxu0 %v5019
        %7114 = vmatpush.bf16.msra.mxu0 %v5011
        %7115 = vmatpush.bf16.msra.mxu0 %v5003
        %7116 = vmatmul.bf16.gmra.mxu0 %v1852
        %v7117 = vpop.f32.mrf.mxu0
        %v7118 = vadd.f32 %v7105, %v7117
        %v7119 = vpop.f32.mrf.mxu0
        %7120 = vdwg.mxu0
        %7121 = vmatpush.bf16.msra.mxu0 %v5123
        %7122 = vmatpush.bf16.msra.mxu0 %v5115
        %7123 = vmatpush.bf16.msra.mxu0 %v5107
        %7124 = vmatpush.bf16.msra.mxu0 %v5099
        %7125 = vmatpush.bf16.msra.mxu0 %v5091
        %7126 = vmatpush.bf16.msra.mxu0 %v5083
        %7127 = vmatpush.bf16.msra.mxu0 %v5075
        %7128 = vmatpush.bf16.msra.mxu0 %v5067
        %7129 = vmatmul.bf16.gmra.mxu0 %v1853
        %v7130 = vpop.f32.mrf.mxu0
        %v7131 = vadd.f32 %v7118, %v7130
        %v7132 = vpop.f32.mrf.mxu0
        %7133 = vdwg.mxu0
        %7134 = vmatpush.bf16.msra.mxu0 %v5187
        %7135 = vmatpush.bf16.msra.mxu0 %v5179
        %7136 = vmatpush.bf16.msra.mxu0 %v5171
        %7137 = vmatpush.bf16.msra.mxu0 %v5163
        %7138 = vmatpush.bf16.msra.mxu0 %v5155
        %7139 = vmatpush.bf16.msra.mxu0 %v5147
        %7140 = vmatpush.bf16.msra.mxu0 %v5139
        %7141 = vmatpush.bf16.msra.mxu0 %v5131
        %7142 = vmatmul.bf16.gmra.mxu0 %v1854
        %v7143 = vpop.f32.mrf.mxu0
        %v7144 = vadd.f32 %v7131, %v7143
        %v7145 = vpop.f32.mrf.mxu0
        %7146 = vdwg.mxu0
        %7147 = vmatpush.bf16.msra.mxu0 %v5251
        %7148 = vmatpush.bf16.msra.mxu0 %v5243
        %7149 = vmatpush.bf16.msra.mxu0 %v5235
        %7150 = vmatpush.bf16.msra.mxu0 %v5227
        %7151 = vmatpush.bf16.msra.mxu0 %v5219
        %7152 = vmatpush.bf16.msra.mxu0 %v5211
        %7153 = vmatpush.bf16.msra.mxu0 %v5203
        %7154 = vmatpush.bf16.msra.mxu0 %v5195
        %7155 = vmatmul.bf16.gmra.mxu0 %v1855
        %v7156 = vpop.f32.mrf.mxu0
        %v7157 = vadd.f32 %v7144, %v7156
        %v7158 = vpop.f32.mrf.mxu0
        %7159 = vdwg.mxu0
        %7160 = vmatpush.bf16.msra.mxu0 %v5315
        %7161 = vmatpush.bf16.msra.mxu0 %v5307
        %7162 = vmatpush.bf16.msra.mxu0 %v5299
        %7163 = vmatpush.bf16.msra.mxu0 %v5291
        %7164 = vmatpush.bf16.msra.mxu0 %v5283
        %7165 = vmatpush.bf16.msra.mxu0 %v5275
        %7166 = vmatpush.bf16.msra.mxu0 %v5267
        %7167 = vmatpush.bf16.msra.mxu0 %v5259
        %7168 = vmatmul.bf16.gmra.mxu0 %v1856
        %v7169 = vpop.f32.mrf.mxu0
        %v7170 = vadd.f32 %v7157, %v7169
        %v7171 = vpop.f32.mrf.mxu0
        %7172 = vdwg.mxu0
        %7173 = vmatpush.bf16.msra.mxu0 %v5379
        %7174 = vmatpush.bf16.msra.mxu0 %v5371
        %7175 = vmatpush.bf16.msra.mxu0 %v5363
        %7176 = vmatpush.bf16.msra.mxu0 %v5355
        %7177 = vmatpush.bf16.msra.mxu0 %v5347
        %7178 = vmatpush.bf16.msra.mxu0 %v5339
        %7179 = vmatpush.bf16.msra.mxu0 %v5331
        %7180 = vmatpush.bf16.msra.mxu0 %v5323
        %7181 = vmatmul.bf16.gmra.mxu0 %v1857
        %v7182 = vpop.f32.mrf.mxu0
        %v7183 = vadd.f32 %v7170, %v7182
        %v7184 = vpop.f32.mrf.mxu0
        %7185 = vdwg.mxu0
        %7186 = vmatpush.bf16.msra.mxu0 %v5443
        %7187 = vmatpush.bf16.msra.mxu0 %v5435
        %7188 = vmatpush.bf16.msra.mxu0 %v5427
        %7189 = vmatpush.bf16.msra.mxu0 %v5419
        %7190 = vmatpush.bf16.msra.mxu0 %v5411
        %7191 = vmatpush.bf16.msra.mxu0 %v5403
        %7192 = vmatpush.bf16.msra.mxu0 %v5395
        %7193 = vmatpush.bf16.msra.mxu0 %v5387
        %7194 = vmatmul.bf16.gmra.mxu0 %v1858
        %v7195 = vpop.f32.mrf.mxu0
        %v7196 = vadd.f32 %v7183, %v7195
        %v7197 = vpop.f32.mrf.mxu0
        %7198 = vdwg.mxu0
        %7199 = vmatpush.bf16.msra.mxu0 %v5507
        %7200 = vmatpush.bf16.msra.mxu0 %v5499
        %7201 = vmatpush.bf16.msra.mxu0 %v5491
        %7202 = vmatpush.bf16.msra.mxu0 %v5483
        %7203 = vmatpush.bf16.msra.mxu0 %v5475
        %7204 = vmatpush.bf16.msra.mxu0 %v5467
        %7205 = vmatpush.bf16.msra.mxu0 %v5459
        %7206 = vmatpush.bf16.msra.mxu0 %v5451
        %7207 = vmatmul.bf16.gmra.mxu0 %v1859
        %v7208 = vpop.f32.mrf.mxu0
        %v7209 = vadd.f32 %v7196, %v7208
        %v7210 = vpop.f32.mrf.mxu0
        %7211 = vdwg.mxu0
        %7212 = vmatpush.bf16.msra.mxu0 %v5571
        %7213 = vmatpush.bf16.msra.mxu0 %v5563
        %7214 = vmatpush.bf16.msra.mxu0 %v5555
        %7215 = vmatpush.bf16.msra.mxu0 %v5547
        %7216 = vmatpush.bf16.msra.mxu0 %v5539
        %7217 = vmatpush.bf16.msra.mxu0 %v5531
        %7218 = vmatpush.bf16.msra.mxu0 %v5523
        %7219 = vmatpush.bf16.msra.mxu0 %v5515
        %7220 = vmatmul.bf16.gmra.mxu0 %v1860
        %v7221 = vpop.f32.mrf.mxu0
        %v7222 = vadd.f32 %v7209, %v7221
        %v7223 = vpop.f32.mrf.mxu0
        %7224 = vdwg.mxu0
        %7225 = vmatpush.bf16.msra.mxu0 %v5635
        %7226 = vmatpush.bf16.msra.mxu0 %v5627
        %7227 = vmatpush.bf16.msra.mxu0 %v5619
        %7228 = vmatpush.bf16.msra.mxu0 %v5611
        %7229 = vmatpush.bf16.msra.mxu0 %v5603
        %7230 = vmatpush.bf16.msra.mxu0 %v5595
        %7231 = vmatpush.bf16.msra.mxu0 %v5587
        %7232 = vmatpush.bf16.msra.mxu0 %v5579
        %7233 = vmatmul.bf16.gmra.mxu0 %v1861
        %v7234 = vpop.f32.mrf.mxu0
        %v7235 = vadd.f32 %v7222, %v7234
        %v7236 = vpop.f32.mrf.mxu0
        %7237 = vdwg.mxu0
        %7238 = vmatpush.bf16.msra.mxu0 %v5699
        %7239 = vmatpush.bf16.msra.mxu0 %v5691
        %7240 = vmatpush.bf16.msra.mxu0 %v5683
        %7241 = vmatpush.bf16.msra.mxu0 %v5675
        %7242 = vmatpush.bf16.msra.mxu0 %v5667
        %7243 = vmatpush.bf16.msra.mxu0 %v5659
        %7244 = vmatpush.bf16.msra.mxu0 %v5651
        %7245 = vmatpush.bf16.msra.mxu0 %v5643
        %7246 = vmatmul.bf16.gmra.mxu0 %v1862
        %v7247 = vpop.f32.mrf.mxu0
        %v7248 = vadd.f32 %v7235, %v7247
        %v7249 = vpop.f32.mrf.mxu0
        %7250 = vdwg.mxu0
        %7251 = vmatpush.bf16.msra.mxu0 %v4996
        %7252 = vmatpush.bf16.msra.mxu0 %v4988
        %7253 = vmatpush.bf16.msra.mxu0 %v4980
        %7254 = vmatpush.bf16.msra.mxu0 %v4972
        %7255 = vmatpush.bf16.msra.mxu0 %v4964
        %7256 = vmatpush.bf16.msra.mxu0 %v4956
        %7257 = vmatpush.bf16.msra.mxu0 %v4948
        %7258 = vmatpush.bf16.msra.mxu0 %v4940
        %7259 = vmatmul.bf16.gmra.mxu0 %v1851
        %v7260 = vpop.f32.mrf.mxu0
        %v7261 = vadd.f32 0.0, %v7260
        %v7262 = vpop.f32.mrf.mxu0
        %7263 = vdwg.mxu0
        %7264 = vmatpush.bf16.msra.mxu0 %v5060
        %7265 = vmatpush.bf16.msra.mxu0 %v5052
        %7266 = vmatpush.bf16.msra.mxu0 %v5044
        %7267 = vmatpush.bf16.msra.mxu0 %v5036
        %7268 = vmatpush.bf16.msra.mxu0 %v5028
        %7269 = vmatpush.bf16.msra.mxu0 %v5020
        %7270 = vmatpush.bf16.msra.mxu0 %v5012
        %7271 = vmatpush.bf16.msra.mxu0 %v5004
        %7272 = vmatmul.bf16.gmra.mxu0 %v1852
        %v7273 = vpop.f32.mrf.mxu0
        %v7274 = vadd.f32 %v7261, %v7273
        %v7275 = vpop.f32.mrf.mxu0
        %7276 = vdwg.mxu0
        %7277 = vmatpush.bf16.msra.mxu0 %v5124
        %7278 = vmatpush.bf16.msra.mxu0 %v5116
        %7279 = vmatpush.bf16.msra.mxu0 %v5108
        %7280 = vmatpush.bf16.msra.mxu0 %v5100
        %7281 = vmatpush.bf16.msra.mxu0 %v5092
        %7282 = vmatpush.bf16.msra.mxu0 %v5084
        %7283 = vmatpush.bf16.msra.mxu0 %v5076
        %7284 = vmatpush.bf16.msra.mxu0 %v5068
        %7285 = vmatmul.bf16.gmra.mxu0 %v1853
        %v7286 = vpop.f32.mrf.mxu0
        %v7287 = vadd.f32 %v7274, %v7286
        %v7288 = vpop.f32.mrf.mxu0
        %7289 = vdwg.mxu0
        %7290 = vmatpush.bf16.msra.mxu0 %v5188
        %7291 = vmatpush.bf16.msra.mxu0 %v5180
        %7292 = vmatpush.bf16.msra.mxu0 %v5172
        %7293 = vmatpush.bf16.msra.mxu0 %v5164
        %7294 = vmatpush.bf16.msra.mxu0 %v5156
        %7295 = vmatpush.bf16.msra.mxu0 %v5148
        %7296 = vmatpush.bf16.msra.mxu0 %v5140
        %7297 = vmatpush.bf16.msra.mxu0 %v5132
        %7298 = vmatmul.bf16.gmra.mxu0 %v1854
        %v7299 = vpop.f32.mrf.mxu0
        %v7300 = vadd.f32 %v7287, %v7299
        %v7301 = vpop.f32.mrf.mxu0
        %7302 = vdwg.mxu0
        %7303 = vmatpush.bf16.msra.mxu0 %v5252
        %7304 = vmatpush.bf16.msra.mxu0 %v5244
        %7305 = vmatpush.bf16.msra.mxu0 %v5236
        %7306 = vmatpush.bf16.msra.mxu0 %v5228
        %7307 = vmatpush.bf16.msra.mxu0 %v5220
        %7308 = vmatpush.bf16.msra.mxu0 %v5212
        %7309 = vmatpush.bf16.msra.mxu0 %v5204
        %7310 = vmatpush.bf16.msra.mxu0 %v5196
        %7311 = vmatmul.bf16.gmra.mxu0 %v1855
        %v7312 = vpop.f32.mrf.mxu0
        %v7313 = vadd.f32 %v7300, %v7312
        %v7314 = vpop.f32.mrf.mxu0
        %7315 = vdwg.mxu0
        %7316 = vmatpush.bf16.msra.mxu0 %v5316
        %7317 = vmatpush.bf16.msra.mxu0 %v5308
        %7318 = vmatpush.bf16.msra.mxu0 %v5300
        %7319 = vmatpush.bf16.msra.mxu0 %v5292
        %7320 = vmatpush.bf16.msra.mxu0 %v5284
        %7321 = vmatpush.bf16.msra.mxu0 %v5276
        %7322 = vmatpush.bf16.msra.mxu0 %v5268
        %7323 = vmatpush.bf16.msra.mxu0 %v5260
        %7324 = vmatmul.bf16.gmra.mxu0 %v1856
        %v7325 = vpop.f32.mrf.mxu0
        %v7326 = vadd.f32 %v7313, %v7325
        %v7327 = vpop.f32.mrf.mxu0
        %7328 = vdwg.mxu0
        %7329 = vmatpush.bf16.msra.mxu0 %v5380
        %7330 = vmatpush.bf16.msra.mxu0 %v5372
        %7331 = vmatpush.bf16.msra.mxu0 %v5364
        %7332 = vmatpush.bf16.msra.mxu0 %v5356
        %7333 = vmatpush.bf16.msra.mxu0 %v5348
        %7334 = vmatpush.bf16.msra.mxu0 %v5340
        %7335 = vmatpush.bf16.msra.mxu0 %v5332
        %7336 = vmatpush.bf16.msra.mxu0 %v5324
        %7337 = vmatmul.bf16.gmra.mxu0 %v1857
        %v7338 = vpop.f32.mrf.mxu0
        %v7339 = vadd.f32 %v7326, %v7338
        %v7340 = vpop.f32.mrf.mxu0
        %7341 = vdwg.mxu0
        %7342 = vmatpush.bf16.msra.mxu0 %v5444
        %7343 = vmatpush.bf16.msra.mxu0 %v5436
        %7344 = vmatpush.bf16.msra.mxu0 %v5428
        %7345 = vmatpush.bf16.msra.mxu0 %v5420
        %7346 = vmatpush.bf16.msra.mxu0 %v5412
        %7347 = vmatpush.bf16.msra.mxu0 %v5404
        %7348 = vmatpush.bf16.msra.mxu0 %v5396
        %7349 = vmatpush.bf16.msra.mxu0 %v5388
        %7350 = vmatmul.bf16.gmra.mxu0 %v1858
        %v7351 = vpop.f32.mrf.mxu0
        %v7352 = vadd.f32 %v7339, %v7351
        %v7353 = vpop.f32.mrf.mxu0
        %7354 = vdwg.mxu0
        %7355 = vmatpush.bf16.msra.mxu0 %v5508
        %7356 = vmatpush.bf16.msra.mxu0 %v5500
        %7357 = vmatpush.bf16.msra.mxu0 %v5492
        %7358 = vmatpush.bf16.msra.mxu0 %v5484
        %7359 = vmatpush.bf16.msra.mxu0 %v5476
        %7360 = vmatpush.bf16.msra.mxu0 %v5468
        %7361 = vmatpush.bf16.msra.mxu0 %v5460
        %7362 = vmatpush.bf16.msra.mxu0 %v5452
        %7363 = vmatmul.bf16.gmra.mxu0 %v1859
        %v7364 = vpop.f32.mrf.mxu0
        %v7365 = vadd.f32 %v7352, %v7364
        %v7366 = vpop.f32.mrf.mxu0
        %7367 = vdwg.mxu0
        %7368 = vmatpush.bf16.msra.mxu0 %v5572
        %7369 = vmatpush.bf16.msra.mxu0 %v5564
        %7370 = vmatpush.bf16.msra.mxu0 %v5556
        %7371 = vmatpush.bf16.msra.mxu0 %v5548
        %7372 = vmatpush.bf16.msra.mxu0 %v5540
        %7373 = vmatpush.bf16.msra.mxu0 %v5532
        %7374 = vmatpush.bf16.msra.mxu0 %v5524
        %7375 = vmatpush.bf16.msra.mxu0 %v5516
        %7376 = vmatmul.bf16.gmra.mxu0 %v1860
        %v7377 = vpop.f32.mrf.mxu0
        %v7378 = vadd.f32 %v7365, %v7377
        %v7379 = vpop.f32.mrf.mxu0
        %7380 = vdwg.mxu0
        %7381 = vmatpush.bf16.msra.mxu0 %v5636
        %7382 = vmatpush.bf16.msra.mxu0 %v5628
        %7383 = vmatpush.bf16.msra.mxu0 %v5620
        %7384 = vmatpush.bf16.msra.mxu0 %v5612
        %7385 = vmatpush.bf16.msra.mxu0 %v5604
        %7386 = vmatpush.bf16.msra.mxu0 %v5596
        %7387 = vmatpush.bf16.msra.mxu0 %v5588
        %7388 = vmatpush.bf16.msra.mxu0 %v5580
        %7389 = vmatmul.bf16.gmra.mxu0 %v1861
        %v7390 = vpop.f32.mrf.mxu0
        %v7391 = vadd.f32 %v7378, %v7390
        %v7392 = vpop.f32.mrf.mxu0
        %7393 = vdwg.mxu0
        %7394 = vmatpush.bf16.msra.mxu0 %v5700
        %7395 = vmatpush.bf16.msra.mxu0 %v5692
        %7396 = vmatpush.bf16.msra.mxu0 %v5684
        %7397 = vmatpush.bf16.msra.mxu0 %v5676
        %7398 = vmatpush.bf16.msra.mxu0 %v5668
        %7399 = vmatpush.bf16.msra.mxu0 %v5660
        %7400 = vmatpush.bf16.msra.mxu0 %v5652
        %7401 = vmatpush.bf16.msra.mxu0 %v5644
        %7402 = vmatmul.bf16.gmra.mxu0 %v1862
        %v7403 = vpop.f32.mrf.mxu0
        %v7404 = vadd.f32 %v7391, %v7403
        %v7405 = vpop.f32.mrf.mxu0
        %7406 = vdwg.mxu0
        %7407 = vmatpush.bf16.msra.mxu0 %v4997
        %7408 = vmatpush.bf16.msra.mxu0 %v4989
        %7409 = vmatpush.bf16.msra.mxu0 %v4981
        %7410 = vmatpush.bf16.msra.mxu0 %v4973
        %7411 = vmatpush.bf16.msra.mxu0 %v4965
        %7412 = vmatpush.bf16.msra.mxu0 %v4957
        %7413 = vmatpush.bf16.msra.mxu0 %v4949
        %7414 = vmatpush.bf16.msra.mxu0 %v4941
        %7415 = vmatmul.bf16.gmra.mxu0 %v1851
        %v7416 = vpop.f32.mrf.mxu0
        %v7417 = vadd.f32 0.0, %v7416
        %v7418 = vpop.f32.mrf.mxu0
        %7419 = vdwg.mxu0
        %7420 = vmatpush.bf16.msra.mxu0 %v5061
        %7421 = vmatpush.bf16.msra.mxu0 %v5053
        %7422 = vmatpush.bf16.msra.mxu0 %v5045
        %7423 = vmatpush.bf16.msra.mxu0 %v5037
        %7424 = vmatpush.bf16.msra.mxu0 %v5029
        %7425 = vmatpush.bf16.msra.mxu0 %v5021
        %7426 = vmatpush.bf16.msra.mxu0 %v5013
        %7427 = vmatpush.bf16.msra.mxu0 %v5005
        %7428 = vmatmul.bf16.gmra.mxu0 %v1852
        %v7429 = vpop.f32.mrf.mxu0
        %v7430 = vadd.f32 %v7417, %v7429
        %v7431 = vpop.f32.mrf.mxu0
        %7432 = vdwg.mxu0
        %7433 = vmatpush.bf16.msra.mxu0 %v5125
        %7434 = vmatpush.bf16.msra.mxu0 %v5117
        %7435 = vmatpush.bf16.msra.mxu0 %v5109
        %7436 = vmatpush.bf16.msra.mxu0 %v5101
        %7437 = vmatpush.bf16.msra.mxu0 %v5093
        %7438 = vmatpush.bf16.msra.mxu0 %v5085
        %7439 = vmatpush.bf16.msra.mxu0 %v5077
        %7440 = vmatpush.bf16.msra.mxu0 %v5069
        %7441 = vmatmul.bf16.gmra.mxu0 %v1853
        %v7442 = vpop.f32.mrf.mxu0
        %v7443 = vadd.f32 %v7430, %v7442
        %v7444 = vpop.f32.mrf.mxu0
        %7445 = vdwg.mxu0
        %7446 = vmatpush.bf16.msra.mxu0 %v5189
        %7447 = vmatpush.bf16.msra.mxu0 %v5181
        %7448 = vmatpush.bf16.msra.mxu0 %v5173
        %7449 = vmatpush.bf16.msra.mxu0 %v5165
        %7450 = vmatpush.bf16.msra.mxu0 %v5157
        %7451 = vmatpush.bf16.msra.mxu0 %v5149
        %7452 = vmatpush.bf16.msra.mxu0 %v5141
        %7453 = vmatpush.bf16.msra.mxu0 %v5133
        %7454 = vmatmul.bf16.gmra.mxu0 %v1854
        %v7455 = vpop.f32.mrf.mxu0
        %v7456 = vadd.f32 %v7443, %v7455
        %v7457 = vpop.f32.mrf.mxu0
        %7458 = vdwg.mxu0
        %7459 = vmatpush.bf16.msra.mxu0 %v5253
        %7460 = vmatpush.bf16.msra.mxu0 %v5245
        %7461 = vmatpush.bf16.msra.mxu0 %v5237
        %7462 = vmatpush.bf16.msra.mxu0 %v5229
        %7463 = vmatpush.bf16.msra.mxu0 %v5221
        %7464 = vmatpush.bf16.msra.mxu0 %v5213
        %7465 = vmatpush.bf16.msra.mxu0 %v5205
        %7466 = vmatpush.bf16.msra.mxu0 %v5197
        %7467 = vmatmul.bf16.gmra.mxu0 %v1855
        %v7468 = vpop.f32.mrf.mxu0
        %v7469 = vadd.f32 %v7456, %v7468
        %v7470 = vpop.f32.mrf.mxu0
        %7471 = vdwg.mxu0
        %7472 = vmatpush.bf16.msra.mxu0 %v5317
        %7473 = vmatpush.bf16.msra.mxu0 %v5309
        %7474 = vmatpush.bf16.msra.mxu0 %v5301
        %7475 = vmatpush.bf16.msra.mxu0 %v5293
        %7476 = vmatpush.bf16.msra.mxu0 %v5285
        %7477 = vmatpush.bf16.msra.mxu0 %v5277
        %7478 = vmatpush.bf16.msra.mxu0 %v5269
        %7479 = vmatpush.bf16.msra.mxu0 %v5261
        %7480 = vmatmul.bf16.gmra.mxu0 %v1856
        %v7481 = vpop.f32.mrf.mxu0
        %v7482 = vadd.f32 %v7469, %v7481
        %v7483 = vpop.f32.mrf.mxu0
        %7484 = vdwg.mxu0
        %7485 = vmatpush.bf16.msra.mxu0 %v5381
        %7486 = vmatpush.bf16.msra.mxu0 %v5373
        %7487 = vmatpush.bf16.msra.mxu0 %v5365
        %7488 = vmatpush.bf16.msra.mxu0 %v5357
        %7489 = vmatpush.bf16.msra.mxu0 %v5349
        %7490 = vmatpush.bf16.msra.mxu0 %v5341
        %7491 = vmatpush.bf16.msra.mxu0 %v5333
        %7492 = vmatpush.bf16.msra.mxu0 %v5325
        %7493 = vmatmul.bf16.gmra.mxu0 %v1857
        %v7494 = vpop.f32.mrf.mxu0
        %v7495 = vadd.f32 %v7482, %v7494
        %v7496 = vpop.f32.mrf.mxu0
        %7497 = vdwg.mxu0
        %7498 = vmatpush.bf16.msra.mxu0 %v5445
        %7499 = vmatpush.bf16.msra.mxu0 %v5437
        %7500 = vmatpush.bf16.msra.mxu0 %v5429
        %7501 = vmatpush.bf16.msra.mxu0 %v5421
        %7502 = vmatpush.bf16.msra.mxu0 %v5413
        %7503 = vmatpush.bf16.msra.mxu0 %v5405
        %7504 = vmatpush.bf16.msra.mxu0 %v5397
        %7505 = vmatpush.bf16.msra.mxu0 %v5389
        %7506 = vmatmul.bf16.gmra.mxu0 %v1858
        %v7507 = vpop.f32.mrf.mxu0
        %v7508 = vadd.f32 %v7495, %v7507
        %v7509 = vpop.f32.mrf.mxu0
        %7510 = vdwg.mxu0
        %7511 = vmatpush.bf16.msra.mxu0 %v5509
        %7512 = vmatpush.bf16.msra.mxu0 %v5501
        %7513 = vmatpush.bf16.msra.mxu0 %v5493
        %7514 = vmatpush.bf16.msra.mxu0 %v5485
        %7515 = vmatpush.bf16.msra.mxu0 %v5477
        %7516 = vmatpush.bf16.msra.mxu0 %v5469
        %7517 = vmatpush.bf16.msra.mxu0 %v5461
        %7518 = vmatpush.bf16.msra.mxu0 %v5453
        %7519 = vmatmul.bf16.gmra.mxu0 %v1859
        %v7520 = vpop.f32.mrf.mxu0
        %v7521 = vadd.f32 %v7508, %v7520
        %v7522 = vpop.f32.mrf.mxu0
        %7523 = vdwg.mxu0
        %7524 = vmatpush.bf16.msra.mxu0 %v5573
        %7525 = vmatpush.bf16.msra.mxu0 %v5565
        %7526 = vmatpush.bf16.msra.mxu0 %v5557
        %7527 = vmatpush.bf16.msra.mxu0 %v5549
        %7528 = vmatpush.bf16.msra.mxu0 %v5541
        %7529 = vmatpush.bf16.msra.mxu0 %v5533
        %7530 = vmatpush.bf16.msra.mxu0 %v5525
        %7531 = vmatpush.bf16.msra.mxu0 %v5517
        %7532 = vmatmul.bf16.gmra.mxu0 %v1860
        %v7533 = vpop.f32.mrf.mxu0
        %v7534 = vadd.f32 %v7521, %v7533
        %v7535 = vpop.f32.mrf.mxu0
        %7536 = vdwg.mxu0
        %7537 = vmatpush.bf16.msra.mxu0 %v5637
        %7538 = vmatpush.bf16.msra.mxu0 %v5629
        %7539 = vmatpush.bf16.msra.mxu0 %v5621
        %7540 = vmatpush.bf16.msra.mxu0 %v5613
        %7541 = vmatpush.bf16.msra.mxu0 %v5605
        %7542 = vmatpush.bf16.msra.mxu0 %v5597
        %7543 = vmatpush.bf16.msra.mxu0 %v5589
        %7544 = vmatpush.bf16.msra.mxu0 %v5581
        %7545 = vmatmul.bf16.gmra.mxu0 %v1861
        %v7546 = vpop.f32.mrf.mxu0
        %v7547 = vadd.f32 %v7534, %v7546
        %v7548 = vpop.f32.mrf.mxu0
        %7549 = vdwg.mxu0
        %7550 = vmatpush.bf16.msra.mxu0 %v5701
        %7551 = vmatpush.bf16.msra.mxu0 %v5693
        %7552 = vmatpush.bf16.msra.mxu0 %v5685
        %7553 = vmatpush.bf16.msra.mxu0 %v5677
        %7554 = vmatpush.bf16.msra.mxu0 %v5669
        %7555 = vmatpush.bf16.msra.mxu0 %v5661
        %7556 = vmatpush.bf16.msra.mxu0 %v5653
        %7557 = vmatpush.bf16.msra.mxu0 %v5645
        %7558 = vmatmul.bf16.gmra.mxu0 %v1862
        %v7559 = vpop.f32.mrf.mxu0
        %v7560 = vadd.f32 %v7547, %v7559
        %v7561 = vpop.f32.mrf.mxu0
        %7562 = vdwg.mxu0
        %7563 = vmatpush.bf16.msra.mxu0 %v4998
        %7564 = vmatpush.bf16.msra.mxu0 %v4990
        %7565 = vmatpush.bf16.msra.mxu0 %v4982
        %7566 = vmatpush.bf16.msra.mxu0 %v4974
        %7567 = vmatpush.bf16.msra.mxu0 %v4966
        %7568 = vmatpush.bf16.msra.mxu0 %v4958
        %7569 = vmatpush.bf16.msra.mxu0 %v4950
        %7570 = vmatpush.bf16.msra.mxu0 %v4942
        %7571 = vmatmul.bf16.gmra.mxu0 %v1851
        %v7572 = vpop.f32.mrf.mxu0
        %v7573 = vadd.f32 0.0, %v7572
        %v7574 = vpop.f32.mrf.mxu0
        %7575 = vdwg.mxu0
        %7576 = vmatpush.bf16.msra.mxu0 %v5062
        %7577 = vmatpush.bf16.msra.mxu0 %v5054
        %7578 = vmatpush.bf16.msra.mxu0 %v5046
        %7579 = vmatpush.bf16.msra.mxu0 %v5038
        %7580 = vmatpush.bf16.msra.mxu0 %v5030
        %7581 = vmatpush.bf16.msra.mxu0 %v5022
        %7582 = vmatpush.bf16.msra.mxu0 %v5014
        %7583 = vmatpush.bf16.msra.mxu0 %v5006
        %7584 = vmatmul.bf16.gmra.mxu0 %v1852
        %v7585 = vpop.f32.mrf.mxu0
        %v7586 = vadd.f32 %v7573, %v7585
        %v7587 = vpop.f32.mrf.mxu0
        %7588 = vdwg.mxu0
        %7589 = vmatpush.bf16.msra.mxu0 %v5126
        %7590 = vmatpush.bf16.msra.mxu0 %v5118
        %7591 = vmatpush.bf16.msra.mxu0 %v5110
        %7592 = vmatpush.bf16.msra.mxu0 %v5102
        %7593 = vmatpush.bf16.msra.mxu0 %v5094
        %7594 = vmatpush.bf16.msra.mxu0 %v5086
        %7595 = vmatpush.bf16.msra.mxu0 %v5078
        %7596 = vmatpush.bf16.msra.mxu0 %v5070
        %7597 = vmatmul.bf16.gmra.mxu0 %v1853
        %v7598 = vpop.f32.mrf.mxu0
        %v7599 = vadd.f32 %v7586, %v7598
        %v7600 = vpop.f32.mrf.mxu0
        %7601 = vdwg.mxu0
        %7602 = vmatpush.bf16.msra.mxu0 %v5190
        %7603 = vmatpush.bf16.msra.mxu0 %v5182
        %7604 = vmatpush.bf16.msra.mxu0 %v5174
        %7605 = vmatpush.bf16.msra.mxu0 %v5166
        %7606 = vmatpush.bf16.msra.mxu0 %v5158
        %7607 = vmatpush.bf16.msra.mxu0 %v5150
        %7608 = vmatpush.bf16.msra.mxu0 %v5142
        %7609 = vmatpush.bf16.msra.mxu0 %v5134
        %7610 = vmatmul.bf16.gmra.mxu0 %v1854
        %v7611 = vpop.f32.mrf.mxu0
        %v7612 = vadd.f32 %v7599, %v7611
        %v7613 = vpop.f32.mrf.mxu0
        %7614 = vdwg.mxu0
        %7615 = vmatpush.bf16.msra.mxu0 %v5254
        %7616 = vmatpush.bf16.msra.mxu0 %v5246
        %7617 = vmatpush.bf16.msra.mxu0 %v5238
        %7618 = vmatpush.bf16.msra.mxu0 %v5230
        %7619 = vmatpush.bf16.msra.mxu0 %v5222
        %7620 = vmatpush.bf16.msra.mxu0 %v5214
        %7621 = vmatpush.bf16.msra.mxu0 %v5206
        %7622 = vmatpush.bf16.msra.mxu0 %v5198
        %7623 = vmatmul.bf16.gmra.mxu0 %v1855
        %v7624 = vpop.f32.mrf.mxu0
        %v7625 = vadd.f32 %v7612, %v7624
        %v7626 = vpop.f32.mrf.mxu0
        %7627 = vdwg.mxu0
        %7628 = vmatpush.bf16.msra.mxu0 %v5318
        %7629 = vmatpush.bf16.msra.mxu0 %v5310
        %7630 = vmatpush.bf16.msra.mxu0 %v5302
        %7631 = vmatpush.bf16.msra.mxu0 %v5294
        %7632 = vmatpush.bf16.msra.mxu0 %v5286
        %7633 = vmatpush.bf16.msra.mxu0 %v5278
        %7634 = vmatpush.bf16.msra.mxu0 %v5270
        %7635 = vmatpush.bf16.msra.mxu0 %v5262
        %7636 = vmatmul.bf16.gmra.mxu0 %v1856
        %v7637 = vpop.f32.mrf.mxu0
        %v7638 = vadd.f32 %v7625, %v7637
        %v7639 = vpop.f32.mrf.mxu0
        %7640 = vdwg.mxu0
        %7641 = vmatpush.bf16.msra.mxu0 %v5382
        %7642 = vmatpush.bf16.msra.mxu0 %v5374
        %7643 = vmatpush.bf16.msra.mxu0 %v5366
        %7644 = vmatpush.bf16.msra.mxu0 %v5358
        %7645 = vmatpush.bf16.msra.mxu0 %v5350
        %7646 = vmatpush.bf16.msra.mxu0 %v5342
        %7647 = vmatpush.bf16.msra.mxu0 %v5334
        %7648 = vmatpush.bf16.msra.mxu0 %v5326
        %7649 = vmatmul.bf16.gmra.mxu0 %v1857
        %v7650 = vpop.f32.mrf.mxu0
        %v7651 = vadd.f32 %v7638, %v7650
        %v7652 = vpop.f32.mrf.mxu0
        %7653 = vdwg.mxu0
        %7654 = vmatpush.bf16.msra.mxu0 %v5446
        %7655 = vmatpush.bf16.msra.mxu0 %v5438
        %7656 = vmatpush.bf16.msra.mxu0 %v5430
        %7657 = vmatpush.bf16.msra.mxu0 %v5422
        %7658 = vmatpush.bf16.msra.mxu0 %v5414
        %7659 = vmatpush.bf16.msra.mxu0 %v5406
        %7660 = vmatpush.bf16.msra.mxu0 %v5398
        %7661 = vmatpush.bf16.msra.mxu0 %v5390
        %7662 = vmatmul.bf16.gmra.mxu0 %v1858
        %v7663 = vpop.f32.mrf.mxu0
        %v7664 = vadd.f32 %v7651, %v7663
        %v7665 = vpop.f32.mrf.mxu0
        %7666 = vdwg.mxu0
        %7667 = vmatpush.bf16.msra.mxu0 %v5510
        %7668 = vmatpush.bf16.msra.mxu0 %v5502
        %7669 = vmatpush.bf16.msra.mxu0 %v5494
        %7670 = vmatpush.bf16.msra.mxu0 %v5486
        %7671 = vmatpush.bf16.msra.mxu0 %v5478
        %7672 = vmatpush.bf16.msra.mxu0 %v5470
        %7673 = vmatpush.bf16.msra.mxu0 %v5462
        %7674 = vmatpush.bf16.msra.mxu0 %v5454
        %7675 = vmatmul.bf16.gmra.mxu0 %v1859
        %v7676 = vpop.f32.mrf.mxu0
        %v7677 = vadd.f32 %v7664, %v7676
        %v7678 = vpop.f32.mrf.mxu0
        %7679 = vdwg.mxu0
        %7680 = vmatpush.bf16.msra.mxu0 %v5574
        %7681 = vmatpush.bf16.msra.mxu0 %v5566
        %7682 = vmatpush.bf16.msra.mxu0 %v5558
        %7683 = vmatpush.bf16.msra.mxu0 %v5550
        %7684 = vmatpush.bf16.msra.mxu0 %v5542
        %7685 = vmatpush.bf16.msra.mxu0 %v5534
        %7686 = vmatpush.bf16.msra.mxu0 %v5526
        %7687 = vmatpush.bf16.msra.mxu0 %v5518
        %7688 = vmatmul.bf16.gmra.mxu0 %v1860
        %v7689 = vpop.f32.mrf.mxu0
        %v7690 = vadd.f32 %v7677, %v7689
        %v7691 = vpop.f32.mrf.mxu0
        %7692 = vdwg.mxu0
        %7693 = vmatpush.bf16.msra.mxu0 %v5638
        %7694 = vmatpush.bf16.msra.mxu0 %v5630
        %7695 = vmatpush.bf16.msra.mxu0 %v5622
        %7696 = vmatpush.bf16.msra.mxu0 %v5614
        %7697 = vmatpush.bf16.msra.mxu0 %v5606
        %7698 = vmatpush.bf16.msra.mxu0 %v5598
        %7699 = vmatpush.bf16.msra.mxu0 %v5590
        %7700 = vmatpush.bf16.msra.mxu0 %v5582
        %7701 = vmatmul.bf16.gmra.mxu0 %v1861
        %v7702 = vpop.f32.mrf.mxu0
        %v7703 = vadd.f32 %v7690, %v7702
        %v7704 = vpop.f32.mrf.mxu0
        %7705 = vdwg.mxu0
        %7706 = vmatpush.bf16.msra.mxu0 %v5702
        %7707 = vmatpush.bf16.msra.mxu0 %v5694
        %7708 = vmatpush.bf16.msra.mxu0 %v5686
        %7709 = vmatpush.bf16.msra.mxu0 %v5678
        %7710 = vmatpush.bf16.msra.mxu0 %v5670
        %7711 = vmatpush.bf16.msra.mxu0 %v5662
        %7712 = vmatpush.bf16.msra.mxu0 %v5654
        %7713 = vmatpush.bf16.msra.mxu0 %v5646
        %7714 = vmatmul.bf16.gmra.mxu0 %v1862
        %v7715 = vpop.f32.mrf.mxu0
        %v7716 = vadd.f32 %v7703, %v7715
        %v7717 = vpop.f32.mrf.mxu0
        %7718 = vdwg.mxu0
        %7719 = vst [vmem:[%s501] sm:$0xff] %v6624
        %7720 = vst [vmem:[%s501 + $0x8] sm:$0xff] %v6780
        %7721 = vst [vmem:[%s501 + $0x10] sm:$0xff] %v6936
        %7722 = vst [vmem:[%s501 + $0x18] sm:$0xff] %v7092
        %7723 = vst [vmem:[%s501 + $0x20] sm:$0xff] %v7248
        %7724 = vst [vmem:[%s501 + $0x28] sm:$0xff] %v7404
        %7725 = vst [vmem:[%s501 + $0x30] sm:$0xff] %v7560
        %7726 = vst [vmem:[%s501 + $0x38] sm:$0xff] %v7716
        %s7727 = sand.u32 %s275, 1
        %s7728 = scalar_lea.sflag [#allocation4], %s7727
        %s7729 = sand.u32 %s275, 1
        %s7730 = smul.addr %s7729, 64
        %s7731 = scalar_lea.vmem [#allocation14], %s7730
        // Predicated region
        $region93: #{tpu_custom_call.1} parent=63 // pred_check
          %p7732 = pneg %p285
        $region94: #{tpu_custom_call.1} parent=63 // pred_check_branch
          %7734 = sbr.rel (%p7732) target = $region96
        $region95: #{tpu_custom_call.1} parent=63 // pred_region
          %7736 = vsyncadd %s7728, 0
          %s7737 = smul.addr %s31, 8
          %s7738 = smul.addr %s7737, 8
          %s7739 = scalar_lea.hbm %s11, %s7738
          %s7741 = sshll.u32 %s7731, 4
          %s7742 = int_to_ptr.vmem [resolvable:$true] %s7741
          %s7743 = sshll.u32 %s7739, 4
          %s7744 = int_to_ptr.hbm [resolvable:$true] %s7743
          %7746 = dma.vmem_to_hbm [thread:$0]  %s7742, 1024, %s7744, %s7728
        $region96: #{tpu_custom_call.1} parent=63 // pred_fallthru
          _
      $region64: #{tpu_custom_call.1} parent=5 // pred_fallthru
        _
      %p7747 = scmp.le.s32.totalorder 2, %s26
      // Predicated region
      $region97: #{tpu_custom_call.1} parent=5 // pred_check
        %p7748 = pneg %p7747
      $region98: #{tpu_custom_call.1} parent=5 // pred_check_branch
        %7750 = sbr.rel (%p7748) target = $region100
      $region99: #{tpu_custom_call.1} parent=5 // pred_region
        %s7751 = ssub.s32 %s26, 2
        // Predicated region
        $region101: #{tpu_custom_call.1} parent=99 // pred_check
          %p7752 = pneg %p291
        $region102: #{tpu_custom_call.1} parent=99 // pred_check_branch
          %7754 = sbr.rel (%p7752) target = $region104
        $region103: #{tpu_custom_call.1} parent=99 // pred_region
          %s7755 = sand.u32 %s276, 1
          %s7756 = scalar_lea.sflag [#allocation4], %s7755
          %s7757 = sand.u32 %s276, 1
          %s7758 = smul.addr %s7757, 64
          %s7759 = scalar_lea.vmem [#allocation14], %s7758
          %7761 = dma.done %s7756, 1024
        $region104: #{tpu_custom_call.1} parent=99 // pred_fallthru
          _
      $region100: #{tpu_custom_call.1} parent=5 // pred_fallthru
        _
    $region6: #{tpu_custom_call.1} parent=1 // loop_footer
      %s30 = sadd.s32 1, %s26
    $region7: #{tpu_custom_call.1} parent=1 // loop_footer_branch
      %25 = sbr.rel target = $region3
    $region8: #{tpu_custom_call.1} parent=1 // loop_exit
      _
    %7762 = vsyncpa [#allocation3], 1
    %s7763 = scalar_lea.sflag [#allocation3], 1
    %7764 = vsyncpa %s7763, 1
    %7765 = vsyncpa [#allocation6], 1
    %7766 = vsyncpa [#allocation9], 1
    %7767 = vsyncpa [#allocation12], 1
    %7768 = vsyncpa [#allocation4], 1
    %s7769 = scalar_lea.sflag [#allocation4], 1
    %7770 = vsyncpa %s7769, 1

</llo_original>
